<compile_context>
chip_gen: v7x
topology: tpu7x:2x2x1
jax: 0.10.0
libtpu: 0.0.40
codegen_flags: <defaults>
</compile_context>

<pallas_src>
import math
from functools import lru_cache, reduce
from operator import add

import numpy as np
import jax
import jax.numpy as jnp
from jax.experimental import pallas as pl
from jax.experimental.pallas import tpu as pltpu


# MXU operand dtype.  f32 accumulation / GN stats / softmax are kept regardless.
_MATMUL_DTYPE = jnp.bfloat16

_VMEM_LIMIT = 48 * 1024 * 1024  # < v7x 64 MiB physical, > v5e 16 MiB default


def _ru(x, m):
    return ((x + m - 1) // m) * m


# --------------------------- tiled matmul kernel ---------------------------
# (Only used for the backbone stand-in patch embeddings now.)

@lru_cache(maxsize=None)
def _matmul_fn(Mp, K, Np, TM, TN, relu):
    """(Mp,K) @ (K,Np) + bias(1,Np), optional fused ReLU, tiled over (M, N)."""

    def kernel(x_ref, w_ref, b_ref, o_ref):
        acc = jnp.dot(x_ref[...], w_ref[...], preferred_element_type=jnp.float32)
        acc = acc + b_ref[...]
        if relu:
            acc = jnp.maximum(acc, 0.0)
        o_ref[...] = acc

    grid = (Mp // TM, Np // TN)
    call = pl.pallas_call(
        kernel,
        grid=grid,
        out_shape=jax.ShapeDtypeStruct((Mp, Np), jnp.float32),
        in_specs=[
            pl.BlockSpec((TM, K), lambda i, j: (i, 0)),
            pl.BlockSpec((K, TN), lambda i, j: (0, j)),
            pl.BlockSpec((1, TN), lambda i, j: (0, j)),
        ],
        out_specs=pl.BlockSpec((TM, TN), lambda i, j: (i, j)),
        compiler_params=pltpu.CompilerParams(
            dimension_semantics=("parallel", "parallel"),
            vmem_limit_bytes=_VMEM_LIMIT,
        ),
        cost_estimate=pl.CostEstimate(
            flops=2 * Mp * Np * K,
            transcendentals=0,
            bytes_accessed=2 * (Mp * K + K * Np) + 4 * Mp * Np,
        ),
    )
    return jax.jit(call)


def pallas_matmul(x, w, b=None, relu=False):
    M, K = x.shape
    N = w.shape[1]
    if b is None:
        b = jnp.zeros((N,), jnp.float32)
    TM = min(1024, _ru(int(M), 8))
    TN = min(256, _ru(int(N), 128))
    Mp, Np = _ru(int(M), TM), _ru(int(N), TN)

    xp = x.astype(_MATMUL_DTYPE)
    wp = w.astype(_MATMUL_DTYPE)
    bp = b.reshape(1, N).astype(jnp.float32)
    if Mp != M:
        xp = jnp.pad(xp, ((0, Mp - M), (0, 0)))
    if Np != N:
        wp = jnp.pad(wp, ((0, 0), (0, Np - N)))
        bp = jnp.pad(bp, ((0, 0), (0, Np - N)))

    out = _matmul_fn(Mp, int(K), Np, TM, TN, bool(relu))(xp, wp, bp)
    return out[:M, :N]


# ------------- fused tap-sum conv (+ bias [+ GroupNorm] [+ ReLU]) -----------

@lru_cache(maxsize=None)
def _gn_matrices(C, G):
    Cg = C // G
    mexp = np.zeros((G, C), np.float32)
    for g in range(G):
        mexp[g, g * Cg:(g + 1) * Cg] = 1.0
    mavg = (mexp / Cg).T                                    # (C, G)
    return jnp.asarray(mavg), jnp.asarray(mexp)


@lru_cache(maxsize=None)
def _conv_fused_fn(B, H, W, Cin, Cout, k, groups, relu):
    """Per-sample fused conv: accumulate k*k taps as (HW,Cin)@(Cin,Cout) MXU
    matmuls from a VMEM-resident padded NHWC tile, then bias (+GN) (+ReLU)."""
    p = k // 2
    Hp, Wp = H + 2 * p, W + 2 * p
    HW = H * W
    use_gn = groups > 0
    eps = 1e-5

    # TODO(synk): for production resolutions (HW >> 4K) tile the spatial dim
    # (two-pass GN stats) instead of keeping the whole padded image in VMEM,
    # and add a second grid axis so v7x's two TensorCores get >1 step each.
    def kernel(*refs):
        if use_gn:
            x_ref, w_ref, b_ref, g_ref, be_ref, ma_ref, me_ref, o_ref = refs
        else:
            x_ref, w_ref, b_ref, o_ref = refs
        x = x_ref[0]                                          # (Hp, Wp, Cin) f32
        acc = jnp.zeros((HW, Cout), jnp.float32)
        for t in range(k * k):                                # static tap unroll
            di, dj = t // k, t % k
            patch = x[di:di + H, dj:dj + W, :].reshape(HW, Cin)
            acc = acc + jnp.dot(patch.astype(_MATMUL_DTYPE), w_ref[t],
                                preferred_element_type=jnp.float32)
        y = acc + b_ref[...]                                  # (HW, Cout) f32
        if use_gn:
            cmean = jnp.mean(y, axis=0, keepdims=True)        # (1, Cout)
            cms = jnp.mean(y * y, axis=0, keepdims=True)
            gmean = jnp.dot(cmean, ma_ref[...], preferred_element_type=jnp.float32)
            gms = jnp.dot(cms, ma_ref[...], preferred_element_type=jnp.float32)
            gvar = jnp.maximum(gms - gmean * gmean, 0.0)
            ginv = jax.lax.rsqrt(gvar + eps)
            mean_f = jnp.dot(gmean, me_ref[...], preferred_element_type=jnp.float32)
            inv_f = jnp.dot(ginv, me_ref[...], preferred_element_type=jnp.float32)
            y = (y - mean_f) * inv_f
            y = y * g_ref[...] + be_ref[...]
        if relu:
            y = jnp.maximum(y, 0.0)
        o_ref[0] = y

    in_specs = [
        pl.BlockSpec((1, Hp, Wp, Cin), lambda b: (b, 0, 0, 0)),
        pl.BlockSpec((k * k, Cin, Cout), lambda b: (0, 0, 0)),
        pl.BlockSpec((1, Cout), lambda b: (0, 0)),
    ]
    if use_gn:
        in_specs += [
            pl.BlockSpec((1, Cout), lambda b: (0, 0)),
            pl.BlockSpec((1, Cout), lambda b: (0, 0)),
            pl.BlockSpec((Cout, groups), lambda b: (0, 0)),
            pl.BlockSpec((groups, Cout), lambda b: (0, 0)),
        ]

    call = pl.pallas_call(
        kernel,
        grid=(B,),
        out_shape=jax.ShapeDtypeStruct((B, HW, Cout), jnp.float32),
        in_specs=in_specs,
        out_specs=pl.BlockSpec((1, HW, Cout), lambda b: (b, 0, 0)),
        compiler_params=pltpu.CompilerParams(
            dimension_semantics=("parallel",),
            vmem_limit_bytes=_VMEM_LIMIT,
        ),
        cost_estimate=pl.CostEstimate(
            flops=2 * B * HW * Cin * Cout * k * k,
            transcendentals=0,
            bytes_accessed=4 * B * (Hp * Wp * Cin + HW * Cout) + 2 * k * k * Cin * Cout,
        ),
    )
    return jax.jit(call)


def conv2d_fused(x, w_taps, b, gamma=None, beta=None, groups=0, relu=True):
    """x: (B, H, W, Cin) NHWC.  w_taps: (k*k, Cin, Cout).  Fused conv(+GN)+ReLU."""
    B, H, W, Cin = x.shape
    kk, _, Cout = w_taps.shape
    k = int(round(math.sqrt(kk)))
    p = k // 2
    xpad = jnp.pad(x.astype(jnp.float32), ((0, 0), (p, p), (p, p), (0, 0)))
    args = [xpad, w_taps.astype(_MATMUL_DTYPE),
            b.reshape(1, Cout).astype(jnp.float32)]
    if groups:
        mavg, mexp = _gn_matrices(int(Cout), int(groups))
        args += [gamma.reshape(1, Cout).astype(jnp.float32),
                 beta.reshape(1, Cout).astype(jnp.float32), mavg, mexp]
    fn = _conv_fused_fn(int(B), int(H), int(W), int(Cin), int(Cout), int(k),
                        int(groups), bool(relu))
    y = fn(*args)                                             # (B, HW, Cout)
    return y.reshape(B, H, W, Cout)


# --------------------- fused DCAMA attention (per block) --------------------

@lru_cache(maxsize=None)
def _dcama_attn_fn(Gp, TG, L, D, h):
    """Fused: +PE, Q/K projection (bf16 MXU), per-head scaled softmax, head
    mean, and mask contraction.  TG (layer, batch) groups per grid step."""
    dk = D // h
    scale = 1.0 / math.sqrt(dk)

    def kernel(q_ref, s_ref, m_ref, pe_ref, wq_ref, wk_ref, bq_ref, bk_ref, o_ref):
        pe = pe_ref[...]                                      # (L, D) f32
        wq = wq_ref[...]                                      # (D, D) bf16
        wk = wk_ref[...]
        bq = bq_ref[...]                                      # (1, D) f32
        bk = bk_ref[...]
        for t in range(TG):                                   # static group unroll
            qt = (q_ref[t] + pe).astype(_MATMUL_DTYPE)        # (L, D)
            st = (s_ref[t] + pe).astype(_MATMUL_DTYPE)
            pq = jnp.dot(qt, wq, preferred_element_type=jnp.float32) + bq
            pk = jnp.dot(st, wk, preferred_element_type=jnp.float32) + bk
            p_sum = jnp.zeros((L, L), jnp.float32)
            for hh in range(h):                               # static head unroll
                qh = pq[:, hh * dk:(hh + 1) * dk]
                kh = pk[:, hh * dk:(hh + 1) * dk]
                sc = jax.lax.dot_general(qh, kh, (((1,), (1,)), ((), ())),
                                         preferred_element_type=jnp.float32) * scale
                sc = sc - jnp.max(sc, axis=-1, keepdims=True)
                e = jnp.exp(sc)
                p_sum = p_sum + e / jnp.sum(e, axis=-1, keepdims=True)
            p_mean = p_sum * (1.0 / h)                        # (Lq, Lk)
            # coarse mask: mask (1, Lk) contracted with attention over keys
            o_ref[t] = jax.lax.dot_general(m_ref[t], p_mean,
                                           (((1,), (1,)), ((), ())),
                                           preferred_element_type=jnp.float32)

    call = pl.pallas_call(
        kernel,
        grid=(Gp // TG,),
        out_shape=jax.ShapeDtypeStruct((Gp, 1, L), jnp.float32),
        in_specs=[
            pl.BlockSpec((TG, L, D), lambda g: (g, 0, 0)),
            pl.BlockSpec((TG, L, D), lambda g: (g, 0, 0)),
            pl.BlockSpec((TG, 1, L), lambda g: (g, 0, 0)),
            pl.BlockSpec((L, D), lambda g: (0, 0)),
            pl.BlockSpec((D, D), lambda g: (0, 0)),
            pl.BlockSpec((D, D), lambda g: (0, 0)),
            pl.BlockSpec((1, D), lambda g: (0, 0)),
            pl.BlockSpec((1, D), lambda g: (0, 0)),
        ],
        out_specs=pl.BlockSpec((TG, 1, L), lambda g: (g, 0, 0)),
        compiler_params=pltpu.CompilerParams(
            dimension_semantics=("parallel",),
            vmem_limit_bytes=_VMEM_LIMIT,
        ),
    )
    return jax.jit(call)


# --------------------------- fused bilinear resize --------------------------

@lru_cache(maxsize=None)
def _bilinear_matrix_np(out_size, in_size):
    """Row-interpolation matrix for F.interpolate(bilinear, align_corners=True)."""
    if out_size == 1:
        s = np.zeros((1,), np.float64)
    else:
        s = np.arange(out_size, dtype=np.float64) * (in_size - 1) / (out_size - 1)
    i0 = np.clip(np.floor(s).astype(np.int64), 0, in_size - 1)
    i1 = np.minimum(i0 + 1, in_size - 1)
    w1 = (s - i0).astype(np.float32)
    w0 = 1.0 - w1
    M = np.zeros((out_size, in_size), np.float32)
    M[np.arange(out_size), i0] += w0
    M[np.arange(out_size), i1] += w1
    return M


@lru_cache(maxsize=None)
def _kron_resize_matrix(oh, ow, h, w):
    # TODO(synk): at production resolutions switch to a separable two-pass
    # kernel; the Kronecker operator is only practical at small spatial sizes.
    return jnp.asarray(np.kron(_bilinear_matrix_np(oh, h), _bilinear_matrix_np(ow, w)))


@lru_cache(maxsize=None)
def _resize_fn(B, HW, OHW, C):
    """out[b] = R2 (OHW, HW) @ x[b] (HW, C): one MXU matmul per sample."""

    def kernel(x_ref, r_ref, o_ref):
        o_ref[0] = jnp.dot(r_ref[...], x_ref[0], preferred_element_type=jnp.float32)

    call = pl.pallas_call(
        kernel,
        grid=(B,),
        out_shape=jax.ShapeDtypeStruct((B, OHW, C), jnp.float32),
        in_specs=[
            pl.BlockSpec((1, HW, C), lambda b: (b, 0, 0)),
            pl.BlockSpec((OHW, HW), lambda b: (0, 0)),
        ],
        out_specs=pl.BlockSpec((1, OHW, C), lambda b: (b, 0, 0)),
        compiler_params=pltpu.CompilerParams(
            dimension_semantics=("parallel",),
            vmem_limit_bytes=_VMEM_LIMIT,
        ),
        cost_estimate=pl.CostEstimate(
            flops=2 * B * OHW * HW * C,
            transcendentals=0,
            bytes_accessed=4 * (OHW * HW + B * (HW + OHW) * C),
        ),
    )
    return jax.jit(call)


def resize_bilinear_nhwc(x, out_h, out_w):
    """NHWC bilinear resize, align_corners=True, one fused Pallas kernel."""
    B, H, W, C = x.shape
    out_h, out_w = int(out_h), int(out_w)
    if (int(H), int(W)) == (out_h, out_w):
        return x
    r2 = _kron_resize_matrix(out_h, out_w, int(H), int(W))     # f32 (OHW, HW)
    fn = _resize_fn(int(B), int(H * W), int(out_h * out_w), int(C))
    y = fn(x.reshape(B, H * W, C).astype(jnp.float32), r2)
    return y.reshape(B, out_h, out_w, C)


# ----------------------------- positional encoding --------------------------

@lru_cache(maxsize=None)
def _sinusoidal_pe(L, D):
    pos = np.arange(L, dtype=np.float64)[:, None]
    div = np.exp(np.arange(0, D, 2, dtype=np.float64) * (-math.log(10000.0) / D))
    pe = np.zeros((L, D), np.float32)
    pe[:, 0::2] = np.sin(pos * div)
    pe[:, 1::2] = np.cos(pos * div)
    return jnp.asarray(pe)


# ----------------------------- parameters ------------------------------

def _normal(key, shape, scale=0.05):
    return scale * jax.random.normal(key, shape, dtype=jnp.float32)


def init_params(key, feat_channels, stack_ids):
    keys = iter(jax.random.split(key, 256))
    params = {}

    # DCAMA blocks: one (Wq, bq, Wk, bk) per in_channels[1:]
    params['attn'] = []
    for d in feat_channels[1:]:
        params['attn'].append((
            _normal(next(keys), (d, d)), jnp.zeros((d,), jnp.float32),
            _normal(next(keys), (d, d)), jnp.zeros((d,), jnp.float32),
        ))

    outch1, outch2, outch3 = 16, 64, 128

    # conv weights are stored in tap layout (k*k, Cin, Cout) for the fused kernel
    def conv_block_params(inch, outs, ks):
        layers, cin = [], inch
        for cout, k in zip(outs, ks):
            layers.append((
                _normal(next(keys), (k * k, cin, cout)),      # conv weight (taps)
                jnp.zeros((cout,), jnp.float32),              # conv bias
                jnp.ones((cout,), jnp.float32),               # GN gamma
                jnp.zeros((cout,), jnp.float32),              # GN beta
            ))
            cin = cout
        return layers

    params['conv1'] = conv_block_params(stack_ids[3] - stack_ids[2], [outch1, outch2, outch3], [3, 3, 3])
    params['conv2'] = conv_block_params(stack_ids[2] - stack_ids[1], [outch1, outch2, outch3], [5, 3, 3])
    params['conv3'] = conv_block_params(stack_ids[1] - stack_ids[0], [outch1, outch2, outch3], [5, 5, 3])
    params['conv4'] = conv_block_params(outch3, [outch3, outch3, outch3], [3, 3, 3])
    params['conv5'] = conv_block_params(outch3, [outch3, outch3, outch3], [3, 3, 3])

    def mixer_params(chans, k=3):
        layers = []
        for cin, cout in zip(chans[:-1], chans[1:]):
            layers.append((_normal(next(keys), (k * k, cin, cout)),
                           jnp.zeros((cout,), jnp.float32)))
        return layers

    mix1_in = outch3 + 2 * feat_channels[1] + 2 * feat_channels[0]
    params['mixer1'] = mixer_params([mix1_in, outch3, outch2])
    params['mixer2'] = mixer_params([outch2, outch2, outch1])
    params['mixer3'] = mixer_params([outch1, outch1, 2])
    return params


# ----------------------------- DCAMA_model forward ------------------------------

def dcama_model_forward(params, query_feats, support_feats, support_mask, stack_ids):
    s0, s1, s2, s3 = stack_ids
    smask = support_mask[..., None].astype(jnp.float32)       # (B, H, W, 1)

    # --- fused DCAMA attention: one pallas_call per block --------------------
    block_cm = []
    for blk, (lo, hi) in enumerate(((s0, s1), (s1, s2), (s2, s3))):
        n = hi - lo
        B, ha, wa, D = query_feats[lo].shape
        L = ha * wa
        G = n * B
        q_tok = jnp.stack([query_feats[i].reshape(B, L, D) for i in range(lo, hi)],
                          axis=0).reshape(G, L, D)
        s_tok = jnp.stack([support_feats[i].reshape(B, L, D) for i in range(lo, hi)],
                          axis=0).reshape(G, L, D)

        mask_bl = resize_bilinear_nhwc(smask, ha, wa).reshape(B, L)
        mvec = jnp.broadcast_to(mask_bl[None], (n, B, L)).reshape(G, 1, L)

        Wq, bq, Wk, bk = params['attn'][blk]
        h = 8
        TG = 4 if G <= 16 else 6
        Gp = _ru(G, TG)
        if Gp != G:
            padn = Gp - G
            q_tok = jnp.pad(q_tok, ((0, padn), (0, 0), (0, 0)))
            s_tok = jnp.pad(s_tok, ((0, padn), (0, 0), (0, 0)))
            mvec = jnp.pad(mvec, ((0, padn), (0, 0), (0, 0)))

        pe = _sinusoidal_pe(int(L), int(D))
        att = _dcama_attn_fn(int(Gp), int(TG), int(L), int(D), int(h))(
            q_tok, s_tok, mvec, pe,
            Wq.astype(_MATMUL_DTYPE), Wk.astype(_MATMUL_DTYPE),
            bq.reshape(1, D).astype(jnp.float32),
            bk.reshape(1, D).astype(jnp.float32))
        att = att[:G].reshape(n, B, ha, wa)
        block_cm.append(jnp.transpose(att, (1, 2, 3, 0)))     # (B, ha, wa, n) NHWC

    cm3, cm2, cm1 = block_cm[0], block_cm[1], block_cm[2]

    def conv_block(x, layers):
        for (w, b, gamma, beta) in layers:
            x = conv2d_fused(x, w, b, gamma, beta, groups=4, relu=True)
        return x

    cm1 = conv_block(cm1, params['conv1'])
    cm2 = conv_block(cm2, params['conv2'])
    cm3 = conv_block(cm3, params['conv3'])

    cm1 = resize_bilinear_nhwc(cm1, cm2.shape[1], cm2.shape[2])
    mix = cm1 + cm2
    mix = conv_block(mix, params['conv4'])
    mix = resize_bilinear_nhwc(mix, cm3.shape[1], cm3.shape[2])
    mix = mix + cm3
    mix = conv_block(mix, params['conv5'])

    mix = jnp.concatenate((mix, query_feats[s1 - 1], support_feats[s1 - 1]), axis=-1)
    up = mix.shape[2] * 2
    mix = resize_bilinear_nhwc(mix, up, up)
    mix = jnp.concatenate((mix, query_feats[s0 - 1], support_feats[s0 - 1]), axis=-1)

    (w1, b1), (w2, b2) = params['mixer1']
    out = conv2d_fused(mix, w1, b1, groups=0, relu=True)
    out = conv2d_fused(out, w2, b2, groups=0, relu=True)
    up = out.shape[2] * 2
    out = resize_bilinear_nhwc(out, up, up)

    (w1, b1), (w2, b2) = params['mixer2']
    out = conv2d_fused(out, w1, b1, groups=0, relu=True)
    out = conv2d_fused(out, w2, b2, groups=0, relu=True)
    up = out.shape[2] * 2
    out = resize_bilinear_nhwc(out, up, up)

    (w1, b1), (w2, b2) = params['mixer3']
    out = conv2d_fused(out, w1, b1, groups=0, relu=True)
    logit = conv2d_fused(out, w2, b2, groups=0, relu=False)    # (B, H, W, 2)
    return jnp.transpose(logit, (0, 3, 1, 2))                  # (B, 2, H, W)


# ----------------------------- backbone stand-in ------------------------------

def backbone_features(img_nhwc, proj_weights, spatial_sizes, nlayers, feat_channels):
    """Deterministic linear patch-embedding pyramid (Swin backbone stand-in).

    Channel-last features; the n per-stage projections are one matmul/stage.
    """
    B = img_nhwc.shape[0]
    feats, wi = [], 0
    for S, n, C in zip(spatial_sizes, nlayers, feat_channels):
        base = resize_bilinear_nhwc(img_nhwc, S, S)                    # (B, S, S, 3)
        tok = base.reshape(B * S * S, 3)
        wcat = jnp.concatenate(proj_weights[wi:wi + n], axis=1)        # (3, n*C)
        f = pallas_matmul(tok, wcat)                                   # (B*S*S, n*C)
        f = f.reshape(B, S, S, n * C)
        for l in range(n):
            feats.append(f[..., l * C:(l + 1) * C])                    # (B, S, S, C)
        wi += n
    return feats


# ----------------------------- top-level module ------------------------------

class DCAMAAdaptiveFSSPallas:
    def __init__(self, key, img_size=64,
                 feat_channels=(16, 32, 64, 128), nlayers=(2, 2, 18, 2)):
        self.feat_channels = list(feat_channels)
        self.nlayers = list(nlayers)
        self.lids = reduce(add, [[i + 1] * x for i, x in enumerate(self.nlayers)])
        counts = np.bincount(np.asarray(self.lids))[-4:]
        self.stack_ids = [int(x) for x in np.cumsum(counts)]           # e.g. [2, 4, 22, 24]
        self.spatial_sizes = [img_size // 4, img_size // 8, img_size // 16, img_size // 32]

        k_params, k_proj = jax.random.split(key)
        self.params = init_params(k_params, self.feat_channels, self.stack_ids)
        pk = jax.random.split(k_proj, sum(self.nlayers))
        self.proj_weights, i = [], 0
        for C, n in zip(self.feat_channels, self.nlayers):
            for _ in range(n):
                self.proj_weights.append(0.1 * jax.random.normal(pk[i], (3, C), dtype=jnp.float32))
                i += 1

    def __call__(self, query_img, support_img, support_mask):
        """query_img (B,3,H,W); support_img (B,1,3,H,W); support_mask (B,1,H,W); nshot=1."""
        q_nhwc = jnp.transpose(query_img, (0, 2, 3, 1))
        s_nhwc = jnp.transpose(support_img[:, 0], (0, 2, 3, 1))
        qf = backbone_features(q_nhwc, self.proj_weights,
                               self.spatial_sizes, self.nlayers, self.feat_channels)
        sf = backbone_features(s_nhwc, self.proj_weights,
                               self.spatial_sizes, self.nlayers, self.feat_channels)
        logit_mask = dcama_model_forward(self.params, qf, sf,
                                         support_mask[:, 0], self.stack_ids)
        return {'out': logit_mask}


if __name__ == "__main__":
    key = jax.random.PRNGKey(0)
    kq, ks, km, kp = jax.random.split(key, 4)

    B, H, W = 2, 64, 64
    query_img = jax.random.normal(kq, (B, 3, H, W), dtype=jnp.float32)
    support_img = jax.random.normal(ks, (B, 1, 3, H, W), dtype=jnp.float32)
    support_mask = (jax.random.uniform(km, (B, 1, H, W)) > 0.5).astype(jnp.float32)

    model = DCAMAAdaptiveFSSPallas(kp, img_size=H)
    out = model(query_img, support_img, support_mask)
    logit = jax.block_until_ready(out['out'])

    assert logit.shape == (B, 2, H, W), logit.shape
    assert bool(jnp.all(jnp.isfinite(logit)))
    print("KERNEL_OK")
</pallas_src>

<mosaic_0001>
module attributes {stable_mosaic.version = 11 : i64} {
  func.func @kernel(%arg0: i32, %arg1: memref<1x4096x3xf32, #tpu.memory_space<vmem>>, %arg2: memref<256x4096xf32, #tpu.memory_space<vmem>>, %arg3: memref<1x256x3xf32, #tpu.memory_space<vmem>>) attributes {dimension_semantics = [#tpu.dimension_semantics<parallel>], iteration_bounds = array<i64: 2>, scalar_prefetch = 0 : i64, scratch_operands = 0 : i64, tpu.core_type = #tpu.core_type<tc>, window_params = [{transform_indices = @transform_0, window_bounds = array<i64: 1, 4096, 3>}, {pipeline_mode = #tpu.pipeline_mode<synchronous>, transform_indices = @transform_1, window_bounds = array<i64: 256, 4096>}, {transform_indices = @transform_2, window_bounds = array<i64: 1, 256, 3>}]} {
    %c0 = arith.constant 0 : index
    %c0_0 = arith.constant 0 : index
    %0 = vector.load %arg2[%c0, %c0_0] : memref<256x4096xf32, #tpu.memory_space<vmem>>, vector<256x4096xf32>
    %c0_1 = arith.constant 0 : index
    %c0_2 = arith.constant 0 : index
    %c0_3 = arith.constant 0 : index
    %1 = vector.load %arg1[%c0_1, %c0_2, %c0_3] : memref<1x4096x3xf32, #tpu.memory_space<vmem>>, vector<1x4096x3xf32>
    %2 = vector.shape_cast %1 : vector<1x4096x3xf32> to vector<4096x3xf32>
    %cst = arith.constant dense<0.000000e+00> : vector<256x3xf32>
    %3 = tpu.matmul %0, %2, %cst {dimension_numbers = #tpu.dot_dimension_numbers<[1], [0], [0], [1], [0, 0, 1, 1], [], []>} : vector<256x4096xf32>, vector<4096x3xf32>, vector<256x3xf32> -> vector<256x3xf32>
    %c0_4 = arith.constant 0 : index
    %c0_5 = arith.constant 0 : index
    %c0_6 = arith.constant 0 : index
    %4 = vector.load %arg3[%c0_4, %c0_5, %c0_6] : memref<1x256x3xf32, #tpu.memory_space<vmem>>, vector<1x256x3xf32>
    %5 = vector.shape_cast %4 : vector<1x256x3xf32> to vector<256x3xf32>
    %6 = vector.shape_cast %3 : vector<256x3xf32> to vector<1x256x3xf32>
    tpu.vector_store %arg3[%c0_4, %c0_5, %c0_6], %6 {strides = array<i32>} : memref<1x256x3xf32, #tpu.memory_space<vmem>>, vector<1x256x3xf32>,
    return
  }
  func.func @transform_0(%arg0: i32) -> (i32, i32, i32) {
    %c0_i32 = arith.constant 0 : i32
    %c0_i32_0 = arith.constant 0 : i32
    %c0_i32_1 = arith.constant 0 : i32
    return %arg0, %c0_i32, %c0_i32_0 : i32, i32, i32
  }
  func.func @transform_1(%arg0: i32) -> (i32, i32) {
    %c0_i32 = arith.constant 0 : i32
    %c0_i32_0 = arith.constant 0 : i32
    %c0_i32_1 = arith.constant 0 : i32
    return %c0_i32, %c0_i32_0 : i32, i32
  }
  func.func @transform_2(%arg0: i32) -> (i32, i32, i32) {
    %c0_i32 = arith.constant 0 : i32
    %c0_i32_0 = arith.constant 0 : i32
    %c0_i32_1 = arith.constant 0 : i32
    return %arg0, %c0_i32, %c0_i32_0 : i32, i32, i32
  }
}

</mosaic_0001>

<llo_original>
// kernel: tpu_custom_call.1
$region0: #{tpu_custom_call.1}
  #allocation0 [shape = 'u32[]', space=smem, size = 0x4, offset = 0x4, fixed_abs, tag = 'smem constant byte address 0x4 - core index']
  #allocation1 [shape = 'u32[144,128]{1,0:T(1,128)}', space=vmem, size = 0x12000, scoped, tag = 'internal scratch']
  %s0 = inlined_call_operand.vmem [shape: f32[2,4096,3], index: 0, kind: input, shape index: {}]
  %s1 = inlined_call_operand.vmem [shape: f32[256,4096], index: 1, kind: input, shape index: {}]
  %s2 = inlined_call_operand.vmem [shape: f32[2,256,3], index: 2, kind: output, shape index: {}]
  %s3 = sld [smem:[#allocation0]]
  $region41: #{tpu_custom_call.1} parent=0
    _
  %s5 = ssub.s32 1, %s3
  %s6 = scalar_select 0, %s5, %s3
  loop: start=0, step=1, limit=4
  $region2: #{tpu_custom_call.1} parent=0 // loop_pre_header
    _
  $region3: #{tpu_custom_call.1} parent=0 // loop_header
    %s8 = sphi 0, %s12
    %p9 = scmp.ge.s32.totalorder %s8, 4
    %s18 = sphi 0, %s20
    %s21 = sphi 0, %s18
    %s22 = sphi 0, %s21
    %s38 = sphi 0, %s22
    %s42 = sphi 0, %s42
    %s44 = sphi 0, %s42
    %s45 = sphi 0, %s44
    %s59 = sphi 0, %s45
    %s65 = sphi 0, %s67
    %s68 = sphi 0, %s65
    %s69 = sphi 0, %s68
    %s85 = sphi 0, %s69
  $region4: #{tpu_custom_call.1} parent=0 // loop_header_branch
    %11 = sbr.rel (%p9) target = $region8
  $region5: #{tpu_custom_call.1} parent=0 // loop_body
    %s13 = ssub.s32 %s8, 1
    %s14 = ssub.s32 %s8, 2
    %s15 = sadd.s32 %s8, 1
    %s16 = ssub.s32 %s8, %s15
    %p17 = scmp.eq.s32.totalorder %s16, 0
    %s19 = sadd.s32 %s18, 1
    %s20 = scalar_select %p17, %s18, %s19
    %p23 = pneg %p17
    %p24 = scmp.eq.s32.totalorder %s8, 1
    %p25 = por %p23, %p24
    %p26 = scmp.ne.s32.totalorder %s18, %s21
    %p27 = scmp.eq.s32.totalorder %s8, 0
    %p28 = por %p26, %p27
    %p29 = scmp.ne.s32.totalorder %s18, %s21
    %p30 = scmp.eq.s32.totalorder %s13, 1
    %p31 = por %p29, %p30
    %p32 = scmp.ne.s32.totalorder %s21, %s22
    %p33 = scmp.eq.s32.totalorder %s13, 0
    %p34 = por %p32, %p33
    %p35 = scmp.ne.s32.totalorder %s21, %s22
    %p36 = scmp.eq.s32.totalorder %s14, 1
    %p37 = por %p35, %p36
    %p39 = scmp.ne.s32.totalorder %s22, %s38
    %p40 = scmp.eq.s32.totalorder %s14, 0
    %p41 = por %p39, %p40
    %s43 = sadd.s32 %s42, 1
    %p46 = scmp.eq.s32.totalorder %s8, 1
    %p47 = scmp.ne.s32.totalorder %s42, %s44
    %p48 = scmp.eq.s32.totalorder %s8, 0
    %p49 = por %p47, %p48
    %p50 = scmp.ne.s32.totalorder %s42, %s44
    %p51 = scmp.eq.s32.totalorder %s13, 1
    %p52 = por %p50, %p51
    %p53 = scmp.ne.s32.totalorder %s44, %s45
    %p54 = scmp.eq.s32.totalorder %s13, 0
    %p55 = por %p53, %p54
    %p56 = scmp.ne.s32.totalorder %s44, %s45
    %p57 = scmp.eq.s32.totalorder %s14, 1
    %p58 = por %p56, %p57
    %p60 = scmp.ne.s32.totalorder %s45, %s59
    %p61 = scmp.eq.s32.totalorder %s14, 0
    %p62 = por %p60, %p61
    %s63 = ssub.s32 %s8, %s15
    %p64 = scmp.eq.s32.totalorder %s63, 0
    %s66 = sadd.s32 %s65, 1
    %s67 = scalar_select %p64, %s65, %s66
    %p70 = pneg %p64
    %p71 = scmp.eq.s32.totalorder %s8, 1
    %p72 = por %p70, %p71
    %p73 = scmp.ne.s32.totalorder %s65, %s68
    %p74 = scmp.eq.s32.totalorder %s8, 0
    %p75 = por %p73, %p74
    %p76 = scmp.ne.s32.totalorder %s65, %s68
    %p77 = scmp.eq.s32.totalorder %s13, 1
    %p78 = por %p76, %p77
    %p79 = scmp.ne.s32.totalorder %s68, %s69
    %p80 = scmp.eq.s32.totalorder %s13, 0
    %p81 = por %p79, %p80
    %p82 = scmp.ne.s32.totalorder %s68, %s69
    %p83 = scmp.eq.s32.totalorder %s14, 1
    %p84 = por %p82, %p83
    %p86 = scmp.ne.s32.totalorder %s69, %s85
    %p87 = scmp.eq.s32.totalorder %s14, 0
    %p88 = por %p86, %p87
    %p89 = scmp.le.s32.totalorder 1, %s8
    %p90 = scmp.lt.s32.totalorder %s8, 3
    %p91 = pnand %p89, %p90
    %p92 = pneg %p91
    // Predicated region
    $region9: #{tpu_custom_call.1} parent=5 // pred_check
      _
    $region10: #{tpu_custom_call.1} parent=5 // pred_check_branch
      %94 = sbr.rel (%p91) target = $region12
    $region11: #{tpu_custom_call.1} parent=5 // pred_region
      %s95 = ssub.s32 %s8, 1
      // Predicated region
      $region13: #{tpu_custom_call.1} parent=11 // pred_check
        %p96 = pneg %p55
      $region14: #{tpu_custom_call.1} parent=11 // pred_check_branch
        %98 = sbr.rel (%p96) target = $region16
      $region15: #{tpu_custom_call.1} parent=11 // pred_region
        _
      $region16: #{tpu_custom_call.1} parent=11 // pred_fallthru
        _
    $region12: #{tpu_custom_call.1} parent=5 // pred_fallthru
      _
    %p99 = scmp.lt.s32.totalorder %s8, 2
    // Predicated region
    $region17: #{tpu_custom_call.1} parent=5 // pred_check
      %p100 = pneg %p99
    $region18: #{tpu_custom_call.1} parent=5 // pred_check_branch
      %102 = sbr.rel (%p100) target = $region20
    $region19: #{tpu_custom_call.1} parent=5 // pred_region
      // Predicated region
      $region21: #{tpu_custom_call.1} parent=19 // pred_check
        %p103 = pneg %p28
      $region22: #{tpu_custom_call.1} parent=19 // pred_check_branch
        %105 = sbr.rel (%p103) target = $region24
      $region23: #{tpu_custom_call.1} parent=19 // pred_region
        %p106 = scmp.lt.s32.totalorder %s8, 1
        %s107 = scalar_select %p106, %s8, 1
        %s108 = smul.addr %s107, 512
        %s109 = smul.addr %s108, 8
        %s110 = scalar_lea.vmem %s0, %s109
      $region24: #{tpu_custom_call.1} parent=19 // pred_fallthru
        _
    $region20: #{tpu_custom_call.1} parent=5 // pred_fallthru
      _
    %p111 = scmp.le.s32.totalorder 1, %s8
    %p112 = scmp.lt.s32.totalorder %s8, 3
    %p113 = pnand %p111, %p112
    %p114 = pneg %p113
    // Predicated region
    $region25: #{tpu_custom_call.1} parent=5 // pred_check
      _
    $region26: #{tpu_custom_call.1} parent=5 // pred_check_branch
      %116 = sbr.rel (%p113) target = $region28
    $region27: #{tpu_custom_call.1} parent=5 // pred_region
      %s117 = ssub.s32 %s8, 1
      %p118 = scmp.lt.s32.totalorder %s13, 1
      %s119 = scalar_select %p118, %s13, 1
      %s120 = smul.addr %s119, 512
      %s121 = smul.addr %s120, 8
      %s122 = scalar_lea.vmem %s0, %s121
      %p123 = pneg %p34
      %p124 = pneg %p31
      %p125 = pneg %p55
      %p126 = pneg %p52
      %p127 = pneg %p81
      %p128 = pneg %p78
      %p129 = scmp.lt.s32.totalorder %s13, 1
      %s130 = scalar_select %p129, %s13, 1
      %s131 = smul.addr %s130, 32
      %s132 = smul.addr %s131, 8
      %s133 = scalar_lea.vmem %s2, %s132
      %p134 = scmp.lt.s32.totalorder %s13, 1
      %s135 = scalar_select %p134, %s13, 1
      %s136 = smul.addr %s135, 512
      %s137 = smul.addr %s136, 8
      %s138 = scalar_lea.vmem %s0, %s137
      %p139 = scmp.lt.s32.totalorder %s13, 1
      %s140 = scalar_select %p139, %s13, 1
      %s141 = smul.addr %s140, 32
      %s142 = smul.addr %s141, 8
      %s143 = scalar_lea.vmem %s2, %s142
      %v144 = vld [vmem:[%s1] sm:$0xff]
      %v145 = vld [vmem:[%s1 + $0x8] sm:$0xff]
      %v146 = vld [vmem:[%s1 + $0x10] sm:$0xff]
      %v147 = vld [vmem:[%s1 + $0x18] sm:$0xff]
      %v148 = vld [vmem:[%s1 + $0x20] sm:$0xff]
      %v149 = vld [vmem:[%s1 + $0x28] sm:$0xff]
      %v150 = vld [vmem:[%s1 + $0x30] sm:$0xff]
      %v151 = vld [vmem:[%s1 + $0x38] sm:$0xff]
      %v152 = vld [vmem:[%s1 + $0x40] sm:$0xff]
      %v153 = vld [vmem:[%s1 + $0x48] sm:$0xff]
      %v154 = vld [vmem:[%s1 + $0x50] sm:$0xff]
      %v155 = vld [vmem:[%s1 + $0x58] sm:$0xff]
      %v156 = vld [vmem:[%s1 + $0x60] sm:$0xff]
      %v157 = vld [vmem:[%s1 + $0x68] sm:$0xff]
      %v158 = vld [vmem:[%s1 + $0x70] sm:$0xff]
      %v159 = vld [vmem:[%s1 + $0x78] sm:$0xff]
      %v160 = vld [vmem:[%s1 + $0x80] sm:$0xff]
      %v161 = vld [vmem:[%s1 + $0x88] sm:$0xff]
      %v162 = vld [vmem:[%s1 + $0x90] sm:$0xff]
      %v163 = vld [vmem:[%s1 + $0x98] sm:$0xff]
      %v164 = vld [vmem:[%s1 + $0xa0] sm:$0xff]
      %v165 = vld [vmem:[%s1 + $0xa8] sm:$0xff]
      %v166 = vld [vmem:[%s1 + $0xb0] sm:$0xff]
      %v167 = vld [vmem:[%s1 + $0xb8] sm:$0xff]
      %v168 = vld [vmem:[%s1 + $0xc0] sm:$0xff]
      %v169 = vld [vmem:[%s1 + $0xc8] sm:$0xff]
      %v170 = vld [vmem:[%s1 + $0xd0] sm:$0xff]
      %v171 = vld [vmem:[%s1 + $0xd8] sm:$0xff]
      %v172 = vld [vmem:[%s1 + $0xe0] sm:$0xff]
      %v173 = vld [vmem:[%s1 + $0xe8] sm:$0xff]
      %v174 = vld [vmem:[%s1 + $0xf0] sm:$0xff]
      %v175 = vld [vmem:[%s1 + $0xf8] sm:$0xff]
      %v176 = vld [vmem:[%s1 + $0x100] sm:$0xff]
      %v177 = vld [vmem:[%s1 + $0x108] sm:$0xff]
      %v178 = vld [vmem:[%s1 + $0x110] sm:$0xff]
      %v179 = vld [vmem:[%s1 + $0x118] sm:$0xff]
      %v180 = vld [vmem:[%s1 + $0x120] sm:$0xff]
      %v181 = vld [vmem:[%s1 + $0x128] sm:$0xff]
      %v182 = vld [vmem:[%s1 + $0x130] sm:$0xff]
      %v183 = vld [vmem:[%s1 + $0x138] sm:$0xff]
      %v184 = vld [vmem:[%s1 + $0x140] sm:$0xff]
      %v185 = vld [vmem:[%s1 + $0x148] sm:$0xff]
      %v186 = vld [vmem:[%s1 + $0x150] sm:$0xff]
      %v187 = vld [vmem:[%s1 + $0x158] sm:$0xff]
      %v188 = vld [vmem:[%s1 + $0x160] sm:$0xff]
      %v189 = vld [vmem:[%s1 + $0x168] sm:$0xff]
      %v190 = vld [vmem:[%s1 + $0x170] sm:$0xff]
      %v191 = vld [vmem:[%s1 + $0x178] sm:$0xff]
      %v192 = vld [vmem:[%s1 + $0x180] sm:$0xff]
      %v193 = vld [vmem:[%s1 + $0x188] sm:$0xff]
      %v194 = vld [vmem:[%s1 + $0x190] sm:$0xff]
      %v195 = vld [vmem:[%s1 + $0x198] sm:$0xff]
      %v196 = vld [vmem:[%s1 + $0x1a0] sm:$0xff]
      %v197 = vld [vmem:[%s1 + $0x1a8] sm:$0xff]
      %v198 = vld [vmem:[%s1 + $0x1b0] sm:$0xff]
      %v199 = vld [vmem:[%s1 + $0x1b8] sm:$0xff]
      %v200 = vld [vmem:[%s1 + $0x1c0] sm:$0xff]
      %v201 = vld [vmem:[%s1 + $0x1c8] sm:$0xff]
      %v202 = vld [vmem:[%s1 + $0x1d0] sm:$0xff]
      %v203 = vld [vmem:[%s1 + $0x1d8] sm:$0xff]
      %v204 = vld [vmem:[%s1 + $0x1e0] sm:$0xff]
      %v205 = vld [vmem:[%s1 + $0x1e8] sm:$0xff]
      %v206 = vld [vmem:[%s1 + $0x1f0] sm:$0xff]
      %v207 = vld [vmem:[%s1 + $0x1f8] sm:$0xff]
      %v208 = vld [vmem:[%s1 + $0x200] sm:$0xff]
      %v209 = vld [vmem:[%s1 + $0x208] sm:$0xff]
      %v210 = vld [vmem:[%s1 + $0x210] sm:$0xff]
      %v211 = vld [vmem:[%s1 + $0x218] sm:$0xff]
      %v212 = vld [vmem:[%s1 + $0x220] sm:$0xff]
      %v213 = vld [vmem:[%s1 + $0x228] sm:$0xff]
      %v214 = vld [vmem:[%s1 + $0x230] sm:$0xff]
      %v215 = vld [vmem:[%s1 + $0x238] sm:$0xff]
      %v216 = vld [vmem:[%s1 + $0x240] sm:$0xff]
      %v217 = vld [vmem:[%s1 + $0x248] sm:$0xff]
      %v218 = vld [vmem:[%s1 + $0x250] sm:$0xff]
      %v219 = vld [vmem:[%s1 + $0x258] sm:$0xff]
      %v220 = vld [vmem:[%s1 + $0x260] sm:$0xff]
      %v221 = vld [vmem:[%s1 + $0x268] sm:$0xff]
      %v222 = vld [vmem:[%s1 + $0x270] sm:$0xff]
      %v223 = vld [vmem:[%s1 + $0x278] sm:$0xff]
      %v224 = vld [vmem:[%s1 + $0x280] sm:$0xff]
      %v225 = vld [vmem:[%s1 + $0x288] sm:$0xff]
      %v226 = vld [vmem:[%s1 + $0x290] sm:$0xff]
      %v227 = vld [vmem:[%s1 + $0x298] sm:$0xff]
      %v228 = vld [vmem:[%s1 + $0x2a0] sm:$0xff]
      %v229 = vld [vmem:[%s1 + $0x2a8] sm:$0xff]
      %v230 = vld [vmem:[%s1 + $0x2b0] sm:$0xff]
      %v231 = vld [vmem:[%s1 + $0x2b8] sm:$0xff]
      %v232 = vld [vmem:[%s1 + $0x2c0] sm:$0xff]
      %v233 = vld [vmem:[%s1 + $0x2c8] sm:$0xff]
      %v234 = vld [vmem:[%s1 + $0x2d0] sm:$0xff]
      %v235 = vld [vmem:[%s1 + $0x2d8] sm:$0xff]
      %v236 = vld [vmem:[%s1 + $0x2e0] sm:$0xff]
      %v237 = vld [vmem:[%s1 + $0x2e8] sm:$0xff]
      %v238 = vld [vmem:[%s1 + $0x2f0] sm:$0xff]
      %v239 = vld [vmem:[%s1 + $0x2f8] sm:$0xff]
      %v240 = vld [vmem:[%s1 + $0x300] sm:$0xff]
      %v241 = vld [vmem:[%s1 + $0x308] sm:$0xff]
      %v242 = vld [vmem:[%s1 + $0x310] sm:$0xff]
      %v243 = vld [vmem:[%s1 + $0x318] sm:$0xff]
      %v244 = vld [vmem:[%s1 + $0x320] sm:$0xff]
      %v245 = vld [vmem:[%s1 + $0x328] sm:$0xff]
      %v246 = vld [vmem:[%s1 + $0x330] sm:$0xff]
      %v247 = vld [vmem:[%s1 + $0x338] sm:$0xff]
      %v248 = vld [vmem:[%s1 + $0x340] sm:$0xff]
      %v249 = vld [vmem:[%s1 + $0x348] sm:$0xff]
      %v250 = vld [vmem:[%s1 + $0x350] sm:$0xff]
      %v251 = vld [vmem:[%s1 + $0x358] sm:$0xff]
      %v252 = vld [vmem:[%s1 + $0x360] sm:$0xff]
      %v253 = vld [vmem:[%s1 + $0x368] sm:$0xff]
      %v254 = vld [vmem:[%s1 + $0x370] sm:$0xff]
      %v255 = vld [vmem:[%s1 + $0x378] sm:$0xff]
      %v256 = vld [vmem:[%s1 + $0x380] sm:$0xff]
      %v257 = vld [vmem:[%s1 + $0x388] sm:$0xff]
      %v258 = vld [vmem:[%s1 + $0x390] sm:$0xff]
      %v259 = vld [vmem:[%s1 + $0x398] sm:$0xff]
      %v260 = vld [vmem:[%s1 + $0x3a0] sm:$0xff]
      %v261 = vld [vmem:[%s1 + $0x3a8] sm:$0xff]
      %v262 = vld [vmem:[%s1 + $0x3b0] sm:$0xff]
      %v263 = vld [vmem:[%s1 + $0x3b8] sm:$0xff]
      %v264 = vld [vmem:[%s1 + $0x3c0] sm:$0xff]
      %v265 = vld [vmem:[%s1 + $0x3c8] sm:$0xff]
      %v266 = vld [vmem:[%s1 + $0x3d0] sm:$0xff]
      %v267 = vld [vmem:[%s1 + $0x3d8] sm:$0xff]
      %v268 = vld [vmem:[%s1 + $0x3e0] sm:$0xff]
      %v269 = vld [vmem:[%s1 + $0x3e8] sm:$0xff]
      %v270 = vld [vmem:[%s1 + $0x3f0] sm:$0xff]
      %v271 = vld [vmem:[%s1 + $0x3f8] sm:$0xff]
      %v272 = vld [vmem:[%s1 + $0x400] sm:$0xff]
      %v273 = vld [vmem:[%s1 + $0x408] sm:$0xff]
      %v274 = vld [vmem:[%s1 + $0x410] sm:$0xff]
      %v275 = vld [vmem:[%s1 + $0x418] sm:$0xff]
      %v276 = vld [vmem:[%s1 + $0x420] sm:$0xff]
      %v277 = vld [vmem:[%s1 + $0x428] sm:$0xff]
      %v278 = vld [vmem:[%s1 + $0x430] sm:$0xff]
      %v279 = vld [vmem:[%s1 + $0x438] sm:$0xff]
      %v280 = vld [vmem:[%s1 + $0x440] sm:$0xff]
      %v281 = vld [vmem:[%s1 + $0x448] sm:$0xff]
      %v282 = vld [vmem:[%s1 + $0x450] sm:$0xff]
      %v283 = vld [vmem:[%s1 + $0x458] sm:$0xff]
      %v284 = vld [vmem:[%s1 + $0x460] sm:$0xff]
      %v285 = vld [vmem:[%s1 + $0x468] sm:$0xff]
      %v286 = vld [vmem:[%s1 + $0x470] sm:$0xff]
      %v287 = vld [vmem:[%s1 + $0x478] sm:$0xff]
      %v288 = vld [vmem:[%s1 + $0x480] sm:$0xff]
      %v289 = vld [vmem:[%s1 + $0x488] sm:$0xff]
      %v290 = vld [vmem:[%s1 + $0x490] sm:$0xff]
      %v291 = vld [vmem:[%s1 + $0x498] sm:$0xff]
      %v292 = vld [vmem:[%s1 + $0x4a0] sm:$0xff]
      %v293 = vld [vmem:[%s1 + $0x4a8] sm:$0xff]
      %v294 = vld [vmem:[%s1 + $0x4b0] sm:$0xff]
      %v295 = vld [vmem:[%s1 + $0x4b8] sm:$0xff]
      %v296 = vld [vmem:[%s1 + $0x4c0] sm:$0xff]
      %v297 = vld [vmem:[%s1 + $0x4c8] sm:$0xff]
      %v298 = vld [vmem:[%s1 + $0x4d0] sm:$0xff]
      %v299 = vld [vmem:[%s1 + $0x4d8] sm:$0xff]
      %v300 = vld [vmem:[%s1 + $0x4e0] sm:$0xff]
      %v301 = vld [vmem:[%s1 + $0x4e8] sm:$0xff]
      %v302 = vld [vmem:[%s1 + $0x4f0] sm:$0xff]
      %v303 = vld [vmem:[%s1 + $0x4f8] sm:$0xff]
      %v304 = vld [vmem:[%s1 + $0x500] sm:$0xff]
      %v305 = vld [vmem:[%s1 + $0x508] sm:$0xff]
      %v306 = vld [vmem:[%s1 + $0x510] sm:$0xff]
      %v307 = vld [vmem:[%s1 + $0x518] sm:$0xff]
      %v308 = vld [vmem:[%s1 + $0x520] sm:$0xff]
      %v309 = vld [vmem:[%s1 + $0x528] sm:$0xff]
      %v310 = vld [vmem:[%s1 + $0x530] sm:$0xff]
      %v311 = vld [vmem:[%s1 + $0x538] sm:$0xff]
      %v312 = vld [vmem:[%s1 + $0x540] sm:$0xff]
      %v313 = vld [vmem:[%s1 + $0x548] sm:$0xff]
      %v314 = vld [vmem:[%s1 + $0x550] sm:$0xff]
      %v315 = vld [vmem:[%s1 + $0x558] sm:$0xff]
      %v316 = vld [vmem:[%s1 + $0x560] sm:$0xff]
      %v317 = vld [vmem:[%s1 + $0x568] sm:$0xff]
      %v318 = vld [vmem:[%s1 + $0x570] sm:$0xff]
      %v319 = vld [vmem:[%s1 + $0x578] sm:$0xff]
      %v320 = vld [vmem:[%s1 + $0x580] sm:$0xff]
      %v321 = vld [vmem:[%s1 + $0x588] sm:$0xff]
      %v322 = vld [vmem:[%s1 + $0x590] sm:$0xff]
      %v323 = vld [vmem:[%s1 + $0x598] sm:$0xff]
      %v324 = vld [vmem:[%s1 + $0x5a0] sm:$0xff]
      %v325 = vld [vmem:[%s1 + $0x5a8] sm:$0xff]
      %v326 = vld [vmem:[%s1 + $0x5b0] sm:$0xff]
      %v327 = vld [vmem:[%s1 + $0x5b8] sm:$0xff]
      %v328 = vld [vmem:[%s1 + $0x5c0] sm:$0xff]
      %v329 = vld [vmem:[%s1 + $0x5c8] sm:$0xff]
      %v330 = vld [vmem:[%s1 + $0x5d0] sm:$0xff]
      %v331 = vld [vmem:[%s1 + $0x5d8] sm:$0xff]
      %v332 = vld [vmem:[%s1 + $0x5e0] sm:$0xff]
      %v333 = vld [vmem:[%s1 + $0x5e8] sm:$0xff]
      %v334 = vld [vmem:[%s1 + $0x5f0] sm:$0xff]
      %v335 = vld [vmem:[%s1 + $0x5f8] sm:$0xff]
      %v336 = vld [vmem:[%s1 + $0x600] sm:$0xff]
      %v337 = vld [vmem:[%s1 + $0x608] sm:$0xff]
      %v338 = vld [vmem:[%s1 + $0x610] sm:$0xff]
      %v339 = vld [vmem:[%s1 + $0x618] sm:$0xff]
      %v340 = vld [vmem:[%s1 + $0x620] sm:$0xff]
      %v341 = vld [vmem:[%s1 + $0x628] sm:$0xff]
      %v342 = vld [vmem:[%s1 + $0x630] sm:$0xff]
      %v343 = vld [vmem:[%s1 + $0x638] sm:$0xff]
      %v344 = vld [vmem:[%s1 + $0x640] sm:$0xff]
      %v345 = vld [vmem:[%s1 + $0x648] sm:$0xff]
      %v346 = vld [vmem:[%s1 + $0x650] sm:$0xff]
      %v347 = vld [vmem:[%s1 + $0x658] sm:$0xff]
      %v348 = vld [vmem:[%s1 + $0x660] sm:$0xff]
      %v349 = vld [vmem:[%s1 + $0x668] sm:$0xff]
      %v350 = vld [vmem:[%s1 + $0x670] sm:$0xff]
      %v351 = vld [vmem:[%s1 + $0x678] sm:$0xff]
      %v352 = vld [vmem:[%s1 + $0x680] sm:$0xff]
      %v353 = vld [vmem:[%s1 + $0x688] sm:$0xff]
      %v354 = vld [vmem:[%s1 + $0x690] sm:$0xff]
      %v355 = vld [vmem:[%s1 + $0x698] sm:$0xff]
      %v356 = vld [vmem:[%s1 + $0x6a0] sm:$0xff]
      %v357 = vld [vmem:[%s1 + $0x6a8] sm:$0xff]
      %v358 = vld [vmem:[%s1 + $0x6b0] sm:$0xff]
      %v359 = vld [vmem:[%s1 + $0x6b8] sm:$0xff]
      %v360 = vld [vmem:[%s1 + $0x6c0] sm:$0xff]
      %v361 = vld [vmem:[%s1 + $0x6c8] sm:$0xff]
      %v362 = vld [vmem:[%s1 + $0x6d0] sm:$0xff]
      %v363 = vld [vmem:[%s1 + $0x6d8] sm:$0xff]
      %v364 = vld [vmem:[%s1 + $0x6e0] sm:$0xff]
      %v365 = vld [vmem:[%s1 + $0x6e8] sm:$0xff]
      %v366 = vld [vmem:[%s1 + $0x6f0] sm:$0xff]
      %v367 = vld [vmem:[%s1 + $0x6f8] sm:$0xff]
      %v368 = vld [vmem:[%s1 + $0x700] sm:$0xff]
      %v369 = vld [vmem:[%s1 + $0x708] sm:$0xff]
      %v370 = vld [vmem:[%s1 + $0x710] sm:$0xff]
      %v371 = vld [vmem:[%s1 + $0x718] sm:$0xff]
      %v372 = vld [vmem:[%s1 + $0x720] sm:$0xff]
      %v373 = vld [vmem:[%s1 + $0x728] sm:$0xff]
      %v374 = vld [vmem:[%s1 + $0x730] sm:$0xff]
      %v375 = vld [vmem:[%s1 + $0x738] sm:$0xff]
      %v376 = vld [vmem:[%s1 + $0x740] sm:$0xff]
      %v377 = vld [vmem:[%s1 + $0x748] sm:$0xff]
      %v378 = vld [vmem:[%s1 + $0x750] sm:$0xff]
      %v379 = vld [vmem:[%s1 + $0x758] sm:$0xff]
      %v380 = vld [vmem:[%s1 + $0x760] sm:$0xff]
      %v381 = vld [vmem:[%s1 + $0x768] sm:$0xff]
      %v382 = vld [vmem:[%s1 + $0x770] sm:$0xff]
      %v383 = vld [vmem:[%s1 + $0x778] sm:$0xff]
      %v384 = vld [vmem:[%s1 + $0x780] sm:$0xff]
      %v385 = vld [vmem:[%s1 + $0x788] sm:$0xff]
      %v386 = vld [vmem:[%s1 + $0x790] sm:$0xff]
      %v387 = vld [vmem:[%s1 + $0x798] sm:$0xff]
      %v388 = vld [vmem:[%s1 + $0x7a0] sm:$0xff]
      %v389 = vld [vmem:[%s1 + $0x7a8] sm:$0xff]
      %v390 = vld [vmem:[%s1 + $0x7b0] sm:$0xff]
      %v391 = vld [vmem:[%s1 + $0x7b8] sm:$0xff]
      %v392 = vld [vmem:[%s1 + $0x7c0] sm:$0xff]
      %v393 = vld [vmem:[%s1 + $0x7c8] sm:$0xff]
      %v394 = vld [vmem:[%s1 + $0x7d0] sm:$0xff]
      %v395 = vld [vmem:[%s1 + $0x7d8] sm:$0xff]
      %v396 = vld [vmem:[%s1 + $0x7e0] sm:$0xff]
      %v397 = vld [vmem:[%s1 + $0x7e8] sm:$0xff]
      %v398 = vld [vmem:[%s1 + $0x7f0] sm:$0xff]
      %v399 = vld [vmem:[%s1 + $0x7f8] sm:$0xff]
      %v400 = vld [vmem:[%s1 + $0x800] sm:$0xff]
      %v401 = vld [vmem:[%s1 + $0x808] sm:$0xff]
      %v402 = vld [vmem:[%s1 + $0x810] sm:$0xff]
      %v403 = vld [vmem:[%s1 + $0x818] sm:$0xff]
      %v404 = vld [vmem:[%s1 + $0x820] sm:$0xff]
      %v405 = vld [vmem:[%s1 + $0x828] sm:$0xff]
      %v406 = vld [vmem:[%s1 + $0x830] sm:$0xff]
      %v407 = vld [vmem:[%s1 + $0x838] sm:$0xff]
      %v408 = vld [vmem:[%s1 + $0x840] sm:$0xff]
      %v409 = vld [vmem:[%s1 + $0x848] sm:$0xff]
      %v410 = vld [vmem:[%s1 + $0x850] sm:$0xff]
      %v411 = vld [vmem:[%s1 + $0x858] sm:$0xff]
      %v412 = vld [vmem:[%s1 + $0x860] sm:$0xff]
      %v413 = vld [vmem:[%s1 + $0x868] sm:$0xff]
      %v414 = vld [vmem:[%s1 + $0x870] sm:$0xff]
      %v415 = vld [vmem:[%s1 + $0x878] sm:$0xff]
      %v416 = vld [vmem:[%s1 + $0x880] sm:$0xff]
      %v417 = vld [vmem:[%s1 + $0x888] sm:$0xff]
      %v418 = vld [vmem:[%s1 + $0x890] sm:$0xff]
      %v419 = vld [vmem:[%s1 + $0x898] sm:$0xff]
      %v420 = vld [vmem:[%s1 + $0x8a0] sm:$0xff]
      %v421 = vld [vmem:[%s1 + $0x8a8] sm:$0xff]
      %v422 = vld [vmem:[%s1 + $0x8b0] sm:$0xff]
      %v423 = vld [vmem:[%s1 + $0x8b8] sm:$0xff]
      %v424 = vld [vmem:[%s1 + $0x8c0] sm:$0xff]
      %v425 = vld [vmem:[%s1 + $0x8c8] sm:$0xff]
      %v426 = vld [vmem:[%s1 + $0x8d0] sm:$0xff]
      %v427 = vld [vmem:[%s1 + $0x8d8] sm:$0xff]
      %v428 = vld [vmem:[%s1 + $0x8e0] sm:$0xff]
      %v429 = vld [vmem:[%s1 + $0x8e8] sm:$0xff]
      %v430 = vld [vmem:[%s1 + $0x8f0] sm:$0xff]
      %v431 = vld [vmem:[%s1 + $0x8f8] sm:$0xff]
      %v432 = vld [vmem:[%s1 + $0x900] sm:$0xff]
      %v433 = vld [vmem:[%s1 + $0x908] sm:$0xff]
      %v434 = vld [vmem:[%s1 + $0x910] sm:$0xff]
      %v435 = vld [vmem:[%s1 + $0x918] sm:$0xff]
      %v436 = vld [vmem:[%s1 + $0x920] sm:$0xff]
      %v437 = vld [vmem:[%s1 + $0x928] sm:$0xff]
      %v438 = vld [vmem:[%s1 + $0x930] sm:$0xff]
      %v439 = vld [vmem:[%s1 + $0x938] sm:$0xff]
      %v440 = vld [vmem:[%s1 + $0x940] sm:$0xff]
      %v441 = vld [vmem:[%s1 + $0x948] sm:$0xff]
      %v442 = vld [vmem:[%s1 + $0x950] sm:$0xff]
      %v443 = vld [vmem:[%s1 + $0x958] sm:$0xff]
      %v444 = vld [vmem:[%s1 + $0x960] sm:$0xff]
      %v445 = vld [vmem:[%s1 + $0x968] sm:$0xff]
      %v446 = vld [vmem:[%s1 + $0x970] sm:$0xff]
      %v447 = vld [vmem:[%s1 + $0x978] sm:$0xff]
      %v448 = vld [vmem:[%s1 + $0x980] sm:$0xff]
      %v449 = vld [vmem:[%s1 + $0x988] sm:$0xff]
      %v450 = vld [vmem:[%s1 + $0x990] sm:$0xff]
      %v451 = vld [vmem:[%s1 + $0x998] sm:$0xff]
      %v452 = vld [vmem:[%s1 + $0x9a0] sm:$0xff]
      %v453 = vld [vmem:[%s1 + $0x9a8] sm:$0xff]
      %v454 = vld [vmem:[%s1 + $0x9b0] sm:$0xff]
      %v455 = vld [vmem:[%s1 + $0x9b8] sm:$0xff]
      %v456 = vld [vmem:[%s1 + $0x9c0] sm:$0xff]
      %v457 = vld [vmem:[%s1 + $0x9c8] sm:$0xff]
      %v458 = vld [vmem:[%s1 + $0x9d0] sm:$0xff]
      %v459 = vld [vmem:[%s1 + $0x9d8] sm:$0xff]
      %v460 = vld [vmem:[%s1 + $0x9e0] sm:$0xff]
      %v461 = vld [vmem:[%s1 + $0x9e8] sm:$0xff]
      %v462 = vld [vmem:[%s1 + $0x9f0] sm:$0xff]
      %v463 = vld [vmem:[%s1 + $0x9f8] sm:$0xff]
      %v464 = vld [vmem:[%s1 + $0xa00] sm:$0xff]
      %v465 = vld [vmem:[%s1 + $0xa08] sm:$0xff]
      %v466 = vld [vmem:[%s1 + $0xa10] sm:$0xff]
      %v467 = vld [vmem:[%s1 + $0xa18] sm:$0xff]
      %v468 = vld [vmem:[%s1 + $0xa20] sm:$0xff]
      %v469 = vld [vmem:[%s1 + $0xa28] sm:$0xff]
      %v470 = vld [vmem:[%s1 + $0xa30] sm:$0xff]
      %v471 = vld [vmem:[%s1 + $0xa38] sm:$0xff]
      %v472 = vld [vmem:[%s1 + $0xa40] sm:$0xff]
      %v473 = vld [vmem:[%s1 + $0xa48] sm:$0xff]
      %v474 = vld [vmem:[%s1 + $0xa50] sm:$0xff]
      %v475 = vld [vmem:[%s1 + $0xa58] sm:$0xff]
      %v476 = vld [vmem:[%s1 + $0xa60] sm:$0xff]
      %v477 = vld [vmem:[%s1 + $0xa68] sm:$0xff]
      %v478 = vld [vmem:[%s1 + $0xa70] sm:$0xff]
      %v479 = vld [vmem:[%s1 + $0xa78] sm:$0xff]
      %v480 = vld [vmem:[%s1 + $0xa80] sm:$0xff]
      %v481 = vld [vmem:[%s1 + $0xa88] sm:$0xff]
      %v482 = vld [vmem:[%s1 + $0xa90] sm:$0xff]
      %v483 = vld [vmem:[%s1 + $0xa98] sm:$0xff]
      %v484 = vld [vmem:[%s1 + $0xaa0] sm:$0xff]
      %v485 = vld [vmem:[%s1 + $0xaa8] sm:$0xff]
      %v486 = vld [vmem:[%s1 + $0xab0] sm:$0xff]
      %v487 = vld [vmem:[%s1 + $0xab8] sm:$0xff]
      %v488 = vld [vmem:[%s1 + $0xac0] sm:$0xff]
      %v489 = vld [vmem:[%s1 + $0xac8] sm:$0xff]
      %v490 = vld [vmem:[%s1 + $0xad0] sm:$0xff]
      %v491 = vld [vmem:[%s1 + $0xad8] sm:$0xff]
      %v492 = vld [vmem:[%s1 + $0xae0] sm:$0xff]
      %v493 = vld [vmem:[%s1 + $0xae8] sm:$0xff]
      %v494 = vld [vmem:[%s1 + $0xaf0] sm:$0xff]
      %v495 = vld [vmem:[%s1 + $0xaf8] sm:$0xff]
      %v496 = vld [vmem:[%s1 + $0xb00] sm:$0xff]
      %v497 = vld [vmem:[%s1 + $0xb08] sm:$0xff]
      %v498 = vld [vmem:[%s1 + $0xb10] sm:$0xff]
      %v499 = vld [vmem:[%s1 + $0xb18] sm:$0xff]
      %v500 = vld [vmem:[%s1 + $0xb20] sm:$0xff]
      %v501 = vld [vmem:[%s1 + $0xb28] sm:$0xff]
      %v502 = vld [vmem:[%s1 + $0xb30] sm:$0xff]
      %v503 = vld [vmem:[%s1 + $0xb38] sm:$0xff]
      %v504 = vld [vmem:[%s1 + $0xb40] sm:$0xff]
      %v505 = vld [vmem:[%s1 + $0xb48] sm:$0xff]
      %v506 = vld [vmem:[%s1 + $0xb50] sm:$0xff]
      %v507 = vld [vmem:[%s1 + $0xb58] sm:$0xff]
      %v508 = vld [vmem:[%s1 + $0xb60] sm:$0xff]
      %v509 = vld [vmem:[%s1 + $0xb68] sm:$0xff]
      %v510 = vld [vmem:[%s1 + $0xb70] sm:$0xff]
      %v511 = vld [vmem:[%s1 + $0xb78] sm:$0xff]
      %v512 = vld [vmem:[%s1 + $0xb80] sm:$0xff]
      %v513 = vld [vmem:[%s1 + $0xb88] sm:$0xff]
      %v514 = vld [vmem:[%s1 + $0xb90] sm:$0xff]
      %v515 = vld [vmem:[%s1 + $0xb98] sm:$0xff]
      %v516 = vld [vmem:[%s1 + $0xba0] sm:$0xff]
      %v517 = vld [vmem:[%s1 + $0xba8] sm:$0xff]
      %v518 = vld [vmem:[%s1 + $0xbb0] sm:$0xff]
      %v519 = vld [vmem:[%s1 + $0xbb8] sm:$0xff]
      %v520 = vld [vmem:[%s1 + $0xbc0] sm:$0xff]
      %v521 = vld [vmem:[%s1 + $0xbc8] sm:$0xff]
      %v522 = vld [vmem:[%s1 + $0xbd0] sm:$0xff]
      %v523 = vld [vmem:[%s1 + $0xbd8] sm:$0xff]
      %v524 = vld [vmem:[%s1 + $0xbe0] sm:$0xff]
      %v525 = vld [vmem:[%s1 + $0xbe8] sm:$0xff]
      %v526 = vld [vmem:[%s1 + $0xbf0] sm:$0xff]
      %v527 = vld [vmem:[%s1 + $0xbf8] sm:$0xff]
      %v528 = vld [vmem:[%s1 + $0xc00] sm:$0xff]
      %v529 = vld [vmem:[%s1 + $0xc08] sm:$0xff]
      %v530 = vld [vmem:[%s1 + $0xc10] sm:$0xff]
      %v531 = vld [vmem:[%s1 + $0xc18] sm:$0xff]
      %v532 = vld [vmem:[%s1 + $0xc20] sm:$0xff]
      %v533 = vld [vmem:[%s1 + $0xc28] sm:$0xff]
      %v534 = vld [vmem:[%s1 + $0xc30] sm:$0xff]
      %v535 = vld [vmem:[%s1 + $0xc38] sm:$0xff]
      %v536 = vld [vmem:[%s1 + $0xc40] sm:$0xff]
      %v537 = vld [vmem:[%s1 + $0xc48] sm:$0xff]
      %v538 = vld [vmem:[%s1 + $0xc50] sm:$0xff]
      %v539 = vld [vmem:[%s1 + $0xc58] sm:$0xff]
      %v540 = vld [vmem:[%s1 + $0xc60] sm:$0xff]
      %v541 = vld [vmem:[%s1 + $0xc68] sm:$0xff]
      %v542 = vld [vmem:[%s1 + $0xc70] sm:$0xff]
      %v543 = vld [vmem:[%s1 + $0xc78] sm:$0xff]
      %v544 = vld [vmem:[%s1 + $0xc80] sm:$0xff]
      %v545 = vld [vmem:[%s1 + $0xc88] sm:$0xff]
      %v546 = vld [vmem:[%s1 + $0xc90] sm:$0xff]
      %v547 = vld [vmem:[%s1 + $0xc98] sm:$0xff]
      %v548 = vld [vmem:[%s1 + $0xca0] sm:$0xff]
      %v549 = vld [vmem:[%s1 + $0xca8] sm:$0xff]
      %v550 = vld [vmem:[%s1 + $0xcb0] sm:$0xff]
      %v551 = vld [vmem:[%s1 + $0xcb8] sm:$0xff]
      %v552 = vld [vmem:[%s1 + $0xcc0] sm:$0xff]
      %v553 = vld [vmem:[%s1 + $0xcc8] sm:$0xff]
      %v554 = vld [vmem:[%s1 + $0xcd0] sm:$0xff]
      %v555 = vld [vmem:[%s1 + $0xcd8] sm:$0xff]
      %v556 = vld [vmem:[%s1 + $0xce0] sm:$0xff]
      %v557 = vld [vmem:[%s1 + $0xce8] sm:$0xff]
      %v558 = vld [vmem:[%s1 + $0xcf0] sm:$0xff]
      %v559 = vld [vmem:[%s1 + $0xcf8] sm:$0xff]
      %v560 = vld [vmem:[%s1 + $0xd00] sm:$0xff]
      %v561 = vld [vmem:[%s1 + $0xd08] sm:$0xff]
      %v562 = vld [vmem:[%s1 + $0xd10] sm:$0xff]
      %v563 = vld [vmem:[%s1 + $0xd18] sm:$0xff]
      %v564 = vld [vmem:[%s1 + $0xd20] sm:$0xff]
      %v565 = vld [vmem:[%s1 + $0xd28] sm:$0xff]
      %v566 = vld [vmem:[%s1 + $0xd30] sm:$0xff]
      %v567 = vld [vmem:[%s1 + $0xd38] sm:$0xff]
      %v568 = vld [vmem:[%s1 + $0xd40] sm:$0xff]
      %v569 = vld [vmem:[%s1 + $0xd48] sm:$0xff]
      %v570 = vld [vmem:[%s1 + $0xd50] sm:$0xff]
      %v571 = vld [vmem:[%s1 + $0xd58] sm:$0xff]
      %v572 = vld [vmem:[%s1 + $0xd60] sm:$0xff]
      %v573 = vld [vmem:[%s1 + $0xd68] sm:$0xff]
      %v574 = vld [vmem:[%s1 + $0xd70] sm:$0xff]
      %v575 = vld [vmem:[%s1 + $0xd78] sm:$0xff]
      %v576 = vld [vmem:[%s1 + $0xd80] sm:$0xff]
      %v577 = vld [vmem:[%s1 + $0xd88] sm:$0xff]
      %v578 = vld [vmem:[%s1 + $0xd90] sm:$0xff]
      %v579 = vld [vmem:[%s1 + $0xd98] sm:$0xff]
      %v580 = vld [vmem:[%s1 + $0xda0] sm:$0xff]
      %v581 = vld [vmem:[%s1 + $0xda8] sm:$0xff]
      %v582 = vld [vmem:[%s1 + $0xdb0] sm:$0xff]
      %v583 = vld [vmem:[%s1 + $0xdb8] sm:$0xff]
      %v584 = vld [vmem:[%s1 + $0xdc0] sm:$0xff]
      %v585 = vld [vmem:[%s1 + $0xdc8] sm:$0xff]
      %v586 = vld [vmem:[%s1 + $0xdd0] sm:$0xff]
      %v587 = vld [vmem:[%s1 + $0xdd8] sm:$0xff]
      %v588 = vld [vmem:[%s1 + $0xde0] sm:$0xff]
      %v589 = vld [vmem:[%s1 + $0xde8] sm:$0xff]
      %v590 = vld [vmem:[%s1 + $0xdf0] sm:$0xff]
      %v591 = vld [vmem:[%s1 + $0xdf8] sm:$0xff]
      %v592 = vld [vmem:[%s1 + $0xe00] sm:$0xff]
      %v593 = vld [vmem:[%s1 + $0xe08] sm:$0xff]
      %v594 = vld [vmem:[%s1 + $0xe10] sm:$0xff]
      %v595 = vld [vmem:[%s1 + $0xe18] sm:$0xff]
      %v596 = vld [vmem:[%s1 + $0xe20] sm:$0xff]
      %v597 = vld [vmem:[%s1 + $0xe28] sm:$0xff]
      %v598 = vld [vmem:[%s1 + $0xe30] sm:$0xff]
      %v599 = vld [vmem:[%s1 + $0xe38] sm:$0xff]
      %v600 = vld [vmem:[%s1 + $0xe40] sm:$0xff]
      %v601 = vld [vmem:[%s1 + $0xe48] sm:$0xff]
      %v602 = vld [vmem:[%s1 + $0xe50] sm:$0xff]
      %v603 = vld [vmem:[%s1 + $0xe58] sm:$0xff]
      %v604 = vld [vmem:[%s1 + $0xe60] sm:$0xff]
      %v605 = vld [vmem:[%s1 + $0xe68] sm:$0xff]
      %v606 = vld [vmem:[%s1 + $0xe70] sm:$0xff]
      %v607 = vld [vmem:[%s1 + $0xe78] sm:$0xff]
      %v608 = vld [vmem:[%s1 + $0xe80] sm:$0xff]
      %v609 = vld [vmem:[%s1 + $0xe88] sm:$0xff]
      %v610 = vld [vmem:[%s1 + $0xe90] sm:$0xff]
      %v611 = vld [vmem:[%s1 + $0xe98] sm:$0xff]
      %v612 = vld [vmem:[%s1 + $0xea0] sm:$0xff]
      %v613 = vld [vmem:[%s1 + $0xea8] sm:$0xff]
      %v614 = vld [vmem:[%s1 + $0xeb0] sm:$0xff]
      %v615 = vld [vmem:[%s1 + $0xeb8] sm:$0xff]
      %v616 = vld [vmem:[%s1 + $0xec0] sm:$0xff]
      %v617 = vld [vmem:[%s1 + $0xec8] sm:$0xff]
      %v618 = vld [vmem:[%s1 + $0xed0] sm:$0xff]
      %v619 = vld [vmem:[%s1 + $0xed8] sm:$0xff]
      %v620 = vld [vmem:[%s1 + $0xee0] sm:$0xff]
      %v621 = vld [vmem:[%s1 + $0xee8] sm:$0xff]
      %v622 = vld [vmem:[%s1 + $0xef0] sm:$0xff]
      %v623 = vld [vmem:[%s1 + $0xef8] sm:$0xff]
      %v624 = vld [vmem:[%s1 + $0xf00] sm:$0xff]
      %v625 = vld [vmem:[%s1 + $0xf08] sm:$0xff]
      %v626 = vld [vmem:[%s1 + $0xf10] sm:$0xff]
      %v627 = vld [vmem:[%s1 + $0xf18] sm:$0xff]
      %v628 = vld [vmem:[%s1 + $0xf20] sm:$0xff]
      %v629 = vld [vmem:[%s1 + $0xf28] sm:$0xff]
      %v630 = vld [vmem:[%s1 + $0xf30] sm:$0xff]
      %v631 = vld [vmem:[%s1 + $0xf38] sm:$0xff]
      %v632 = vld [vmem:[%s1 + $0xf40] sm:$0xff]
      %v633 = vld [vmem:[%s1 + $0xf48] sm:$0xff]
      %v634 = vld [vmem:[%s1 + $0xf50] sm:$0xff]
      %v635 = vld [vmem:[%s1 + $0xf58] sm:$0xff]
      %v636 = vld [vmem:[%s1 + $0xf60] sm:$0xff]
      %v637 = vld [vmem:[%s1 + $0xf68] sm:$0xff]
      %v638 = vld [vmem:[%s1 + $0xf70] sm:$0xff]
      %v639 = vld [vmem:[%s1 + $0xf78] sm:$0xff]
      %v640 = vld [vmem:[%s1 + $0xf80] sm:$0xff]
      %v641 = vld [vmem:[%s1 + $0xf88] sm:$0xff]
      %v642 = vld [vmem:[%s1 + $0xf90] sm:$0xff]
      %v643 = vld [vmem:[%s1 + $0xf98] sm:$0xff]
      %v644 = vld [vmem:[%s1 + $0xfa0] sm:$0xff]
      %v645 = vld [vmem:[%s1 + $0xfa8] sm:$0xff]
      %v646 = vld [vmem:[%s1 + $0xfb0] sm:$0xff]
      %v647 = vld [vmem:[%s1 + $0xfb8] sm:$0xff]
      %v648 = vld [vmem:[%s1 + $0xfc0] sm:$0xff]
      %v649 = vld [vmem:[%s1 + $0xfc8] sm:$0xff]
      %v650 = vld [vmem:[%s1 + $0xfd0] sm:$0xff]
      %v651 = vld [vmem:[%s1 + $0xfd8] sm:$0xff]
      %v652 = vld [vmem:[%s1 + $0xfe0] sm:$0xff]
      %v653 = vld [vmem:[%s1 + $0xfe8] sm:$0xff]
      %v654 = vld [vmem:[%s1 + $0xff0] sm:$0xff]
      %v655 = vld [vmem:[%s1 + $0xff8] sm:$0xff]
      %v656 = vld [vmem:[%s1 + $0x1000] sm:$0xff]
      %v657 = vld [vmem:[%s1 + $0x1008] sm:$0xff]
      %v658 = vld [vmem:[%s1 + $0x1010] sm:$0xff]
      %v659 = vld [vmem:[%s1 + $0x1018] sm:$0xff]
      %v660 = vld [vmem:[%s1 + $0x1020] sm:$0xff]
      %v661 = vld [vmem:[%s1 + $0x1028] sm:$0xff]
      %v662 = vld [vmem:[%s1 + $0x1030] sm:$0xff]
      %v663 = vld [vmem:[%s1 + $0x1038] sm:$0xff]
      %v664 = vld [vmem:[%s1 + $0x1040] sm:$0xff]
      %v665 = vld [vmem:[%s1 + $0x1048] sm:$0xff]
      %v666 = vld [vmem:[%s1 + $0x1050] sm:$0xff]
      %v667 = vld [vmem:[%s1 + $0x1058] sm:$0xff]
      %v668 = vld [vmem:[%s1 + $0x1060] sm:$0xff]
      %v669 = vld [vmem:[%s1 + $0x1068] sm:$0xff]
      %v670 = vld [vmem:[%s1 + $0x1070] sm:$0xff]
      %v671 = vld [vmem:[%s1 + $0x1078] sm:$0xff]
      %v672 = vld [vmem:[%s1 + $0x1080] sm:$0xff]
      %v673 = vld [vmem:[%s1 + $0x1088] sm:$0xff]
      %v674 = vld [vmem:[%s1 + $0x1090] sm:$0xff]
      %v675 = vld [vmem:[%s1 + $0x1098] sm:$0xff]
      %v676 = vld [vmem:[%s1 + $0x10a0] sm:$0xff]
      %v677 = vld [vmem:[%s1 + $0x10a8] sm:$0xff]
      %v678 = vld [vmem:[%s1 + $0x10b0] sm:$0xff]
      %v679 = vld [vmem:[%s1 + $0x10b8] sm:$0xff]
      %v680 = vld [vmem:[%s1 + $0x10c0] sm:$0xff]
      %v681 = vld [vmem:[%s1 + $0x10c8] sm:$0xff]
      %v682 = vld [vmem:[%s1 + $0x10d0] sm:$0xff]
      %v683 = vld [vmem:[%s1 + $0x10d8] sm:$0xff]
      %v684 = vld [vmem:[%s1 + $0x10e0] sm:$0xff]
      %v685 = vld [vmem:[%s1 + $0x10e8] sm:$0xff]
      %v686 = vld [vmem:[%s1 + $0x10f0] sm:$0xff]
      %v687 = vld [vmem:[%s1 + $0x10f8] sm:$0xff]
      %v688 = vld [vmem:[%s1 + $0x1100] sm:$0xff]
      %v689 = vld [vmem:[%s1 + $0x1108] sm:$0xff]
      %v690 = vld [vmem:[%s1 + $0x1110] sm:$0xff]
      %v691 = vld [vmem:[%s1 + $0x1118] sm:$0xff]
      %v692 = vld [vmem:[%s1 + $0x1120] sm:$0xff]
      %v693 = vld [vmem:[%s1 + $0x1128] sm:$0xff]
      %v694 = vld [vmem:[%s1 + $0x1130] sm:$0xff]
      %v695 = vld [vmem:[%s1 + $0x1138] sm:$0xff]
      %v696 = vld [vmem:[%s1 + $0x1140] sm:$0xff]
      %v697 = vld [vmem:[%s1 + $0x1148] sm:$0xff]
      %v698 = vld [vmem:[%s1 + $0x1150] sm:$0xff]
      %v699 = vld [vmem:[%s1 + $0x1158] sm:$0xff]
      %v700 = vld [vmem:[%s1 + $0x1160] sm:$0xff]
      %v701 = vld [vmem:[%s1 + $0x1168] sm:$0xff]
      %v702 = vld [vmem:[%s1 + $0x1170] sm:$0xff]
      %v703 = vld [vmem:[%s1 + $0x1178] sm:$0xff]
      %v704 = vld [vmem:[%s1 + $0x1180] sm:$0xff]
      %v705 = vld [vmem:[%s1 + $0x1188] sm:$0xff]
      %v706 = vld [vmem:[%s1 + $0x1190] sm:$0xff]
      %v707 = vld [vmem:[%s1 + $0x1198] sm:$0xff]
      %v708 = vld [vmem:[%s1 + $0x11a0] sm:$0xff]
      %v709 = vld [vmem:[%s1 + $0x11a8] sm:$0xff]
      %v710 = vld [vmem:[%s1 + $0x11b0] sm:$0xff]
      %v711 = vld [vmem:[%s1 + $0x11b8] sm:$0xff]
      %v712 = vld [vmem:[%s1 + $0x11c0] sm:$0xff]
      %v713 = vld [vmem:[%s1 + $0x11c8] sm:$0xff]
      %v714 = vld [vmem:[%s1 + $0x11d0] sm:$0xff]
      %v715 = vld [vmem:[%s1 + $0x11d8] sm:$0xff]
      %v716 = vld [vmem:[%s1 + $0x11e0] sm:$0xff]
      %v717 = vld [vmem:[%s1 + $0x11e8] sm:$0xff]
      %v718 = vld [vmem:[%s1 + $0x11f0] sm:$0xff]
      %v719 = vld [vmem:[%s1 + $0x11f8] sm:$0xff]
      %v720 = vld [vmem:[%s1 + $0x1200] sm:$0xff]
      %v721 = vld [vmem:[%s1 + $0x1208] sm:$0xff]
      %v722 = vld [vmem:[%s1 + $0x1210] sm:$0xff]
      %v723 = vld [vmem:[%s1 + $0x1218] sm:$0xff]
      %v724 = vld [vmem:[%s1 + $0x1220] sm:$0xff]
      %v725 = vld [vmem:[%s1 + $0x1228] sm:$0xff]
      %v726 = vld [vmem:[%s1 + $0x1230] sm:$0xff]
      %v727 = vld [vmem:[%s1 + $0x1238] sm:$0xff]
      %v728 = vld [vmem:[%s1 + $0x1240] sm:$0xff]
      %v729 = vld [vmem:[%s1 + $0x1248] sm:$0xff]
      %v730 = vld [vmem:[%s1 + $0x1250] sm:$0xff]
      %v731 = vld [vmem:[%s1 + $0x1258] sm:$0xff]
      %v732 = vld [vmem:[%s1 + $0x1260] sm:$0xff]
      %v733 = vld [vmem:[%s1 + $0x1268] sm:$0xff]
      %v734 = vld [vmem:[%s1 + $0x1270] sm:$0xff]
      %v735 = vld [vmem:[%s1 + $0x1278] sm:$0xff]
      %v736 = vld [vmem:[%s1 + $0x1280] sm:$0xff]
      %v737 = vld [vmem:[%s1 + $0x1288] sm:$0xff]
      %v738 = vld [vmem:[%s1 + $0x1290] sm:$0xff]
      %v739 = vld [vmem:[%s1 + $0x1298] sm:$0xff]
      %v740 = vld [vmem:[%s1 + $0x12a0] sm:$0xff]
      %v741 = vld [vmem:[%s1 + $0x12a8] sm:$0xff]
      %v742 = vld [vmem:[%s1 + $0x12b0] sm:$0xff]
      %v743 = vld [vmem:[%s1 + $0x12b8] sm:$0xff]
      %v744 = vld [vmem:[%s1 + $0x12c0] sm:$0xff]
      %v745 = vld [vmem:[%s1 + $0x12c8] sm:$0xff]
      %v746 = vld [vmem:[%s1 + $0x12d0] sm:$0xff]
      %v747 = vld [vmem:[%s1 + $0x12d8] sm:$0xff]
      %v748 = vld [vmem:[%s1 + $0x12e0] sm:$0xff]
      %v749 = vld [vmem:[%s1 + $0x12e8] sm:$0xff]
      %v750 = vld [vmem:[%s1 + $0x12f0] sm:$0xff]
      %v751 = vld [vmem:[%s1 + $0x12f8] sm:$0xff]
      %v752 = vld [vmem:[%s1 + $0x1300] sm:$0xff]
      %v753 = vld [vmem:[%s1 + $0x1308] sm:$0xff]
      %v754 = vld [vmem:[%s1 + $0x1310] sm:$0xff]
      %v755 = vld [vmem:[%s1 + $0x1318] sm:$0xff]
      %v756 = vld [vmem:[%s1 + $0x1320] sm:$0xff]
      %v757 = vld [vmem:[%s1 + $0x1328] sm:$0xff]
      %v758 = vld [vmem:[%s1 + $0x1330] sm:$0xff]
      %v759 = vld [vmem:[%s1 + $0x1338] sm:$0xff]
      %v760 = vld [vmem:[%s1 + $0x1340] sm:$0xff]
      %v761 = vld [vmem:[%s1 + $0x1348] sm:$0xff]
      %v762 = vld [vmem:[%s1 + $0x1350] sm:$0xff]
      %v763 = vld [vmem:[%s1 + $0x1358] sm:$0xff]
      %v764 = vld [vmem:[%s1 + $0x1360] sm:$0xff]
      %v765 = vld [vmem:[%s1 + $0x1368] sm:$0xff]
      %v766 = vld [vmem:[%s1 + $0x1370] sm:$0xff]
      %v767 = vld [vmem:[%s1 + $0x1378] sm:$0xff]
      %v768 = vld [vmem:[%s1 + $0x1380] sm:$0xff]
      %v769 = vld [vmem:[%s1 + $0x1388] sm:$0xff]
      %v770 = vld [vmem:[%s1 + $0x1390] sm:$0xff]
      %v771 = vld [vmem:[%s1 + $0x1398] sm:$0xff]
      %v772 = vld [vmem:[%s1 + $0x13a0] sm:$0xff]
      %v773 = vld [vmem:[%s1 + $0x13a8] sm:$0xff]
      %v774 = vld [vmem:[%s1 + $0x13b0] sm:$0xff]
      %v775 = vld [vmem:[%s1 + $0x13b8] sm:$0xff]
      %v776 = vld [vmem:[%s1 + $0x13c0] sm:$0xff]
      %v777 = vld [vmem:[%s1 + $0x13c8] sm:$0xff]
      %v778 = vld [vmem:[%s1 + $0x13d0] sm:$0xff]
      %v779 = vld [vmem:[%s1 + $0x13d8] sm:$0xff]
      %v780 = vld [vmem:[%s1 + $0x13e0] sm:$0xff]
      %v781 = vld [vmem:[%s1 + $0x13e8] sm:$0xff]
      %v782 = vld [vmem:[%s1 + $0x13f0] sm:$0xff]
      %v783 = vld [vmem:[%s1 + $0x13f8] sm:$0xff]
      %v784 = vld [vmem:[%s1 + $0x1400] sm:$0xff]
      %v785 = vld [vmem:[%s1 + $0x1408] sm:$0xff]
      %v786 = vld [vmem:[%s1 + $0x1410] sm:$0xff]
      %v787 = vld [vmem:[%s1 + $0x1418] sm:$0xff]
      %v788 = vld [vmem:[%s1 + $0x1420] sm:$0xff]
      %v789 = vld [vmem:[%s1 + $0x1428] sm:$0xff]
      %v790 = vld [vmem:[%s1 + $0x1430] sm:$0xff]
      %v791 = vld [vmem:[%s1 + $0x1438] sm:$0xff]
      %v792 = vld [vmem:[%s1 + $0x1440] sm:$0xff]
      %v793 = vld [vmem:[%s1 + $0x1448] sm:$0xff]
      %v794 = vld [vmem:[%s1 + $0x1450] sm:$0xff]
      %v795 = vld [vmem:[%s1 + $0x1458] sm:$0xff]
      %v796 = vld [vmem:[%s1 + $0x1460] sm:$0xff]
      %v797 = vld [vmem:[%s1 + $0x1468] sm:$0xff]
      %v798 = vld [vmem:[%s1 + $0x1470] sm:$0xff]
      %v799 = vld [vmem:[%s1 + $0x1478] sm:$0xff]
      %v800 = vld [vmem:[%s1 + $0x1480] sm:$0xff]
      %v801 = vld [vmem:[%s1 + $0x1488] sm:$0xff]
      %v802 = vld [vmem:[%s1 + $0x1490] sm:$0xff]
      %v803 = vld [vmem:[%s1 + $0x1498] sm:$0xff]
      %v804 = vld [vmem:[%s1 + $0x14a0] sm:$0xff]
      %v805 = vld [vmem:[%s1 + $0x14a8] sm:$0xff]
      %v806 = vld [vmem:[%s1 + $0x14b0] sm:$0xff]
      %v807 = vld [vmem:[%s1 + $0x14b8] sm:$0xff]
      %v808 = vld [vmem:[%s1 + $0x14c0] sm:$0xff]
      %v809 = vld [vmem:[%s1 + $0x14c8] sm:$0xff]
      %v810 = vld [vmem:[%s1 + $0x14d0] sm:$0xff]
      %v811 = vld [vmem:[%s1 + $0x14d8] sm:$0xff]
      %v812 = vld [vmem:[%s1 + $0x14e0] sm:$0xff]
      %v813 = vld [vmem:[%s1 + $0x14e8] sm:$0xff]
      %v814 = vld [vmem:[%s1 + $0x14f0] sm:$0xff]
      %v815 = vld [vmem:[%s1 + $0x14f8] sm:$0xff]
      %v816 = vld [vmem:[%s1 + $0x1500] sm:$0xff]
      %v817 = vld [vmem:[%s1 + $0x1508] sm:$0xff]
      %v818 = vld [vmem:[%s1 + $0x1510] sm:$0xff]
      %v819 = vld [vmem:[%s1 + $0x1518] sm:$0xff]
      %v820 = vld [vmem:[%s1 + $0x1520] sm:$0xff]
      %v821 = vld [vmem:[%s1 + $0x1528] sm:$0xff]
      %v822 = vld [vmem:[%s1 + $0x1530] sm:$0xff]
      %v823 = vld [vmem:[%s1 + $0x1538] sm:$0xff]
      %v824 = vld [vmem:[%s1 + $0x1540] sm:$0xff]
      %v825 = vld [vmem:[%s1 + $0x1548] sm:$0xff]
      %v826 = vld [vmem:[%s1 + $0x1550] sm:$0xff]
      %v827 = vld [vmem:[%s1 + $0x1558] sm:$0xff]
      %v828 = vld [vmem:[%s1 + $0x1560] sm:$0xff]
      %v829 = vld [vmem:[%s1 + $0x1568] sm:$0xff]
      %v830 = vld [vmem:[%s1 + $0x1570] sm:$0xff]
      %v831 = vld [vmem:[%s1 + $0x1578] sm:$0xff]
      %v832 = vld [vmem:[%s1 + $0x1580] sm:$0xff]
      %v833 = vld [vmem:[%s1 + $0x1588] sm:$0xff]
      %v834 = vld [vmem:[%s1 + $0x1590] sm:$0xff]
      %v835 = vld [vmem:[%s1 + $0x1598] sm:$0xff]
      %v836 = vld [vmem:[%s1 + $0x15a0] sm:$0xff]
      %v837 = vld [vmem:[%s1 + $0x15a8] sm:$0xff]
      %v838 = vld [vmem:[%s1 + $0x15b0] sm:$0xff]
      %v839 = vld [vmem:[%s1 + $0x15b8] sm:$0xff]
      %v840 = vld [vmem:[%s1 + $0x15c0] sm:$0xff]
      %v841 = vld [vmem:[%s1 + $0x15c8] sm:$0xff]
      %v842 = vld [vmem:[%s1 + $0x15d0] sm:$0xff]
      %v843 = vld [vmem:[%s1 + $0x15d8] sm:$0xff]
      %v844 = vld [vmem:[%s1 + $0x15e0] sm:$0xff]
      %v845 = vld [vmem:[%s1 + $0x15e8] sm:$0xff]
      %v846 = vld [vmem:[%s1 + $0x15f0] sm:$0xff]
      %v847 = vld [vmem:[%s1 + $0x15f8] sm:$0xff]
      %v848 = vld [vmem:[%s1 + $0x1600] sm:$0xff]
      %v849 = vld [vmem:[%s1 + $0x1608] sm:$0xff]
      %v850 = vld [vmem:[%s1 + $0x1610] sm:$0xff]
      %v851 = vld [vmem:[%s1 + $0x1618] sm:$0xff]
      %v852 = vld [vmem:[%s1 + $0x1620] sm:$0xff]
      %v853 = vld [vmem:[%s1 + $0x1628] sm:$0xff]
      %v854 = vld [vmem:[%s1 + $0x1630] sm:$0xff]
      %v855 = vld [vmem:[%s1 + $0x1638] sm:$0xff]
      %v856 = vld [vmem:[%s1 + $0x1640] sm:$0xff]
      %v857 = vld [vmem:[%s1 + $0x1648] sm:$0xff]
      %v858 = vld [vmem:[%s1 + $0x1650] sm:$0xff]
      %v859 = vld [vmem:[%s1 + $0x1658] sm:$0xff]
      %v860 = vld [vmem:[%s1 + $0x1660] sm:$0xff]
      %v861 = vld [vmem:[%s1 + $0x1668] sm:$0xff]
      %v862 = vld [vmem:[%s1 + $0x1670] sm:$0xff]
      %v863 = vld [vmem:[%s1 + $0x1678] sm:$0xff]
      %v864 = vld [vmem:[%s1 + $0x1680] sm:$0xff]
      %v865 = vld [vmem:[%s1 + $0x1688] sm:$0xff]
      %v866 = vld [vmem:[%s1 + $0x1690] sm:$0xff]
      %v867 = vld [vmem:[%s1 + $0x1698] sm:$0xff]
      %v868 = vld [vmem:[%s1 + $0x16a0] sm:$0xff]
      %v869 = vld [vmem:[%s1 + $0x16a8] sm:$0xff]
      %v870 = vld [vmem:[%s1 + $0x16b0] sm:$0xff]
      %v871 = vld [vmem:[%s1 + $0x16b8] sm:$0xff]
      %v872 = vld [vmem:[%s1 + $0x16c0] sm:$0xff]
      %v873 = vld [vmem:[%s1 + $0x16c8] sm:$0xff]
      %v874 = vld [vmem:[%s1 + $0x16d0] sm:$0xff]
      %v875 = vld [vmem:[%s1 + $0x16d8] sm:$0xff]
      %v876 = vld [vmem:[%s1 + $0x16e0] sm:$0xff]
      %v877 = vld [vmem:[%s1 + $0x16e8] sm:$0xff]
      %v878 = vld [vmem:[%s1 + $0x16f0] sm:$0xff]
      %v879 = vld [vmem:[%s1 + $0x16f8] sm:$0xff]
      %v880 = vld [vmem:[%s1 + $0x1700] sm:$0xff]
      %v881 = vld [vmem:[%s1 + $0x1708] sm:$0xff]
      %v882 = vld [vmem:[%s1 + $0x1710] sm:$0xff]
      %v883 = vld [vmem:[%s1 + $0x1718] sm:$0xff]
      %v884 = vld [vmem:[%s1 + $0x1720] sm:$0xff]
      %v885 = vld [vmem:[%s1 + $0x1728] sm:$0xff]
      %v886 = vld [vmem:[%s1 + $0x1730] sm:$0xff]
      %v887 = vld [vmem:[%s1 + $0x1738] sm:$0xff]
      %v888 = vld [vmem:[%s1 + $0x1740] sm:$0xff]
      %v889 = vld [vmem:[%s1 + $0x1748] sm:$0xff]
      %v890 = vld [vmem:[%s1 + $0x1750] sm:$0xff]
      %v891 = vld [vmem:[%s1 + $0x1758] sm:$0xff]
      %v892 = vld [vmem:[%s1 + $0x1760] sm:$0xff]
      %v893 = vld [vmem:[%s1 + $0x1768] sm:$0xff]
      %v894 = vld [vmem:[%s1 + $0x1770] sm:$0xff]
      %v895 = vld [vmem:[%s1 + $0x1778] sm:$0xff]
      %v896 = vld [vmem:[%s1 + $0x1780] sm:$0xff]
      %v897 = vld [vmem:[%s1 + $0x1788] sm:$0xff]
      %v898 = vld [vmem:[%s1 + $0x1790] sm:$0xff]
      %v899 = vld [vmem:[%s1 + $0x1798] sm:$0xff]
      %v900 = vld [vmem:[%s1 + $0x17a0] sm:$0xff]
      %v901 = vld [vmem:[%s1 + $0x17a8] sm:$0xff]
      %v902 = vld [vmem:[%s1 + $0x17b0] sm:$0xff]
      %v903 = vld [vmem:[%s1 + $0x17b8] sm:$0xff]
      %v904 = vld [vmem:[%s1 + $0x17c0] sm:$0xff]
      %v905 = vld [vmem:[%s1 + $0x17c8] sm:$0xff]
      %v906 = vld [vmem:[%s1 + $0x17d0] sm:$0xff]
      %v907 = vld [vmem:[%s1 + $0x17d8] sm:$0xff]
      %v908 = vld [vmem:[%s1 + $0x17e0] sm:$0xff]
      %v909 = vld [vmem:[%s1 + $0x17e8] sm:$0xff]
      %v910 = vld [vmem:[%s1 + $0x17f0] sm:$0xff]
      %v911 = vld [vmem:[%s1 + $0x17f8] sm:$0xff]
      %v912 = vld [vmem:[%s1 + $0x1800] sm:$0xff]
      %v913 = vld [vmem:[%s1 + $0x1808] sm:$0xff]
      %v914 = vld [vmem:[%s1 + $0x1810] sm:$0xff]
      %v915 = vld [vmem:[%s1 + $0x1818] sm:$0xff]
      %v916 = vld [vmem:[%s1 + $0x1820] sm:$0xff]
      %v917 = vld [vmem:[%s1 + $0x1828] sm:$0xff]
      %v918 = vld [vmem:[%s1 + $0x1830] sm:$0xff]
      %v919 = vld [vmem:[%s1 + $0x1838] sm:$0xff]
      %v920 = vld [vmem:[%s1 + $0x1840] sm:$0xff]
      %v921 = vld [vmem:[%s1 + $0x1848] sm:$0xff]
      %v922 = vld [vmem:[%s1 + $0x1850] sm:$0xff]
      %v923 = vld [vmem:[%s1 + $0x1858] sm:$0xff]
      %v924 = vld [vmem:[%s1 + $0x1860] sm:$0xff]
      %v925 = vld [vmem:[%s1 + $0x1868] sm:$0xff]
      %v926 = vld [vmem:[%s1 + $0x1870] sm:$0xff]
      %v927 = vld [vmem:[%s1 + $0x1878] sm:$0xff]
      %v928 = vld [vmem:[%s1 + $0x1880] sm:$0xff]
      %v929 = vld [vmem:[%s1 + $0x1888] sm:$0xff]
      %v930 = vld [vmem:[%s1 + $0x1890] sm:$0xff]
      %v931 = vld [vmem:[%s1 + $0x1898] sm:$0xff]
      %v932 = vld [vmem:[%s1 + $0x18a0] sm:$0xff]
      %v933 = vld [vmem:[%s1 + $0x18a8] sm:$0xff]
      %v934 = vld [vmem:[%s1 + $0x18b0] sm:$0xff]
      %v935 = vld [vmem:[%s1 + $0x18b8] sm:$0xff]
      %v936 = vld [vmem:[%s1 + $0x18c0] sm:$0xff]
      %v937 = vld [vmem:[%s1 + $0x18c8] sm:$0xff]
      %v938 = vld [vmem:[%s1 + $0x18d0] sm:$0xff]
      %v939 = vld [vmem:[%s1 + $0x18d8] sm:$0xff]
      %v940 = vld [vmem:[%s1 + $0x18e0] sm:$0xff]
      %v941 = vld [vmem:[%s1 + $0x18e8] sm:$0xff]
      %v942 = vld [vmem:[%s1 + $0x18f0] sm:$0xff]
      %v943 = vld [vmem:[%s1 + $0x18f8] sm:$0xff]
      %v944 = vld [vmem:[%s1 + $0x1900] sm:$0xff]
      %v945 = vld [vmem:[%s1 + $0x1908] sm:$0xff]
      %v946 = vld [vmem:[%s1 + $0x1910] sm:$0xff]
      %v947 = vld [vmem:[%s1 + $0x1918] sm:$0xff]
      %v948 = vld [vmem:[%s1 + $0x1920] sm:$0xff]
      %v949 = vld [vmem:[%s1 + $0x1928] sm:$0xff]
      %v950 = vld [vmem:[%s1 + $0x1930] sm:$0xff]
      %v951 = vld [vmem:[%s1 + $0x1938] sm:$0xff]
      %v952 = vld [vmem:[%s1 + $0x1940] sm:$0xff]
      %v953 = vld [vmem:[%s1 + $0x1948] sm:$0xff]
      %v954 = vld [vmem:[%s1 + $0x1950] sm:$0xff]
      %v955 = vld [vmem:[%s1 + $0x1958] sm:$0xff]
      %v956 = vld [vmem:[%s1 + $0x1960] sm:$0xff]
      %v957 = vld [vmem:[%s1 + $0x1968] sm:$0xff]
      %v958 = vld [vmem:[%s1 + $0x1970] sm:$0xff]
      %v959 = vld [vmem:[%s1 + $0x1978] sm:$0xff]
      %v960 = vld [vmem:[%s1 + $0x1980] sm:$0xff]
      %v961 = vld [vmem:[%s1 + $0x1988] sm:$0xff]
      %v962 = vld [vmem:[%s1 + $0x1990] sm:$0xff]
      %v963 = vld [vmem:[%s1 + $0x1998] sm:$0xff]
      %v964 = vld [vmem:[%s1 + $0x19a0] sm:$0xff]
      %v965 = vld [vmem:[%s1 + $0x19a8] sm:$0xff]
      %v966 = vld [vmem:[%s1 + $0x19b0] sm:$0xff]
      %v967 = vld [vmem:[%s1 + $0x19b8] sm:$0xff]
      %v968 = vld [vmem:[%s1 + $0x19c0] sm:$0xff]
      %v969 = vld [vmem:[%s1 + $0x19c8] sm:$0xff]
      %v970 = vld [vmem:[%s1 + $0x19d0] sm:$0xff]
      %v971 = vld [vmem:[%s1 + $0x19d8] sm:$0xff]
      %v972 = vld [vmem:[%s1 + $0x19e0] sm:$0xff]
      %v973 = vld [vmem:[%s1 + $0x19e8] sm:$0xff]
      %v974 = vld [vmem:[%s1 + $0x19f0] sm:$0xff]
      %v975 = vld [vmem:[%s1 + $0x19f8] sm:$0xff]
      %v976 = vld [vmem:[%s1 + $0x1a00] sm:$0xff]
      %v977 = vld [vmem:[%s1 + $0x1a08] sm:$0xff]
      %v978 = vld [vmem:[%s1 + $0x1a10] sm:$0xff]
      %v979 = vld [vmem:[%s1 + $0x1a18] sm:$0xff]
      %v980 = vld [vmem:[%s1 + $0x1a20] sm:$0xff]
      %v981 = vld [vmem:[%s1 + $0x1a28] sm:$0xff]
      %v982 = vld [vmem:[%s1 + $0x1a30] sm:$0xff]
      %v983 = vld [vmem:[%s1 + $0x1a38] sm:$0xff]
      %v984 = vld [vmem:[%s1 + $0x1a40] sm:$0xff]
      %v985 = vld [vmem:[%s1 + $0x1a48] sm:$0xff]
      %v986 = vld [vmem:[%s1 + $0x1a50] sm:$0xff]
      %v987 = vld [vmem:[%s1 + $0x1a58] sm:$0xff]
      %v988 = vld [vmem:[%s1 + $0x1a60] sm:$0xff]
      %v989 = vld [vmem:[%s1 + $0x1a68] sm:$0xff]
      %v990 = vld [vmem:[%s1 + $0x1a70] sm:$0xff]
      %v991 = vld [vmem:[%s1 + $0x1a78] sm:$0xff]
      %v992 = vld [vmem:[%s1 + $0x1a80] sm:$0xff]
      %v993 = vld [vmem:[%s1 + $0x1a88] sm:$0xff]
      %v994 = vld [vmem:[%s1 + $0x1a90] sm:$0xff]
      %v995 = vld [vmem:[%s1 + $0x1a98] sm:$0xff]
      %v996 = vld [vmem:[%s1 + $0x1aa0] sm:$0xff]
      %v997 = vld [vmem:[%s1 + $0x1aa8] sm:$0xff]
      %v998 = vld [vmem:[%s1 + $0x1ab0] sm:$0xff]
      %v999 = vld [vmem:[%s1 + $0x1ab8] sm:$0xff]
      %v1000 = vld [vmem:[%s1 + $0x1ac0] sm:$0xff]
      %v1001 = vld [vmem:[%s1 + $0x1ac8] sm:$0xff]
      %v1002 = vld [vmem:[%s1 + $0x1ad0] sm:$0xff]
      %v1003 = vld [vmem:[%s1 + $0x1ad8] sm:$0xff]
      %v1004 = vld [vmem:[%s1 + $0x1ae0] sm:$0xff]
      %v1005 = vld [vmem:[%s1 + $0x1ae8] sm:$0xff]
      %v1006 = vld [vmem:[%s1 + $0x1af0] sm:$0xff]
      %v1007 = vld [vmem:[%s1 + $0x1af8] sm:$0xff]
      %v1008 = vld [vmem:[%s1 + $0x1b00] sm:$0xff]
      %v1009 = vld [vmem:[%s1 + $0x1b08] sm:$0xff]
      %v1010 = vld [vmem:[%s1 + $0x1b10] sm:$0xff]
      %v1011 = vld [vmem:[%s1 + $0x1b18] sm:$0xff]
      %v1012 = vld [vmem:[%s1 + $0x1b20] sm:$0xff]
      %v1013 = vld [vmem:[%s1 + $0x1b28] sm:$0xff]
      %v1014 = vld [vmem:[%s1 + $0x1b30] sm:$0xff]
      %v1015 = vld [vmem:[%s1 + $0x1b38] sm:$0xff]
      %v1016 = vld [vmem:[%s1 + $0x1b40] sm:$0xff]
      %v1017 = vld [vmem:[%s1 + $0x1b48] sm:$0xff]
      %v1018 = vld [vmem:[%s1 + $0x1b50] sm:$0xff]
      %v1019 = vld [vmem:[%s1 + $0x1b58] sm:$0xff]
      %v1020 = vld [vmem:[%s1 + $0x1b60] sm:$0xff]
      %v1021 = vld [vmem:[%s1 + $0x1b68] sm:$0xff]
      %v1022 = vld [vmem:[%s1 + $0x1b70] sm:$0xff]
      %v1023 = vld [vmem:[%s1 + $0x1b78] sm:$0xff]
      %v1024 = vld [vmem:[%s1 + $0x1b80] sm:$0xff]
      %v1025 = vld [vmem:[%s1 + $0x1b88] sm:$0xff]
      %v1026 = vld [vmem:[%s1 + $0x1b90] sm:$0xff]
      %v1027 = vld [vmem:[%s1 + $0x1b98] sm:$0xff]
      %v1028 = vld [vmem:[%s1 + $0x1ba0] sm:$0xff]
      %v1029 = vld [vmem:[%s1 + $0x1ba8] sm:$0xff]
      %v1030 = vld [vmem:[%s1 + $0x1bb0] sm:$0xff]
      %v1031 = vld [vmem:[%s1 + $0x1bb8] sm:$0xff]
      %v1032 = vld [vmem:[%s1 + $0x1bc0] sm:$0xff]
      %v1033 = vld [vmem:[%s1 + $0x1bc8] sm:$0xff]
      %v1034 = vld [vmem:[%s1 + $0x1bd0] sm:$0xff]
      %v1035 = vld [vmem:[%s1 + $0x1bd8] sm:$0xff]
      %v1036 = vld [vmem:[%s1 + $0x1be0] sm:$0xff]
      %v1037 = vld [vmem:[%s1 + $0x1be8] sm:$0xff]
      %v1038 = vld [vmem:[%s1 + $0x1bf0] sm:$0xff]
      %v1039 = vld [vmem:[%s1 + $0x1bf8] sm:$0xff]
      %v1040 = vld [vmem:[%s1 + $0x1c00] sm:$0xff]
      %v1041 = vld [vmem:[%s1 + $0x1c08] sm:$0xff]
      %v1042 = vld [vmem:[%s1 + $0x1c10] sm:$0xff]
      %v1043 = vld [vmem:[%s1 + $0x1c18] sm:$0xff]
      %v1044 = vld [vmem:[%s1 + $0x1c20] sm:$0xff]
      %v1045 = vld [vmem:[%s1 + $0x1c28] sm:$0xff]
      %v1046 = vld [vmem:[%s1 + $0x1c30] sm:$0xff]
      %v1047 = vld [vmem:[%s1 + $0x1c38] sm:$0xff]
      %v1048 = vld [vmem:[%s1 + $0x1c40] sm:$0xff]
      %v1049 = vld [vmem:[%s1 + $0x1c48] sm:$0xff]
      %v1050 = vld [vmem:[%s1 + $0x1c50] sm:$0xff]
      %v1051 = vld [vmem:[%s1 + $0x1c58] sm:$0xff]
      %v1052 = vld [vmem:[%s1 + $0x1c60] sm:$0xff]
      %v1053 = vld [vmem:[%s1 + $0x1c68] sm:$0xff]
      %v1054 = vld [vmem:[%s1 + $0x1c70] sm:$0xff]
      %v1055 = vld [vmem:[%s1 + $0x1c78] sm:$0xff]
      %v1056 = vld [vmem:[%s1 + $0x1c80] sm:$0xff]
      %v1057 = vld [vmem:[%s1 + $0x1c88] sm:$0xff]
      %v1058 = vld [vmem:[%s1 + $0x1c90] sm:$0xff]
      %v1059 = vld [vmem:[%s1 + $0x1c98] sm:$0xff]
      %v1060 = vld [vmem:[%s1 + $0x1ca0] sm:$0xff]
      %v1061 = vld [vmem:[%s1 + $0x1ca8] sm:$0xff]
      %v1062 = vld [vmem:[%s1 + $0x1cb0] sm:$0xff]
      %v1063 = vld [vmem:[%s1 + $0x1cb8] sm:$0xff]
      %v1064 = vld [vmem:[%s1 + $0x1cc0] sm:$0xff]
      %v1065 = vld [vmem:[%s1 + $0x1cc8] sm:$0xff]
      %v1066 = vld [vmem:[%s1 + $0x1cd0] sm:$0xff]
      %v1067 = vld [vmem:[%s1 + $0x1cd8] sm:$0xff]
      %v1068 = vld [vmem:[%s1 + $0x1ce0] sm:$0xff]
      %v1069 = vld [vmem:[%s1 + $0x1ce8] sm:$0xff]
      %v1070 = vld [vmem:[%s1 + $0x1cf0] sm:$0xff]
      %v1071 = vld [vmem:[%s1 + $0x1cf8] sm:$0xff]
      %v1072 = vld [vmem:[%s1 + $0x1d00] sm:$0xff]
      %v1073 = vld [vmem:[%s1 + $0x1d08] sm:$0xff]
      %v1074 = vld [vmem:[%s1 + $0x1d10] sm:$0xff]
      %v1075 = vld [vmem:[%s1 + $0x1d18] sm:$0xff]
      %v1076 = vld [vmem:[%s1 + $0x1d20] sm:$0xff]
      %v1077 = vld [vmem:[%s1 + $0x1d28] sm:$0xff]
      %v1078 = vld [vmem:[%s1 + $0x1d30] sm:$0xff]
      %v1079 = vld [vmem:[%s1 + $0x1d38] sm:$0xff]
      %v1080 = vld [vmem:[%s1 + $0x1d40] sm:$0xff]
      %v1081 = vld [vmem:[%s1 + $0x1d48] sm:$0xff]
      %v1082 = vld [vmem:[%s1 + $0x1d50] sm:$0xff]
      %v1083 = vld [vmem:[%s1 + $0x1d58] sm:$0xff]
      %v1084 = vld [vmem:[%s1 + $0x1d60] sm:$0xff]
      %v1085 = vld [vmem:[%s1 + $0x1d68] sm:$0xff]
      %v1086 = vld [vmem:[%s1 + $0x1d70] sm:$0xff]
      %v1087 = vld [vmem:[%s1 + $0x1d78] sm:$0xff]
      %v1088 = vld [vmem:[%s1 + $0x1d80] sm:$0xff]
      %v1089 = vld [vmem:[%s1 + $0x1d88] sm:$0xff]
      %v1090 = vld [vmem:[%s1 + $0x1d90] sm:$0xff]
      %v1091 = vld [vmem:[%s1 + $0x1d98] sm:$0xff]
      %v1092 = vld [vmem:[%s1 + $0x1da0] sm:$0xff]
      %v1093 = vld [vmem:[%s1 + $0x1da8] sm:$0xff]
      %v1094 = vld [vmem:[%s1 + $0x1db0] sm:$0xff]
      %v1095 = vld [vmem:[%s1 + $0x1db8] sm:$0xff]
      %v1096 = vld [vmem:[%s1 + $0x1dc0] sm:$0xff]
      %v1097 = vld [vmem:[%s1 + $0x1dc8] sm:$0xff]
      %v1098 = vld [vmem:[%s1 + $0x1dd0] sm:$0xff]
      %v1099 = vld [vmem:[%s1 + $0x1dd8] sm:$0xff]
      %v1100 = vld [vmem:[%s1 + $0x1de0] sm:$0xff]
      %v1101 = vld [vmem:[%s1 + $0x1de8] sm:$0xff]
      %v1102 = vld [vmem:[%s1 + $0x1df0] sm:$0xff]
      %v1103 = vld [vmem:[%s1 + $0x1df8] sm:$0xff]
      %v1104 = vld [vmem:[%s1 + $0x1e00] sm:$0xff]
      %v1105 = vld [vmem:[%s1 + $0x1e08] sm:$0xff]
      %v1106 = vld [vmem:[%s1 + $0x1e10] sm:$0xff]
      %v1107 = vld [vmem:[%s1 + $0x1e18] sm:$0xff]
      %v1108 = vld [vmem:[%s1 + $0x1e20] sm:$0xff]
      %v1109 = vld [vmem:[%s1 + $0x1e28] sm:$0xff]
      %v1110 = vld [vmem:[%s1 + $0x1e30] sm:$0xff]
      %v1111 = vld [vmem:[%s1 + $0x1e38] sm:$0xff]
      %v1112 = vld [vmem:[%s1 + $0x1e40] sm:$0xff]
      %v1113 = vld [vmem:[%s1 + $0x1e48] sm:$0xff]
      %v1114 = vld [vmem:[%s1 + $0x1e50] sm:$0xff]
      %v1115 = vld [vmem:[%s1 + $0x1e58] sm:$0xff]
      %v1116 = vld [vmem:[%s1 + $0x1e60] sm:$0xff]
      %v1117 = vld [vmem:[%s1 + $0x1e68] sm:$0xff]
      %v1118 = vld [vmem:[%s1 + $0x1e70] sm:$0xff]
      %v1119 = vld [vmem:[%s1 + $0x1e78] sm:$0xff]
      %v1120 = vld [vmem:[%s1 + $0x1e80] sm:$0xff]
      %v1121 = vld [vmem:[%s1 + $0x1e88] sm:$0xff]
      %v1122 = vld [vmem:[%s1 + $0x1e90] sm:$0xff]
      %v1123 = vld [vmem:[%s1 + $0x1e98] sm:$0xff]
      %v1124 = vld [vmem:[%s1 + $0x1ea0] sm:$0xff]
      %v1125 = vld [vmem:[%s1 + $0x1ea8] sm:$0xff]
      %v1126 = vld [vmem:[%s1 + $0x1eb0] sm:$0xff]
      %v1127 = vld [vmem:[%s1 + $0x1eb8] sm:$0xff]
      %v1128 = vld [vmem:[%s1 + $0x1ec0] sm:$0xff]
      %v1129 = vld [vmem:[%s1 + $0x1ec8] sm:$0xff]
      %v1130 = vld [vmem:[%s1 + $0x1ed0] sm:$0xff]
      %v1131 = vld [vmem:[%s1 + $0x1ed8] sm:$0xff]
      %v1132 = vld [vmem:[%s1 + $0x1ee0] sm:$0xff]
      %v1133 = vld [vmem:[%s1 + $0x1ee8] sm:$0xff]
      %v1134 = vld [vmem:[%s1 + $0x1ef0] sm:$0xff]
      %v1135 = vld [vmem:[%s1 + $0x1ef8] sm:$0xff]
      %v1136 = vld [vmem:[%s1 + $0x1f00] sm:$0xff]
      %v1137 = vld [vmem:[%s1 + $0x1f08] sm:$0xff]
      %v1138 = vld [vmem:[%s1 + $0x1f10] sm:$0xff]
      %v1139 = vld [vmem:[%s1 + $0x1f18] sm:$0xff]
      %v1140 = vld [vmem:[%s1 + $0x1f20] sm:$0xff]
      %v1141 = vld [vmem:[%s1 + $0x1f28] sm:$0xff]
      %v1142 = vld [vmem:[%s1 + $0x1f30] sm:$0xff]
      %v1143 = vld [vmem:[%s1 + $0x1f38] sm:$0xff]
      %v1144 = vld [vmem:[%s1 + $0x1f40] sm:$0xff]
      %v1145 = vld [vmem:[%s1 + $0x1f48] sm:$0xff]
      %v1146 = vld [vmem:[%s1 + $0x1f50] sm:$0xff]
      %v1147 = vld [vmem:[%s1 + $0x1f58] sm:$0xff]
      %v1148 = vld [vmem:[%s1 + $0x1f60] sm:$0xff]
      %v1149 = vld [vmem:[%s1 + $0x1f68] sm:$0xff]
      %v1150 = vld [vmem:[%s1 + $0x1f70] sm:$0xff]
      %v1151 = vld [vmem:[%s1 + $0x1f78] sm:$0xff]
      %v1152 = vld [vmem:[%s1 + $0x1f80] sm:$0xff]
      %v1153 = vld [vmem:[%s1 + $0x1f88] sm:$0xff]
      %v1154 = vld [vmem:[%s1 + $0x1f90] sm:$0xff]
      %v1155 = vld [vmem:[%s1 + $0x1f98] sm:$0xff]
      %v1156 = vld [vmem:[%s1 + $0x1fa0] sm:$0xff]
      %v1157 = vld [vmem:[%s1 + $0x1fa8] sm:$0xff]
      %v1158 = vld [vmem:[%s1 + $0x1fb0] sm:$0xff]
      %v1159 = vld [vmem:[%s1 + $0x1fb8] sm:$0xff]
      %v1160 = vld [vmem:[%s1 + $0x1fc0] sm:$0xff]
      %v1161 = vld [vmem:[%s1 + $0x1fc8] sm:$0xff]
      %v1162 = vld [vmem:[%s1 + $0x1fd0] sm:$0xff]
      %v1163 = vld [vmem:[%s1 + $0x1fd8] sm:$0xff]
      %v1164 = vld [vmem:[%s1 + $0x1fe0] sm:$0xff]
      %v1165 = vld [vmem:[%s1 + $0x1fe8] sm:$0xff]
      %v1166 = vld [vmem:[%s1 + $0x1ff0] sm:$0xff]
      %v1167 = vld [vmem:[%s1 + $0x1ff8] sm:$0xff]
      %v1168 = vld [vmem:[%s138] sm:$0xff]
      %v1169 = vld [vmem:[%s138 + $0x8] sm:$0xff]
      %v1170 = vld [vmem:[%s138 + $0x10] sm:$0xff]
      %v1171 = vld [vmem:[%s138 + $0x18] sm:$0xff]
      %v1172 = vld [vmem:[%s138 + $0x20] sm:$0xff]
      %v1173 = vld [vmem:[%s138 + $0x28] sm:$0xff]
      %v1174 = vld [vmem:[%s138 + $0x30] sm:$0xff]
      %v1175 = vld [vmem:[%s138 + $0x38] sm:$0xff]
      %v1176 = vld [vmem:[%s138 + $0x40] sm:$0xff]
      %v1177 = vld [vmem:[%s138 + $0x48] sm:$0xff]
      %v1178 = vld [vmem:[%s138 + $0x50] sm:$0xff]
      %v1179 = vld [vmem:[%s138 + $0x58] sm:$0xff]
      %v1180 = vld [vmem:[%s138 + $0x60] sm:$0xff]
      %v1181 = vld [vmem:[%s138 + $0x68] sm:$0xff]
      %v1182 = vld [vmem:[%s138 + $0x70] sm:$0xff]
      %v1183 = vld [vmem:[%s138 + $0x78] sm:$0xff]
      %v1184 = vld [vmem:[%s138 + $0x80] sm:$0xff]
      %v1185 = vld [vmem:[%s138 + $0x88] sm:$0xff]
      %v1186 = vld [vmem:[%s138 + $0x90] sm:$0xff]
      %v1187 = vld [vmem:[%s138 + $0x98] sm:$0xff]
      %v1188 = vld [vmem:[%s138 + $0xa0] sm:$0xff]
      %v1189 = vld [vmem:[%s138 + $0xa8] sm:$0xff]
      %v1190 = vld [vmem:[%s138 + $0xb0] sm:$0xff]
      %v1191 = vld [vmem:[%s138 + $0xb8] sm:$0xff]
      %v1192 = vld [vmem:[%s138 + $0xc0] sm:$0xff]
      %v1193 = vld [vmem:[%s138 + $0xc8] sm:$0xff]
      %v1194 = vld [vmem:[%s138 + $0xd0] sm:$0xff]
      %v1195 = vld [vmem:[%s138 + $0xd8] sm:$0xff]
      %v1196 = vld [vmem:[%s138 + $0xe0] sm:$0xff]
      %v1197 = vld [vmem:[%s138 + $0xe8] sm:$0xff]
      %v1198 = vld [vmem:[%s138 + $0xf0] sm:$0xff]
      %v1199 = vld [vmem:[%s138 + $0xf8] sm:$0xff]
      %v1200 = vld [vmem:[%s138 + $0x100] sm:$0xff]
      %v1201 = vld [vmem:[%s138 + $0x108] sm:$0xff]
      %v1202 = vld [vmem:[%s138 + $0x110] sm:$0xff]
      %v1203 = vld [vmem:[%s138 + $0x118] sm:$0xff]
      %v1204 = vld [vmem:[%s138 + $0x120] sm:$0xff]
      %v1205 = vld [vmem:[%s138 + $0x128] sm:$0xff]
      %v1206 = vld [vmem:[%s138 + $0x130] sm:$0xff]
      %v1207 = vld [vmem:[%s138 + $0x138] sm:$0xff]
      %v1208 = vld [vmem:[%s138 + $0x140] sm:$0xff]
      %v1209 = vld [vmem:[%s138 + $0x148] sm:$0xff]
      %v1210 = vld [vmem:[%s138 + $0x150] sm:$0xff]
      %v1211 = vld [vmem:[%s138 + $0x158] sm:$0xff]
      %v1212 = vld [vmem:[%s138 + $0x160] sm:$0xff]
      %v1213 = vld [vmem:[%s138 + $0x168] sm:$0xff]
      %v1214 = vld [vmem:[%s138 + $0x170] sm:$0xff]
      %v1215 = vld [vmem:[%s138 + $0x178] sm:$0xff]
      %v1216 = vld [vmem:[%s138 + $0x180] sm:$0xff]
      %v1217 = vld [vmem:[%s138 + $0x188] sm:$0xff]
      %v1218 = vld [vmem:[%s138 + $0x190] sm:$0xff]
      %v1219 = vld [vmem:[%s138 + $0x198] sm:$0xff]
      %v1220 = vld [vmem:[%s138 + $0x1a0] sm:$0xff]
      %v1221 = vld [vmem:[%s138 + $0x1a8] sm:$0xff]
      %v1222 = vld [vmem:[%s138 + $0x1b0] sm:$0xff]
      %v1223 = vld [vmem:[%s138 + $0x1b8] sm:$0xff]
      %v1224 = vld [vmem:[%s138 + $0x1c0] sm:$0xff]
      %v1225 = vld [vmem:[%s138 + $0x1c8] sm:$0xff]
      %v1226 = vld [vmem:[%s138 + $0x1d0] sm:$0xff]
      %v1227 = vld [vmem:[%s138 + $0x1d8] sm:$0xff]
      %v1228 = vld [vmem:[%s138 + $0x1e0] sm:$0xff]
      %v1229 = vld [vmem:[%s138 + $0x1e8] sm:$0xff]
      %v1230 = vld [vmem:[%s138 + $0x1f0] sm:$0xff]
      %v1231 = vld [vmem:[%s138 + $0x1f8] sm:$0xff]
      %v1232 = vld [vmem:[%s138 + $0x200] sm:$0xff]
      %v1233 = vld [vmem:[%s138 + $0x208] sm:$0xff]
      %v1234 = vld [vmem:[%s138 + $0x210] sm:$0xff]
      %v1235 = vld [vmem:[%s138 + $0x218] sm:$0xff]
      %v1236 = vld [vmem:[%s138 + $0x220] sm:$0xff]
      %v1237 = vld [vmem:[%s138 + $0x228] sm:$0xff]
      %v1238 = vld [vmem:[%s138 + $0x230] sm:$0xff]
      %v1239 = vld [vmem:[%s138 + $0x238] sm:$0xff]
      %v1240 = vld [vmem:[%s138 + $0x240] sm:$0xff]
      %v1241 = vld [vmem:[%s138 + $0x248] sm:$0xff]
      %v1242 = vld [vmem:[%s138 + $0x250] sm:$0xff]
      %v1243 = vld [vmem:[%s138 + $0x258] sm:$0xff]
      %v1244 = vld [vmem:[%s138 + $0x260] sm:$0xff]
      %v1245 = vld [vmem:[%s138 + $0x268] sm:$0xff]
      %v1246 = vld [vmem:[%s138 + $0x270] sm:$0xff]
      %v1247 = vld [vmem:[%s138 + $0x278] sm:$0xff]
      %v1248 = vld [vmem:[%s138 + $0x280] sm:$0xff]
      %v1249 = vld [vmem:[%s138 + $0x288] sm:$0xff]
      %v1250 = vld [vmem:[%s138 + $0x290] sm:$0xff]
      %v1251 = vld [vmem:[%s138 + $0x298] sm:$0xff]
      %v1252 = vld [vmem:[%s138 + $0x2a0] sm:$0xff]
      %v1253 = vld [vmem:[%s138 + $0x2a8] sm:$0xff]
      %v1254 = vld [vmem:[%s138 + $0x2b0] sm:$0xff]
      %v1255 = vld [vmem:[%s138 + $0x2b8] sm:$0xff]
      %v1256 = vld [vmem:[%s138 + $0x2c0] sm:$0xff]
      %v1257 = vld [vmem:[%s138 + $0x2c8] sm:$0xff]
      %v1258 = vld [vmem:[%s138 + $0x2d0] sm:$0xff]
      %v1259 = vld [vmem:[%s138 + $0x2d8] sm:$0xff]
      %v1260 = vld [vmem:[%s138 + $0x2e0] sm:$0xff]
      %v1261 = vld [vmem:[%s138 + $0x2e8] sm:$0xff]
      %v1262 = vld [vmem:[%s138 + $0x2f0] sm:$0xff]
      %v1263 = vld [vmem:[%s138 + $0x2f8] sm:$0xff]
      %v1264 = vld [vmem:[%s138 + $0x300] sm:$0xff]
      %v1265 = vld [vmem:[%s138 + $0x308] sm:$0xff]
      %v1266 = vld [vmem:[%s138 + $0x310] sm:$0xff]
      %v1267 = vld [vmem:[%s138 + $0x318] sm:$0xff]
      %v1268 = vld [vmem:[%s138 + $0x320] sm:$0xff]
      %v1269 = vld [vmem:[%s138 + $0x328] sm:$0xff]
      %v1270 = vld [vmem:[%s138 + $0x330] sm:$0xff]
      %v1271 = vld [vmem:[%s138 + $0x338] sm:$0xff]
      %v1272 = vld [vmem:[%s138 + $0x340] sm:$0xff]
      %v1273 = vld [vmem:[%s138 + $0x348] sm:$0xff]
      %v1274 = vld [vmem:[%s138 + $0x350] sm:$0xff]
      %v1275 = vld [vmem:[%s138 + $0x358] sm:$0xff]
      %v1276 = vld [vmem:[%s138 + $0x360] sm:$0xff]
      %v1277 = vld [vmem:[%s138 + $0x368] sm:$0xff]
      %v1278 = vld [vmem:[%s138 + $0x370] sm:$0xff]
      %v1279 = vld [vmem:[%s138 + $0x378] sm:$0xff]
      %v1280 = vld [vmem:[%s138 + $0x380] sm:$0xff]
      %v1281 = vld [vmem:[%s138 + $0x388] sm:$0xff]
      %v1282 = vld [vmem:[%s138 + $0x390] sm:$0xff]
      %v1283 = vld [vmem:[%s138 + $0x398] sm:$0xff]
      %v1284 = vld [vmem:[%s138 + $0x3a0] sm:$0xff]
      %v1285 = vld [vmem:[%s138 + $0x3a8] sm:$0xff]
      %v1286 = vld [vmem:[%s138 + $0x3b0] sm:$0xff]
      %v1287 = vld [vmem:[%s138 + $0x3b8] sm:$0xff]
      %v1288 = vld [vmem:[%s138 + $0x3c0] sm:$0xff]
      %v1289 = vld [vmem:[%s138 + $0x3c8] sm:$0xff]
      %v1290 = vld [vmem:[%s138 + $0x3d0] sm:$0xff]
      %v1291 = vld [vmem:[%s138 + $0x3d8] sm:$0xff]
      %v1292 = vld [vmem:[%s138 + $0x3e0] sm:$0xff]
      %v1293 = vld [vmem:[%s138 + $0x3e8] sm:$0xff]
      %v1294 = vld [vmem:[%s138 + $0x3f0] sm:$0xff]
      %v1295 = vld [vmem:[%s138 + $0x3f8] sm:$0xff]
      %v1296 = vld [vmem:[%s138 + $0x400] sm:$0xff]
      %v1297 = vld [vmem:[%s138 + $0x408] sm:$0xff]
      %v1298 = vld [vmem:[%s138 + $0x410] sm:$0xff]
      %v1299 = vld [vmem:[%s138 + $0x418] sm:$0xff]
      %v1300 = vld [vmem:[%s138 + $0x420] sm:$0xff]
      %v1301 = vld [vmem:[%s138 + $0x428] sm:$0xff]
      %v1302 = vld [vmem:[%s138 + $0x430] sm:$0xff]
      %v1303 = vld [vmem:[%s138 + $0x438] sm:$0xff]
      %v1304 = vld [vmem:[%s138 + $0x440] sm:$0xff]
      %v1305 = vld [vmem:[%s138 + $0x448] sm:$0xff]
      %v1306 = vld [vmem:[%s138 + $0x450] sm:$0xff]
      %v1307 = vld [vmem:[%s138 + $0x458] sm:$0xff]
      %v1308 = vld [vmem:[%s138 + $0x460] sm:$0xff]
      %v1309 = vld [vmem:[%s138 + $0x468] sm:$0xff]
      %v1310 = vld [vmem:[%s138 + $0x470] sm:$0xff]
      %v1311 = vld [vmem:[%s138 + $0x478] sm:$0xff]
      %v1312 = vld [vmem:[%s138 + $0x480] sm:$0xff]
      %v1313 = vld [vmem:[%s138 + $0x488] sm:$0xff]
      %v1314 = vld [vmem:[%s138 + $0x490] sm:$0xff]
      %v1315 = vld [vmem:[%s138 + $0x498] sm:$0xff]
      %v1316 = vld [vmem:[%s138 + $0x4a0] sm:$0xff]
      %v1317 = vld [vmem:[%s138 + $0x4a8] sm:$0xff]
      %v1318 = vld [vmem:[%s138 + $0x4b0] sm:$0xff]
      %v1319 = vld [vmem:[%s138 + $0x4b8] sm:$0xff]
      %v1320 = vld [vmem:[%s138 + $0x4c0] sm:$0xff]
      %v1321 = vld [vmem:[%s138 + $0x4c8] sm:$0xff]
      %v1322 = vld [vmem:[%s138 + $0x4d0] sm:$0xff]
      %v1323 = vld [vmem:[%s138 + $0x4d8] sm:$0xff]
      %v1324 = vld [vmem:[%s138 + $0x4e0] sm:$0xff]
      %v1325 = vld [vmem:[%s138 + $0x4e8] sm:$0xff]
      %v1326 = vld [vmem:[%s138 + $0x4f0] sm:$0xff]
      %v1327 = vld [vmem:[%s138 + $0x4f8] sm:$0xff]
      %v1328 = vld [vmem:[%s138 + $0x500] sm:$0xff]
      %v1329 = vld [vmem:[%s138 + $0x508] sm:$0xff]
      %v1330 = vld [vmem:[%s138 + $0x510] sm:$0xff]
      %v1331 = vld [vmem:[%s138 + $0x518] sm:$0xff]
      %v1332 = vld [vmem:[%s138 + $0x520] sm:$0xff]
      %v1333 = vld [vmem:[%s138 + $0x528] sm:$0xff]
      %v1334 = vld [vmem:[%s138 + $0x530] sm:$0xff]
      %v1335 = vld [vmem:[%s138 + $0x538] sm:$0xff]
      %v1336 = vld [vmem:[%s138 + $0x540] sm:$0xff]
      %v1337 = vld [vmem:[%s138 + $0x548] sm:$0xff]
      %v1338 = vld [vmem:[%s138 + $0x550] sm:$0xff]
      %v1339 = vld [vmem:[%s138 + $0x558] sm:$0xff]
      %v1340 = vld [vmem:[%s138 + $0x560] sm:$0xff]
      %v1341 = vld [vmem:[%s138 + $0x568] sm:$0xff]
      %v1342 = vld [vmem:[%s138 + $0x570] sm:$0xff]
      %v1343 = vld [vmem:[%s138 + $0x578] sm:$0xff]
      %v1344 = vld [vmem:[%s138 + $0x580] sm:$0xff]
      %v1345 = vld [vmem:[%s138 + $0x588] sm:$0xff]
      %v1346 = vld [vmem:[%s138 + $0x590] sm:$0xff]
      %v1347 = vld [vmem:[%s138 + $0x598] sm:$0xff]
      %v1348 = vld [vmem:[%s138 + $0x5a0] sm:$0xff]
      %v1349 = vld [vmem:[%s138 + $0x5a8] sm:$0xff]
      %v1350 = vld [vmem:[%s138 + $0x5b0] sm:$0xff]
      %v1351 = vld [vmem:[%s138 + $0x5b8] sm:$0xff]
      %v1352 = vld [vmem:[%s138 + $0x5c0] sm:$0xff]
      %v1353 = vld [vmem:[%s138 + $0x5c8] sm:$0xff]
      %v1354 = vld [vmem:[%s138 + $0x5d0] sm:$0xff]
      %v1355 = vld [vmem:[%s138 + $0x5d8] sm:$0xff]
      %v1356 = vld [vmem:[%s138 + $0x5e0] sm:$0xff]
      %v1357 = vld [vmem:[%s138 + $0x5e8] sm:$0xff]
      %v1358 = vld [vmem:[%s138 + $0x5f0] sm:$0xff]
      %v1359 = vld [vmem:[%s138 + $0x5f8] sm:$0xff]
      %v1360 = vld [vmem:[%s138 + $0x600] sm:$0xff]
      %v1361 = vld [vmem:[%s138 + $0x608] sm:$0xff]
      %v1362 = vld [vmem:[%s138 + $0x610] sm:$0xff]
      %v1363 = vld [vmem:[%s138 + $0x618] sm:$0xff]
      %v1364 = vld [vmem:[%s138 + $0x620] sm:$0xff]
      %v1365 = vld [vmem:[%s138 + $0x628] sm:$0xff]
      %v1366 = vld [vmem:[%s138 + $0x630] sm:$0xff]
      %v1367 = vld [vmem:[%s138 + $0x638] sm:$0xff]
      %v1368 = vld [vmem:[%s138 + $0x640] sm:$0xff]
      %v1369 = vld [vmem:[%s138 + $0x648] sm:$0xff]
      %v1370 = vld [vmem:[%s138 + $0x650] sm:$0xff]
      %v1371 = vld [vmem:[%s138 + $0x658] sm:$0xff]
      %v1372 = vld [vmem:[%s138 + $0x660] sm:$0xff]
      %v1373 = vld [vmem:[%s138 + $0x668] sm:$0xff]
      %v1374 = vld [vmem:[%s138 + $0x670] sm:$0xff]
      %v1375 = vld [vmem:[%s138 + $0x678] sm:$0xff]
      %v1376 = vld [vmem:[%s138 + $0x680] sm:$0xff]
      %v1377 = vld [vmem:[%s138 + $0x688] sm:$0xff]
      %v1378 = vld [vmem:[%s138 + $0x690] sm:$0xff]
      %v1379 = vld [vmem:[%s138 + $0x698] sm:$0xff]
      %v1380 = vld [vmem:[%s138 + $0x6a0] sm:$0xff]
      %v1381 = vld [vmem:[%s138 + $0x6a8] sm:$0xff]
      %v1382 = vld [vmem:[%s138 + $0x6b0] sm:$0xff]
      %v1383 = vld [vmem:[%s138 + $0x6b8] sm:$0xff]
      %v1384 = vld [vmem:[%s138 + $0x6c0] sm:$0xff]
      %v1385 = vld [vmem:[%s138 + $0x6c8] sm:$0xff]
      %v1386 = vld [vmem:[%s138 + $0x6d0] sm:$0xff]
      %v1387 = vld [vmem:[%s138 + $0x6d8] sm:$0xff]
      %v1388 = vld [vmem:[%s138 + $0x6e0] sm:$0xff]
      %v1389 = vld [vmem:[%s138 + $0x6e8] sm:$0xff]
      %v1390 = vld [vmem:[%s138 + $0x6f0] sm:$0xff]
      %v1391 = vld [vmem:[%s138 + $0x6f8] sm:$0xff]
      %v1392 = vld [vmem:[%s138 + $0x700] sm:$0xff]
      %v1393 = vld [vmem:[%s138 + $0x708] sm:$0xff]
      %v1394 = vld [vmem:[%s138 + $0x710] sm:$0xff]
      %v1395 = vld [vmem:[%s138 + $0x718] sm:$0xff]
      %v1396 = vld [vmem:[%s138 + $0x720] sm:$0xff]
      %v1397 = vld [vmem:[%s138 + $0x728] sm:$0xff]
      %v1398 = vld [vmem:[%s138 + $0x730] sm:$0xff]
      %v1399 = vld [vmem:[%s138 + $0x738] sm:$0xff]
      %v1400 = vld [vmem:[%s138 + $0x740] sm:$0xff]
      %v1401 = vld [vmem:[%s138 + $0x748] sm:$0xff]
      %v1402 = vld [vmem:[%s138 + $0x750] sm:$0xff]
      %v1403 = vld [vmem:[%s138 + $0x758] sm:$0xff]
      %v1404 = vld [vmem:[%s138 + $0x760] sm:$0xff]
      %v1405 = vld [vmem:[%s138 + $0x768] sm:$0xff]
      %v1406 = vld [vmem:[%s138 + $0x770] sm:$0xff]
      %v1407 = vld [vmem:[%s138 + $0x778] sm:$0xff]
      %v1408 = vld [vmem:[%s138 + $0x780] sm:$0xff]
      %v1409 = vld [vmem:[%s138 + $0x788] sm:$0xff]
      %v1410 = vld [vmem:[%s138 + $0x790] sm:$0xff]
      %v1411 = vld [vmem:[%s138 + $0x798] sm:$0xff]
      %v1412 = vld [vmem:[%s138 + $0x7a0] sm:$0xff]
      %v1413 = vld [vmem:[%s138 + $0x7a8] sm:$0xff]
      %v1414 = vld [vmem:[%s138 + $0x7b0] sm:$0xff]
      %v1415 = vld [vmem:[%s138 + $0x7b8] sm:$0xff]
      %v1416 = vld [vmem:[%s138 + $0x7c0] sm:$0xff]
      %v1417 = vld [vmem:[%s138 + $0x7c8] sm:$0xff]
      %v1418 = vld [vmem:[%s138 + $0x7d0] sm:$0xff]
      %v1419 = vld [vmem:[%s138 + $0x7d8] sm:$0xff]
      %v1420 = vld [vmem:[%s138 + $0x7e0] sm:$0xff]
      %v1421 = vld [vmem:[%s138 + $0x7e8] sm:$0xff]
      %v1422 = vld [vmem:[%s138 + $0x7f0] sm:$0xff]
      %v1423 = vld [vmem:[%s138 + $0x7f8] sm:$0xff]
      %v1424 = vld [vmem:[%s138 + $0x800] sm:$0xff]
      %v1425 = vld [vmem:[%s138 + $0x808] sm:$0xff]
      %v1426 = vld [vmem:[%s138 + $0x810] sm:$0xff]
      %v1427 = vld [vmem:[%s138 + $0x818] sm:$0xff]
      %v1428 = vld [vmem:[%s138 + $0x820] sm:$0xff]
      %v1429 = vld [vmem:[%s138 + $0x828] sm:$0xff]
      %v1430 = vld [vmem:[%s138 + $0x830] sm:$0xff]
      %v1431 = vld [vmem:[%s138 + $0x838] sm:$0xff]
      %v1432 = vld [vmem:[%s138 + $0x840] sm:$0xff]
      %v1433 = vld [vmem:[%s138 + $0x848] sm:$0xff]
      %v1434 = vld [vmem:[%s138 + $0x850] sm:$0xff]
      %v1435 = vld [vmem:[%s138 + $0x858] sm:$0xff]
      %v1436 = vld [vmem:[%s138 + $0x860] sm:$0xff]
      %v1437 = vld [vmem:[%s138 + $0x868] sm:$0xff]
      %v1438 = vld [vmem:[%s138 + $0x870] sm:$0xff]
      %v1439 = vld [vmem:[%s138 + $0x878] sm:$0xff]
      %v1440 = vld [vmem:[%s138 + $0x880] sm:$0xff]
      %v1441 = vld [vmem:[%s138 + $0x888] sm:$0xff]
      %v1442 = vld [vmem:[%s138 + $0x890] sm:$0xff]
      %v1443 = vld [vmem:[%s138 + $0x898] sm:$0xff]
      %v1444 = vld [vmem:[%s138 + $0x8a0] sm:$0xff]
      %v1445 = vld [vmem:[%s138 + $0x8a8] sm:$0xff]
      %v1446 = vld [vmem:[%s138 + $0x8b0] sm:$0xff]
      %v1447 = vld [vmem:[%s138 + $0x8b8] sm:$0xff]
      %v1448 = vld [vmem:[%s138 + $0x8c0] sm:$0xff]
      %v1449 = vld [vmem:[%s138 + $0x8c8] sm:$0xff]
      %v1450 = vld [vmem:[%s138 + $0x8d0] sm:$0xff]
      %v1451 = vld [vmem:[%s138 + $0x8d8] sm:$0xff]
      %v1452 = vld [vmem:[%s138 + $0x8e0] sm:$0xff]
      %v1453 = vld [vmem:[%s138 + $0x8e8] sm:$0xff]
      %v1454 = vld [vmem:[%s138 + $0x8f0] sm:$0xff]
      %v1455 = vld [vmem:[%s138 + $0x8f8] sm:$0xff]
      %v1456 = vld [vmem:[%s138 + $0x900] sm:$0xff]
      %v1457 = vld [vmem:[%s138 + $0x908] sm:$0xff]
      %v1458 = vld [vmem:[%s138 + $0x910] sm:$0xff]
      %v1459 = vld [vmem:[%s138 + $0x918] sm:$0xff]
      %v1460 = vld [vmem:[%s138 + $0x920] sm:$0xff]
      %v1461 = vld [vmem:[%s138 + $0x928] sm:$0xff]
      %v1462 = vld [vmem:[%s138 + $0x930] sm:$0xff]
      %v1463 = vld [vmem:[%s138 + $0x938] sm:$0xff]
      %v1464 = vld [vmem:[%s138 + $0x940] sm:$0xff]
      %v1465 = vld [vmem:[%s138 + $0x948] sm:$0xff]
      %v1466 = vld [vmem:[%s138 + $0x950] sm:$0xff]
      %v1467 = vld [vmem:[%s138 + $0x958] sm:$0xff]
      %v1468 = vld [vmem:[%s138 + $0x960] sm:$0xff]
      %v1469 = vld [vmem:[%s138 + $0x968] sm:$0xff]
      %v1470 = vld [vmem:[%s138 + $0x970] sm:$0xff]
      %v1471 = vld [vmem:[%s138 + $0x978] sm:$0xff]
      %v1472 = vld [vmem:[%s138 + $0x980] sm:$0xff]
      %v1473 = vld [vmem:[%s138 + $0x988] sm:$0xff]
      %v1474 = vld [vmem:[%s138 + $0x990] sm:$0xff]
      %v1475 = vld [vmem:[%s138 + $0x998] sm:$0xff]
      %v1476 = vld [vmem:[%s138 + $0x9a0] sm:$0xff]
      %v1477 = vld [vmem:[%s138 + $0x9a8] sm:$0xff]
      %v1478 = vld [vmem:[%s138 + $0x9b0] sm:$0xff]
      %v1479 = vld [vmem:[%s138 + $0x9b8] sm:$0xff]
      %v1480 = vld [vmem:[%s138 + $0x9c0] sm:$0xff]
      %v1481 = vld [vmem:[%s138 + $0x9c8] sm:$0xff]
      %v1482 = vld [vmem:[%s138 + $0x9d0] sm:$0xff]
      %v1483 = vld [vmem:[%s138 + $0x9d8] sm:$0xff]
      %v1484 = vld [vmem:[%s138 + $0x9e0] sm:$0xff]
      %v1485 = vld [vmem:[%s138 + $0x9e8] sm:$0xff]
      %v1486 = vld [vmem:[%s138 + $0x9f0] sm:$0xff]
      %v1487 = vld [vmem:[%s138 + $0x9f8] sm:$0xff]
      %v1488 = vld [vmem:[%s138 + $0xa00] sm:$0xff]
      %v1489 = vld [vmem:[%s138 + $0xa08] sm:$0xff]
      %v1490 = vld [vmem:[%s138 + $0xa10] sm:$0xff]
      %v1491 = vld [vmem:[%s138 + $0xa18] sm:$0xff]
      %v1492 = vld [vmem:[%s138 + $0xa20] sm:$0xff]
      %v1493 = vld [vmem:[%s138 + $0xa28] sm:$0xff]
      %v1494 = vld [vmem:[%s138 + $0xa30] sm:$0xff]
      %v1495 = vld [vmem:[%s138 + $0xa38] sm:$0xff]
      %v1496 = vld [vmem:[%s138 + $0xa40] sm:$0xff]
      %v1497 = vld [vmem:[%s138 + $0xa48] sm:$0xff]
      %v1498 = vld [vmem:[%s138 + $0xa50] sm:$0xff]
      %v1499 = vld [vmem:[%s138 + $0xa58] sm:$0xff]
      %v1500 = vld [vmem:[%s138 + $0xa60] sm:$0xff]
      %v1501 = vld [vmem:[%s138 + $0xa68] sm:$0xff]
      %v1502 = vld [vmem:[%s138 + $0xa70] sm:$0xff]
      %v1503 = vld [vmem:[%s138 + $0xa78] sm:$0xff]
      %v1504 = vld [vmem:[%s138 + $0xa80] sm:$0xff]
      %v1505 = vld [vmem:[%s138 + $0xa88] sm:$0xff]
      %v1506 = vld [vmem:[%s138 + $0xa90] sm:$0xff]
      %v1507 = vld [vmem:[%s138 + $0xa98] sm:$0xff]
      %v1508 = vld [vmem:[%s138 + $0xaa0] sm:$0xff]
      %v1509 = vld [vmem:[%s138 + $0xaa8] sm:$0xff]
      %v1510 = vld [vmem:[%s138 + $0xab0] sm:$0xff]
      %v1511 = vld [vmem:[%s138 + $0xab8] sm:$0xff]
      %v1512 = vld [vmem:[%s138 + $0xac0] sm:$0xff]
      %v1513 = vld [vmem:[%s138 + $0xac8] sm:$0xff]
      %v1514 = vld [vmem:[%s138 + $0xad0] sm:$0xff]
      %v1515 = vld [vmem:[%s138 + $0xad8] sm:$0xff]
      %v1516 = vld [vmem:[%s138 + $0xae0] sm:$0xff]
      %v1517 = vld [vmem:[%s138 + $0xae8] sm:$0xff]
      %v1518 = vld [vmem:[%s138 + $0xaf0] sm:$0xff]
      %v1519 = vld [vmem:[%s138 + $0xaf8] sm:$0xff]
      %v1520 = vld [vmem:[%s138 + $0xb00] sm:$0xff]
      %v1521 = vld [vmem:[%s138 + $0xb08] sm:$0xff]
      %v1522 = vld [vmem:[%s138 + $0xb10] sm:$0xff]
      %v1523 = vld [vmem:[%s138 + $0xb18] sm:$0xff]
      %v1524 = vld [vmem:[%s138 + $0xb20] sm:$0xff]
      %v1525 = vld [vmem:[%s138 + $0xb28] sm:$0xff]
      %v1526 = vld [vmem:[%s138 + $0xb30] sm:$0xff]
      %v1527 = vld [vmem:[%s138 + $0xb38] sm:$0xff]
      %v1528 = vld [vmem:[%s138 + $0xb40] sm:$0xff]
      %v1529 = vld [vmem:[%s138 + $0xb48] sm:$0xff]
      %v1530 = vld [vmem:[%s138 + $0xb50] sm:$0xff]
      %v1531 = vld [vmem:[%s138 + $0xb58] sm:$0xff]
      %v1532 = vld [vmem:[%s138 + $0xb60] sm:$0xff]
      %v1533 = vld [vmem:[%s138 + $0xb68] sm:$0xff]
      %v1534 = vld [vmem:[%s138 + $0xb70] sm:$0xff]
      %v1535 = vld [vmem:[%s138 + $0xb78] sm:$0xff]
      %v1536 = vld [vmem:[%s138 + $0xb80] sm:$0xff]
      %v1537 = vld [vmem:[%s138 + $0xb88] sm:$0xff]
      %v1538 = vld [vmem:[%s138 + $0xb90] sm:$0xff]
      %v1539 = vld [vmem:[%s138 + $0xb98] sm:$0xff]
      %v1540 = vld [vmem:[%s138 + $0xba0] sm:$0xff]
      %v1541 = vld [vmem:[%s138 + $0xba8] sm:$0xff]
      %v1542 = vld [vmem:[%s138 + $0xbb0] sm:$0xff]
      %v1543 = vld [vmem:[%s138 + $0xbb8] sm:$0xff]
      %v1544 = vld [vmem:[%s138 + $0xbc0] sm:$0xff]
      %v1545 = vld [vmem:[%s138 + $0xbc8] sm:$0xff]
      %v1546 = vld [vmem:[%s138 + $0xbd0] sm:$0xff]
      %v1547 = vld [vmem:[%s138 + $0xbd8] sm:$0xff]
      %v1548 = vld [vmem:[%s138 + $0xbe0] sm:$0xff]
      %v1549 = vld [vmem:[%s138 + $0xbe8] sm:$0xff]
      %v1550 = vld [vmem:[%s138 + $0xbf0] sm:$0xff]
      %v1551 = vld [vmem:[%s138 + $0xbf8] sm:$0xff]
      %v1552 = vld [vmem:[%s138 + $0xc00] sm:$0xff]
      %v1553 = vld [vmem:[%s138 + $0xc08] sm:$0xff]
      %v1554 = vld [vmem:[%s138 + $0xc10] sm:$0xff]
      %v1555 = vld [vmem:[%s138 + $0xc18] sm:$0xff]
      %v1556 = vld [vmem:[%s138 + $0xc20] sm:$0xff]
      %v1557 = vld [vmem:[%s138 + $0xc28] sm:$0xff]
      %v1558 = vld [vmem:[%s138 + $0xc30] sm:$0xff]
      %v1559 = vld [vmem:[%s138 + $0xc38] sm:$0xff]
      %v1560 = vld [vmem:[%s138 + $0xc40] sm:$0xff]
      %v1561 = vld [vmem:[%s138 + $0xc48] sm:$0xff]
      %v1562 = vld [vmem:[%s138 + $0xc50] sm:$0xff]
      %v1563 = vld [vmem:[%s138 + $0xc58] sm:$0xff]
      %v1564 = vld [vmem:[%s138 + $0xc60] sm:$0xff]
      %v1565 = vld [vmem:[%s138 + $0xc68] sm:$0xff]
      %v1566 = vld [vmem:[%s138 + $0xc70] sm:$0xff]
      %v1567 = vld [vmem:[%s138 + $0xc78] sm:$0xff]
      %v1568 = vld [vmem:[%s138 + $0xc80] sm:$0xff]
      %v1569 = vld [vmem:[%s138 + $0xc88] sm:$0xff]
      %v1570 = vld [vmem:[%s138 + $0xc90] sm:$0xff]
      %v1571 = vld [vmem:[%s138 + $0xc98] sm:$0xff]
      %v1572 = vld [vmem:[%s138 + $0xca0] sm:$0xff]
      %v1573 = vld [vmem:[%s138 + $0xca8] sm:$0xff]
      %v1574 = vld [vmem:[%s138 + $0xcb0] sm:$0xff]
      %v1575 = vld [vmem:[%s138 + $0xcb8] sm:$0xff]
      %v1576 = vld [vmem:[%s138 + $0xcc0] sm:$0xff]
      %v1577 = vld [vmem:[%s138 + $0xcc8] sm:$0xff]
      %v1578 = vld [vmem:[%s138 + $0xcd0] sm:$0xff]
      %v1579 = vld [vmem:[%s138 + $0xcd8] sm:$0xff]
      %v1580 = vld [vmem:[%s138 + $0xce0] sm:$0xff]
      %v1581 = vld [vmem:[%s138 + $0xce8] sm:$0xff]
      %v1582 = vld [vmem:[%s138 + $0xcf0] sm:$0xff]
      %v1583 = vld [vmem:[%s138 + $0xcf8] sm:$0xff]
      %v1584 = vld [vmem:[%s138 + $0xd00] sm:$0xff]
      %v1585 = vld [vmem:[%s138 + $0xd08] sm:$0xff]
      %v1586 = vld [vmem:[%s138 + $0xd10] sm:$0xff]
      %v1587 = vld [vmem:[%s138 + $0xd18] sm:$0xff]
      %v1588 = vld [vmem:[%s138 + $0xd20] sm:$0xff]
      %v1589 = vld [vmem:[%s138 + $0xd28] sm:$0xff]
      %v1590 = vld [vmem:[%s138 + $0xd30] sm:$0xff]
      %v1591 = vld [vmem:[%s138 + $0xd38] sm:$0xff]
      %v1592 = vld [vmem:[%s138 + $0xd40] sm:$0xff]
      %v1593 = vld [vmem:[%s138 + $0xd48] sm:$0xff]
      %v1594 = vld [vmem:[%s138 + $0xd50] sm:$0xff]
      %v1595 = vld [vmem:[%s138 + $0xd58] sm:$0xff]
      %v1596 = vld [vmem:[%s138 + $0xd60] sm:$0xff]
      %v1597 = vld [vmem:[%s138 + $0xd68] sm:$0xff]
      %v1598 = vld [vmem:[%s138 + $0xd70] sm:$0xff]
      %v1599 = vld [vmem:[%s138 + $0xd78] sm:$0xff]
      %v1600 = vld [vmem:[%s138 + $0xd80] sm:$0xff]
      %v1601 = vld [vmem:[%s138 + $0xd88] sm:$0xff]
      %v1602 = vld [vmem:[%s138 + $0xd90] sm:$0xff]
      %v1603 = vld [vmem:[%s138 + $0xd98] sm:$0xff]
      %v1604 = vld [vmem:[%s138 + $0xda0] sm:$0xff]
      %v1605 = vld [vmem:[%s138 + $0xda8] sm:$0xff]
      %v1606 = vld [vmem:[%s138 + $0xdb0] sm:$0xff]
      %v1607 = vld [vmem:[%s138 + $0xdb8] sm:$0xff]
      %v1608 = vld [vmem:[%s138 + $0xdc0] sm:$0xff]
      %v1609 = vld [vmem:[%s138 + $0xdc8] sm:$0xff]
      %v1610 = vld [vmem:[%s138 + $0xdd0] sm:$0xff]
      %v1611 = vld [vmem:[%s138 + $0xdd8] sm:$0xff]
      %v1612 = vld [vmem:[%s138 + $0xde0] sm:$0xff]
      %v1613 = vld [vmem:[%s138 + $0xde8] sm:$0xff]
      %v1614 = vld [vmem:[%s138 + $0xdf0] sm:$0xff]
      %v1615 = vld [vmem:[%s138 + $0xdf8] sm:$0xff]
      %v1616 = vld [vmem:[%s138 + $0xe00] sm:$0xff]
      %v1617 = vld [vmem:[%s138 + $0xe08] sm:$0xff]
      %v1618 = vld [vmem:[%s138 + $0xe10] sm:$0xff]
      %v1619 = vld [vmem:[%s138 + $0xe18] sm:$0xff]
      %v1620 = vld [vmem:[%s138 + $0xe20] sm:$0xff]
      %v1621 = vld [vmem:[%s138 + $0xe28] sm:$0xff]
      %v1622 = vld [vmem:[%s138 + $0xe30] sm:$0xff]
      %v1623 = vld [vmem:[%s138 + $0xe38] sm:$0xff]
      %v1624 = vld [vmem:[%s138 + $0xe40] sm:$0xff]
      %v1625 = vld [vmem:[%s138 + $0xe48] sm:$0xff]
      %v1626 = vld [vmem:[%s138 + $0xe50] sm:$0xff]
      %v1627 = vld [vmem:[%s138 + $0xe58] sm:$0xff]
      %v1628 = vld [vmem:[%s138 + $0xe60] sm:$0xff]
      %v1629 = vld [vmem:[%s138 + $0xe68] sm:$0xff]
      %v1630 = vld [vmem:[%s138 + $0xe70] sm:$0xff]
      %v1631 = vld [vmem:[%s138 + $0xe78] sm:$0xff]
      %v1632 = vld [vmem:[%s138 + $0xe80] sm:$0xff]
      %v1633 = vld [vmem:[%s138 + $0xe88] sm:$0xff]
      %v1634 = vld [vmem:[%s138 + $0xe90] sm:$0xff]
      %v1635 = vld [vmem:[%s138 + $0xe98] sm:$0xff]
      %v1636 = vld [vmem:[%s138 + $0xea0] sm:$0xff]
      %v1637 = vld [vmem:[%s138 + $0xea8] sm:$0xff]
      %v1638 = vld [vmem:[%s138 + $0xeb0] sm:$0xff]
      %v1639 = vld [vmem:[%s138 + $0xeb8] sm:$0xff]
      %v1640 = vld [vmem:[%s138 + $0xec0] sm:$0xff]
      %v1641 = vld [vmem:[%s138 + $0xec8] sm:$0xff]
      %v1642 = vld [vmem:[%s138 + $0xed0] sm:$0xff]
      %v1643 = vld [vmem:[%s138 + $0xed8] sm:$0xff]
      %v1644 = vld [vmem:[%s138 + $0xee0] sm:$0xff]
      %v1645 = vld [vmem:[%s138 + $0xee8] sm:$0xff]
      %v1646 = vld [vmem:[%s138 + $0xef0] sm:$0xff]
      %v1647 = vld [vmem:[%s138 + $0xef8] sm:$0xff]
      %v1648 = vld [vmem:[%s138 + $0xf00] sm:$0xff]
      %v1649 = vld [vmem:[%s138 + $0xf08] sm:$0xff]
      %v1650 = vld [vmem:[%s138 + $0xf10] sm:$0xff]
      %v1651 = vld [vmem:[%s138 + $0xf18] sm:$0xff]
      %v1652 = vld [vmem:[%s138 + $0xf20] sm:$0xff]
      %v1653 = vld [vmem:[%s138 + $0xf28] sm:$0xff]
      %v1654 = vld [vmem:[%s138 + $0xf30] sm:$0xff]
      %v1655 = vld [vmem:[%s138 + $0xf38] sm:$0xff]
      %v1656 = vld [vmem:[%s138 + $0xf40] sm:$0xff]
      %v1657 = vld [vmem:[%s138 + $0xf48] sm:$0xff]
      %v1658 = vld [vmem:[%s138 + $0xf50] sm:$0xff]
      %v1659 = vld [vmem:[%s138 + $0xf58] sm:$0xff]
      %v1660 = vld [vmem:[%s138 + $0xf60] sm:$0xff]
      %v1661 = vld [vmem:[%s138 + $0xf68] sm:$0xff]
      %v1662 = vld [vmem:[%s138 + $0xf70] sm:$0xff]
      %v1663 = vld [vmem:[%s138 + $0xf78] sm:$0xff]
      %v1664 = vld [vmem:[%s138 + $0xf80] sm:$0xff]
      %v1665 = vld [vmem:[%s138 + $0xf88] sm:$0xff]
      %v1666 = vld [vmem:[%s138 + $0xf90] sm:$0xff]
      %v1667 = vld [vmem:[%s138 + $0xf98] sm:$0xff]
      %v1668 = vld [vmem:[%s138 + $0xfa0] sm:$0xff]
      %v1669 = vld [vmem:[%s138 + $0xfa8] sm:$0xff]
      %v1670 = vld [vmem:[%s138 + $0xfb0] sm:$0xff]
      %v1671 = vld [vmem:[%s138 + $0xfb8] sm:$0xff]
      %v1672 = vld [vmem:[%s138 + $0xfc0] sm:$0xff]
      %v1673 = vld [vmem:[%s138 + $0xfc8] sm:$0xff]
      %v1674 = vld [vmem:[%s138 + $0xfd0] sm:$0xff]
      %v1675 = vld [vmem:[%s138 + $0xfd8] sm:$0xff]
      %v1676 = vld [vmem:[%s138 + $0xfe0] sm:$0xff]
      %v1677 = vld [vmem:[%s138 + $0xfe8] sm:$0xff]
      %v1678 = vld [vmem:[%s138 + $0xff0] sm:$0xff]
      %v1679 = vld [vmem:[%s138 + $0xff8] sm:$0xff]
      %1680 = vmatprep.subr.mxu0 0.0
      %1681 = vmatpush1.msra.mxu0 %v1168
      %1682 = vmatprep.subr.mxu0 0.0
      %1683 = vmatpush1.msra.mxu0 %v1169
      %1684 = vmatprep.subr.mxu0 0.0
      %1685 = vmatpush1.msra.mxu0 %v1170
      %1686 = vmatprep.subr.mxu0 0.0
      %1687 = vmatpush1.msra.mxu0 %v1171
      %1688 = vmatprep.subr.mxu0 0.0
      %1689 = vmatpush1.msra.mxu0 %v1172
      %1690 = vmatprep.subr.mxu0 0.0
      %1691 = vmatpush1.msra.mxu0 %v1173
      %1692 = vmatprep.subr.mxu0 0.0
      %1693 = vmatpush1.msra.mxu0 %v1174
      %1694 = vmatprep.subr.mxu0 0.0
      %1695 = vmatpush1.msra.mxu0 %v1175
      %1696 = vmatprep.subr.mxu0 0.0
      %1697 = vmatpush1.msra.mxu0 %v1176
      %1698 = vmatprep.subr.mxu0 0.0
      %1699 = vmatpush1.msra.mxu0 %v1177
      %1700 = vmatprep.subr.mxu0 0.0
      %1701 = vmatpush1.msra.mxu0 %v1178
      %1702 = vmatprep.subr.mxu0 0.0
      %1703 = vmatpush1.msra.mxu0 %v1179
      %1704 = vmatprep.subr.mxu0 0.0
      %1705 = vmatpush1.msra.mxu0 %v1180
      %1706 = vmatprep.subr.mxu0 0.0
      %1707 = vmatpush1.msra.mxu0 %v1181
      %1708 = vmatprep.subr.mxu0 0.0
      %1709 = vmatpush1.msra.mxu0 %v1182
      %1710 = vmatprep.subr.mxu0 0.0
      %1711 = vmatpush1.msra.mxu0 %v1183
      %1712 = vmatprep.subr.mxu0 0.0
      %1713 = vmatpush1.msra.mxu0 %v1184
      %1714 = vmatprep.subr.mxu0 0.0
      %1715 = vmatpush1.msra.mxu0 %v1185
      %1716 = vmatprep.subr.mxu0 0.0
      %1717 = vmatpush1.msra.mxu0 %v1186
      %1718 = vmatprep.subr.mxu0 0.0
      %1719 = vmatpush1.msra.mxu0 %v1187
      %1720 = vmatprep.subr.mxu0 0.0
      %1721 = vmatpush1.msra.mxu0 %v1188
      %1722 = vmatprep.subr.mxu0 0.0
      %1723 = vmatpush1.msra.mxu0 %v1189
      %1724 = vmatprep.subr.mxu0 0.0
      %1725 = vmatpush1.msra.mxu0 %v1190
      %1726 = vmatprep.subr.mxu0 0.0
      %1727 = vmatpush1.msra.mxu0 %v1191
      %1728 = vmatprep.subr.mxu0 0.0
      %1729 = vmatpush1.msra.mxu0 %v1192
      %1730 = vmatprep.subr.mxu0 0.0
      %1731 = vmatpush1.msra.mxu0 %v1193
      %1732 = vmatprep.subr.mxu0 0.0
      %1733 = vmatpush1.msra.mxu0 %v1194
      %1734 = vmatprep.subr.mxu0 0.0
      %1735 = vmatpush1.msra.mxu0 %v1195
      %1736 = vmatprep.subr.mxu0 0.0
      %1737 = vmatpush1.msra.mxu0 %v1196
      %1738 = vmatprep.subr.mxu0 0.0
      %1739 = vmatpush1.msra.mxu0 %v1197
      %1740 = vmatprep.subr.mxu0 0.0
      %1741 = vmatpush1.msra.mxu0 %v1198
      %1742 = vmatprep.subr.mxu0 0.0
      %1743 = vmatpush1.msra.mxu0 %v1199
      %1744 = vmatprep.mubr.f32.mxu0 %v145
      %1745 = vmatmul.mubr.f32.gmra.mrb[0].mxu0 %v144
      %v1746 = vpop.f32.mrb[0].mxu0
      %v1747 = vadd.f32 0.0, %v1746
      %v1748 = vpop.f32.mrb[0].mxu0
      %1749 = vmatprep.mubr.f32.mxu0 %v177
      %1750 = vmatmul.mubr.f32.gmra.mrb[0].mxu0 %v176
      %v1751 = vpop.f32.mrb[0].mxu0
      %v1752 = vadd.f32 0.0, %v1751
      %v1753 = vpop.f32.mrb[0].mxu0
      %1754 = vmatprep.mubr.f32.mxu0 %v209
      %1755 = vmatmul.mubr.f32.gmra.mrb[0].mxu0 %v208
      %v1756 = vpop.f32.mrb[0].mxu0
      %v1757 = vadd.f32 0.0, %v1756
      %v1758 = vpop.f32.mrb[0].mxu0
      %1759 = vmatprep.mubr.f32.mxu0 %v241
      %1760 = vmatmul.mubr.f32.gmra.mrb[0].mxu0 %v240
      %v1761 = vpop.f32.mrb[0].mxu0
      %v1762 = vadd.f32 0.0, %v1761
      %v1763 = vpop.f32.mrb[0].mxu0
      %1764 = vmatprep.mubr.f32.mxu0 %v273
      %1765 = vmatmul.mubr.f32.gmra.mrb[0].mxu0 %v272
      %v1766 = vpop.f32.mrb[0].mxu0
      %v1767 = vadd.f32 0.0, %v1766
      %v1768 = vpop.f32.mrb[0].mxu0
      %1769 = vmatprep.mubr.f32.mxu0 %v305
      %1770 = vmatmul.mubr.f32.gmra.mrb[0].mxu0 %v304
      %v1771 = vpop.f32.mrb[0].mxu0
      %v1772 = vadd.f32 0.0, %v1771
      %v1773 = vpop.f32.mrb[0].mxu0
      %1774 = vmatprep.mubr.f32.mxu0 %v337
      %1775 = vmatmul.mubr.f32.gmra.mrb[0].mxu0 %v336
      %v1776 = vpop.f32.mrb[0].mxu0
      %v1777 = vadd.f32 0.0, %v1776
      %v1778 = vpop.f32.mrb[0].mxu0
      %1779 = vmatprep.mubr.f32.mxu0 %v369
      %1780 = vmatmul.mubr.f32.gmra.mrb[0].mxu0 %v368
      %v1781 = vpop.f32.mrb[0].mxu0
      %v1782 = vadd.f32 0.0, %v1781
      %v1783 = vpop.f32.mrb[0].mxu0
      %1784 = vmatprep.mubr.f32.mxu0 %v401
      %1785 = vmatmul.mubr.f32.gmra.mrb[0].mxu0 %v400
      %v1786 = vpop.f32.mrb[0].mxu0
      %v1787 = vadd.f32 0.0, %v1786
      %v1788 = vpop.f32.mrb[0].mxu0
      %1789 = vmatprep.mubr.f32.mxu0 %v433
      %1790 = vmatmul.mubr.f32.gmra.mrb[0].mxu0 %v432
      %v1791 = vpop.f32.mrb[0].mxu0
      %v1792 = vadd.f32 0.0, %v1791
      %v1793 = vpop.f32.mrb[0].mxu0
      %1794 = vmatprep.mubr.f32.mxu0 %v465
      %1795 = vmatmul.mubr.f32.gmra.mrb[0].mxu0 %v464
      %v1796 = vpop.f32.mrb[0].mxu0
      %v1797 = vadd.f32 0.0, %v1796
      %v1798 = vpop.f32.mrb[0].mxu0
      %1799 = vmatprep.mubr.f32.mxu0 %v497
      %1800 = vmatmul.mubr.f32.gmra.mrb[0].mxu0 %v496
      %v1801 = vpop.f32.mrb[0].mxu0
      %v1802 = vadd.f32 0.0, %v1801
      %v1803 = vpop.f32.mrb[0].mxu0
      %1804 = vmatprep.mubr.f32.mxu0 %v529
      %1805 = vmatmul.mubr.f32.gmra.mrb[0].mxu0 %v528
      %v1806 = vpop.f32.mrb[0].mxu0
      %v1807 = vadd.f32 0.0, %v1806
      %v1808 = vpop.f32.mrb[0].mxu0
      %1809 = vmatprep.mubr.f32.mxu0 %v561
      %1810 = vmatmul.mubr.f32.gmra.mrb[0].mxu0 %v560
      %v1811 = vpop.f32.mrb[0].mxu0
      %v1812 = vadd.f32 0.0, %v1811
      %v1813 = vpop.f32.mrb[0].mxu0
      %1814 = vmatprep.mubr.f32.mxu0 %v593
      %1815 = vmatmul.mubr.f32.gmra.mrb[0].mxu0 %v592
      %v1816 = vpop.f32.mrb[0].mxu0
      %v1817 = vadd.f32 0.0, %v1816
      %v1818 = vpop.f32.mrb[0].mxu0
      %1819 = vmatprep.mubr.f32.mxu0 %v625
      %1820 = vmatmul.mubr.f32.gmra.mrb[0].mxu0 %v624
      %v1821 = vpop.f32.mrb[0].mxu0
      %v1822 = vadd.f32 0.0, %v1821
      %v1823 = vpop.f32.mrb[0].mxu0
      %1824 = vmatprep.mubr.f32.mxu0 %v657
      %1825 = vmatmul.mubr.f32.gmra.mrb[0].mxu0 %v656
      %v1826 = vpop.f32.mrb[0].mxu0
      %v1827 = vadd.f32 0.0, %v1826
      %v1828 = vpop.f32.mrb[0].mxu0
      %1829 = vmatprep.mubr.f32.mxu0 %v689
      %1830 = vmatmul.mubr.f32.gmra.mrb[0].mxu0 %v688
      %v1831 = vpop.f32.mrb[0].mxu0
      %v1832 = vadd.f32 0.0, %v1831
      %v1833 = vpop.f32.mrb[0].mxu0
      %1834 = vmatprep.mubr.f32.mxu0 %v721
      %1835 = vmatmul.mubr.f32.gmra.mrb[0].mxu0 %v720
      %v1836 = vpop.f32.mrb[0].mxu0
      %v1837 = vadd.f32 0.0, %v1836
      %v1838 = vpop.f32.mrb[0].mxu0
      %1839 = vmatprep.mubr.f32.mxu0 %v753
      %1840 = vmatmul.mubr.f32.gmra.mrb[0].mxu0 %v752
      %v1841 = vpop.f32.mrb[0].mxu0
      %v1842 = vadd.f32 0.0, %v1841
      %v1843 = vpop.f32.mrb[0].mxu0
      %1844 = vmatprep.mubr.f32.mxu0 %v785
      %1845 = vmatmul.mubr.f32.gmra.mrb[0].mxu0 %v784
      %v1846 = vpop.f32.mrb[0].mxu0
      %v1847 = vadd.f32 0.0, %v1846
      %v1848 = vpop.f32.mrb[0].mxu0
      %1849 = vmatprep.mubr.f32.mxu0 %v817
      %1850 = vmatmul.mubr.f32.gmra.mrb[0].mxu0 %v816
      %v1851 = vpop.f32.mrb[0].mxu0
      %v1852 = vadd.f32 0.0, %v1851
      %v1853 = vpop.f32.mrb[0].mxu0
      %1854 = vmatprep.mubr.f32.mxu0 %v849
      %1855 = vmatmul.mubr.f32.gmra.mrb[0].mxu0 %v848
      %v1856 = vpop.f32.mrb[0].mxu0
      %v1857 = vadd.f32 0.0, %v1856
      %v1858 = vpop.f32.mrb[0].mxu0
      %1859 = vmatprep.mubr.f32.mxu0 %v881
      %1860 = vmatmul.mubr.f32.gmra.mrb[0].mxu0 %v880
      %v1861 = vpop.f32.mrb[0].mxu0
      %v1862 = vadd.f32 0.0, %v1861
      %v1863 = vpop.f32.mrb[0].mxu0
      %1864 = vmatprep.mubr.f32.mxu0 %v913
      %1865 = vmatmul.mubr.f32.gmra.mrb[0].mxu0 %v912
      %v1866 = vpop.f32.mrb[0].mxu0
      %v1867 = vadd.f32 0.0, %v1866
      %v1868 = vpop.f32.mrb[0].mxu0
      %1869 = vmatprep.mubr.f32.mxu0 %v945
      %1870 = vmatmul.mubr.f32.gmra.mrb[0].mxu0 %v944
      %v1871 = vpop.f32.mrb[0].mxu0
      %v1872 = vadd.f32 0.0, %v1871
      %v1873 = vpop.f32.mrb[0].mxu0
      %1874 = vmatprep.mubr.f32.mxu0 %v977
      %1875 = vmatmul.mubr.f32.gmra.mrb[0].mxu0 %v976
      %v1876 = vpop.f32.mrb[0].mxu0
      %v1877 = vadd.f32 0.0, %v1876
      %v1878 = vpop.f32.mrb[0].mxu0
      %1879 = vmatprep.mubr.f32.mxu0 %v1009
      %1880 = vmatmul.mubr.f32.gmra.mrb[0].mxu0 %v1008
      %v1881 = vpop.f32.mrb[0].mxu0
      %v1882 = vadd.f32 0.0, %v1881
      %v1883 = vpop.f32.mrb[0].mxu0
      %1884 = vmatprep.mubr.f32.mxu0 %v1041
      %1885 = vmatmul.mubr.f32.gmra.mrb[0].mxu0 %v1040
      %v1886 = vpop.f32.mrb[0].mxu0
      %v1887 = vadd.f32 0.0, %v1886
      %v1888 = vpop.f32.mrb[0].mxu0
      %1889 = vmatprep.mubr.f32.mxu0 %v1073
      %1890 = vmatmul.mubr.f32.gmra.mrb[0].mxu0 %v1072
      %v1891 = vpop.f32.mrb[0].mxu0
      %v1892 = vadd.f32 0.0, %v1891
      %v1893 = vpop.f32.mrb[0].mxu0
      %1894 = vmatprep.mubr.f32.mxu0 %v1105
      %1895 = vmatmul.mubr.f32.gmra.mrb[0].mxu0 %v1104
      %v1896 = vpop.f32.mrb[0].mxu0
      %v1897 = vadd.f32 0.0, %v1896
      %v1898 = vpop.f32.mrb[0].mxu0
      %1899 = vmatprep.mubr.f32.mxu0 %v1137
      %1900 = vmatmul.mubr.f32.gmra.mrb[0].mxu0 %v1136
      %v1901 = vpop.f32.mrb[0].mxu0
      %v1902 = vadd.f32 0.0, %v1901
      %v1903 = vpop.f32.mrb[0].mxu0
      %1904 = vdwg.mxu0
      %1905 = vmatprep.subr.mxu0 0.0
      %1906 = vmatpush1.msra.mxu0 %v1200
      %1907 = vmatprep.subr.mxu0 0.0
      %1908 = vmatpush1.msra.mxu0 %v1201
      %1909 = vmatprep.subr.mxu0 0.0
      %1910 = vmatpush1.msra.mxu0 %v1202
      %1911 = vmatprep.subr.mxu0 0.0
      %1912 = vmatpush1.msra.mxu0 %v1203
      %1913 = vmatprep.subr.mxu0 0.0
      %1914 = vmatpush1.msra.mxu0 %v1204
      %1915 = vmatprep.subr.mxu0 0.0
      %1916 = vmatpush1.msra.mxu0 %v1205
      %1917 = vmatprep.subr.mxu0 0.0
      %1918 = vmatpush1.msra.mxu0 %v1206
      %1919 = vmatprep.subr.mxu0 0.0
      %1920 = vmatpush1.msra.mxu0 %v1207
      %1921 = vmatprep.subr.mxu0 0.0
      %1922 = vmatpush1.msra.mxu0 %v1208
      %1923 = vmatprep.subr.mxu0 0.0
      %1924 = vmatpush1.msra.mxu0 %v1209
      %1925 = vmatprep.subr.mxu0 0.0
      %1926 = vmatpush1.msra.mxu0 %v1210
      %1927 = vmatprep.subr.mxu0 0.0
      %1928 = vmatpush1.msra.mxu0 %v1211
      %1929 = vmatprep.subr.mxu0 0.0
      %1930 = vmatpush1.msra.mxu0 %v1212
      %1931 = vmatprep.subr.mxu0 0.0
      %1932 = vmatpush1.msra.mxu0 %v1213
      %1933 = vmatprep.subr.mxu0 0.0
      %1934 = vmatpush1.msra.mxu0 %v1214
      %1935 = vmatprep.subr.mxu0 0.0
      %1936 = vmatpush1.msra.mxu0 %v1215
      %1937 = vmatprep.subr.mxu0 0.0
      %1938 = vmatpush1.msra.mxu0 %v1216
      %1939 = vmatprep.subr.mxu0 0.0
      %1940 = vmatpush1.msra.mxu0 %v1217
      %1941 = vmatprep.subr.mxu0 0.0
      %1942 = vmatpush1.msra.mxu0 %v1218
      %1943 = vmatprep.subr.mxu0 0.0
      %1944 = vmatpush1.msra.mxu0 %v1219
      %1945 = vmatprep.subr.mxu0 0.0
      %1946 = vmatpush1.msra.mxu0 %v1220
      %1947 = vmatprep.subr.mxu0 0.0
      %1948 = vmatpush1.msra.mxu0 %v1221
      %1949 = vmatprep.subr.mxu0 0.0
      %1950 = vmatpush1.msra.mxu0 %v1222
      %1951 = vmatprep.subr.mxu0 0.0
      %1952 = vmatpush1.msra.mxu0 %v1223
      %1953 = vmatprep.subr.mxu0 0.0
      %1954 = vmatpush1.msra.mxu0 %v1224
      %1955 = vmatprep.subr.mxu0 0.0
      %1956 = vmatpush1.msra.mxu0 %v1225
      %1957 = vmatprep.subr.mxu0 0.0
      %1958 = vmatpush1.msra.mxu0 %v1226
      %1959 = vmatprep.subr.mxu0 0.0
      %1960 = vmatpush1.msra.mxu0 %v1227
      %1961 = vmatprep.subr.mxu0 0.0
      %1962 = vmatpush1.msra.mxu0 %v1228
      %1963 = vmatprep.subr.mxu0 0.0
      %1964 = vmatpush1.msra.mxu0 %v1229
      %1965 = vmatprep.subr.mxu0 0.0
      %1966 = vmatpush1.msra.mxu0 %v1230
      %1967 = vmatprep.subr.mxu0 0.0
      %1968 = vmatpush1.msra.mxu0 %v1231
      %1969 = vmatprep.mubr.f32.mxu0 %v147
      %1970 = vmatmul.mubr.f32.gmra.mrb[0].mxu0 %v146
      %v1971 = vpop.f32.mrb[0].mxu0
      %v1972 = vadd.f32 %v1747, %v1971
      %v1973 = vpop.f32.mrb[0].mxu0
      %1974 = vmatprep.mubr.f32.mxu0 %v179
      %1975 = vmatmul.mubr.f32.gmra.mrb[0].mxu0 %v178
      %v1976 = vpop.f32.mrb[0].mxu0
      %v1977 = vadd.f32 %v1752, %v1976
      %v1978 = vpop.f32.mrb[0].mxu0
      %1979 = vmatprep.mubr.f32.mxu0 %v211
      %1980 = vmatmul.mubr.f32.gmra.mrb[0].mxu0 %v210
      %v1981 = vpop.f32.mrb[0].mxu0
      %v1982 = vadd.f32 %v1757, %v1981
      %v1983 = vpop.f32.mrb[0].mxu0
      %1984 = vmatprep.mubr.f32.mxu0 %v243
      %1985 = vmatmul.mubr.f32.gmra.mrb[0].mxu0 %v242
      %v1986 = vpop.f32.mrb[0].mxu0
      %v1987 = vadd.f32 %v1762, %v1986
      %v1988 = vpop.f32.mrb[0].mxu0
      %1989 = vmatprep.mubr.f32.mxu0 %v275
      %1990 = vmatmul.mubr.f32.gmra.mrb[0].mxu0 %v274
      %v1991 = vpop.f32.mrb[0].mxu0
      %v1992 = vadd.f32 %v1767, %v1991
      %v1993 = vpop.f32.mrb[0].mxu0
      %1994 = vmatprep.mubr.f32.mxu0 %v307
      %1995 = vmatmul.mubr.f32.gmra.mrb[0].mxu0 %v306
      %v1996 = vpop.f32.mrb[0].mxu0
      %v1997 = vadd.f32 %v1772, %v1996
      %v1998 = vpop.f32.mrb[0].mxu0
      %1999 = vmatprep.mubr.f32.mxu0 %v339
      %2000 = vmatmul.mubr.f32.gmra.mrb[0].mxu0 %v338
      %v2001 = vpop.f32.mrb[0].mxu0
      %v2002 = vadd.f32 %v1777, %v2001
      %v2003 = vpop.f32.mrb[0].mxu0
      %2004 = vmatprep.mubr.f32.mxu0 %v371
      %2005 = vmatmul.mubr.f32.gmra.mrb[0].mxu0 %v370
      %v2006 = vpop.f32.mrb[0].mxu0
      %v2007 = vadd.f32 %v1782, %v2006
      %v2008 = vpop.f32.mrb[0].mxu0
      %2009 = vmatprep.mubr.f32.mxu0 %v403
      %2010 = vmatmul.mubr.f32.gmra.mrb[0].mxu0 %v402
      %v2011 = vpop.f32.mrb[0].mxu0
      %v2012 = vadd.f32 %v1787, %v2011
      %v2013 = vpop.f32.mrb[0].mxu0
      %2014 = vmatprep.mubr.f32.mxu0 %v435
      %2015 = vmatmul.mubr.f32.gmra.mrb[0].mxu0 %v434
      %v2016 = vpop.f32.mrb[0].mxu0
      %v2017 = vadd.f32 %v1792, %v2016
      %v2018 = vpop.f32.mrb[0].mxu0
      %2019 = vmatprep.mubr.f32.mxu0 %v467
      %2020 = vmatmul.mubr.f32.gmra.mrb[0].mxu0 %v466
      %v2021 = vpop.f32.mrb[0].mxu0
      %v2022 = vadd.f32 %v1797, %v2021
      %v2023 = vpop.f32.mrb[0].mxu0
      %2024 = vmatprep.mubr.f32.mxu0 %v499
      %2025 = vmatmul.mubr.f32.gmra.mrb[0].mxu0 %v498
      %v2026 = vpop.f32.mrb[0].mxu0
      %v2027 = vadd.f32 %v1802, %v2026
      %v2028 = vpop.f32.mrb[0].mxu0
      %2029 = vmatprep.mubr.f32.mxu0 %v531
      %2030 = vmatmul.mubr.f32.gmra.mrb[0].mxu0 %v530
      %v2031 = vpop.f32.mrb[0].mxu0
      %v2032 = vadd.f32 %v1807, %v2031
      %v2033 = vpop.f32.mrb[0].mxu0
      %2034 = vmatprep.mubr.f32.mxu0 %v563
      %2035 = vmatmul.mubr.f32.gmra.mrb[0].mxu0 %v562
      %v2036 = vpop.f32.mrb[0].mxu0
      %v2037 = vadd.f32 %v1812, %v2036
      %v2038 = vpop.f32.mrb[0].mxu0
      %2039 = vmatprep.mubr.f32.mxu0 %v595
      %2040 = vmatmul.mubr.f32.gmra.mrb[0].mxu0 %v594
      %v2041 = vpop.f32.mrb[0].mxu0
      %v2042 = vadd.f32 %v1817, %v2041
      %v2043 = vpop.f32.mrb[0].mxu0
      %2044 = vmatprep.mubr.f32.mxu0 %v627
      %2045 = vmatmul.mubr.f32.gmra.mrb[0].mxu0 %v626
      %v2046 = vpop.f32.mrb[0].mxu0
      %v2047 = vadd.f32 %v1822, %v2046
      %v2048 = vpop.f32.mrb[0].mxu0
      %2049 = vmatprep.mubr.f32.mxu0 %v659
      %2050 = vmatmul.mubr.f32.gmra.mrb[0].mxu0 %v658
      %v2051 = vpop.f32.mrb[0].mxu0
      %v2052 = vadd.f32 %v1827, %v2051
      %v2053 = vpop.f32.mrb[0].mxu0
      %2054 = vmatprep.mubr.f32.mxu0 %v691
      %2055 = vmatmul.mubr.f32.gmra.mrb[0].mxu0 %v690
      %v2056 = vpop.f32.mrb[0].mxu0
      %v2057 = vadd.f32 %v1832, %v2056
      %v2058 = vpop.f32.mrb[0].mxu0
      %2059 = vmatprep.mubr.f32.mxu0 %v723
      %2060 = vmatmul.mubr.f32.gmra.mrb[0].mxu0 %v722
      %v2061 = vpop.f32.mrb[0].mxu0
      %v2062 = vadd.f32 %v1837, %v2061
      %v2063 = vpop.f32.mrb[0].mxu0
      %2064 = vmatprep.mubr.f32.mxu0 %v755
      %2065 = vmatmul.mubr.f32.gmra.mrb[0].mxu0 %v754
      %v2066 = vpop.f32.mrb[0].mxu0
      %v2067 = vadd.f32 %v1842, %v2066
      %v2068 = vpop.f32.mrb[0].mxu0
      %2069 = vmatprep.mubr.f32.mxu0 %v787
      %2070 = vmatmul.mubr.f32.gmra.mrb[0].mxu0 %v786
      %v2071 = vpop.f32.mrb[0].mxu0
      %v2072 = vadd.f32 %v1847, %v2071
      %v2073 = vpop.f32.mrb[0].mxu0
      %2074 = vmatprep.mubr.f32.mxu0 %v819
      %2075 = vmatmul.mubr.f32.gmra.mrb[0].mxu0 %v818
      %v2076 = vpop.f32.mrb[0].mxu0
      %v2077 = vadd.f32 %v1852, %v2076
      %v2078 = vpop.f32.mrb[0].mxu0
      %2079 = vmatprep.mubr.f32.mxu0 %v851
      %2080 = vmatmul.mubr.f32.gmra.mrb[0].mxu0 %v850
      %v2081 = vpop.f32.mrb[0].mxu0
      %v2082 = vadd.f32 %v1857, %v2081
      %v2083 = vpop.f32.mrb[0].mxu0
      %2084 = vmatprep.mubr.f32.mxu0 %v883
      %2085 = vmatmul.mubr.f32.gmra.mrb[0].mxu0 %v882
      %v2086 = vpop.f32.mrb[0].mxu0
      %v2087 = vadd.f32 %v1862, %v2086
      %v2088 = vpop.f32.mrb[0].mxu0
      %2089 = vmatprep.mubr.f32.mxu0 %v915
      %2090 = vmatmul.mubr.f32.gmra.mrb[0].mxu0 %v914
      %v2091 = vpop.f32.mrb[0].mxu0
      %v2092 = vadd.f32 %v1867, %v2091
      %v2093 = vpop.f32.mrb[0].mxu0
      %2094 = vmatprep.mubr.f32.mxu0 %v947
      %2095 = vmatmul.mubr.f32.gmra.mrb[0].mxu0 %v946
      %v2096 = vpop.f32.mrb[0].mxu0
      %v2097 = vadd.f32 %v1872, %v2096
      %v2098 = vpop.f32.mrb[0].mxu0
      %2099 = vmatprep.mubr.f32.mxu0 %v979
      %2100 = vmatmul.mubr.f32.gmra.mrb[0].mxu0 %v978
      %v2101 = vpop.f32.mrb[0].mxu0
      %v2102 = vadd.f32 %v1877, %v2101
      %v2103 = vpop.f32.mrb[0].mxu0
      %2104 = vmatprep.mubr.f32.mxu0 %v1011
      %2105 = vmatmul.mubr.f32.gmra.mrb[0].mxu0 %v1010
      %v2106 = vpop.f32.mrb[0].mxu0
      %v2107 = vadd.f32 %v1882, %v2106
      %v2108 = vpop.f32.mrb[0].mxu0
      %2109 = vmatprep.mubr.f32.mxu0 %v1043
      %2110 = vmatmul.mubr.f32.gmra.mrb[0].mxu0 %v1042
      %v2111 = vpop.f32.mrb[0].mxu0
      %v2112 = vadd.f32 %v1887, %v2111
      %v2113 = vpop.f32.mrb[0].mxu0
      %2114 = vmatprep.mubr.f32.mxu0 %v1075
      %2115 = vmatmul.mubr.f32.gmra.mrb[0].mxu0 %v1074
      %v2116 = vpop.f32.mrb[0].mxu0
      %v2117 = vadd.f32 %v1892, %v2116
      %v2118 = vpop.f32.mrb[0].mxu0
      %2119 = vmatprep.mubr.f32.mxu0 %v1107
      %2120 = vmatmul.mubr.f32.gmra.mrb[0].mxu0 %v1106
      %v2121 = vpop.f32.mrb[0].mxu0
      %v2122 = vadd.f32 %v1897, %v2121
      %v2123 = vpop.f32.mrb[0].mxu0
      %2124 = vmatprep.mubr.f32.mxu0 %v1139
      %2125 = vmatmul.mubr.f32.gmra.mrb[0].mxu0 %v1138
      %v2126 = vpop.f32.mrb[0].mxu0
      %v2127 = vadd.f32 %v1902, %v2126
      %v2128 = vpop.f32.mrb[0].mxu0
      %2129 = vdwg.mxu0
      %2130 = vmatprep.subr.mxu0 0.0
      %2131 = vmatpush1.msra.mxu0 %v1232
      %2132 = vmatprep.subr.mxu0 0.0
      %2133 = vmatpush1.msra.mxu0 %v1233
      %2134 = vmatprep.subr.mxu0 0.0
      %2135 = vmatpush1.msra.mxu0 %v1234
      %2136 = vmatprep.subr.mxu0 0.0
      %2137 = vmatpush1.msra.mxu0 %v1235
      %2138 = vmatprep.subr.mxu0 0.0
      %2139 = vmatpush1.msra.mxu0 %v1236
      %2140 = vmatprep.subr.mxu0 0.0
      %2141 = vmatpush1.msra.mxu0 %v1237
      %2142 = vmatprep.subr.mxu0 0.0
      %2143 = vmatpush1.msra.mxu0 %v1238
      %2144 = vmatprep.subr.mxu0 0.0
      %2145 = vmatpush1.msra.mxu0 %v1239
      %2146 = vmatprep.subr.mxu0 0.0
      %2147 = vmatpush1.msra.mxu0 %v1240
      %2148 = vmatprep.subr.mxu0 0.0
      %2149 = vmatpush1.msra.mxu0 %v1241
      %2150 = vmatprep.subr.mxu0 0.0
      %2151 = vmatpush1.msra.mxu0 %v1242
      %2152 = vmatprep.subr.mxu0 0.0
      %2153 = vmatpush1.msra.mxu0 %v1243
      %2154 = vmatprep.subr.mxu0 0.0
      %2155 = vmatpush1.msra.mxu0 %v1244
      %2156 = vmatprep.subr.mxu0 0.0
      %2157 = vmatpush1.msra.mxu0 %v1245
      %2158 = vmatprep.subr.mxu0 0.0
      %2159 = vmatpush1.msra.mxu0 %v1246
      %2160 = vmatprep.subr.mxu0 0.0
      %2161 = vmatpush1.msra.mxu0 %v1247
      %2162 = vmatprep.subr.mxu0 0.0
      %2163 = vmatpush1.msra.mxu0 %v1248
      %2164 = vmatprep.subr.mxu0 0.0
      %2165 = vmatpush1.msra.mxu0 %v1249
      %2166 = vmatprep.subr.mxu0 0.0
      %2167 = vmatpush1.msra.mxu0 %v1250
      %2168 = vmatprep.subr.mxu0 0.0
      %2169 = vmatpush1.msra.mxu0 %v1251
      %2170 = vmatprep.subr.mxu0 0.0
      %2171 = vmatpush1.msra.mxu0 %v1252
      %2172 = vmatprep.subr.mxu0 0.0
      %2173 = vmatpush1.msra.mxu0 %v1253
      %2174 = vmatprep.subr.mxu0 0.0
      %2175 = vmatpush1.msra.mxu0 %v1254
      %2176 = vmatprep.subr.mxu0 0.0
      %2177 = vmatpush1.msra.mxu0 %v1255
      %2178 = vmatprep.subr.mxu0 0.0
      %2179 = vmatpush1.msra.mxu0 %v1256
      %2180 = vmatprep.subr.mxu0 0.0
      %2181 = vmatpush1.msra.mxu0 %v1257
      %2182 = vmatprep.subr.mxu0 0.0
      %2183 = vmatpush1.msra.mxu0 %v1258
      %2184 = vmatprep.subr.mxu0 0.0
      %2185 = vmatpush1.msra.mxu0 %v1259
      %2186 = vmatprep.subr.mxu0 0.0
      %2187 = vmatpush1.msra.mxu0 %v1260
      %2188 = vmatprep.subr.mxu0 0.0
      %2189 = vmatpush1.msra.mxu0 %v1261
      %2190 = vmatprep.subr.mxu0 0.0
      %2191 = vmatpush1.msra.mxu0 %v1262
      %2192 = vmatprep.subr.mxu0 0.0
      %2193 = vmatpush1.msra.mxu0 %v1263
      %2194 = vmatprep.mubr.f32.mxu0 %v149
      %2195 = vmatmul.mubr.f32.gmra.mrb[0].mxu0 %v148
      %v2196 = vpop.f32.mrb[0].mxu0
      %v2197 = vadd.f32 %v1972, %v2196
      %v2198 = vpop.f32.mrb[0].mxu0
      %2199 = vmatprep.mubr.f32.mxu0 %v181
      %2200 = vmatmul.mubr.f32.gmra.mrb[0].mxu0 %v180
      %v2201 = vpop.f32.mrb[0].mxu0
      %v2202 = vadd.f32 %v1977, %v2201
      %v2203 = vpop.f32.mrb[0].mxu0
      %2204 = vmatprep.mubr.f32.mxu0 %v213
      %2205 = vmatmul.mubr.f32.gmra.mrb[0].mxu0 %v212
      %v2206 = vpop.f32.mrb[0].mxu0
      %v2207 = vadd.f32 %v1982, %v2206
      %v2208 = vpop.f32.mrb[0].mxu0
      %2209 = vmatprep.mubr.f32.mxu0 %v245
      %2210 = vmatmul.mubr.f32.gmra.mrb[0].mxu0 %v244
      %v2211 = vpop.f32.mrb[0].mxu0
      %v2212 = vadd.f32 %v1987, %v2211
      %v2213 = vpop.f32.mrb[0].mxu0
      %2214 = vmatprep.mubr.f32.mxu0 %v277
      %2215 = vmatmul.mubr.f32.gmra.mrb[0].mxu0 %v276
      %v2216 = vpop.f32.mrb[0].mxu0
      %v2217 = vadd.f32 %v1992, %v2216
      %v2218 = vpop.f32.mrb[0].mxu0
      %2219 = vmatprep.mubr.f32.mxu0 %v309
      %2220 = vmatmul.mubr.f32.gmra.mrb[0].mxu0 %v308
      %v2221 = vpop.f32.mrb[0].mxu0
      %v2222 = vadd.f32 %v1997, %v2221
      %v2223 = vpop.f32.mrb[0].mxu0
      %2224 = vmatprep.mubr.f32.mxu0 %v341
      %2225 = vmatmul.mubr.f32.gmra.mrb[0].mxu0 %v340
      %v2226 = vpop.f32.mrb[0].mxu0
      %v2227 = vadd.f32 %v2002, %v2226
      %v2228 = vpop.f32.mrb[0].mxu0
      %2229 = vmatprep.mubr.f32.mxu0 %v373
      %2230 = vmatmul.mubr.f32.gmra.mrb[0].mxu0 %v372
      %v2231 = vpop.f32.mrb[0].mxu0
      %v2232 = vadd.f32 %v2007, %v2231
      %v2233 = vpop.f32.mrb[0].mxu0
      %2234 = vmatprep.mubr.f32.mxu0 %v405
      %2235 = vmatmul.mubr.f32.gmra.mrb[0].mxu0 %v404
      %v2236 = vpop.f32.mrb[0].mxu0
      %v2237 = vadd.f32 %v2012, %v2236
      %v2238 = vpop.f32.mrb[0].mxu0
      %2239 = vmatprep.mubr.f32.mxu0 %v437
      %2240 = vmatmul.mubr.f32.gmra.mrb[0].mxu0 %v436
      %v2241 = vpop.f32.mrb[0].mxu0
      %v2242 = vadd.f32 %v2017, %v2241
      %v2243 = vpop.f32.mrb[0].mxu0
      %2244 = vmatprep.mubr.f32.mxu0 %v469
      %2245 = vmatmul.mubr.f32.gmra.mrb[0].mxu0 %v468
      %v2246 = vpop.f32.mrb[0].mxu0
      %v2247 = vadd.f32 %v2022, %v2246
      %v2248 = vpop.f32.mrb[0].mxu0
      %2249 = vmatprep.mubr.f32.mxu0 %v501
      %2250 = vmatmul.mubr.f32.gmra.mrb[0].mxu0 %v500
      %v2251 = vpop.f32.mrb[0].mxu0
      %v2252 = vadd.f32 %v2027, %v2251
      %v2253 = vpop.f32.mrb[0].mxu0
      %2254 = vmatprep.mubr.f32.mxu0 %v533
      %2255 = vmatmul.mubr.f32.gmra.mrb[0].mxu0 %v532
      %v2256 = vpop.f32.mrb[0].mxu0
      %v2257 = vadd.f32 %v2032, %v2256
      %v2258 = vpop.f32.mrb[0].mxu0
      %2259 = vmatprep.mubr.f32.mxu0 %v565
      %2260 = vmatmul.mubr.f32.gmra.mrb[0].mxu0 %v564
      %v2261 = vpop.f32.mrb[0].mxu0
      %v2262 = vadd.f32 %v2037, %v2261
      %v2263 = vpop.f32.mrb[0].mxu0
      %2264 = vmatprep.mubr.f32.mxu0 %v597
      %2265 = vmatmul.mubr.f32.gmra.mrb[0].mxu0 %v596
      %v2266 = vpop.f32.mrb[0].mxu0
      %v2267 = vadd.f32 %v2042, %v2266
      %v2268 = vpop.f32.mrb[0].mxu0
      %2269 = vmatprep.mubr.f32.mxu0 %v629
      %2270 = vmatmul.mubr.f32.gmra.mrb[0].mxu0 %v628
      %v2271 = vpop.f32.mrb[0].mxu0
      %v2272 = vadd.f32 %v2047, %v2271
      %v2273 = vpop.f32.mrb[0].mxu0
      %2274 = vmatprep.mubr.f32.mxu0 %v661
      %2275 = vmatmul.mubr.f32.gmra.mrb[0].mxu0 %v660
      %v2276 = vpop.f32.mrb[0].mxu0
      %v2277 = vadd.f32 %v2052, %v2276
      %v2278 = vpop.f32.mrb[0].mxu0
      %2279 = vmatprep.mubr.f32.mxu0 %v693
      %2280 = vmatmul.mubr.f32.gmra.mrb[0].mxu0 %v692
      %v2281 = vpop.f32.mrb[0].mxu0
      %v2282 = vadd.f32 %v2057, %v2281
      %v2283 = vpop.f32.mrb[0].mxu0
      %2284 = vmatprep.mubr.f32.mxu0 %v725
      %2285 = vmatmul.mubr.f32.gmra.mrb[0].mxu0 %v724
      %v2286 = vpop.f32.mrb[0].mxu0
      %v2287 = vadd.f32 %v2062, %v2286
      %v2288 = vpop.f32.mrb[0].mxu0
      %2289 = vmatprep.mubr.f32.mxu0 %v757
      %2290 = vmatmul.mubr.f32.gmra.mrb[0].mxu0 %v756
      %v2291 = vpop.f32.mrb[0].mxu0
      %v2292 = vadd.f32 %v2067, %v2291
      %v2293 = vpop.f32.mrb[0].mxu0
      %2294 = vmatprep.mubr.f32.mxu0 %v789
      %2295 = vmatmul.mubr.f32.gmra.mrb[0].mxu0 %v788
      %v2296 = vpop.f32.mrb[0].mxu0
      %v2297 = vadd.f32 %v2072, %v2296
      %v2298 = vpop.f32.mrb[0].mxu0
      %2299 = vmatprep.mubr.f32.mxu0 %v821
      %2300 = vmatmul.mubr.f32.gmra.mrb[0].mxu0 %v820
      %v2301 = vpop.f32.mrb[0].mxu0
      %v2302 = vadd.f32 %v2077, %v2301
      %v2303 = vpop.f32.mrb[0].mxu0
      %2304 = vmatprep.mubr.f32.mxu0 %v853
      %2305 = vmatmul.mubr.f32.gmra.mrb[0].mxu0 %v852
      %v2306 = vpop.f32.mrb[0].mxu0
      %v2307 = vadd.f32 %v2082, %v2306
      %v2308 = vpop.f32.mrb[0].mxu0
      %2309 = vmatprep.mubr.f32.mxu0 %v885
      %2310 = vmatmul.mubr.f32.gmra.mrb[0].mxu0 %v884
      %v2311 = vpop.f32.mrb[0].mxu0
      %v2312 = vadd.f32 %v2087, %v2311
      %v2313 = vpop.f32.mrb[0].mxu0
      %2314 = vmatprep.mubr.f32.mxu0 %v917
      %2315 = vmatmul.mubr.f32.gmra.mrb[0].mxu0 %v916
      %v2316 = vpop.f32.mrb[0].mxu0
      %v2317 = vadd.f32 %v2092, %v2316
      %v2318 = vpop.f32.mrb[0].mxu0
      %2319 = vmatprep.mubr.f32.mxu0 %v949
      %2320 = vmatmul.mubr.f32.gmra.mrb[0].mxu0 %v948
      %v2321 = vpop.f32.mrb[0].mxu0
      %v2322 = vadd.f32 %v2097, %v2321
      %v2323 = vpop.f32.mrb[0].mxu0
      %2324 = vmatprep.mubr.f32.mxu0 %v981
      %2325 = vmatmul.mubr.f32.gmra.mrb[0].mxu0 %v980
      %v2326 = vpop.f32.mrb[0].mxu0
      %v2327 = vadd.f32 %v2102, %v2326
      %v2328 = vpop.f32.mrb[0].mxu0
      %2329 = vmatprep.mubr.f32.mxu0 %v1013
      %2330 = vmatmul.mubr.f32.gmra.mrb[0].mxu0 %v1012
      %v2331 = vpop.f32.mrb[0].mxu0
      %v2332 = vadd.f32 %v2107, %v2331
      %v2333 = vpop.f32.mrb[0].mxu0
      %2334 = vmatprep.mubr.f32.mxu0 %v1045
      %2335 = vmatmul.mubr.f32.gmra.mrb[0].mxu0 %v1044
      %v2336 = vpop.f32.mrb[0].mxu0
      %v2337 = vadd.f32 %v2112, %v2336
      %v2338 = vpop.f32.mrb[0].mxu0
      %2339 = vmatprep.mubr.f32.mxu0 %v1077
      %2340 = vmatmul.mubr.f32.gmra.mrb[0].mxu0 %v1076
      %v2341 = vpop.f32.mrb[0].mxu0
      %v2342 = vadd.f32 %v2117, %v2341
      %v2343 = vpop.f32.mrb[0].mxu0
      %2344 = vmatprep.mubr.f32.mxu0 %v1109
      %2345 = vmatmul.mubr.f32.gmra.mrb[0].mxu0 %v1108
      %v2346 = vpop.f32.mrb[0].mxu0
      %v2347 = vadd.f32 %v2122, %v2346
      %v2348 = vpop.f32.mrb[0].mxu0
      %2349 = vmatprep.mubr.f32.mxu0 %v1141
      %2350 = vmatmul.mubr.f32.gmra.mrb[0].mxu0 %v1140
      %v2351 = vpop.f32.mrb[0].mxu0
      %v2352 = vadd.f32 %v2127, %v2351
      %v2353 = vpop.f32.mrb[0].mxu0
      %2354 = vdwg.mxu0
      %2355 = vmatprep.subr.mxu0 0.0
      %2356 = vmatpush1.msra.mxu0 %v1264
      %2357 = vmatprep.subr.mxu0 0.0
      %2358 = vmatpush1.msra.mxu0 %v1265
      %2359 = vmatprep.subr.mxu0 0.0
      %2360 = vmatpush1.msra.mxu0 %v1266
      %2361 = vmatprep.subr.mxu0 0.0
      %2362 = vmatpush1.msra.mxu0 %v1267
      %2363 = vmatprep.subr.mxu0 0.0
      %2364 = vmatpush1.msra.mxu0 %v1268
      %2365 = vmatprep.subr.mxu0 0.0
      %2366 = vmatpush1.msra.mxu0 %v1269
      %2367 = vmatprep.subr.mxu0 0.0
      %2368 = vmatpush1.msra.mxu0 %v1270
      %2369 = vmatprep.subr.mxu0 0.0
      %2370 = vmatpush1.msra.mxu0 %v1271
      %2371 = vmatprep.subr.mxu0 0.0
      %2372 = vmatpush1.msra.mxu0 %v1272
      %2373 = vmatprep.subr.mxu0 0.0
      %2374 = vmatpush1.msra.mxu0 %v1273
      %2375 = vmatprep.subr.mxu0 0.0
      %2376 = vmatpush1.msra.mxu0 %v1274
      %2377 = vmatprep.subr.mxu0 0.0
      %2378 = vmatpush1.msra.mxu0 %v1275
      %2379 = vmatprep.subr.mxu0 0.0
      %2380 = vmatpush1.msra.mxu0 %v1276
      %2381 = vmatprep.subr.mxu0 0.0
      %2382 = vmatpush1.msra.mxu0 %v1277
      %2383 = vmatprep.subr.mxu0 0.0
      %2384 = vmatpush1.msra.mxu0 %v1278
      %2385 = vmatprep.subr.mxu0 0.0
      %2386 = vmatpush1.msra.mxu0 %v1279
      %2387 = vmatprep.subr.mxu0 0.0
      %2388 = vmatpush1.msra.mxu0 %v1280
      %2389 = vmatprep.subr.mxu0 0.0
      %2390 = vmatpush1.msra.mxu0 %v1281
      %2391 = vmatprep.subr.mxu0 0.0
      %2392 = vmatpush1.msra.mxu0 %v1282
      %2393 = vmatprep.subr.mxu0 0.0
      %2394 = vmatpush1.msra.mxu0 %v1283
      %2395 = vmatprep.subr.mxu0 0.0
      %2396 = vmatpush1.msra.mxu0 %v1284
      %2397 = vmatprep.subr.mxu0 0.0
      %2398 = vmatpush1.msra.mxu0 %v1285
      %2399 = vmatprep.subr.mxu0 0.0
      %2400 = vmatpush1.msra.mxu0 %v1286
      %2401 = vmatprep.subr.mxu0 0.0
      %2402 = vmatpush1.msra.mxu0 %v1287
      %2403 = vmatprep.subr.mxu0 0.0
      %2404 = vmatpush1.msra.mxu0 %v1288
      %2405 = vmatprep.subr.mxu0 0.0
      %2406 = vmatpush1.msra.mxu0 %v1289
      %2407 = vmatprep.subr.mxu0 0.0
      %2408 = vmatpush1.msra.mxu0 %v1290
      %2409 = vmatprep.subr.mxu0 0.0
      %2410 = vmatpush1.msra.mxu0 %v1291
      %2411 = vmatprep.subr.mxu0 0.0
      %2412 = vmatpush1.msra.mxu0 %v1292
      %2413 = vmatprep.subr.mxu0 0.0
      %2414 = vmatpush1.msra.mxu0 %v1293
      %2415 = vmatprep.subr.mxu0 0.0
      %2416 = vmatpush1.msra.mxu0 %v1294
      %2417 = vmatprep.subr.mxu0 0.0
      %2418 = vmatpush1.msra.mxu0 %v1295
      %2419 = vmatprep.mubr.f32.mxu0 %v151
      %2420 = vmatmul.mubr.f32.gmra.mrb[0].mxu0 %v150
      %v2421 = vpop.f32.mrb[0].mxu0
      %v2422 = vadd.f32 %v2197, %v2421
      %v2423 = vpop.f32.mrb[0].mxu0
      %2424 = vmatprep.mubr.f32.mxu0 %v183
      %2425 = vmatmul.mubr.f32.gmra.mrb[0].mxu0 %v182
      %v2426 = vpop.f32.mrb[0].mxu0
      %v2427 = vadd.f32 %v2202, %v2426
      %v2428 = vpop.f32.mrb[0].mxu0
      %2429 = vmatprep.mubr.f32.mxu0 %v215
      %2430 = vmatmul.mubr.f32.gmra.mrb[0].mxu0 %v214
      %v2431 = vpop.f32.mrb[0].mxu0
      %v2432 = vadd.f32 %v2207, %v2431
      %v2433 = vpop.f32.mrb[0].mxu0
      %2434 = vmatprep.mubr.f32.mxu0 %v247
      %2435 = vmatmul.mubr.f32.gmra.mrb[0].mxu0 %v246
      %v2436 = vpop.f32.mrb[0].mxu0
      %v2437 = vadd.f32 %v2212, %v2436
      %v2438 = vpop.f32.mrb[0].mxu0
      %2439 = vmatprep.mubr.f32.mxu0 %v279
      %2440 = vmatmul.mubr.f32.gmra.mrb[0].mxu0 %v278
      %v2441 = vpop.f32.mrb[0].mxu0
      %v2442 = vadd.f32 %v2217, %v2441
      %v2443 = vpop.f32.mrb[0].mxu0
      %2444 = vmatprep.mubr.f32.mxu0 %v311
      %2445 = vmatmul.mubr.f32.gmra.mrb[0].mxu0 %v310
      %v2446 = vpop.f32.mrb[0].mxu0
      %v2447 = vadd.f32 %v2222, %v2446
      %v2448 = vpop.f32.mrb[0].mxu0
      %2449 = vmatprep.mubr.f32.mxu0 %v343
      %2450 = vmatmul.mubr.f32.gmra.mrb[0].mxu0 %v342
      %v2451 = vpop.f32.mrb[0].mxu0
      %v2452 = vadd.f32 %v2227, %v2451
      %v2453 = vpop.f32.mrb[0].mxu0
      %2454 = vmatprep.mubr.f32.mxu0 %v375
      %2455 = vmatmul.mubr.f32.gmra.mrb[0].mxu0 %v374
      %v2456 = vpop.f32.mrb[0].mxu0
      %v2457 = vadd.f32 %v2232, %v2456
      %v2458 = vpop.f32.mrb[0].mxu0
      %2459 = vmatprep.mubr.f32.mxu0 %v407
      %2460 = vmatmul.mubr.f32.gmra.mrb[0].mxu0 %v406
      %v2461 = vpop.f32.mrb[0].mxu0
      %v2462 = vadd.f32 %v2237, %v2461
      %v2463 = vpop.f32.mrb[0].mxu0
      %2464 = vmatprep.mubr.f32.mxu0 %v439
      %2465 = vmatmul.mubr.f32.gmra.mrb[0].mxu0 %v438
      %v2466 = vpop.f32.mrb[0].mxu0
      %v2467 = vadd.f32 %v2242, %v2466
      %v2468 = vpop.f32.mrb[0].mxu0
      %2469 = vmatprep.mubr.f32.mxu0 %v471
      %2470 = vmatmul.mubr.f32.gmra.mrb[0].mxu0 %v470
      %v2471 = vpop.f32.mrb[0].mxu0
      %v2472 = vadd.f32 %v2247, %v2471
      %v2473 = vpop.f32.mrb[0].mxu0
      %2474 = vmatprep.mubr.f32.mxu0 %v503
      %2475 = vmatmul.mubr.f32.gmra.mrb[0].mxu0 %v502
      %v2476 = vpop.f32.mrb[0].mxu0
      %v2477 = vadd.f32 %v2252, %v2476
      %v2478 = vpop.f32.mrb[0].mxu0
      %2479 = vmatprep.mubr.f32.mxu0 %v535
      %2480 = vmatmul.mubr.f32.gmra.mrb[0].mxu0 %v534
      %v2481 = vpop.f32.mrb[0].mxu0
      %v2482 = vadd.f32 %v2257, %v2481
      %v2483 = vpop.f32.mrb[0].mxu0
      %2484 = vmatprep.mubr.f32.mxu0 %v567
      %2485 = vmatmul.mubr.f32.gmra.mrb[0].mxu0 %v566
      %v2486 = vpop.f32.mrb[0].mxu0
      %v2487 = vadd.f32 %v2262, %v2486
      %v2488 = vpop.f32.mrb[0].mxu0
      %2489 = vmatprep.mubr.f32.mxu0 %v599
      %2490 = vmatmul.mubr.f32.gmra.mrb[0].mxu0 %v598
      %v2491 = vpop.f32.mrb[0].mxu0
      %v2492 = vadd.f32 %v2267, %v2491
      %v2493 = vpop.f32.mrb[0].mxu0
      %2494 = vmatprep.mubr.f32.mxu0 %v631
      %2495 = vmatmul.mubr.f32.gmra.mrb[0].mxu0 %v630
      %v2496 = vpop.f32.mrb[0].mxu0
      %v2497 = vadd.f32 %v2272, %v2496
      %v2498 = vpop.f32.mrb[0].mxu0
      %2499 = vmatprep.mubr.f32.mxu0 %v663
      %2500 = vmatmul.mubr.f32.gmra.mrb[0].mxu0 %v662
      %v2501 = vpop.f32.mrb[0].mxu0
      %v2502 = vadd.f32 %v2277, %v2501
      %v2503 = vpop.f32.mrb[0].mxu0
      %2504 = vmatprep.mubr.f32.mxu0 %v695
      %2505 = vmatmul.mubr.f32.gmra.mrb[0].mxu0 %v694
      %v2506 = vpop.f32.mrb[0].mxu0
      %v2507 = vadd.f32 %v2282, %v2506
      %v2508 = vpop.f32.mrb[0].mxu0
      %2509 = vmatprep.mubr.f32.mxu0 %v727
      %2510 = vmatmul.mubr.f32.gmra.mrb[0].mxu0 %v726
      %v2511 = vpop.f32.mrb[0].mxu0
      %v2512 = vadd.f32 %v2287, %v2511
      %v2513 = vpop.f32.mrb[0].mxu0
      %2514 = vmatprep.mubr.f32.mxu0 %v759
      %2515 = vmatmul.mubr.f32.gmra.mrb[0].mxu0 %v758
      %v2516 = vpop.f32.mrb[0].mxu0
      %v2517 = vadd.f32 %v2292, %v2516
      %v2518 = vpop.f32.mrb[0].mxu0
      %2519 = vmatprep.mubr.f32.mxu0 %v791
      %2520 = vmatmul.mubr.f32.gmra.mrb[0].mxu0 %v790
      %v2521 = vpop.f32.mrb[0].mxu0
      %v2522 = vadd.f32 %v2297, %v2521
      %v2523 = vpop.f32.mrb[0].mxu0
      %2524 = vmatprep.mubr.f32.mxu0 %v823
      %2525 = vmatmul.mubr.f32.gmra.mrb[0].mxu0 %v822
      %v2526 = vpop.f32.mrb[0].mxu0
      %v2527 = vadd.f32 %v2302, %v2526
      %v2528 = vpop.f32.mrb[0].mxu0
      %2529 = vmatprep.mubr.f32.mxu0 %v855
      %2530 = vmatmul.mubr.f32.gmra.mrb[0].mxu0 %v854
      %v2531 = vpop.f32.mrb[0].mxu0
      %v2532 = vadd.f32 %v2307, %v2531
      %v2533 = vpop.f32.mrb[0].mxu0
      %2534 = vmatprep.mubr.f32.mxu0 %v887
      %2535 = vmatmul.mubr.f32.gmra.mrb[0].mxu0 %v886
      %v2536 = vpop.f32.mrb[0].mxu0
      %v2537 = vadd.f32 %v2312, %v2536
      %v2538 = vpop.f32.mrb[0].mxu0
      %2539 = vmatprep.mubr.f32.mxu0 %v919
      %2540 = vmatmul.mubr.f32.gmra.mrb[0].mxu0 %v918
      %v2541 = vpop.f32.mrb[0].mxu0
      %v2542 = vadd.f32 %v2317, %v2541
      %v2543 = vpop.f32.mrb[0].mxu0
      %2544 = vmatprep.mubr.f32.mxu0 %v951
      %2545 = vmatmul.mubr.f32.gmra.mrb[0].mxu0 %v950
      %v2546 = vpop.f32.mrb[0].mxu0
      %v2547 = vadd.f32 %v2322, %v2546
      %v2548 = vpop.f32.mrb[0].mxu0
      %2549 = vmatprep.mubr.f32.mxu0 %v983
      %2550 = vmatmul.mubr.f32.gmra.mrb[0].mxu0 %v982
      %v2551 = vpop.f32.mrb[0].mxu0
      %v2552 = vadd.f32 %v2327, %v2551
      %v2553 = vpop.f32.mrb[0].mxu0
      %2554 = vmatprep.mubr.f32.mxu0 %v1015
      %2555 = vmatmul.mubr.f32.gmra.mrb[0].mxu0 %v1014
      %v2556 = vpop.f32.mrb[0].mxu0
      %v2557 = vadd.f32 %v2332, %v2556
      %v2558 = vpop.f32.mrb[0].mxu0
      %2559 = vmatprep.mubr.f32.mxu0 %v1047
      %2560 = vmatmul.mubr.f32.gmra.mrb[0].mxu0 %v1046
      %v2561 = vpop.f32.mrb[0].mxu0
      %v2562 = vadd.f32 %v2337, %v2561
      %v2563 = vpop.f32.mrb[0].mxu0
      %2564 = vmatprep.mubr.f32.mxu0 %v1079
      %2565 = vmatmul.mubr.f32.gmra.mrb[0].mxu0 %v1078
      %v2566 = vpop.f32.mrb[0].mxu0
      %v2567 = vadd.f32 %v2342, %v2566
      %v2568 = vpop.f32.mrb[0].mxu0
      %2569 = vmatprep.mubr.f32.mxu0 %v1111
      %2570 = vmatmul.mubr.f32.gmra.mrb[0].mxu0 %v1110
      %v2571 = vpop.f32.mrb[0].mxu0
      %v2572 = vadd.f32 %v2347, %v2571
      %v2573 = vpop.f32.mrb[0].mxu0
      %2574 = vmatprep.mubr.f32.mxu0 %v1143
      %2575 = vmatmul.mubr.f32.gmra.mrb[0].mxu0 %v1142
      %v2576 = vpop.f32.mrb[0].mxu0
      %v2577 = vadd.f32 %v2352, %v2576
      %v2578 = vpop.f32.mrb[0].mxu0
      %2579 = vdwg.mxu0
      %2580 = vmatprep.subr.mxu0 0.0
      %2581 = vmatpush1.msra.mxu0 %v1296
      %2582 = vmatprep.subr.mxu0 0.0
      %2583 = vmatpush1.msra.mxu0 %v1297
      %2584 = vmatprep.subr.mxu0 0.0
      %2585 = vmatpush1.msra.mxu0 %v1298
      %2586 = vmatprep.subr.mxu0 0.0
      %2587 = vmatpush1.msra.mxu0 %v1299
      %2588 = vmatprep.subr.mxu0 0.0
      %2589 = vmatpush1.msra.mxu0 %v1300
      %2590 = vmatprep.subr.mxu0 0.0
      %2591 = vmatpush1.msra.mxu0 %v1301
      %2592 = vmatprep.subr.mxu0 0.0
      %2593 = vmatpush1.msra.mxu0 %v1302
      %2594 = vmatprep.subr.mxu0 0.0
      %2595 = vmatpush1.msra.mxu0 %v1303
      %2596 = vmatprep.subr.mxu0 0.0
      %2597 = vmatpush1.msra.mxu0 %v1304
      %2598 = vmatprep.subr.mxu0 0.0
      %2599 = vmatpush1.msra.mxu0 %v1305
      %2600 = vmatprep.subr.mxu0 0.0
      %2601 = vmatpush1.msra.mxu0 %v1306
      %2602 = vmatprep.subr.mxu0 0.0
      %2603 = vmatpush1.msra.mxu0 %v1307
      %2604 = vmatprep.subr.mxu0 0.0
      %2605 = vmatpush1.msra.mxu0 %v1308
      %2606 = vmatprep.subr.mxu0 0.0
      %2607 = vmatpush1.msra.mxu0 %v1309
      %2608 = vmatprep.subr.mxu0 0.0
      %2609 = vmatpush1.msra.mxu0 %v1310
      %2610 = vmatprep.subr.mxu0 0.0
      %2611 = vmatpush1.msra.mxu0 %v1311
      %2612 = vmatprep.subr.mxu0 0.0
      %2613 = vmatpush1.msra.mxu0 %v1312
      %2614 = vmatprep.subr.mxu0 0.0
      %2615 = vmatpush1.msra.mxu0 %v1313
      %2616 = vmatprep.subr.mxu0 0.0
      %2617 = vmatpush1.msra.mxu0 %v1314
      %2618 = vmatprep.subr.mxu0 0.0
      %2619 = vmatpush1.msra.mxu0 %v1315
      %2620 = vmatprep.subr.mxu0 0.0
      %2621 = vmatpush1.msra.mxu0 %v1316
      %2622 = vmatprep.subr.mxu0 0.0
      %2623 = vmatpush1.msra.mxu0 %v1317
      %2624 = vmatprep.subr.mxu0 0.0
      %2625 = vmatpush1.msra.mxu0 %v1318
      %2626 = vmatprep.subr.mxu0 0.0
      %2627 = vmatpush1.msra.mxu0 %v1319
      %2628 = vmatprep.subr.mxu0 0.0
      %2629 = vmatpush1.msra.mxu0 %v1320
      %2630 = vmatprep.subr.mxu0 0.0
      %2631 = vmatpush1.msra.mxu0 %v1321
      %2632 = vmatprep.subr.mxu0 0.0
      %2633 = vmatpush1.msra.mxu0 %v1322
      %2634 = vmatprep.subr.mxu0 0.0
      %2635 = vmatpush1.msra.mxu0 %v1323
      %2636 = vmatprep.subr.mxu0 0.0
      %2637 = vmatpush1.msra.mxu0 %v1324
      %2638 = vmatprep.subr.mxu0 0.0
      %2639 = vmatpush1.msra.mxu0 %v1325
      %2640 = vmatprep.subr.mxu0 0.0
      %2641 = vmatpush1.msra.mxu0 %v1326
      %2642 = vmatprep.subr.mxu0 0.0
      %2643 = vmatpush1.msra.mxu0 %v1327
      %2644 = vmatprep.mubr.f32.mxu0 %v153
      %2645 = vmatmul.mubr.f32.gmra.mrb[0].mxu0 %v152
      %v2646 = vpop.f32.mrb[0].mxu0
      %v2647 = vadd.f32 %v2422, %v2646
      %v2648 = vpop.f32.mrb[0].mxu0
      %2649 = vmatprep.mubr.f32.mxu0 %v185
      %2650 = vmatmul.mubr.f32.gmra.mrb[0].mxu0 %v184
      %v2651 = vpop.f32.mrb[0].mxu0
      %v2652 = vadd.f32 %v2427, %v2651
      %v2653 = vpop.f32.mrb[0].mxu0
      %2654 = vmatprep.mubr.f32.mxu0 %v217
      %2655 = vmatmul.mubr.f32.gmra.mrb[0].mxu0 %v216
      %v2656 = vpop.f32.mrb[0].mxu0
      %v2657 = vadd.f32 %v2432, %v2656
      %v2658 = vpop.f32.mrb[0].mxu0
      %2659 = vmatprep.mubr.f32.mxu0 %v249
      %2660 = vmatmul.mubr.f32.gmra.mrb[0].mxu0 %v248
      %v2661 = vpop.f32.mrb[0].mxu0
      %v2662 = vadd.f32 %v2437, %v2661
      %v2663 = vpop.f32.mrb[0].mxu0
      %2664 = vmatprep.mubr.f32.mxu0 %v281
      %2665 = vmatmul.mubr.f32.gmra.mrb[0].mxu0 %v280
      %v2666 = vpop.f32.mrb[0].mxu0
      %v2667 = vadd.f32 %v2442, %v2666
      %v2668 = vpop.f32.mrb[0].mxu0
      %2669 = vmatprep.mubr.f32.mxu0 %v313
      %2670 = vmatmul.mubr.f32.gmra.mrb[0].mxu0 %v312
      %v2671 = vpop.f32.mrb[0].mxu0
      %v2672 = vadd.f32 %v2447, %v2671
      %v2673 = vpop.f32.mrb[0].mxu0
      %2674 = vmatprep.mubr.f32.mxu0 %v345
      %2675 = vmatmul.mubr.f32.gmra.mrb[0].mxu0 %v344
      %v2676 = vpop.f32.mrb[0].mxu0
      %v2677 = vadd.f32 %v2452, %v2676
      %v2678 = vpop.f32.mrb[0].mxu0
      %2679 = vmatprep.mubr.f32.mxu0 %v377
      %2680 = vmatmul.mubr.f32.gmra.mrb[0].mxu0 %v376
      %v2681 = vpop.f32.mrb[0].mxu0
      %v2682 = vadd.f32 %v2457, %v2681
      %v2683 = vpop.f32.mrb[0].mxu0
      %2684 = vmatprep.mubr.f32.mxu0 %v409
      %2685 = vmatmul.mubr.f32.gmra.mrb[0].mxu0 %v408
      %v2686 = vpop.f32.mrb[0].mxu0
      %v2687 = vadd.f32 %v2462, %v2686
      %v2688 = vpop.f32.mrb[0].mxu0
      %2689 = vmatprep.mubr.f32.mxu0 %v441
      %2690 = vmatmul.mubr.f32.gmra.mrb[0].mxu0 %v440
      %v2691 = vpop.f32.mrb[0].mxu0
      %v2692 = vadd.f32 %v2467, %v2691
      %v2693 = vpop.f32.mrb[0].mxu0
      %2694 = vmatprep.mubr.f32.mxu0 %v473
      %2695 = vmatmul.mubr.f32.gmra.mrb[0].mxu0 %v472
      %v2696 = vpop.f32.mrb[0].mxu0
      %v2697 = vadd.f32 %v2472, %v2696
      %v2698 = vpop.f32.mrb[0].mxu0
      %2699 = vmatprep.mubr.f32.mxu0 %v505
      %2700 = vmatmul.mubr.f32.gmra.mrb[0].mxu0 %v504
      %v2701 = vpop.f32.mrb[0].mxu0
      %v2702 = vadd.f32 %v2477, %v2701
      %v2703 = vpop.f32.mrb[0].mxu0
      %2704 = vmatprep.mubr.f32.mxu0 %v537
      %2705 = vmatmul.mubr.f32.gmra.mrb[0].mxu0 %v536
      %v2706 = vpop.f32.mrb[0].mxu0
      %v2707 = vadd.f32 %v2482, %v2706
      %v2708 = vpop.f32.mrb[0].mxu0
      %2709 = vmatprep.mubr.f32.mxu0 %v569
      %2710 = vmatmul.mubr.f32.gmra.mrb[0].mxu0 %v568
      %v2711 = vpop.f32.mrb[0].mxu0
      %v2712 = vadd.f32 %v2487, %v2711
      %v2713 = vpop.f32.mrb[0].mxu0
      %2714 = vmatprep.mubr.f32.mxu0 %v601
      %2715 = vmatmul.mubr.f32.gmra.mrb[0].mxu0 %v600
      %v2716 = vpop.f32.mrb[0].mxu0
      %v2717 = vadd.f32 %v2492, %v2716
      %v2718 = vpop.f32.mrb[0].mxu0
      %2719 = vmatprep.mubr.f32.mxu0 %v633
      %2720 = vmatmul.mubr.f32.gmra.mrb[0].mxu0 %v632
      %v2721 = vpop.f32.mrb[0].mxu0
      %v2722 = vadd.f32 %v2497, %v2721
      %v2723 = vpop.f32.mrb[0].mxu0
      %2724 = vmatprep.mubr.f32.mxu0 %v665
      %2725 = vmatmul.mubr.f32.gmra.mrb[0].mxu0 %v664
      %v2726 = vpop.f32.mrb[0].mxu0
      %v2727 = vadd.f32 %v2502, %v2726
      %v2728 = vpop.f32.mrb[0].mxu0
      %2729 = vmatprep.mubr.f32.mxu0 %v697
      %2730 = vmatmul.mubr.f32.gmra.mrb[0].mxu0 %v696
      %v2731 = vpop.f32.mrb[0].mxu0
      %v2732 = vadd.f32 %v2507, %v2731
      %v2733 = vpop.f32.mrb[0].mxu0
      %2734 = vmatprep.mubr.f32.mxu0 %v729
      %2735 = vmatmul.mubr.f32.gmra.mrb[0].mxu0 %v728
      %v2736 = vpop.f32.mrb[0].mxu0
      %v2737 = vadd.f32 %v2512, %v2736
      %v2738 = vpop.f32.mrb[0].mxu0
      %2739 = vmatprep.mubr.f32.mxu0 %v761
      %2740 = vmatmul.mubr.f32.gmra.mrb[0].mxu0 %v760
      %v2741 = vpop.f32.mrb[0].mxu0
      %v2742 = vadd.f32 %v2517, %v2741
      %v2743 = vpop.f32.mrb[0].mxu0
      %2744 = vmatprep.mubr.f32.mxu0 %v793
      %2745 = vmatmul.mubr.f32.gmra.mrb[0].mxu0 %v792
      %v2746 = vpop.f32.mrb[0].mxu0
      %v2747 = vadd.f32 %v2522, %v2746
      %v2748 = vpop.f32.mrb[0].mxu0
      %2749 = vmatprep.mubr.f32.mxu0 %v825
      %2750 = vmatmul.mubr.f32.gmra.mrb[0].mxu0 %v824
      %v2751 = vpop.f32.mrb[0].mxu0
      %v2752 = vadd.f32 %v2527, %v2751
      %v2753 = vpop.f32.mrb[0].mxu0
      %2754 = vmatprep.mubr.f32.mxu0 %v857
      %2755 = vmatmul.mubr.f32.gmra.mrb[0].mxu0 %v856
      %v2756 = vpop.f32.mrb[0].mxu0
      %v2757 = vadd.f32 %v2532, %v2756
      %v2758 = vpop.f32.mrb[0].mxu0
      %2759 = vmatprep.mubr.f32.mxu0 %v889
      %2760 = vmatmul.mubr.f32.gmra.mrb[0].mxu0 %v888
      %v2761 = vpop.f32.mrb[0].mxu0
      %v2762 = vadd.f32 %v2537, %v2761
      %v2763 = vpop.f32.mrb[0].mxu0
      %2764 = vmatprep.mubr.f32.mxu0 %v921
      %2765 = vmatmul.mubr.f32.gmra.mrb[0].mxu0 %v920
      %v2766 = vpop.f32.mrb[0].mxu0
      %v2767 = vadd.f32 %v2542, %v2766
      %v2768 = vpop.f32.mrb[0].mxu0
      %2769 = vmatprep.mubr.f32.mxu0 %v953
      %2770 = vmatmul.mubr.f32.gmra.mrb[0].mxu0 %v952
      %v2771 = vpop.f32.mrb[0].mxu0
      %v2772 = vadd.f32 %v2547, %v2771
      %v2773 = vpop.f32.mrb[0].mxu0
      %2774 = vmatprep.mubr.f32.mxu0 %v985
      %2775 = vmatmul.mubr.f32.gmra.mrb[0].mxu0 %v984
      %v2776 = vpop.f32.mrb[0].mxu0
      %v2777 = vadd.f32 %v2552, %v2776
      %v2778 = vpop.f32.mrb[0].mxu0
      %2779 = vmatprep.mubr.f32.mxu0 %v1017
      %2780 = vmatmul.mubr.f32.gmra.mrb[0].mxu0 %v1016
      %v2781 = vpop.f32.mrb[0].mxu0
      %v2782 = vadd.f32 %v2557, %v2781
      %v2783 = vpop.f32.mrb[0].mxu0
      %2784 = vmatprep.mubr.f32.mxu0 %v1049
      %2785 = vmatmul.mubr.f32.gmra.mrb[0].mxu0 %v1048
      %v2786 = vpop.f32.mrb[0].mxu0
      %v2787 = vadd.f32 %v2562, %v2786
      %v2788 = vpop.f32.mrb[0].mxu0
      %2789 = vmatprep.mubr.f32.mxu0 %v1081
      %2790 = vmatmul.mubr.f32.gmra.mrb[0].mxu0 %v1080
      %v2791 = vpop.f32.mrb[0].mxu0
      %v2792 = vadd.f32 %v2567, %v2791
      %v2793 = vpop.f32.mrb[0].mxu0
      %2794 = vmatprep.mubr.f32.mxu0 %v1113
      %2795 = vmatmul.mubr.f32.gmra.mrb[0].mxu0 %v1112
      %v2796 = vpop.f32.mrb[0].mxu0
      %v2797 = vadd.f32 %v2572, %v2796
      %v2798 = vpop.f32.mrb[0].mxu0
      %2799 = vmatprep.mubr.f32.mxu0 %v1145
      %2800 = vmatmul.mubr.f32.gmra.mrb[0].mxu0 %v1144
      %v2801 = vpop.f32.mrb[0].mxu0
      %v2802 = vadd.f32 %v2577, %v2801
      %v2803 = vpop.f32.mrb[0].mxu0
      %2804 = vdwg.mxu0
      %2805 = vmatprep.subr.mxu0 0.0
      %2806 = vmatpush1.msra.mxu0 %v1328
      %2807 = vmatprep.subr.mxu0 0.0
      %2808 = vmatpush1.msra.mxu0 %v1329
      %2809 = vmatprep.subr.mxu0 0.0
      %2810 = vmatpush1.msra.mxu0 %v1330
      %2811 = vmatprep.subr.mxu0 0.0
      %2812 = vmatpush1.msra.mxu0 %v1331
      %2813 = vmatprep.subr.mxu0 0.0
      %2814 = vmatpush1.msra.mxu0 %v1332
      %2815 = vmatprep.subr.mxu0 0.0
      %2816 = vmatpush1.msra.mxu0 %v1333
      %2817 = vmatprep.subr.mxu0 0.0
      %2818 = vmatpush1.msra.mxu0 %v1334
      %2819 = vmatprep.subr.mxu0 0.0
      %2820 = vmatpush1.msra.mxu0 %v1335
      %2821 = vmatprep.subr.mxu0 0.0
      %2822 = vmatpush1.msra.mxu0 %v1336
      %2823 = vmatprep.subr.mxu0 0.0
      %2824 = vmatpush1.msra.mxu0 %v1337
      %2825 = vmatprep.subr.mxu0 0.0
      %2826 = vmatpush1.msra.mxu0 %v1338
      %2827 = vmatprep.subr.mxu0 0.0
      %2828 = vmatpush1.msra.mxu0 %v1339
      %2829 = vmatprep.subr.mxu0 0.0
      %2830 = vmatpush1.msra.mxu0 %v1340
      %2831 = vmatprep.subr.mxu0 0.0
      %2832 = vmatpush1.msra.mxu0 %v1341
      %2833 = vmatprep.subr.mxu0 0.0
      %2834 = vmatpush1.msra.mxu0 %v1342
      %2835 = vmatprep.subr.mxu0 0.0
      %2836 = vmatpush1.msra.mxu0 %v1343
      %2837 = vmatprep.subr.mxu0 0.0
      %2838 = vmatpush1.msra.mxu0 %v1344
      %2839 = vmatprep.subr.mxu0 0.0
      %2840 = vmatpush1.msra.mxu0 %v1345
      %2841 = vmatprep.subr.mxu0 0.0
      %2842 = vmatpush1.msra.mxu0 %v1346
      %2843 = vmatprep.subr.mxu0 0.0
      %2844 = vmatpush1.msra.mxu0 %v1347
      %2845 = vmatprep.subr.mxu0 0.0
      %2846 = vmatpush1.msra.mxu0 %v1348
      %2847 = vmatprep.subr.mxu0 0.0
      %2848 = vmatpush1.msra.mxu0 %v1349
      %2849 = vmatprep.subr.mxu0 0.0
      %2850 = vmatpush1.msra.mxu0 %v1350
      %2851 = vmatprep.subr.mxu0 0.0
      %2852 = vmatpush1.msra.mxu0 %v1351
      %2853 = vmatprep.subr.mxu0 0.0
      %2854 = vmatpush1.msra.mxu0 %v1352
      %2855 = vmatprep.subr.mxu0 0.0
      %2856 = vmatpush1.msra.mxu0 %v1353
      %2857 = vmatprep.subr.mxu0 0.0
      %2858 = vmatpush1.msra.mxu0 %v1354
      %2859 = vmatprep.subr.mxu0 0.0
      %2860 = vmatpush1.msra.mxu0 %v1355
      %2861 = vmatprep.subr.mxu0 0.0
      %2862 = vmatpush1.msra.mxu0 %v1356
      %2863 = vmatprep.subr.mxu0 0.0
      %2864 = vmatpush1.msra.mxu0 %v1357
      %2865 = vmatprep.subr.mxu0 0.0
      %2866 = vmatpush1.msra.mxu0 %v1358
      %2867 = vmatprep.subr.mxu0 0.0
      %2868 = vmatpush1.msra.mxu0 %v1359
      %2869 = vmatprep.mubr.f32.mxu0 %v155
      %2870 = vmatmul.mubr.f32.gmra.mrb[0].mxu0 %v154
      %v2871 = vpop.f32.mrb[0].mxu0
      %v2872 = vadd.f32 %v2647, %v2871
      %v2873 = vpop.f32.mrb[0].mxu0
      %2874 = vmatprep.mubr.f32.mxu0 %v187
      %2875 = vmatmul.mubr.f32.gmra.mrb[0].mxu0 %v186
      %v2876 = vpop.f32.mrb[0].mxu0
      %v2877 = vadd.f32 %v2652, %v2876
      %v2878 = vpop.f32.mrb[0].mxu0
      %2879 = vmatprep.mubr.f32.mxu0 %v219
      %2880 = vmatmul.mubr.f32.gmra.mrb[0].mxu0 %v218
      %v2881 = vpop.f32.mrb[0].mxu0
      %v2882 = vadd.f32 %v2657, %v2881
      %v2883 = vpop.f32.mrb[0].mxu0
      %2884 = vmatprep.mubr.f32.mxu0 %v251
      %2885 = vmatmul.mubr.f32.gmra.mrb[0].mxu0 %v250
      %v2886 = vpop.f32.mrb[0].mxu0
      %v2887 = vadd.f32 %v2662, %v2886
      %v2888 = vpop.f32.mrb[0].mxu0
      %2889 = vmatprep.mubr.f32.mxu0 %v283
      %2890 = vmatmul.mubr.f32.gmra.mrb[0].mxu0 %v282
      %v2891 = vpop.f32.mrb[0].mxu0
      %v2892 = vadd.f32 %v2667, %v2891
      %v2893 = vpop.f32.mrb[0].mxu0
      %2894 = vmatprep.mubr.f32.mxu0 %v315
      %2895 = vmatmul.mubr.f32.gmra.mrb[0].mxu0 %v314
      %v2896 = vpop.f32.mrb[0].mxu0
      %v2897 = vadd.f32 %v2672, %v2896
      %v2898 = vpop.f32.mrb[0].mxu0
      %2899 = vmatprep.mubr.f32.mxu0 %v347
      %2900 = vmatmul.mubr.f32.gmra.mrb[0].mxu0 %v346
      %v2901 = vpop.f32.mrb[0].mxu0
      %v2902 = vadd.f32 %v2677, %v2901
      %v2903 = vpop.f32.mrb[0].mxu0
      %2904 = vmatprep.mubr.f32.mxu0 %v379
      %2905 = vmatmul.mubr.f32.gmra.mrb[0].mxu0 %v378
      %v2906 = vpop.f32.mrb[0].mxu0
      %v2907 = vadd.f32 %v2682, %v2906
      %v2908 = vpop.f32.mrb[0].mxu0
      %2909 = vmatprep.mubr.f32.mxu0 %v411
      %2910 = vmatmul.mubr.f32.gmra.mrb[0].mxu0 %v410
      %v2911 = vpop.f32.mrb[0].mxu0
      %v2912 = vadd.f32 %v2687, %v2911
      %v2913 = vpop.f32.mrb[0].mxu0
      %2914 = vmatprep.mubr.f32.mxu0 %v443
      %2915 = vmatmul.mubr.f32.gmra.mrb[0].mxu0 %v442
      %v2916 = vpop.f32.mrb[0].mxu0
      %v2917 = vadd.f32 %v2692, %v2916
      %v2918 = vpop.f32.mrb[0].mxu0
      %2919 = vmatprep.mubr.f32.mxu0 %v475
      %2920 = vmatmul.mubr.f32.gmra.mrb[0].mxu0 %v474
      %v2921 = vpop.f32.mrb[0].mxu0
      %v2922 = vadd.f32 %v2697, %v2921
      %v2923 = vpop.f32.mrb[0].mxu0
      %2924 = vmatprep.mubr.f32.mxu0 %v507
      %2925 = vmatmul.mubr.f32.gmra.mrb[0].mxu0 %v506
      %v2926 = vpop.f32.mrb[0].mxu0
      %v2927 = vadd.f32 %v2702, %v2926
      %v2928 = vpop.f32.mrb[0].mxu0
      %2929 = vmatprep.mubr.f32.mxu0 %v539
      %2930 = vmatmul.mubr.f32.gmra.mrb[0].mxu0 %v538
      %v2931 = vpop.f32.mrb[0].mxu0
      %v2932 = vadd.f32 %v2707, %v2931
      %v2933 = vpop.f32.mrb[0].mxu0
      %2934 = vmatprep.mubr.f32.mxu0 %v571
      %2935 = vmatmul.mubr.f32.gmra.mrb[0].mxu0 %v570
      %v2936 = vpop.f32.mrb[0].mxu0
      %v2937 = vadd.f32 %v2712, %v2936
      %v2938 = vpop.f32.mrb[0].mxu0
      %2939 = vmatprep.mubr.f32.mxu0 %v603
      %2940 = vmatmul.mubr.f32.gmra.mrb[0].mxu0 %v602
      %v2941 = vpop.f32.mrb[0].mxu0
      %v2942 = vadd.f32 %v2717, %v2941
      %v2943 = vpop.f32.mrb[0].mxu0
      %2944 = vmatprep.mubr.f32.mxu0 %v635
      %2945 = vmatmul.mubr.f32.gmra.mrb[0].mxu0 %v634
      %v2946 = vpop.f32.mrb[0].mxu0
      %v2947 = vadd.f32 %v2722, %v2946
      %v2948 = vpop.f32.mrb[0].mxu0
      %2949 = vmatprep.mubr.f32.mxu0 %v667
      %2950 = vmatmul.mubr.f32.gmra.mrb[0].mxu0 %v666
      %v2951 = vpop.f32.mrb[0].mxu0
      %v2952 = vadd.f32 %v2727, %v2951
      %v2953 = vpop.f32.mrb[0].mxu0
      %2954 = vmatprep.mubr.f32.mxu0 %v699
      %2955 = vmatmul.mubr.f32.gmra.mrb[0].mxu0 %v698
      %v2956 = vpop.f32.mrb[0].mxu0
      %v2957 = vadd.f32 %v2732, %v2956
      %v2958 = vpop.f32.mrb[0].mxu0
      %2959 = vmatprep.mubr.f32.mxu0 %v731
      %2960 = vmatmul.mubr.f32.gmra.mrb[0].mxu0 %v730
      %v2961 = vpop.f32.mrb[0].mxu0
      %v2962 = vadd.f32 %v2737, %v2961
      %v2963 = vpop.f32.mrb[0].mxu0
      %2964 = vmatprep.mubr.f32.mxu0 %v763
      %2965 = vmatmul.mubr.f32.gmra.mrb[0].mxu0 %v762
      %v2966 = vpop.f32.mrb[0].mxu0
      %v2967 = vadd.f32 %v2742, %v2966
      %v2968 = vpop.f32.mrb[0].mxu0
      %2969 = vmatprep.mubr.f32.mxu0 %v795
      %2970 = vmatmul.mubr.f32.gmra.mrb[0].mxu0 %v794
      %v2971 = vpop.f32.mrb[0].mxu0
      %v2972 = vadd.f32 %v2747, %v2971
      %v2973 = vpop.f32.mrb[0].mxu0
      %2974 = vmatprep.mubr.f32.mxu0 %v827
      %2975 = vmatmul.mubr.f32.gmra.mrb[0].mxu0 %v826
      %v2976 = vpop.f32.mrb[0].mxu0
      %v2977 = vadd.f32 %v2752, %v2976
      %v2978 = vpop.f32.mrb[0].mxu0
      %2979 = vmatprep.mubr.f32.mxu0 %v859
      %2980 = vmatmul.mubr.f32.gmra.mrb[0].mxu0 %v858
      %v2981 = vpop.f32.mrb[0].mxu0
      %v2982 = vadd.f32 %v2757, %v2981
      %v2983 = vpop.f32.mrb[0].mxu0
      %2984 = vmatprep.mubr.f32.mxu0 %v891
      %2985 = vmatmul.mubr.f32.gmra.mrb[0].mxu0 %v890
      %v2986 = vpop.f32.mrb[0].mxu0
      %v2987 = vadd.f32 %v2762, %v2986
      %v2988 = vpop.f32.mrb[0].mxu0
      %2989 = vmatprep.mubr.f32.mxu0 %v923
      %2990 = vmatmul.mubr.f32.gmra.mrb[0].mxu0 %v922
      %v2991 = vpop.f32.mrb[0].mxu0
      %v2992 = vadd.f32 %v2767, %v2991
      %v2993 = vpop.f32.mrb[0].mxu0
      %2994 = vmatprep.mubr.f32.mxu0 %v955
      %2995 = vmatmul.mubr.f32.gmra.mrb[0].mxu0 %v954
      %v2996 = vpop.f32.mrb[0].mxu0
      %v2997 = vadd.f32 %v2772, %v2996
      %v2998 = vpop.f32.mrb[0].mxu0
      %2999 = vmatprep.mubr.f32.mxu0 %v987
      %3000 = vmatmul.mubr.f32.gmra.mrb[0].mxu0 %v986
      %v3001 = vpop.f32.mrb[0].mxu0
      %v3002 = vadd.f32 %v2777, %v3001
      %v3003 = vpop.f32.mrb[0].mxu0
      %3004 = vmatprep.mubr.f32.mxu0 %v1019
      %3005 = vmatmul.mubr.f32.gmra.mrb[0].mxu0 %v1018
      %v3006 = vpop.f32.mrb[0].mxu0
      %v3007 = vadd.f32 %v2782, %v3006
      %v3008 = vpop.f32.mrb[0].mxu0
      %3009 = vmatprep.mubr.f32.mxu0 %v1051
      %3010 = vmatmul.mubr.f32.gmra.mrb[0].mxu0 %v1050
      %v3011 = vpop.f32.mrb[0].mxu0
      %v3012 = vadd.f32 %v2787, %v3011
      %v3013 = vpop.f32.mrb[0].mxu0
      %3014 = vmatprep.mubr.f32.mxu0 %v1083
      %3015 = vmatmul.mubr.f32.gmra.mrb[0].mxu0 %v1082
      %v3016 = vpop.f32.mrb[0].mxu0
      %v3017 = vadd.f32 %v2792, %v3016
      %v3018 = vpop.f32.mrb[0].mxu0
      %3019 = vmatprep.mubr.f32.mxu0 %v1115
      %3020 = vmatmul.mubr.f32.gmra.mrb[0].mxu0 %v1114
      %v3021 = vpop.f32.mrb[0].mxu0
      %v3022 = vadd.f32 %v2797, %v3021
      %v3023 = vpop.f32.mrb[0].mxu0
      %3024 = vmatprep.mubr.f32.mxu0 %v1147
      %3025 = vmatmul.mubr.f32.gmra.mrb[0].mxu0 %v1146
      %v3026 = vpop.f32.mrb[0].mxu0
      %v3027 = vadd.f32 %v2802, %v3026
      %v3028 = vpop.f32.mrb[0].mxu0
      %3029 = vdwg.mxu0
      %3030 = vmatprep.subr.mxu0 0.0
      %3031 = vmatpush1.msra.mxu0 %v1360
      %3032 = vmatprep.subr.mxu0 0.0
      %3033 = vmatpush1.msra.mxu0 %v1361
      %3034 = vmatprep.subr.mxu0 0.0
      %3035 = vmatpush1.msra.mxu0 %v1362
      %3036 = vmatprep.subr.mxu0 0.0
      %3037 = vmatpush1.msra.mxu0 %v1363
      %3038 = vmatprep.subr.mxu0 0.0
      %3039 = vmatpush1.msra.mxu0 %v1364
      %3040 = vmatprep.subr.mxu0 0.0
      %3041 = vmatpush1.msra.mxu0 %v1365
      %3042 = vmatprep.subr.mxu0 0.0
      %3043 = vmatpush1.msra.mxu0 %v1366
      %3044 = vmatprep.subr.mxu0 0.0
      %3045 = vmatpush1.msra.mxu0 %v1367
      %3046 = vmatprep.subr.mxu0 0.0
      %3047 = vmatpush1.msra.mxu0 %v1368
      %3048 = vmatprep.subr.mxu0 0.0
      %3049 = vmatpush1.msra.mxu0 %v1369
      %3050 = vmatprep.subr.mxu0 0.0
      %3051 = vmatpush1.msra.mxu0 %v1370
      %3052 = vmatprep.subr.mxu0 0.0
      %3053 = vmatpush1.msra.mxu0 %v1371
      %3054 = vmatprep.subr.mxu0 0.0
      %3055 = vmatpush1.msra.mxu0 %v1372
      %3056 = vmatprep.subr.mxu0 0.0
      %3057 = vmatpush1.msra.mxu0 %v1373
      %3058 = vmatprep.subr.mxu0 0.0
      %3059 = vmatpush1.msra.mxu0 %v1374
      %3060 = vmatprep.subr.mxu0 0.0
      %3061 = vmatpush1.msra.mxu0 %v1375
      %3062 = vmatprep.subr.mxu0 0.0
      %3063 = vmatpush1.msra.mxu0 %v1376
      %3064 = vmatprep.subr.mxu0 0.0
      %3065 = vmatpush1.msra.mxu0 %v1377
      %3066 = vmatprep.subr.mxu0 0.0
      %3067 = vmatpush1.msra.mxu0 %v1378
      %3068 = vmatprep.subr.mxu0 0.0
      %3069 = vmatpush1.msra.mxu0 %v1379
      %3070 = vmatprep.subr.mxu0 0.0
      %3071 = vmatpush1.msra.mxu0 %v1380
      %3072 = vmatprep.subr.mxu0 0.0
      %3073 = vmatpush1.msra.mxu0 %v1381
      %3074 = vmatprep.subr.mxu0 0.0
      %3075 = vmatpush1.msra.mxu0 %v1382
      %3076 = vmatprep.subr.mxu0 0.0
      %3077 = vmatpush1.msra.mxu0 %v1383
      %3078 = vmatprep.subr.mxu0 0.0
      %3079 = vmatpush1.msra.mxu0 %v1384
      %3080 = vmatprep.subr.mxu0 0.0
      %3081 = vmatpush1.msra.mxu0 %v1385
      %3082 = vmatprep.subr.mxu0 0.0
      %3083 = vmatpush1.msra.mxu0 %v1386
      %3084 = vmatprep.subr.mxu0 0.0
      %3085 = vmatpush1.msra.mxu0 %v1387
      %3086 = vmatprep.subr.mxu0 0.0
      %3087 = vmatpush1.msra.mxu0 %v1388
      %3088 = vmatprep.subr.mxu0 0.0
      %3089 = vmatpush1.msra.mxu0 %v1389
      %3090 = vmatprep.subr.mxu0 0.0
      %3091 = vmatpush1.msra.mxu0 %v1390
      %3092 = vmatprep.subr.mxu0 0.0
      %3093 = vmatpush1.msra.mxu0 %v1391
      %3094 = vmatprep.mubr.f32.mxu0 %v157
      %3095 = vmatmul.mubr.f32.gmra.mrb[0].mxu0 %v156
      %v3096 = vpop.f32.mrb[0].mxu0
      %v3097 = vadd.f32 %v2872, %v3096
      %v3098 = vpop.f32.mrb[0].mxu0
      %3099 = vmatprep.mubr.f32.mxu0 %v189
      %3100 = vmatmul.mubr.f32.gmra.mrb[0].mxu0 %v188
      %v3101 = vpop.f32.mrb[0].mxu0
      %v3102 = vadd.f32 %v2877, %v3101
      %v3103 = vpop.f32.mrb[0].mxu0
      %3104 = vmatprep.mubr.f32.mxu0 %v221
      %3105 = vmatmul.mubr.f32.gmra.mrb[0].mxu0 %v220
      %v3106 = vpop.f32.mrb[0].mxu0
      %v3107 = vadd.f32 %v2882, %v3106
      %v3108 = vpop.f32.mrb[0].mxu0
      %3109 = vmatprep.mubr.f32.mxu0 %v253
      %3110 = vmatmul.mubr.f32.gmra.mrb[0].mxu0 %v252
      %v3111 = vpop.f32.mrb[0].mxu0
      %v3112 = vadd.f32 %v2887, %v3111
      %v3113 = vpop.f32.mrb[0].mxu0
      %3114 = vmatprep.mubr.f32.mxu0 %v285
      %3115 = vmatmul.mubr.f32.gmra.mrb[0].mxu0 %v284
      %v3116 = vpop.f32.mrb[0].mxu0
      %v3117 = vadd.f32 %v2892, %v3116
      %v3118 = vpop.f32.mrb[0].mxu0
      %3119 = vmatprep.mubr.f32.mxu0 %v317
      %3120 = vmatmul.mubr.f32.gmra.mrb[0].mxu0 %v316
      %v3121 = vpop.f32.mrb[0].mxu0
      %v3122 = vadd.f32 %v2897, %v3121
      %v3123 = vpop.f32.mrb[0].mxu0
      %3124 = vmatprep.mubr.f32.mxu0 %v349
      %3125 = vmatmul.mubr.f32.gmra.mrb[0].mxu0 %v348
      %v3126 = vpop.f32.mrb[0].mxu0
      %v3127 = vadd.f32 %v2902, %v3126
      %v3128 = vpop.f32.mrb[0].mxu0
      %3129 = vmatprep.mubr.f32.mxu0 %v381
      %3130 = vmatmul.mubr.f32.gmra.mrb[0].mxu0 %v380
      %v3131 = vpop.f32.mrb[0].mxu0
      %v3132 = vadd.f32 %v2907, %v3131
      %v3133 = vpop.f32.mrb[0].mxu0
      %3134 = vmatprep.mubr.f32.mxu0 %v413
      %3135 = vmatmul.mubr.f32.gmra.mrb[0].mxu0 %v412
      %v3136 = vpop.f32.mrb[0].mxu0
      %v3137 = vadd.f32 %v2912, %v3136
      %v3138 = vpop.f32.mrb[0].mxu0
      %3139 = vmatprep.mubr.f32.mxu0 %v445
      %3140 = vmatmul.mubr.f32.gmra.mrb[0].mxu0 %v444
      %v3141 = vpop.f32.mrb[0].mxu0
      %v3142 = vadd.f32 %v2917, %v3141
      %v3143 = vpop.f32.mrb[0].mxu0
      %3144 = vmatprep.mubr.f32.mxu0 %v477
      %3145 = vmatmul.mubr.f32.gmra.mrb[0].mxu0 %v476
      %v3146 = vpop.f32.mrb[0].mxu0
      %v3147 = vadd.f32 %v2922, %v3146
      %v3148 = vpop.f32.mrb[0].mxu0
      %3149 = vmatprep.mubr.f32.mxu0 %v509
      %3150 = vmatmul.mubr.f32.gmra.mrb[0].mxu0 %v508
      %v3151 = vpop.f32.mrb[0].mxu0
      %v3152 = vadd.f32 %v2927, %v3151
      %v3153 = vpop.f32.mrb[0].mxu0
      %3154 = vmatprep.mubr.f32.mxu0 %v541
      %3155 = vmatmul.mubr.f32.gmra.mrb[0].mxu0 %v540
      %v3156 = vpop.f32.mrb[0].mxu0
      %v3157 = vadd.f32 %v2932, %v3156
      %v3158 = vpop.f32.mrb[0].mxu0
      %3159 = vmatprep.mubr.f32.mxu0 %v573
      %3160 = vmatmul.mubr.f32.gmra.mrb[0].mxu0 %v572
      %v3161 = vpop.f32.mrb[0].mxu0
      %v3162 = vadd.f32 %v2937, %v3161
      %v3163 = vpop.f32.mrb[0].mxu0
      %3164 = vmatprep.mubr.f32.mxu0 %v605
      %3165 = vmatmul.mubr.f32.gmra.mrb[0].mxu0 %v604
      %v3166 = vpop.f32.mrb[0].mxu0
      %v3167 = vadd.f32 %v2942, %v3166
      %v3168 = vpop.f32.mrb[0].mxu0
      %3169 = vmatprep.mubr.f32.mxu0 %v637
      %3170 = vmatmul.mubr.f32.gmra.mrb[0].mxu0 %v636
      %v3171 = vpop.f32.mrb[0].mxu0
      %v3172 = vadd.f32 %v2947, %v3171
      %v3173 = vpop.f32.mrb[0].mxu0
      %3174 = vmatprep.mubr.f32.mxu0 %v669
      %3175 = vmatmul.mubr.f32.gmra.mrb[0].mxu0 %v668
      %v3176 = vpop.f32.mrb[0].mxu0
      %v3177 = vadd.f32 %v2952, %v3176
      %v3178 = vpop.f32.mrb[0].mxu0
      %3179 = vmatprep.mubr.f32.mxu0 %v701
      %3180 = vmatmul.mubr.f32.gmra.mrb[0].mxu0 %v700
      %v3181 = vpop.f32.mrb[0].mxu0
      %v3182 = vadd.f32 %v2957, %v3181
      %v3183 = vpop.f32.mrb[0].mxu0
      %3184 = vmatprep.mubr.f32.mxu0 %v733
      %3185 = vmatmul.mubr.f32.gmra.mrb[0].mxu0 %v732
      %v3186 = vpop.f32.mrb[0].mxu0
      %v3187 = vadd.f32 %v2962, %v3186
      %v3188 = vpop.f32.mrb[0].mxu0
      %3189 = vmatprep.mubr.f32.mxu0 %v765
      %3190 = vmatmul.mubr.f32.gmra.mrb[0].mxu0 %v764
      %v3191 = vpop.f32.mrb[0].mxu0
      %v3192 = vadd.f32 %v2967, %v3191
      %v3193 = vpop.f32.mrb[0].mxu0
      %3194 = vmatprep.mubr.f32.mxu0 %v797
      %3195 = vmatmul.mubr.f32.gmra.mrb[0].mxu0 %v796
      %v3196 = vpop.f32.mrb[0].mxu0
      %v3197 = vadd.f32 %v2972, %v3196
      %v3198 = vpop.f32.mrb[0].mxu0
      %3199 = vmatprep.mubr.f32.mxu0 %v829
      %3200 = vmatmul.mubr.f32.gmra.mrb[0].mxu0 %v828
      %v3201 = vpop.f32.mrb[0].mxu0
      %v3202 = vadd.f32 %v2977, %v3201
      %v3203 = vpop.f32.mrb[0].mxu0
      %3204 = vmatprep.mubr.f32.mxu0 %v861
      %3205 = vmatmul.mubr.f32.gmra.mrb[0].mxu0 %v860
      %v3206 = vpop.f32.mrb[0].mxu0
      %v3207 = vadd.f32 %v2982, %v3206
      %v3208 = vpop.f32.mrb[0].mxu0
      %3209 = vmatprep.mubr.f32.mxu0 %v893
      %3210 = vmatmul.mubr.f32.gmra.mrb[0].mxu0 %v892
      %v3211 = vpop.f32.mrb[0].mxu0
      %v3212 = vadd.f32 %v2987, %v3211
      %v3213 = vpop.f32.mrb[0].mxu0
      %3214 = vmatprep.mubr.f32.mxu0 %v925
      %3215 = vmatmul.mubr.f32.gmra.mrb[0].mxu0 %v924
      %v3216 = vpop.f32.mrb[0].mxu0
      %v3217 = vadd.f32 %v2992, %v3216
      %v3218 = vpop.f32.mrb[0].mxu0
      %3219 = vmatprep.mubr.f32.mxu0 %v957
      %3220 = vmatmul.mubr.f32.gmra.mrb[0].mxu0 %v956
      %v3221 = vpop.f32.mrb[0].mxu0
      %v3222 = vadd.f32 %v2997, %v3221
      %v3223 = vpop.f32.mrb[0].mxu0
      %3224 = vmatprep.mubr.f32.mxu0 %v989
      %3225 = vmatmul.mubr.f32.gmra.mrb[0].mxu0 %v988
      %v3226 = vpop.f32.mrb[0].mxu0
      %v3227 = vadd.f32 %v3002, %v3226
      %v3228 = vpop.f32.mrb[0].mxu0
      %3229 = vmatprep.mubr.f32.mxu0 %v1021
      %3230 = vmatmul.mubr.f32.gmra.mrb[0].mxu0 %v1020
      %v3231 = vpop.f32.mrb[0].mxu0
      %v3232 = vadd.f32 %v3007, %v3231
      %v3233 = vpop.f32.mrb[0].mxu0
      %3234 = vmatprep.mubr.f32.mxu0 %v1053
      %3235 = vmatmul.mubr.f32.gmra.mrb[0].mxu0 %v1052
      %v3236 = vpop.f32.mrb[0].mxu0
      %v3237 = vadd.f32 %v3012, %v3236
      %v3238 = vpop.f32.mrb[0].mxu0
      %3239 = vmatprep.mubr.f32.mxu0 %v1085
      %3240 = vmatmul.mubr.f32.gmra.mrb[0].mxu0 %v1084
      %v3241 = vpop.f32.mrb[0].mxu0
      %v3242 = vadd.f32 %v3017, %v3241
      %v3243 = vpop.f32.mrb[0].mxu0
      %3244 = vmatprep.mubr.f32.mxu0 %v1117
      %3245 = vmatmul.mubr.f32.gmra.mrb[0].mxu0 %v1116
      %v3246 = vpop.f32.mrb[0].mxu0
      %v3247 = vadd.f32 %v3022, %v3246
      %v3248 = vpop.f32.mrb[0].mxu0
      %3249 = vmatprep.mubr.f32.mxu0 %v1149
      %3250 = vmatmul.mubr.f32.gmra.mrb[0].mxu0 %v1148
      %v3251 = vpop.f32.mrb[0].mxu0
      %v3252 = vadd.f32 %v3027, %v3251
      %v3253 = vpop.f32.mrb[0].mxu0
      %3254 = vdwg.mxu0
      %3255 = vmatprep.subr.mxu0 0.0
      %3256 = vmatpush1.msra.mxu0 %v1392
      %3257 = vmatprep.subr.mxu0 0.0
      %3258 = vmatpush1.msra.mxu0 %v1393
      %3259 = vmatprep.subr.mxu0 0.0
      %3260 = vmatpush1.msra.mxu0 %v1394
      %3261 = vmatprep.subr.mxu0 0.0
      %3262 = vmatpush1.msra.mxu0 %v1395
      %3263 = vmatprep.subr.mxu0 0.0
      %3264 = vmatpush1.msra.mxu0 %v1396
      %3265 = vmatprep.subr.mxu0 0.0
      %3266 = vmatpush1.msra.mxu0 %v1397
      %3267 = vmatprep.subr.mxu0 0.0
      %3268 = vmatpush1.msra.mxu0 %v1398
      %3269 = vmatprep.subr.mxu0 0.0
      %3270 = vmatpush1.msra.mxu0 %v1399
      %3271 = vmatprep.subr.mxu0 0.0
      %3272 = vmatpush1.msra.mxu0 %v1400
      %3273 = vmatprep.subr.mxu0 0.0
      %3274 = vmatpush1.msra.mxu0 %v1401
      %3275 = vmatprep.subr.mxu0 0.0
      %3276 = vmatpush1.msra.mxu0 %v1402
      %3277 = vmatprep.subr.mxu0 0.0
      %3278 = vmatpush1.msra.mxu0 %v1403
      %3279 = vmatprep.subr.mxu0 0.0
      %3280 = vmatpush1.msra.mxu0 %v1404
      %3281 = vmatprep.subr.mxu0 0.0
      %3282 = vmatpush1.msra.mxu0 %v1405
      %3283 = vmatprep.subr.mxu0 0.0
      %3284 = vmatpush1.msra.mxu0 %v1406
      %3285 = vmatprep.subr.mxu0 0.0
      %3286 = vmatpush1.msra.mxu0 %v1407
      %3287 = vmatprep.subr.mxu0 0.0
      %3288 = vmatpush1.msra.mxu0 %v1408
      %3289 = vmatprep.subr.mxu0 0.0
      %3290 = vmatpush1.msra.mxu0 %v1409
      %3291 = vmatprep.subr.mxu0 0.0
      %3292 = vmatpush1.msra.mxu0 %v1410
      %3293 = vmatprep.subr.mxu0 0.0
      %3294 = vmatpush1.msra.mxu0 %v1411
      %3295 = vmatprep.subr.mxu0 0.0
      %3296 = vmatpush1.msra.mxu0 %v1412
      %3297 = vmatprep.subr.mxu0 0.0
      %3298 = vmatpush1.msra.mxu0 %v1413
      %3299 = vmatprep.subr.mxu0 0.0
      %3300 = vmatpush1.msra.mxu0 %v1414
      %3301 = vmatprep.subr.mxu0 0.0
      %3302 = vmatpush1.msra.mxu0 %v1415
      %3303 = vmatprep.subr.mxu0 0.0
      %3304 = vmatpush1.msra.mxu0 %v1416
      %3305 = vmatprep.subr.mxu0 0.0
      %3306 = vmatpush1.msra.mxu0 %v1417
      %3307 = vmatprep.subr.mxu0 0.0
      %3308 = vmatpush1.msra.mxu0 %v1418
      %3309 = vmatprep.subr.mxu0 0.0
      %3310 = vmatpush1.msra.mxu0 %v1419
      %3311 = vmatprep.subr.mxu0 0.0
      %3312 = vmatpush1.msra.mxu0 %v1420
      %3313 = vmatprep.subr.mxu0 0.0
      %3314 = vmatpush1.msra.mxu0 %v1421
      %3315 = vmatprep.subr.mxu0 0.0
      %3316 = vmatpush1.msra.mxu0 %v1422
      %3317 = vmatprep.subr.mxu0 0.0
      %3318 = vmatpush1.msra.mxu0 %v1423
      %3319 = vmatprep.mubr.f32.mxu0 %v159
      %3320 = vmatmul.mubr.f32.gmra.mrb[0].mxu0 %v158
      %v3321 = vpop.f32.mrb[0].mxu0
      %v3322 = vadd.f32 %v3097, %v3321
      %v3323 = vpop.f32.mrb[0].mxu0
      %3324 = vmatprep.mubr.f32.mxu0 %v191
      %3325 = vmatmul.mubr.f32.gmra.mrb[0].mxu0 %v190
      %v3326 = vpop.f32.mrb[0].mxu0
      %v3327 = vadd.f32 %v3102, %v3326
      %v3328 = vpop.f32.mrb[0].mxu0
      %3329 = vmatprep.mubr.f32.mxu0 %v223
      %3330 = vmatmul.mubr.f32.gmra.mrb[0].mxu0 %v222
      %v3331 = vpop.f32.mrb[0].mxu0
      %v3332 = vadd.f32 %v3107, %v3331
      %v3333 = vpop.f32.mrb[0].mxu0
      %3334 = vmatprep.mubr.f32.mxu0 %v255
      %3335 = vmatmul.mubr.f32.gmra.mrb[0].mxu0 %v254
      %v3336 = vpop.f32.mrb[0].mxu0
      %v3337 = vadd.f32 %v3112, %v3336
      %v3338 = vpop.f32.mrb[0].mxu0
      %3339 = vmatprep.mubr.f32.mxu0 %v287
      %3340 = vmatmul.mubr.f32.gmra.mrb[0].mxu0 %v286
      %v3341 = vpop.f32.mrb[0].mxu0
      %v3342 = vadd.f32 %v3117, %v3341
      %v3343 = vpop.f32.mrb[0].mxu0
      %3344 = vmatprep.mubr.f32.mxu0 %v319
      %3345 = vmatmul.mubr.f32.gmra.mrb[0].mxu0 %v318
      %v3346 = vpop.f32.mrb[0].mxu0
      %v3347 = vadd.f32 %v3122, %v3346
      %v3348 = vpop.f32.mrb[0].mxu0
      %3349 = vmatprep.mubr.f32.mxu0 %v351
      %3350 = vmatmul.mubr.f32.gmra.mrb[0].mxu0 %v350
      %v3351 = vpop.f32.mrb[0].mxu0
      %v3352 = vadd.f32 %v3127, %v3351
      %v3353 = vpop.f32.mrb[0].mxu0
      %3354 = vmatprep.mubr.f32.mxu0 %v383
      %3355 = vmatmul.mubr.f32.gmra.mrb[0].mxu0 %v382
      %v3356 = vpop.f32.mrb[0].mxu0
      %v3357 = vadd.f32 %v3132, %v3356
      %v3358 = vpop.f32.mrb[0].mxu0
      %3359 = vmatprep.mubr.f32.mxu0 %v415
      %3360 = vmatmul.mubr.f32.gmra.mrb[0].mxu0 %v414
      %v3361 = vpop.f32.mrb[0].mxu0
      %v3362 = vadd.f32 %v3137, %v3361
      %v3363 = vpop.f32.mrb[0].mxu0
      %3364 = vmatprep.mubr.f32.mxu0 %v447
      %3365 = vmatmul.mubr.f32.gmra.mrb[0].mxu0 %v446
      %v3366 = vpop.f32.mrb[0].mxu0
      %v3367 = vadd.f32 %v3142, %v3366
      %v3368 = vpop.f32.mrb[0].mxu0
      %3369 = vmatprep.mubr.f32.mxu0 %v479
      %3370 = vmatmul.mubr.f32.gmra.mrb[0].mxu0 %v478
      %v3371 = vpop.f32.mrb[0].mxu0
      %v3372 = vadd.f32 %v3147, %v3371
      %v3373 = vpop.f32.mrb[0].mxu0
      %3374 = vmatprep.mubr.f32.mxu0 %v511
      %3375 = vmatmul.mubr.f32.gmra.mrb[0].mxu0 %v510
      %v3376 = vpop.f32.mrb[0].mxu0
      %v3377 = vadd.f32 %v3152, %v3376
      %v3378 = vpop.f32.mrb[0].mxu0
      %3379 = vmatprep.mubr.f32.mxu0 %v543
      %3380 = vmatmul.mubr.f32.gmra.mrb[0].mxu0 %v542
      %v3381 = vpop.f32.mrb[0].mxu0
      %v3382 = vadd.f32 %v3157, %v3381
      %v3383 = vpop.f32.mrb[0].mxu0
      %3384 = vmatprep.mubr.f32.mxu0 %v575
      %3385 = vmatmul.mubr.f32.gmra.mrb[0].mxu0 %v574
      %v3386 = vpop.f32.mrb[0].mxu0
      %v3387 = vadd.f32 %v3162, %v3386
      %v3388 = vpop.f32.mrb[0].mxu0
      %3389 = vmatprep.mubr.f32.mxu0 %v607
      %3390 = vmatmul.mubr.f32.gmra.mrb[0].mxu0 %v606
      %v3391 = vpop.f32.mrb[0].mxu0
      %v3392 = vadd.f32 %v3167, %v3391
      %v3393 = vpop.f32.mrb[0].mxu0
      %3394 = vmatprep.mubr.f32.mxu0 %v639
      %3395 = vmatmul.mubr.f32.gmra.mrb[0].mxu0 %v638
      %v3396 = vpop.f32.mrb[0].mxu0
      %v3397 = vadd.f32 %v3172, %v3396
      %v3398 = vpop.f32.mrb[0].mxu0
      %3399 = vmatprep.mubr.f32.mxu0 %v671
      %3400 = vmatmul.mubr.f32.gmra.mrb[0].mxu0 %v670
      %v3401 = vpop.f32.mrb[0].mxu0
      %v3402 = vadd.f32 %v3177, %v3401
      %v3403 = vpop.f32.mrb[0].mxu0
      %3404 = vmatprep.mubr.f32.mxu0 %v703
      %3405 = vmatmul.mubr.f32.gmra.mrb[0].mxu0 %v702
      %v3406 = vpop.f32.mrb[0].mxu0
      %v3407 = vadd.f32 %v3182, %v3406
      %v3408 = vpop.f32.mrb[0].mxu0
      %3409 = vmatprep.mubr.f32.mxu0 %v735
      %3410 = vmatmul.mubr.f32.gmra.mrb[0].mxu0 %v734
      %v3411 = vpop.f32.mrb[0].mxu0
      %v3412 = vadd.f32 %v3187, %v3411
      %v3413 = vpop.f32.mrb[0].mxu0
      %3414 = vmatprep.mubr.f32.mxu0 %v767
      %3415 = vmatmul.mubr.f32.gmra.mrb[0].mxu0 %v766
      %v3416 = vpop.f32.mrb[0].mxu0
      %v3417 = vadd.f32 %v3192, %v3416
      %v3418 = vpop.f32.mrb[0].mxu0
      %3419 = vmatprep.mubr.f32.mxu0 %v799
      %3420 = vmatmul.mubr.f32.gmra.mrb[0].mxu0 %v798
      %v3421 = vpop.f32.mrb[0].mxu0
      %v3422 = vadd.f32 %v3197, %v3421
      %v3423 = vpop.f32.mrb[0].mxu0
      %3424 = vmatprep.mubr.f32.mxu0 %v831
      %3425 = vmatmul.mubr.f32.gmra.mrb[0].mxu0 %v830
      %v3426 = vpop.f32.mrb[0].mxu0
      %v3427 = vadd.f32 %v3202, %v3426
      %v3428 = vpop.f32.mrb[0].mxu0
      %3429 = vmatprep.mubr.f32.mxu0 %v863
      %3430 = vmatmul.mubr.f32.gmra.mrb[0].mxu0 %v862
      %v3431 = vpop.f32.mrb[0].mxu0
      %v3432 = vadd.f32 %v3207, %v3431
      %v3433 = vpop.f32.mrb[0].mxu0
      %3434 = vmatprep.mubr.f32.mxu0 %v895
      %3435 = vmatmul.mubr.f32.gmra.mrb[0].mxu0 %v894
      %v3436 = vpop.f32.mrb[0].mxu0
      %v3437 = vadd.f32 %v3212, %v3436
      %v3438 = vpop.f32.mrb[0].mxu0
      %3439 = vmatprep.mubr.f32.mxu0 %v927
      %3440 = vmatmul.mubr.f32.gmra.mrb[0].mxu0 %v926
      %v3441 = vpop.f32.mrb[0].mxu0
      %v3442 = vadd.f32 %v3217, %v3441
      %v3443 = vpop.f32.mrb[0].mxu0
      %3444 = vmatprep.mubr.f32.mxu0 %v959
      %3445 = vmatmul.mubr.f32.gmra.mrb[0].mxu0 %v958
      %v3446 = vpop.f32.mrb[0].mxu0
      %v3447 = vadd.f32 %v3222, %v3446
      %v3448 = vpop.f32.mrb[0].mxu0
      %3449 = vmatprep.mubr.f32.mxu0 %v991
      %3450 = vmatmul.mubr.f32.gmra.mrb[0].mxu0 %v990
      %v3451 = vpop.f32.mrb[0].mxu0
      %v3452 = vadd.f32 %v3227, %v3451
      %v3453 = vpop.f32.mrb[0].mxu0
      %3454 = vmatprep.mubr.f32.mxu0 %v1023
      %3455 = vmatmul.mubr.f32.gmra.mrb[0].mxu0 %v1022
      %v3456 = vpop.f32.mrb[0].mxu0
      %v3457 = vadd.f32 %v3232, %v3456
      %v3458 = vpop.f32.mrb[0].mxu0
      %3459 = vmatprep.mubr.f32.mxu0 %v1055
      %3460 = vmatmul.mubr.f32.gmra.mrb[0].mxu0 %v1054
      %v3461 = vpop.f32.mrb[0].mxu0
      %v3462 = vadd.f32 %v3237, %v3461
      %v3463 = vpop.f32.mrb[0].mxu0
      %3464 = vmatprep.mubr.f32.mxu0 %v1087
      %3465 = vmatmul.mubr.f32.gmra.mrb[0].mxu0 %v1086
      %v3466 = vpop.f32.mrb[0].mxu0
      %v3467 = vadd.f32 %v3242, %v3466
      %v3468 = vpop.f32.mrb[0].mxu0
      %3469 = vmatprep.mubr.f32.mxu0 %v1119
      %3470 = vmatmul.mubr.f32.gmra.mrb[0].mxu0 %v1118
      %v3471 = vpop.f32.mrb[0].mxu0
      %v3472 = vadd.f32 %v3247, %v3471
      %v3473 = vpop.f32.mrb[0].mxu0
      %3474 = vmatprep.mubr.f32.mxu0 %v1151
      %3475 = vmatmul.mubr.f32.gmra.mrb[0].mxu0 %v1150
      %v3476 = vpop.f32.mrb[0].mxu0
      %v3477 = vadd.f32 %v3252, %v3476
      %v3478 = vpop.f32.mrb[0].mxu0
      %3479 = vdwg.mxu0
      %3480 = vmatprep.subr.mxu0 0.0
      %3481 = vmatpush1.msra.mxu0 %v1424
      %3482 = vmatprep.subr.mxu0 0.0
      %3483 = vmatpush1.msra.mxu0 %v1425
      %3484 = vmatprep.subr.mxu0 0.0
      %3485 = vmatpush1.msra.mxu0 %v1426
      %3486 = vmatprep.subr.mxu0 0.0
      %3487 = vmatpush1.msra.mxu0 %v1427
      %3488 = vmatprep.subr.mxu0 0.0
      %3489 = vmatpush1.msra.mxu0 %v1428
      %3490 = vmatprep.subr.mxu0 0.0
      %3491 = vmatpush1.msra.mxu0 %v1429
      %3492 = vmatprep.subr.mxu0 0.0
      %3493 = vmatpush1.msra.mxu0 %v1430
      %3494 = vmatprep.subr.mxu0 0.0
      %3495 = vmatpush1.msra.mxu0 %v1431
      %3496 = vmatprep.subr.mxu0 0.0
      %3497 = vmatpush1.msra.mxu0 %v1432
      %3498 = vmatprep.subr.mxu0 0.0
      %3499 = vmatpush1.msra.mxu0 %v1433
      %3500 = vmatprep.subr.mxu0 0.0
      %3501 = vmatpush1.msra.mxu0 %v1434
      %3502 = vmatprep.subr.mxu0 0.0
      %3503 = vmatpush1.msra.mxu0 %v1435
      %3504 = vmatprep.subr.mxu0 0.0
      %3505 = vmatpush1.msra.mxu0 %v1436
      %3506 = vmatprep.subr.mxu0 0.0
      %3507 = vmatpush1.msra.mxu0 %v1437
      %3508 = vmatprep.subr.mxu0 0.0
      %3509 = vmatpush1.msra.mxu0 %v1438
      %3510 = vmatprep.subr.mxu0 0.0
      %3511 = vmatpush1.msra.mxu0 %v1439
      %3512 = vmatprep.subr.mxu0 0.0
      %3513 = vmatpush1.msra.mxu0 %v1440
      %3514 = vmatprep.subr.mxu0 0.0
      %3515 = vmatpush1.msra.mxu0 %v1441
      %3516 = vmatprep.subr.mxu0 0.0
      %3517 = vmatpush1.msra.mxu0 %v1442
      %3518 = vmatprep.subr.mxu0 0.0
      %3519 = vmatpush1.msra.mxu0 %v1443
      %3520 = vmatprep.subr.mxu0 0.0
      %3521 = vmatpush1.msra.mxu0 %v1444
      %3522 = vmatprep.subr.mxu0 0.0
      %3523 = vmatpush1.msra.mxu0 %v1445
      %3524 = vmatprep.subr.mxu0 0.0
      %3525 = vmatpush1.msra.mxu0 %v1446
      %3526 = vmatprep.subr.mxu0 0.0
      %3527 = vmatpush1.msra.mxu0 %v1447
      %3528 = vmatprep.subr.mxu0 0.0
      %3529 = vmatpush1.msra.mxu0 %v1448
      %3530 = vmatprep.subr.mxu0 0.0
      %3531 = vmatpush1.msra.mxu0 %v1449
      %3532 = vmatprep.subr.mxu0 0.0
      %3533 = vmatpush1.msra.mxu0 %v1450
      %3534 = vmatprep.subr.mxu0 0.0
      %3535 = vmatpush1.msra.mxu0 %v1451
      %3536 = vmatprep.subr.mxu0 0.0
      %3537 = vmatpush1.msra.mxu0 %v1452
      %3538 = vmatprep.subr.mxu0 0.0
      %3539 = vmatpush1.msra.mxu0 %v1453
      %3540 = vmatprep.subr.mxu0 0.0
      %3541 = vmatpush1.msra.mxu0 %v1454
      %3542 = vmatprep.subr.mxu0 0.0
      %3543 = vmatpush1.msra.mxu0 %v1455
      %3544 = vmatprep.mubr.f32.mxu0 %v161
      %3545 = vmatmul.mubr.f32.gmra.mrb[0].mxu0 %v160
      %v3546 = vpop.f32.mrb[0].mxu0
      %v3547 = vadd.f32 %v3322, %v3546
      %v3548 = vpop.f32.mrb[0].mxu0
      %3549 = vmatprep.mubr.f32.mxu0 %v193
      %3550 = vmatmul.mubr.f32.gmra.mrb[0].mxu0 %v192
      %v3551 = vpop.f32.mrb[0].mxu0
      %v3552 = vadd.f32 %v3327, %v3551
      %v3553 = vpop.f32.mrb[0].mxu0
      %3554 = vmatprep.mubr.f32.mxu0 %v225
      %3555 = vmatmul.mubr.f32.gmra.mrb[0].mxu0 %v224
      %v3556 = vpop.f32.mrb[0].mxu0
      %v3557 = vadd.f32 %v3332, %v3556
      %v3558 = vpop.f32.mrb[0].mxu0
      %3559 = vmatprep.mubr.f32.mxu0 %v257
      %3560 = vmatmul.mubr.f32.gmra.mrb[0].mxu0 %v256
      %v3561 = vpop.f32.mrb[0].mxu0
      %v3562 = vadd.f32 %v3337, %v3561
      %v3563 = vpop.f32.mrb[0].mxu0
      %3564 = vmatprep.mubr.f32.mxu0 %v289
      %3565 = vmatmul.mubr.f32.gmra.mrb[0].mxu0 %v288
      %v3566 = vpop.f32.mrb[0].mxu0
      %v3567 = vadd.f32 %v3342, %v3566
      %v3568 = vpop.f32.mrb[0].mxu0
      %3569 = vmatprep.mubr.f32.mxu0 %v321
      %3570 = vmatmul.mubr.f32.gmra.mrb[0].mxu0 %v320
      %v3571 = vpop.f32.mrb[0].mxu0
      %v3572 = vadd.f32 %v3347, %v3571
      %v3573 = vpop.f32.mrb[0].mxu0
      %3574 = vmatprep.mubr.f32.mxu0 %v353
      %3575 = vmatmul.mubr.f32.gmra.mrb[0].mxu0 %v352
      %v3576 = vpop.f32.mrb[0].mxu0
      %v3577 = vadd.f32 %v3352, %v3576
      %v3578 = vpop.f32.mrb[0].mxu0
      %3579 = vmatprep.mubr.f32.mxu0 %v385
      %3580 = vmatmul.mubr.f32.gmra.mrb[0].mxu0 %v384
      %v3581 = vpop.f32.mrb[0].mxu0
      %v3582 = vadd.f32 %v3357, %v3581
      %v3583 = vpop.f32.mrb[0].mxu0
      %3584 = vmatprep.mubr.f32.mxu0 %v417
      %3585 = vmatmul.mubr.f32.gmra.mrb[0].mxu0 %v416
      %v3586 = vpop.f32.mrb[0].mxu0
      %v3587 = vadd.f32 %v3362, %v3586
      %v3588 = vpop.f32.mrb[0].mxu0
      %3589 = vmatprep.mubr.f32.mxu0 %v449
      %3590 = vmatmul.mubr.f32.gmra.mrb[0].mxu0 %v448
      %v3591 = vpop.f32.mrb[0].mxu0
      %v3592 = vadd.f32 %v3367, %v3591
      %v3593 = vpop.f32.mrb[0].mxu0
      %3594 = vmatprep.mubr.f32.mxu0 %v481
      %3595 = vmatmul.mubr.f32.gmra.mrb[0].mxu0 %v480
      %v3596 = vpop.f32.mrb[0].mxu0
      %v3597 = vadd.f32 %v3372, %v3596
      %v3598 = vpop.f32.mrb[0].mxu0
      %3599 = vmatprep.mubr.f32.mxu0 %v513
      %3600 = vmatmul.mubr.f32.gmra.mrb[0].mxu0 %v512
      %v3601 = vpop.f32.mrb[0].mxu0
      %v3602 = vadd.f32 %v3377, %v3601
      %v3603 = vpop.f32.mrb[0].mxu0
      %3604 = vmatprep.mubr.f32.mxu0 %v545
      %3605 = vmatmul.mubr.f32.gmra.mrb[0].mxu0 %v544
      %v3606 = vpop.f32.mrb[0].mxu0
      %v3607 = vadd.f32 %v3382, %v3606
      %v3608 = vpop.f32.mrb[0].mxu0
      %3609 = vmatprep.mubr.f32.mxu0 %v577
      %3610 = vmatmul.mubr.f32.gmra.mrb[0].mxu0 %v576
      %v3611 = vpop.f32.mrb[0].mxu0
      %v3612 = vadd.f32 %v3387, %v3611
      %v3613 = vpop.f32.mrb[0].mxu0
      %3614 = vmatprep.mubr.f32.mxu0 %v609
      %3615 = vmatmul.mubr.f32.gmra.mrb[0].mxu0 %v608
      %v3616 = vpop.f32.mrb[0].mxu0
      %v3617 = vadd.f32 %v3392, %v3616
      %v3618 = vpop.f32.mrb[0].mxu0
      %3619 = vmatprep.mubr.f32.mxu0 %v641
      %3620 = vmatmul.mubr.f32.gmra.mrb[0].mxu0 %v640
      %v3621 = vpop.f32.mrb[0].mxu0
      %v3622 = vadd.f32 %v3397, %v3621
      %v3623 = vpop.f32.mrb[0].mxu0
      %3624 = vmatprep.mubr.f32.mxu0 %v673
      %3625 = vmatmul.mubr.f32.gmra.mrb[0].mxu0 %v672
      %v3626 = vpop.f32.mrb[0].mxu0
      %v3627 = vadd.f32 %v3402, %v3626
      %v3628 = vpop.f32.mrb[0].mxu0
      %3629 = vmatprep.mubr.f32.mxu0 %v705
      %3630 = vmatmul.mubr.f32.gmra.mrb[0].mxu0 %v704
      %v3631 = vpop.f32.mrb[0].mxu0
      %v3632 = vadd.f32 %v3407, %v3631
      %v3633 = vpop.f32.mrb[0].mxu0
      %3634 = vmatprep.mubr.f32.mxu0 %v737
      %3635 = vmatmul.mubr.f32.gmra.mrb[0].mxu0 %v736
      %v3636 = vpop.f32.mrb[0].mxu0
      %v3637 = vadd.f32 %v3412, %v3636
      %v3638 = vpop.f32.mrb[0].mxu0
      %3639 = vmatprep.mubr.f32.mxu0 %v769
      %3640 = vmatmul.mubr.f32.gmra.mrb[0].mxu0 %v768
      %v3641 = vpop.f32.mrb[0].mxu0
      %v3642 = vadd.f32 %v3417, %v3641
      %v3643 = vpop.f32.mrb[0].mxu0
      %3644 = vmatprep.mubr.f32.mxu0 %v801
      %3645 = vmatmul.mubr.f32.gmra.mrb[0].mxu0 %v800
      %v3646 = vpop.f32.mrb[0].mxu0
      %v3647 = vadd.f32 %v3422, %v3646
      %v3648 = vpop.f32.mrb[0].mxu0
      %3649 = vmatprep.mubr.f32.mxu0 %v833
      %3650 = vmatmul.mubr.f32.gmra.mrb[0].mxu0 %v832
      %v3651 = vpop.f32.mrb[0].mxu0
      %v3652 = vadd.f32 %v3427, %v3651
      %v3653 = vpop.f32.mrb[0].mxu0
      %3654 = vmatprep.mubr.f32.mxu0 %v865
      %3655 = vmatmul.mubr.f32.gmra.mrb[0].mxu0 %v864
      %v3656 = vpop.f32.mrb[0].mxu0
      %v3657 = vadd.f32 %v3432, %v3656
      %v3658 = vpop.f32.mrb[0].mxu0
      %3659 = vmatprep.mubr.f32.mxu0 %v897
      %3660 = vmatmul.mubr.f32.gmra.mrb[0].mxu0 %v896
      %v3661 = vpop.f32.mrb[0].mxu0
      %v3662 = vadd.f32 %v3437, %v3661
      %v3663 = vpop.f32.mrb[0].mxu0
      %3664 = vmatprep.mubr.f32.mxu0 %v929
      %3665 = vmatmul.mubr.f32.gmra.mrb[0].mxu0 %v928
      %v3666 = vpop.f32.mrb[0].mxu0
      %v3667 = vadd.f32 %v3442, %v3666
      %v3668 = vpop.f32.mrb[0].mxu0
      %3669 = vmatprep.mubr.f32.mxu0 %v961
      %3670 = vmatmul.mubr.f32.gmra.mrb[0].mxu0 %v960
      %v3671 = vpop.f32.mrb[0].mxu0
      %v3672 = vadd.f32 %v3447, %v3671
      %v3673 = vpop.f32.mrb[0].mxu0
      %3674 = vmatprep.mubr.f32.mxu0 %v993
      %3675 = vmatmul.mubr.f32.gmra.mrb[0].mxu0 %v992
      %v3676 = vpop.f32.mrb[0].mxu0
      %v3677 = vadd.f32 %v3452, %v3676
      %v3678 = vpop.f32.mrb[0].mxu0
      %3679 = vmatprep.mubr.f32.mxu0 %v1025
      %3680 = vmatmul.mubr.f32.gmra.mrb[0].mxu0 %v1024
      %v3681 = vpop.f32.mrb[0].mxu0
      %v3682 = vadd.f32 %v3457, %v3681
      %v3683 = vpop.f32.mrb[0].mxu0
      %3684 = vmatprep.mubr.f32.mxu0 %v1057
      %3685 = vmatmul.mubr.f32.gmra.mrb[0].mxu0 %v1056
      %v3686 = vpop.f32.mrb[0].mxu0
      %v3687 = vadd.f32 %v3462, %v3686
      %v3688 = vpop.f32.mrb[0].mxu0
      %3689 = vmatprep.mubr.f32.mxu0 %v1089
      %3690 = vmatmul.mubr.f32.gmra.mrb[0].mxu0 %v1088
      %v3691 = vpop.f32.mrb[0].mxu0
      %v3692 = vadd.f32 %v3467, %v3691
      %v3693 = vpop.f32.mrb[0].mxu0
      %3694 = vmatprep.mubr.f32.mxu0 %v1121
      %3695 = vmatmul.mubr.f32.gmra.mrb[0].mxu0 %v1120
      %v3696 = vpop.f32.mrb[0].mxu0
      %v3697 = vadd.f32 %v3472, %v3696
      %v3698 = vpop.f32.mrb[0].mxu0
      %3699 = vmatprep.mubr.f32.mxu0 %v1153
      %3700 = vmatmul.mubr.f32.gmra.mrb[0].mxu0 %v1152
      %v3701 = vpop.f32.mrb[0].mxu0
      %v3702 = vadd.f32 %v3477, %v3701
      %v3703 = vpop.f32.mrb[0].mxu0
      %3704 = vdwg.mxu0
      %3705 = vmatprep.subr.mxu0 0.0
      %3706 = vmatpush1.msra.mxu0 %v1456
      %3707 = vmatprep.subr.mxu0 0.0
      %3708 = vmatpush1.msra.mxu0 %v1457
      %3709 = vmatprep.subr.mxu0 0.0
      %3710 = vmatpush1.msra.mxu0 %v1458
      %3711 = vmatprep.subr.mxu0 0.0
      %3712 = vmatpush1.msra.mxu0 %v1459
      %3713 = vmatprep.subr.mxu0 0.0
      %3714 = vmatpush1.msra.mxu0 %v1460
      %3715 = vmatprep.subr.mxu0 0.0
      %3716 = vmatpush1.msra.mxu0 %v1461
      %3717 = vmatprep.subr.mxu0 0.0
      %3718 = vmatpush1.msra.mxu0 %v1462
      %3719 = vmatprep.subr.mxu0 0.0
      %3720 = vmatpush1.msra.mxu0 %v1463
      %3721 = vmatprep.subr.mxu0 0.0
      %3722 = vmatpush1.msra.mxu0 %v1464
      %3723 = vmatprep.subr.mxu0 0.0
      %3724 = vmatpush1.msra.mxu0 %v1465
      %3725 = vmatprep.subr.mxu0 0.0
      %3726 = vmatpush1.msra.mxu0 %v1466
      %3727 = vmatprep.subr.mxu0 0.0
      %3728 = vmatpush1.msra.mxu0 %v1467
      %3729 = vmatprep.subr.mxu0 0.0
      %3730 = vmatpush1.msra.mxu0 %v1468
      %3731 = vmatprep.subr.mxu0 0.0
      %3732 = vmatpush1.msra.mxu0 %v1469
      %3733 = vmatprep.subr.mxu0 0.0
      %3734 = vmatpush1.msra.mxu0 %v1470
      %3735 = vmatprep.subr.mxu0 0.0
      %3736 = vmatpush1.msra.mxu0 %v1471
      %3737 = vmatprep.subr.mxu0 0.0
      %3738 = vmatpush1.msra.mxu0 %v1472
      %3739 = vmatprep.subr.mxu0 0.0
      %3740 = vmatpush1.msra.mxu0 %v1473
      %3741 = vmatprep.subr.mxu0 0.0
      %3742 = vmatpush1.msra.mxu0 %v1474
      %3743 = vmatprep.subr.mxu0 0.0
      %3744 = vmatpush1.msra.mxu0 %v1475
      %3745 = vmatprep.subr.mxu0 0.0
      %3746 = vmatpush1.msra.mxu0 %v1476
      %3747 = vmatprep.subr.mxu0 0.0
      %3748 = vmatpush1.msra.mxu0 %v1477
      %3749 = vmatprep.subr.mxu0 0.0
      %3750 = vmatpush1.msra.mxu0 %v1478
      %3751 = vmatprep.subr.mxu0 0.0
      %3752 = vmatpush1.msra.mxu0 %v1479
      %3753 = vmatprep.subr.mxu0 0.0
      %3754 = vmatpush1.msra.mxu0 %v1480
      %3755 = vmatprep.subr.mxu0 0.0
      %3756 = vmatpush1.msra.mxu0 %v1481
      %3757 = vmatprep.subr.mxu0 0.0
      %3758 = vmatpush1.msra.mxu0 %v1482
      %3759 = vmatprep.subr.mxu0 0.0
      %3760 = vmatpush1.msra.mxu0 %v1483
      %3761 = vmatprep.subr.mxu0 0.0
      %3762 = vmatpush1.msra.mxu0 %v1484
      %3763 = vmatprep.subr.mxu0 0.0
      %3764 = vmatpush1.msra.mxu0 %v1485
      %3765 = vmatprep.subr.mxu0 0.0
      %3766 = vmatpush1.msra.mxu0 %v1486
      %3767 = vmatprep.subr.mxu0 0.0
      %3768 = vmatpush1.msra.mxu0 %v1487
      %3769 = vmatprep.mubr.f32.mxu0 %v163
      %3770 = vmatmul.mubr.f32.gmra.mrb[0].mxu0 %v162
      %v3771 = vpop.f32.mrb[0].mxu0
      %v3772 = vadd.f32 %v3547, %v3771
      %v3773 = vpop.f32.mrb[0].mxu0
      %3774 = vmatprep.mubr.f32.mxu0 %v195
      %3775 = vmatmul.mubr.f32.gmra.mrb[0].mxu0 %v194
      %v3776 = vpop.f32.mrb[0].mxu0
      %v3777 = vadd.f32 %v3552, %v3776
      %v3778 = vpop.f32.mrb[0].mxu0
      %3779 = vmatprep.mubr.f32.mxu0 %v227
      %3780 = vmatmul.mubr.f32.gmra.mrb[0].mxu0 %v226
      %v3781 = vpop.f32.mrb[0].mxu0
      %v3782 = vadd.f32 %v3557, %v3781
      %v3783 = vpop.f32.mrb[0].mxu0
      %3784 = vmatprep.mubr.f32.mxu0 %v259
      %3785 = vmatmul.mubr.f32.gmra.mrb[0].mxu0 %v258
      %v3786 = vpop.f32.mrb[0].mxu0
      %v3787 = vadd.f32 %v3562, %v3786
      %v3788 = vpop.f32.mrb[0].mxu0
      %3789 = vmatprep.mubr.f32.mxu0 %v291
      %3790 = vmatmul.mubr.f32.gmra.mrb[0].mxu0 %v290
      %v3791 = vpop.f32.mrb[0].mxu0
      %v3792 = vadd.f32 %v3567, %v3791
      %v3793 = vpop.f32.mrb[0].mxu0
      %3794 = vmatprep.mubr.f32.mxu0 %v323
      %3795 = vmatmul.mubr.f32.gmra.mrb[0].mxu0 %v322
      %v3796 = vpop.f32.mrb[0].mxu0
      %v3797 = vadd.f32 %v3572, %v3796
      %v3798 = vpop.f32.mrb[0].mxu0
      %3799 = vmatprep.mubr.f32.mxu0 %v355
      %3800 = vmatmul.mubr.f32.gmra.mrb[0].mxu0 %v354
      %v3801 = vpop.f32.mrb[0].mxu0
      %v3802 = vadd.f32 %v3577, %v3801
      %v3803 = vpop.f32.mrb[0].mxu0
      %3804 = vmatprep.mubr.f32.mxu0 %v387
      %3805 = vmatmul.mubr.f32.gmra.mrb[0].mxu0 %v386
      %v3806 = vpop.f32.mrb[0].mxu0
      %v3807 = vadd.f32 %v3582, %v3806
      %v3808 = vpop.f32.mrb[0].mxu0
      %3809 = vmatprep.mubr.f32.mxu0 %v419
      %3810 = vmatmul.mubr.f32.gmra.mrb[0].mxu0 %v418
      %v3811 = vpop.f32.mrb[0].mxu0
      %v3812 = vadd.f32 %v3587, %v3811
      %v3813 = vpop.f32.mrb[0].mxu0
      %3814 = vmatprep.mubr.f32.mxu0 %v451
      %3815 = vmatmul.mubr.f32.gmra.mrb[0].mxu0 %v450
      %v3816 = vpop.f32.mrb[0].mxu0
      %v3817 = vadd.f32 %v3592, %v3816
      %v3818 = vpop.f32.mrb[0].mxu0
      %3819 = vmatprep.mubr.f32.mxu0 %v483
      %3820 = vmatmul.mubr.f32.gmra.mrb[0].mxu0 %v482
      %v3821 = vpop.f32.mrb[0].mxu0
      %v3822 = vadd.f32 %v3597, %v3821
      %v3823 = vpop.f32.mrb[0].mxu0
      %3824 = vmatprep.mubr.f32.mxu0 %v515
      %3825 = vmatmul.mubr.f32.gmra.mrb[0].mxu0 %v514
      %v3826 = vpop.f32.mrb[0].mxu0
      %v3827 = vadd.f32 %v3602, %v3826
      %v3828 = vpop.f32.mrb[0].mxu0
      %3829 = vmatprep.mubr.f32.mxu0 %v547
      %3830 = vmatmul.mubr.f32.gmra.mrb[0].mxu0 %v546
      %v3831 = vpop.f32.mrb[0].mxu0
      %v3832 = vadd.f32 %v3607, %v3831
      %v3833 = vpop.f32.mrb[0].mxu0
      %3834 = vmatprep.mubr.f32.mxu0 %v579
      %3835 = vmatmul.mubr.f32.gmra.mrb[0].mxu0 %v578
      %v3836 = vpop.f32.mrb[0].mxu0
      %v3837 = vadd.f32 %v3612, %v3836
      %v3838 = vpop.f32.mrb[0].mxu0
      %3839 = vmatprep.mubr.f32.mxu0 %v611
      %3840 = vmatmul.mubr.f32.gmra.mrb[0].mxu0 %v610
      %v3841 = vpop.f32.mrb[0].mxu0
      %v3842 = vadd.f32 %v3617, %v3841
      %v3843 = vpop.f32.mrb[0].mxu0
      %3844 = vmatprep.mubr.f32.mxu0 %v643
      %3845 = vmatmul.mubr.f32.gmra.mrb[0].mxu0 %v642
      %v3846 = vpop.f32.mrb[0].mxu0
      %v3847 = vadd.f32 %v3622, %v3846
      %v3848 = vpop.f32.mrb[0].mxu0
      %3849 = vmatprep.mubr.f32.mxu0 %v675
      %3850 = vmatmul.mubr.f32.gmra.mrb[0].mxu0 %v674
      %v3851 = vpop.f32.mrb[0].mxu0
      %v3852 = vadd.f32 %v3627, %v3851
      %v3853 = vpop.f32.mrb[0].mxu0
      %3854 = vmatprep.mubr.f32.mxu0 %v707
      %3855 = vmatmul.mubr.f32.gmra.mrb[0].mxu0 %v706
      %v3856 = vpop.f32.mrb[0].mxu0
      %v3857 = vadd.f32 %v3632, %v3856
      %v3858 = vpop.f32.mrb[0].mxu0
      %3859 = vmatprep.mubr.f32.mxu0 %v739
      %3860 = vmatmul.mubr.f32.gmra.mrb[0].mxu0 %v738
      %v3861 = vpop.f32.mrb[0].mxu0
      %v3862 = vadd.f32 %v3637, %v3861
      %v3863 = vpop.f32.mrb[0].mxu0
      %3864 = vmatprep.mubr.f32.mxu0 %v771
      %3865 = vmatmul.mubr.f32.gmra.mrb[0].mxu0 %v770
      %v3866 = vpop.f32.mrb[0].mxu0
      %v3867 = vadd.f32 %v3642, %v3866
      %v3868 = vpop.f32.mrb[0].mxu0
      %3869 = vmatprep.mubr.f32.mxu0 %v803
      %3870 = vmatmul.mubr.f32.gmra.mrb[0].mxu0 %v802
      %v3871 = vpop.f32.mrb[0].mxu0
      %v3872 = vadd.f32 %v3647, %v3871
      %v3873 = vpop.f32.mrb[0].mxu0
      %3874 = vmatprep.mubr.f32.mxu0 %v835
      %3875 = vmatmul.mubr.f32.gmra.mrb[0].mxu0 %v834
      %v3876 = vpop.f32.mrb[0].mxu0
      %v3877 = vadd.f32 %v3652, %v3876
      %v3878 = vpop.f32.mrb[0].mxu0
      %3879 = vmatprep.mubr.f32.mxu0 %v867
      %3880 = vmatmul.mubr.f32.gmra.mrb[0].mxu0 %v866
      %v3881 = vpop.f32.mrb[0].mxu0
      %v3882 = vadd.f32 %v3657, %v3881
      %v3883 = vpop.f32.mrb[0].mxu0
      %3884 = vmatprep.mubr.f32.mxu0 %v899
      %3885 = vmatmul.mubr.f32.gmra.mrb[0].mxu0 %v898
      %v3886 = vpop.f32.mrb[0].mxu0
      %v3887 = vadd.f32 %v3662, %v3886
      %v3888 = vpop.f32.mrb[0].mxu0
      %3889 = vmatprep.mubr.f32.mxu0 %v931
      %3890 = vmatmul.mubr.f32.gmra.mrb[0].mxu0 %v930
      %v3891 = vpop.f32.mrb[0].mxu0
      %v3892 = vadd.f32 %v3667, %v3891
      %v3893 = vpop.f32.mrb[0].mxu0
      %3894 = vmatprep.mubr.f32.mxu0 %v963
      %3895 = vmatmul.mubr.f32.gmra.mrb[0].mxu0 %v962
      %v3896 = vpop.f32.mrb[0].mxu0
      %v3897 = vadd.f32 %v3672, %v3896
      %v3898 = vpop.f32.mrb[0].mxu0
      %3899 = vmatprep.mubr.f32.mxu0 %v995
      %3900 = vmatmul.mubr.f32.gmra.mrb[0].mxu0 %v994
      %v3901 = vpop.f32.mrb[0].mxu0
      %v3902 = vadd.f32 %v3677, %v3901
      %v3903 = vpop.f32.mrb[0].mxu0
      %3904 = vmatprep.mubr.f32.mxu0 %v1027
      %3905 = vmatmul.mubr.f32.gmra.mrb[0].mxu0 %v1026
      %v3906 = vpop.f32.mrb[0].mxu0
      %v3907 = vadd.f32 %v3682, %v3906
      %v3908 = vpop.f32.mrb[0].mxu0
      %3909 = vmatprep.mubr.f32.mxu0 %v1059
      %3910 = vmatmul.mubr.f32.gmra.mrb[0].mxu0 %v1058
      %v3911 = vpop.f32.mrb[0].mxu0
      %v3912 = vadd.f32 %v3687, %v3911
      %v3913 = vpop.f32.mrb[0].mxu0
      %3914 = vmatprep.mubr.f32.mxu0 %v1091
      %3915 = vmatmul.mubr.f32.gmra.mrb[0].mxu0 %v1090
      %v3916 = vpop.f32.mrb[0].mxu0
      %v3917 = vadd.f32 %v3692, %v3916
      %v3918 = vpop.f32.mrb[0].mxu0
      %3919 = vmatprep.mubr.f32.mxu0 %v1123
      %3920 = vmatmul.mubr.f32.gmra.mrb[0].mxu0 %v1122
      %v3921 = vpop.f32.mrb[0].mxu0
      %v3922 = vadd.f32 %v3697, %v3921
      %v3923 = vpop.f32.mrb[0].mxu0
      %3924 = vmatprep.mubr.f32.mxu0 %v1155
      %3925 = vmatmul.mubr.f32.gmra.mrb[0].mxu0 %v1154
      %v3926 = vpop.f32.mrb[0].mxu0
      %v3927 = vadd.f32 %v3702, %v3926
      %v3928 = vpop.f32.mrb[0].mxu0
      %3929 = vdwg.mxu0
      %3930 = vmatprep.subr.mxu0 0.0
      %3931 = vmatpush1.msra.mxu0 %v1488
      %3932 = vmatprep.subr.mxu0 0.0
      %3933 = vmatpush1.msra.mxu0 %v1489
      %3934 = vmatprep.subr.mxu0 0.0
      %3935 = vmatpush1.msra.mxu0 %v1490
      %3936 = vmatprep.subr.mxu0 0.0
      %3937 = vmatpush1.msra.mxu0 %v1491
      %3938 = vmatprep.subr.mxu0 0.0
      %3939 = vmatpush1.msra.mxu0 %v1492
      %3940 = vmatprep.subr.mxu0 0.0
      %3941 = vmatpush1.msra.mxu0 %v1493
      %3942 = vmatprep.subr.mxu0 0.0
      %3943 = vmatpush1.msra.mxu0 %v1494
      %3944 = vmatprep.subr.mxu0 0.0
      %3945 = vmatpush1.msra.mxu0 %v1495
      %3946 = vmatprep.subr.mxu0 0.0
      %3947 = vmatpush1.msra.mxu0 %v1496
      %3948 = vmatprep.subr.mxu0 0.0
      %3949 = vmatpush1.msra.mxu0 %v1497
      %3950 = vmatprep.subr.mxu0 0.0
      %3951 = vmatpush1.msra.mxu0 %v1498
      %3952 = vmatprep.subr.mxu0 0.0
      %3953 = vmatpush1.msra.mxu0 %v1499
      %3954 = vmatprep.subr.mxu0 0.0
      %3955 = vmatpush1.msra.mxu0 %v1500
      %3956 = vmatprep.subr.mxu0 0.0
      %3957 = vmatpush1.msra.mxu0 %v1501
      %3958 = vmatprep.subr.mxu0 0.0
      %3959 = vmatpush1.msra.mxu0 %v1502
      %3960 = vmatprep.subr.mxu0 0.0
      %3961 = vmatpush1.msra.mxu0 %v1503
      %3962 = vmatprep.subr.mxu0 0.0
      %3963 = vmatpush1.msra.mxu0 %v1504
      %3964 = vmatprep.subr.mxu0 0.0
      %3965 = vmatpush1.msra.mxu0 %v1505
      %3966 = vmatprep.subr.mxu0 0.0
      %3967 = vmatpush1.msra.mxu0 %v1506
      %3968 = vmatprep.subr.mxu0 0.0
      %3969 = vmatpush1.msra.mxu0 %v1507
      %3970 = vmatprep.subr.mxu0 0.0
      %3971 = vmatpush1.msra.mxu0 %v1508
      %3972 = vmatprep.subr.mxu0 0.0
      %3973 = vmatpush1.msra.mxu0 %v1509
      %3974 = vmatprep.subr.mxu0 0.0
      %3975 = vmatpush1.msra.mxu0 %v1510
      %3976 = vmatprep.subr.mxu0 0.0
      %3977 = vmatpush1.msra.mxu0 %v1511
      %3978 = vmatprep.subr.mxu0 0.0
      %3979 = vmatpush1.msra.mxu0 %v1512
      %3980 = vmatprep.subr.mxu0 0.0
      %3981 = vmatpush1.msra.mxu0 %v1513
      %3982 = vmatprep.subr.mxu0 0.0
      %3983 = vmatpush1.msra.mxu0 %v1514
      %3984 = vmatprep.subr.mxu0 0.0
      %3985 = vmatpush1.msra.mxu0 %v1515
      %3986 = vmatprep.subr.mxu0 0.0
      %3987 = vmatpush1.msra.mxu0 %v1516
      %3988 = vmatprep.subr.mxu0 0.0
      %3989 = vmatpush1.msra.mxu0 %v1517
      %3990 = vmatprep.subr.mxu0 0.0
      %3991 = vmatpush1.msra.mxu0 %v1518
      %3992 = vmatprep.subr.mxu0 0.0
      %3993 = vmatpush1.msra.mxu0 %v1519
      %3994 = vmatprep.mubr.f32.mxu0 %v165
      %3995 = vmatmul.mubr.f32.gmra.mrb[0].mxu0 %v164
      %v3996 = vpop.f32.mrb[0].mxu0
      %v3997 = vadd.f32 %v3772, %v3996
      %v3998 = vpop.f32.mrb[0].mxu0
      %3999 = vmatprep.mubr.f32.mxu0 %v197
      %4000 = vmatmul.mubr.f32.gmra.mrb[0].mxu0 %v196
      %v4001 = vpop.f32.mrb[0].mxu0
      %v4002 = vadd.f32 %v3777, %v4001
      %v4003 = vpop.f32.mrb[0].mxu0
      %4004 = vmatprep.mubr.f32.mxu0 %v229
      %4005 = vmatmul.mubr.f32.gmra.mrb[0].mxu0 %v228
      %v4006 = vpop.f32.mrb[0].mxu0
      %v4007 = vadd.f32 %v3782, %v4006
      %v4008 = vpop.f32.mrb[0].mxu0
      %4009 = vmatprep.mubr.f32.mxu0 %v261
      %4010 = vmatmul.mubr.f32.gmra.mrb[0].mxu0 %v260
      %v4011 = vpop.f32.mrb[0].mxu0
      %v4012 = vadd.f32 %v3787, %v4011
      %v4013 = vpop.f32.mrb[0].mxu0
      %4014 = vmatprep.mubr.f32.mxu0 %v293
      %4015 = vmatmul.mubr.f32.gmra.mrb[0].mxu0 %v292
      %v4016 = vpop.f32.mrb[0].mxu0
      %v4017 = vadd.f32 %v3792, %v4016
      %v4018 = vpop.f32.mrb[0].mxu0
      %4019 = vmatprep.mubr.f32.mxu0 %v325
      %4020 = vmatmul.mubr.f32.gmra.mrb[0].mxu0 %v324
      %v4021 = vpop.f32.mrb[0].mxu0
      %v4022 = vadd.f32 %v3797, %v4021
      %v4023 = vpop.f32.mrb[0].mxu0
      %4024 = vmatprep.mubr.f32.mxu0 %v357
      %4025 = vmatmul.mubr.f32.gmra.mrb[0].mxu0 %v356
      %v4026 = vpop.f32.mrb[0].mxu0
      %v4027 = vadd.f32 %v3802, %v4026
      %v4028 = vpop.f32.mrb[0].mxu0
      %4029 = vmatprep.mubr.f32.mxu0 %v389
      %4030 = vmatmul.mubr.f32.gmra.mrb[0].mxu0 %v388
      %v4031 = vpop.f32.mrb[0].mxu0
      %v4032 = vadd.f32 %v3807, %v4031
      %v4033 = vpop.f32.mrb[0].mxu0
      %4034 = vmatprep.mubr.f32.mxu0 %v421
      %4035 = vmatmul.mubr.f32.gmra.mrb[0].mxu0 %v420
      %v4036 = vpop.f32.mrb[0].mxu0
      %v4037 = vadd.f32 %v3812, %v4036
      %v4038 = vpop.f32.mrb[0].mxu0
      %4039 = vmatprep.mubr.f32.mxu0 %v453
      %4040 = vmatmul.mubr.f32.gmra.mrb[0].mxu0 %v452
      %v4041 = vpop.f32.mrb[0].mxu0
      %v4042 = vadd.f32 %v3817, %v4041
      %v4043 = vpop.f32.mrb[0].mxu0
      %4044 = vmatprep.mubr.f32.mxu0 %v485
      %4045 = vmatmul.mubr.f32.gmra.mrb[0].mxu0 %v484
      %v4046 = vpop.f32.mrb[0].mxu0
      %v4047 = vadd.f32 %v3822, %v4046
      %v4048 = vpop.f32.mrb[0].mxu0
      %4049 = vmatprep.mubr.f32.mxu0 %v517
      %4050 = vmatmul.mubr.f32.gmra.mrb[0].mxu0 %v516
      %v4051 = vpop.f32.mrb[0].mxu0
      %v4052 = vadd.f32 %v3827, %v4051
      %v4053 = vpop.f32.mrb[0].mxu0
      %4054 = vmatprep.mubr.f32.mxu0 %v549
      %4055 = vmatmul.mubr.f32.gmra.mrb[0].mxu0 %v548
      %v4056 = vpop.f32.mrb[0].mxu0
      %v4057 = vadd.f32 %v3832, %v4056
      %v4058 = vpop.f32.mrb[0].mxu0
      %4059 = vmatprep.mubr.f32.mxu0 %v581
      %4060 = vmatmul.mubr.f32.gmra.mrb[0].mxu0 %v580
      %v4061 = vpop.f32.mrb[0].mxu0
      %v4062 = vadd.f32 %v3837, %v4061
      %v4063 = vpop.f32.mrb[0].mxu0
      %4064 = vmatprep.mubr.f32.mxu0 %v613
      %4065 = vmatmul.mubr.f32.gmra.mrb[0].mxu0 %v612
      %v4066 = vpop.f32.mrb[0].mxu0
      %v4067 = vadd.f32 %v3842, %v4066
      %v4068 = vpop.f32.mrb[0].mxu0
      %4069 = vmatprep.mubr.f32.mxu0 %v645
      %4070 = vmatmul.mubr.f32.gmra.mrb[0].mxu0 %v644
      %v4071 = vpop.f32.mrb[0].mxu0
      %v4072 = vadd.f32 %v3847, %v4071
      %v4073 = vpop.f32.mrb[0].mxu0
      %4074 = vmatprep.mubr.f32.mxu0 %v677
      %4075 = vmatmul.mubr.f32.gmra.mrb[0].mxu0 %v676
      %v4076 = vpop.f32.mrb[0].mxu0
      %v4077 = vadd.f32 %v3852, %v4076
      %v4078 = vpop.f32.mrb[0].mxu0
      %4079 = vmatprep.mubr.f32.mxu0 %v709
      %4080 = vmatmul.mubr.f32.gmra.mrb[0].mxu0 %v708
      %v4081 = vpop.f32.mrb[0].mxu0
      %v4082 = vadd.f32 %v3857, %v4081
      %v4083 = vpop.f32.mrb[0].mxu0
      %4084 = vmatprep.mubr.f32.mxu0 %v741
      %4085 = vmatmul.mubr.f32.gmra.mrb[0].mxu0 %v740
      %v4086 = vpop.f32.mrb[0].mxu0
      %v4087 = vadd.f32 %v3862, %v4086
      %v4088 = vpop.f32.mrb[0].mxu0
      %4089 = vmatprep.mubr.f32.mxu0 %v773
      %4090 = vmatmul.mubr.f32.gmra.mrb[0].mxu0 %v772
      %v4091 = vpop.f32.mrb[0].mxu0
      %v4092 = vadd.f32 %v3867, %v4091
      %v4093 = vpop.f32.mrb[0].mxu0
      %4094 = vmatprep.mubr.f32.mxu0 %v805
      %4095 = vmatmul.mubr.f32.gmra.mrb[0].mxu0 %v804
      %v4096 = vpop.f32.mrb[0].mxu0
      %v4097 = vadd.f32 %v3872, %v4096
      %v4098 = vpop.f32.mrb[0].mxu0
      %4099 = vmatprep.mubr.f32.mxu0 %v837
      %4100 = vmatmul.mubr.f32.gmra.mrb[0].mxu0 %v836
      %v4101 = vpop.f32.mrb[0].mxu0
      %v4102 = vadd.f32 %v3877, %v4101
      %v4103 = vpop.f32.mrb[0].mxu0
      %4104 = vmatprep.mubr.f32.mxu0 %v869
      %4105 = vmatmul.mubr.f32.gmra.mrb[0].mxu0 %v868
      %v4106 = vpop.f32.mrb[0].mxu0
      %v4107 = vadd.f32 %v3882, %v4106
      %v4108 = vpop.f32.mrb[0].mxu0
      %4109 = vmatprep.mubr.f32.mxu0 %v901
      %4110 = vmatmul.mubr.f32.gmra.mrb[0].mxu0 %v900
      %v4111 = vpop.f32.mrb[0].mxu0
      %v4112 = vadd.f32 %v3887, %v4111
      %v4113 = vpop.f32.mrb[0].mxu0
      %4114 = vmatprep.mubr.f32.mxu0 %v933
      %4115 = vmatmul.mubr.f32.gmra.mrb[0].mxu0 %v932
      %v4116 = vpop.f32.mrb[0].mxu0
      %v4117 = vadd.f32 %v3892, %v4116
      %v4118 = vpop.f32.mrb[0].mxu0
      %4119 = vmatprep.mubr.f32.mxu0 %v965
      %4120 = vmatmul.mubr.f32.gmra.mrb[0].mxu0 %v964
      %v4121 = vpop.f32.mrb[0].mxu0
      %v4122 = vadd.f32 %v3897, %v4121
      %v4123 = vpop.f32.mrb[0].mxu0
      %4124 = vmatprep.mubr.f32.mxu0 %v997
      %4125 = vmatmul.mubr.f32.gmra.mrb[0].mxu0 %v996
      %v4126 = vpop.f32.mrb[0].mxu0
      %v4127 = vadd.f32 %v3902, %v4126
      %v4128 = vpop.f32.mrb[0].mxu0
      %4129 = vmatprep.mubr.f32.mxu0 %v1029
      %4130 = vmatmul.mubr.f32.gmra.mrb[0].mxu0 %v1028
      %v4131 = vpop.f32.mrb[0].mxu0
      %v4132 = vadd.f32 %v3907, %v4131
      %v4133 = vpop.f32.mrb[0].mxu0
      %4134 = vmatprep.mubr.f32.mxu0 %v1061
      %4135 = vmatmul.mubr.f32.gmra.mrb[0].mxu0 %v1060
      %v4136 = vpop.f32.mrb[0].mxu0
      %v4137 = vadd.f32 %v3912, %v4136
      %v4138 = vpop.f32.mrb[0].mxu0
      %4139 = vmatprep.mubr.f32.mxu0 %v1093
      %4140 = vmatmul.mubr.f32.gmra.mrb[0].mxu0 %v1092
      %v4141 = vpop.f32.mrb[0].mxu0
      %v4142 = vadd.f32 %v3917, %v4141
      %v4143 = vpop.f32.mrb[0].mxu0
      %4144 = vmatprep.mubr.f32.mxu0 %v1125
      %4145 = vmatmul.mubr.f32.gmra.mrb[0].mxu0 %v1124
      %v4146 = vpop.f32.mrb[0].mxu0
      %v4147 = vadd.f32 %v3922, %v4146
      %v4148 = vpop.f32.mrb[0].mxu0
      %4149 = vmatprep.mubr.f32.mxu0 %v1157
      %4150 = vmatmul.mubr.f32.gmra.mrb[0].mxu0 %v1156
      %v4151 = vpop.f32.mrb[0].mxu0
      %v4152 = vadd.f32 %v3927, %v4151
      %v4153 = vpop.f32.mrb[0].mxu0
      %4154 = vdwg.mxu0
      %4155 = vmatprep.subr.mxu0 0.0
      %4156 = vmatpush1.msra.mxu0 %v1520
      %4157 = vmatprep.subr.mxu0 0.0
      %4158 = vmatpush1.msra.mxu0 %v1521
      %4159 = vmatprep.subr.mxu0 0.0
      %4160 = vmatpush1.msra.mxu0 %v1522
      %4161 = vmatprep.subr.mxu0 0.0
      %4162 = vmatpush1.msra.mxu0 %v1523
      %4163 = vmatprep.subr.mxu0 0.0
      %4164 = vmatpush1.msra.mxu0 %v1524
      %4165 = vmatprep.subr.mxu0 0.0
      %4166 = vmatpush1.msra.mxu0 %v1525
      %4167 = vmatprep.subr.mxu0 0.0
      %4168 = vmatpush1.msra.mxu0 %v1526
      %4169 = vmatprep.subr.mxu0 0.0
      %4170 = vmatpush1.msra.mxu0 %v1527
      %4171 = vmatprep.subr.mxu0 0.0
      %4172 = vmatpush1.msra.mxu0 %v1528
      %4173 = vmatprep.subr.mxu0 0.0
      %4174 = vmatpush1.msra.mxu0 %v1529
      %4175 = vmatprep.subr.mxu0 0.0
      %4176 = vmatpush1.msra.mxu0 %v1530
      %4177 = vmatprep.subr.mxu0 0.0
      %4178 = vmatpush1.msra.mxu0 %v1531
      %4179 = vmatprep.subr.mxu0 0.0
      %4180 = vmatpush1.msra.mxu0 %v1532
      %4181 = vmatprep.subr.mxu0 0.0
      %4182 = vmatpush1.msra.mxu0 %v1533
      %4183 = vmatprep.subr.mxu0 0.0
      %4184 = vmatpush1.msra.mxu0 %v1534
      %4185 = vmatprep.subr.mxu0 0.0
      %4186 = vmatpush1.msra.mxu0 %v1535
      %4187 = vmatprep.subr.mxu0 0.0
      %4188 = vmatpush1.msra.mxu0 %v1536
      %4189 = vmatprep.subr.mxu0 0.0
      %4190 = vmatpush1.msra.mxu0 %v1537
      %4191 = vmatprep.subr.mxu0 0.0
      %4192 = vmatpush1.msra.mxu0 %v1538
      %4193 = vmatprep.subr.mxu0 0.0
      %4194 = vmatpush1.msra.mxu0 %v1539
      %4195 = vmatprep.subr.mxu0 0.0
      %4196 = vmatpush1.msra.mxu0 %v1540
      %4197 = vmatprep.subr.mxu0 0.0
      %4198 = vmatpush1.msra.mxu0 %v1541
      %4199 = vmatprep.subr.mxu0 0.0
      %4200 = vmatpush1.msra.mxu0 %v1542
      %4201 = vmatprep.subr.mxu0 0.0
      %4202 = vmatpush1.msra.mxu0 %v1543
      %4203 = vmatprep.subr.mxu0 0.0
      %4204 = vmatpush1.msra.mxu0 %v1544
      %4205 = vmatprep.subr.mxu0 0.0
      %4206 = vmatpush1.msra.mxu0 %v1545
      %4207 = vmatprep.subr.mxu0 0.0
      %4208 = vmatpush1.msra.mxu0 %v1546
      %4209 = vmatprep.subr.mxu0 0.0
      %4210 = vmatpush1.msra.mxu0 %v1547
      %4211 = vmatprep.subr.mxu0 0.0
      %4212 = vmatpush1.msra.mxu0 %v1548
      %4213 = vmatprep.subr.mxu0 0.0
      %4214 = vmatpush1.msra.mxu0 %v1549
      %4215 = vmatprep.subr.mxu0 0.0
      %4216 = vmatpush1.msra.mxu0 %v1550
      %4217 = vmatprep.subr.mxu0 0.0
      %4218 = vmatpush1.msra.mxu0 %v1551
      %4219 = vmatprep.mubr.f32.mxu0 %v167
      %4220 = vmatmul.mubr.f32.gmra.mrb[0].mxu0 %v166
      %v4221 = vpop.f32.mrb[0].mxu0
      %v4222 = vadd.f32 %v3997, %v4221
      %v4223 = vpop.f32.mrb[0].mxu0
      %4224 = vmatprep.mubr.f32.mxu0 %v199
      %4225 = vmatmul.mubr.f32.gmra.mrb[0].mxu0 %v198
      %v4226 = vpop.f32.mrb[0].mxu0
      %v4227 = vadd.f32 %v4002, %v4226
      %v4228 = vpop.f32.mrb[0].mxu0
      %4229 = vmatprep.mubr.f32.mxu0 %v231
      %4230 = vmatmul.mubr.f32.gmra.mrb[0].mxu0 %v230
      %v4231 = vpop.f32.mrb[0].mxu0
      %v4232 = vadd.f32 %v4007, %v4231
      %v4233 = vpop.f32.mrb[0].mxu0
      %4234 = vmatprep.mubr.f32.mxu0 %v263
      %4235 = vmatmul.mubr.f32.gmra.mrb[0].mxu0 %v262
      %v4236 = vpop.f32.mrb[0].mxu0
      %v4237 = vadd.f32 %v4012, %v4236
      %v4238 = vpop.f32.mrb[0].mxu0
      %4239 = vmatprep.mubr.f32.mxu0 %v295
      %4240 = vmatmul.mubr.f32.gmra.mrb[0].mxu0 %v294
      %v4241 = vpop.f32.mrb[0].mxu0
      %v4242 = vadd.f32 %v4017, %v4241
      %v4243 = vpop.f32.mrb[0].mxu0
      %4244 = vmatprep.mubr.f32.mxu0 %v327
      %4245 = vmatmul.mubr.f32.gmra.mrb[0].mxu0 %v326
      %v4246 = vpop.f32.mrb[0].mxu0
      %v4247 = vadd.f32 %v4022, %v4246
      %v4248 = vpop.f32.mrb[0].mxu0
      %4249 = vmatprep.mubr.f32.mxu0 %v359
      %4250 = vmatmul.mubr.f32.gmra.mrb[0].mxu0 %v358
      %v4251 = vpop.f32.mrb[0].mxu0
      %v4252 = vadd.f32 %v4027, %v4251
      %v4253 = vpop.f32.mrb[0].mxu0
      %4254 = vmatprep.mubr.f32.mxu0 %v391
      %4255 = vmatmul.mubr.f32.gmra.mrb[0].mxu0 %v390
      %v4256 = vpop.f32.mrb[0].mxu0
      %v4257 = vadd.f32 %v4032, %v4256
      %v4258 = vpop.f32.mrb[0].mxu0
      %4259 = vmatprep.mubr.f32.mxu0 %v423
      %4260 = vmatmul.mubr.f32.gmra.mrb[0].mxu0 %v422
      %v4261 = vpop.f32.mrb[0].mxu0
      %v4262 = vadd.f32 %v4037, %v4261
      %v4263 = vpop.f32.mrb[0].mxu0
      %4264 = vmatprep.mubr.f32.mxu0 %v455
      %4265 = vmatmul.mubr.f32.gmra.mrb[0].mxu0 %v454
      %v4266 = vpop.f32.mrb[0].mxu0
      %v4267 = vadd.f32 %v4042, %v4266
      %v4268 = vpop.f32.mrb[0].mxu0
      %4269 = vmatprep.mubr.f32.mxu0 %v487
      %4270 = vmatmul.mubr.f32.gmra.mrb[0].mxu0 %v486
      %v4271 = vpop.f32.mrb[0].mxu0
      %v4272 = vadd.f32 %v4047, %v4271
      %v4273 = vpop.f32.mrb[0].mxu0
      %4274 = vmatprep.mubr.f32.mxu0 %v519
      %4275 = vmatmul.mubr.f32.gmra.mrb[0].mxu0 %v518
      %v4276 = vpop.f32.mrb[0].mxu0
      %v4277 = vadd.f32 %v4052, %v4276
      %v4278 = vpop.f32.mrb[0].mxu0
      %4279 = vmatprep.mubr.f32.mxu0 %v551
      %4280 = vmatmul.mubr.f32.gmra.mrb[0].mxu0 %v550
      %v4281 = vpop.f32.mrb[0].mxu0
      %v4282 = vadd.f32 %v4057, %v4281
      %v4283 = vpop.f32.mrb[0].mxu0
      %4284 = vmatprep.mubr.f32.mxu0 %v583
      %4285 = vmatmul.mubr.f32.gmra.mrb[0].mxu0 %v582
      %v4286 = vpop.f32.mrb[0].mxu0
      %v4287 = vadd.f32 %v4062, %v4286
      %v4288 = vpop.f32.mrb[0].mxu0
      %4289 = vmatprep.mubr.f32.mxu0 %v615
      %4290 = vmatmul.mubr.f32.gmra.mrb[0].mxu0 %v614
      %v4291 = vpop.f32.mrb[0].mxu0
      %v4292 = vadd.f32 %v4067, %v4291
      %v4293 = vpop.f32.mrb[0].mxu0
      %4294 = vmatprep.mubr.f32.mxu0 %v647
      %4295 = vmatmul.mubr.f32.gmra.mrb[0].mxu0 %v646
      %v4296 = vpop.f32.mrb[0].mxu0
      %v4297 = vadd.f32 %v4072, %v4296
      %v4298 = vpop.f32.mrb[0].mxu0
      %4299 = vmatprep.mubr.f32.mxu0 %v679
      %4300 = vmatmul.mubr.f32.gmra.mrb[0].mxu0 %v678
      %v4301 = vpop.f32.mrb[0].mxu0
      %v4302 = vadd.f32 %v4077, %v4301
      %v4303 = vpop.f32.mrb[0].mxu0
      %4304 = vmatprep.mubr.f32.mxu0 %v711
      %4305 = vmatmul.mubr.f32.gmra.mrb[0].mxu0 %v710
      %v4306 = vpop.f32.mrb[0].mxu0
      %v4307 = vadd.f32 %v4082, %v4306
      %v4308 = vpop.f32.mrb[0].mxu0
      %4309 = vmatprep.mubr.f32.mxu0 %v743
      %4310 = vmatmul.mubr.f32.gmra.mrb[0].mxu0 %v742
      %v4311 = vpop.f32.mrb[0].mxu0
      %v4312 = vadd.f32 %v4087, %v4311
      %v4313 = vpop.f32.mrb[0].mxu0
      %4314 = vmatprep.mubr.f32.mxu0 %v775
      %4315 = vmatmul.mubr.f32.gmra.mrb[0].mxu0 %v774
      %v4316 = vpop.f32.mrb[0].mxu0
      %v4317 = vadd.f32 %v4092, %v4316
      %v4318 = vpop.f32.mrb[0].mxu0
      %4319 = vmatprep.mubr.f32.mxu0 %v807
      %4320 = vmatmul.mubr.f32.gmra.mrb[0].mxu0 %v806
      %v4321 = vpop.f32.mrb[0].mxu0
      %v4322 = vadd.f32 %v4097, %v4321
      %v4323 = vpop.f32.mrb[0].mxu0
      %4324 = vmatprep.mubr.f32.mxu0 %v839
      %4325 = vmatmul.mubr.f32.gmra.mrb[0].mxu0 %v838
      %v4326 = vpop.f32.mrb[0].mxu0
      %v4327 = vadd.f32 %v4102, %v4326
      %v4328 = vpop.f32.mrb[0].mxu0
      %4329 = vmatprep.mubr.f32.mxu0 %v871
      %4330 = vmatmul.mubr.f32.gmra.mrb[0].mxu0 %v870
      %v4331 = vpop.f32.mrb[0].mxu0
      %v4332 = vadd.f32 %v4107, %v4331
      %v4333 = vpop.f32.mrb[0].mxu0
      %4334 = vmatprep.mubr.f32.mxu0 %v903
      %4335 = vmatmul.mubr.f32.gmra.mrb[0].mxu0 %v902
      %v4336 = vpop.f32.mrb[0].mxu0
      %v4337 = vadd.f32 %v4112, %v4336
      %v4338 = vpop.f32.mrb[0].mxu0
      %4339 = vmatprep.mubr.f32.mxu0 %v935
      %4340 = vmatmul.mubr.f32.gmra.mrb[0].mxu0 %v934
      %v4341 = vpop.f32.mrb[0].mxu0
      %v4342 = vadd.f32 %v4117, %v4341
      %v4343 = vpop.f32.mrb[0].mxu0
      %4344 = vmatprep.mubr.f32.mxu0 %v967
      %4345 = vmatmul.mubr.f32.gmra.mrb[0].mxu0 %v966
      %v4346 = vpop.f32.mrb[0].mxu0
      %v4347 = vadd.f32 %v4122, %v4346
      %v4348 = vpop.f32.mrb[0].mxu0
      %4349 = vmatprep.mubr.f32.mxu0 %v999
      %4350 = vmatmul.mubr.f32.gmra.mrb[0].mxu0 %v998
      %v4351 = vpop.f32.mrb[0].mxu0
      %v4352 = vadd.f32 %v4127, %v4351
      %v4353 = vpop.f32.mrb[0].mxu0
      %4354 = vmatprep.mubr.f32.mxu0 %v1031
      %4355 = vmatmul.mubr.f32.gmra.mrb[0].mxu0 %v1030
      %v4356 = vpop.f32.mrb[0].mxu0
      %v4357 = vadd.f32 %v4132, %v4356
      %v4358 = vpop.f32.mrb[0].mxu0
      %4359 = vmatprep.mubr.f32.mxu0 %v1063
      %4360 = vmatmul.mubr.f32.gmra.mrb[0].mxu0 %v1062
      %v4361 = vpop.f32.mrb[0].mxu0
      %v4362 = vadd.f32 %v4137, %v4361
      %v4363 = vpop.f32.mrb[0].mxu0
      %4364 = vmatprep.mubr.f32.mxu0 %v1095
      %4365 = vmatmul.mubr.f32.gmra.mrb[0].mxu0 %v1094
      %v4366 = vpop.f32.mrb[0].mxu0
      %v4367 = vadd.f32 %v4142, %v4366
      %v4368 = vpop.f32.mrb[0].mxu0
      %4369 = vmatprep.mubr.f32.mxu0 %v1127
      %4370 = vmatmul.mubr.f32.gmra.mrb[0].mxu0 %v1126
      %v4371 = vpop.f32.mrb[0].mxu0
      %v4372 = vadd.f32 %v4147, %v4371
      %v4373 = vpop.f32.mrb[0].mxu0
      %4374 = vmatprep.mubr.f32.mxu0 %v1159
      %4375 = vmatmul.mubr.f32.gmra.mrb[0].mxu0 %v1158
      %v4376 = vpop.f32.mrb[0].mxu0
      %v4377 = vadd.f32 %v4152, %v4376
      %v4378 = vpop.f32.mrb[0].mxu0
      %4379 = vdwg.mxu0
      %4380 = vmatprep.subr.mxu0 0.0
      %4381 = vmatpush1.msra.mxu0 %v1552
      %4382 = vmatprep.subr.mxu0 0.0
      %4383 = vmatpush1.msra.mxu0 %v1553
      %4384 = vmatprep.subr.mxu0 0.0
      %4385 = vmatpush1.msra.mxu0 %v1554
      %4386 = vmatprep.subr.mxu0 0.0
      %4387 = vmatpush1.msra.mxu0 %v1555
      %4388 = vmatprep.subr.mxu0 0.0
      %4389 = vmatpush1.msra.mxu0 %v1556
      %4390 = vmatprep.subr.mxu0 0.0
      %4391 = vmatpush1.msra.mxu0 %v1557
      %4392 = vmatprep.subr.mxu0 0.0
      %4393 = vmatpush1.msra.mxu0 %v1558
      %4394 = vmatprep.subr.mxu0 0.0
      %4395 = vmatpush1.msra.mxu0 %v1559
      %4396 = vmatprep.subr.mxu0 0.0
      %4397 = vmatpush1.msra.mxu0 %v1560
      %4398 = vmatprep.subr.mxu0 0.0
      %4399 = vmatpush1.msra.mxu0 %v1561
      %4400 = vmatprep.subr.mxu0 0.0
      %4401 = vmatpush1.msra.mxu0 %v1562
      %4402 = vmatprep.subr.mxu0 0.0
      %4403 = vmatpush1.msra.mxu0 %v1563
      %4404 = vmatprep.subr.mxu0 0.0
      %4405 = vmatpush1.msra.mxu0 %v1564
      %4406 = vmatprep.subr.mxu0 0.0
      %4407 = vmatpush1.msra.mxu0 %v1565
      %4408 = vmatprep.subr.mxu0 0.0
      %4409 = vmatpush1.msra.mxu0 %v1566
      %4410 = vmatprep.subr.mxu0 0.0
      %4411 = vmatpush1.msra.mxu0 %v1567
      %4412 = vmatprep.subr.mxu0 0.0
      %4413 = vmatpush1.msra.mxu0 %v1568
      %4414 = vmatprep.subr.mxu0 0.0
      %4415 = vmatpush1.msra.mxu0 %v1569
      %4416 = vmatprep.subr.mxu0 0.0
      %4417 = vmatpush1.msra.mxu0 %v1570
      %4418 = vmatprep.subr.mxu0 0.0
      %4419 = vmatpush1.msra.mxu0 %v1571
      %4420 = vmatprep.subr.mxu0 0.0
      %4421 = vmatpush1.msra.mxu0 %v1572
      %4422 = vmatprep.subr.mxu0 0.0
      %4423 = vmatpush1.msra.mxu0 %v1573
      %4424 = vmatprep.subr.mxu0 0.0
      %4425 = vmatpush1.msra.mxu0 %v1574
      %4426 = vmatprep.subr.mxu0 0.0
      %4427 = vmatpush1.msra.mxu0 %v1575
      %4428 = vmatprep.subr.mxu0 0.0
      %4429 = vmatpush1.msra.mxu0 %v1576
      %4430 = vmatprep.subr.mxu0 0.0
      %4431 = vmatpush1.msra.mxu0 %v1577
      %4432 = vmatprep.subr.mxu0 0.0
      %4433 = vmatpush1.msra.mxu0 %v1578
      %4434 = vmatprep.subr.mxu0 0.0
      %4435 = vmatpush1.msra.mxu0 %v1579
      %4436 = vmatprep.subr.mxu0 0.0
      %4437 = vmatpush1.msra.mxu0 %v1580
      %4438 = vmatprep.subr.mxu0 0.0
      %4439 = vmatpush1.msra.mxu0 %v1581
      %4440 = vmatprep.subr.mxu0 0.0
      %4441 = vmatpush1.msra.mxu0 %v1582
      %4442 = vmatprep.subr.mxu0 0.0
      %4443 = vmatpush1.msra.mxu0 %v1583
      %4444 = vmatprep.mubr.f32.mxu0 %v169
      %4445 = vmatmul.mubr.f32.gmra.mrb[0].mxu0 %v168
      %v4446 = vpop.f32.mrb[0].mxu0
      %v4447 = vadd.f32 %v4222, %v4446
      %v4448 = vpop.f32.mrb[0].mxu0
      %4449 = vmatprep.mubr.f32.mxu0 %v201
      %4450 = vmatmul.mubr.f32.gmra.mrb[0].mxu0 %v200
      %v4451 = vpop.f32.mrb[0].mxu0
      %v4452 = vadd.f32 %v4227, %v4451
      %v4453 = vpop.f32.mrb[0].mxu0
      %4454 = vmatprep.mubr.f32.mxu0 %v233
      %4455 = vmatmul.mubr.f32.gmra.mrb[0].mxu0 %v232
      %v4456 = vpop.f32.mrb[0].mxu0
      %v4457 = vadd.f32 %v4232, %v4456
      %v4458 = vpop.f32.mrb[0].mxu0
      %4459 = vmatprep.mubr.f32.mxu0 %v265
      %4460 = vmatmul.mubr.f32.gmra.mrb[0].mxu0 %v264
      %v4461 = vpop.f32.mrb[0].mxu0
      %v4462 = vadd.f32 %v4237, %v4461
      %v4463 = vpop.f32.mrb[0].mxu0
      %4464 = vmatprep.mubr.f32.mxu0 %v297
      %4465 = vmatmul.mubr.f32.gmra.mrb[0].mxu0 %v296
      %v4466 = vpop.f32.mrb[0].mxu0
      %v4467 = vadd.f32 %v4242, %v4466
      %v4468 = vpop.f32.mrb[0].mxu0
      %4469 = vmatprep.mubr.f32.mxu0 %v329
      %4470 = vmatmul.mubr.f32.gmra.mrb[0].mxu0 %v328
      %v4471 = vpop.f32.mrb[0].mxu0
      %v4472 = vadd.f32 %v4247, %v4471
      %v4473 = vpop.f32.mrb[0].mxu0
      %4474 = vmatprep.mubr.f32.mxu0 %v361
      %4475 = vmatmul.mubr.f32.gmra.mrb[0].mxu0 %v360
      %v4476 = vpop.f32.mrb[0].mxu0
      %v4477 = vadd.f32 %v4252, %v4476
      %v4478 = vpop.f32.mrb[0].mxu0
      %4479 = vmatprep.mubr.f32.mxu0 %v393
      %4480 = vmatmul.mubr.f32.gmra.mrb[0].mxu0 %v392
      %v4481 = vpop.f32.mrb[0].mxu0
      %v4482 = vadd.f32 %v4257, %v4481
      %v4483 = vpop.f32.mrb[0].mxu0
      %4484 = vmatprep.mubr.f32.mxu0 %v425
      %4485 = vmatmul.mubr.f32.gmra.mrb[0].mxu0 %v424
      %v4486 = vpop.f32.mrb[0].mxu0
      %v4487 = vadd.f32 %v4262, %v4486
      %v4488 = vpop.f32.mrb[0].mxu0
      %4489 = vmatprep.mubr.f32.mxu0 %v457
      %4490 = vmatmul.mubr.f32.gmra.mrb[0].mxu0 %v456
      %v4491 = vpop.f32.mrb[0].mxu0
      %v4492 = vadd.f32 %v4267, %v4491
      %v4493 = vpop.f32.mrb[0].mxu0
      %4494 = vmatprep.mubr.f32.mxu0 %v489
      %4495 = vmatmul.mubr.f32.gmra.mrb[0].mxu0 %v488
      %v4496 = vpop.f32.mrb[0].mxu0
      %v4497 = vadd.f32 %v4272, %v4496
      %v4498 = vpop.f32.mrb[0].mxu0
      %4499 = vmatprep.mubr.f32.mxu0 %v521
      %4500 = vmatmul.mubr.f32.gmra.mrb[0].mxu0 %v520
      %v4501 = vpop.f32.mrb[0].mxu0
      %v4502 = vadd.f32 %v4277, %v4501
      %v4503 = vpop.f32.mrb[0].mxu0
      %4504 = vmatprep.mubr.f32.mxu0 %v553
      %4505 = vmatmul.mubr.f32.gmra.mrb[0].mxu0 %v552
      %v4506 = vpop.f32.mrb[0].mxu0
      %v4507 = vadd.f32 %v4282, %v4506
      %v4508 = vpop.f32.mrb[0].mxu0
      %4509 = vmatprep.mubr.f32.mxu0 %v585
      %4510 = vmatmul.mubr.f32.gmra.mrb[0].mxu0 %v584
      %v4511 = vpop.f32.mrb[0].mxu0
      %v4512 = vadd.f32 %v4287, %v4511
      %v4513 = vpop.f32.mrb[0].mxu0
      %4514 = vmatprep.mubr.f32.mxu0 %v617
      %4515 = vmatmul.mubr.f32.gmra.mrb[0].mxu0 %v616
      %v4516 = vpop.f32.mrb[0].mxu0
      %v4517 = vadd.f32 %v4292, %v4516
      %v4518 = vpop.f32.mrb[0].mxu0
      %4519 = vmatprep.mubr.f32.mxu0 %v649
      %4520 = vmatmul.mubr.f32.gmra.mrb[0].mxu0 %v648
      %v4521 = vpop.f32.mrb[0].mxu0
      %v4522 = vadd.f32 %v4297, %v4521
      %v4523 = vpop.f32.mrb[0].mxu0
      %4524 = vmatprep.mubr.f32.mxu0 %v681
      %4525 = vmatmul.mubr.f32.gmra.mrb[0].mxu0 %v680
      %v4526 = vpop.f32.mrb[0].mxu0
      %v4527 = vadd.f32 %v4302, %v4526
      %v4528 = vpop.f32.mrb[0].mxu0
      %4529 = vmatprep.mubr.f32.mxu0 %v713
      %4530 = vmatmul.mubr.f32.gmra.mrb[0].mxu0 %v712
      %v4531 = vpop.f32.mrb[0].mxu0
      %v4532 = vadd.f32 %v4307, %v4531
      %v4533 = vpop.f32.mrb[0].mxu0
      %4534 = vmatprep.mubr.f32.mxu0 %v745
      %4535 = vmatmul.mubr.f32.gmra.mrb[0].mxu0 %v744
      %v4536 = vpop.f32.mrb[0].mxu0
      %v4537 = vadd.f32 %v4312, %v4536
      %v4538 = vpop.f32.mrb[0].mxu0
      %4539 = vmatprep.mubr.f32.mxu0 %v777
      %4540 = vmatmul.mubr.f32.gmra.mrb[0].mxu0 %v776
      %v4541 = vpop.f32.mrb[0].mxu0
      %v4542 = vadd.f32 %v4317, %v4541
      %v4543 = vpop.f32.mrb[0].mxu0
      %4544 = vmatprep.mubr.f32.mxu0 %v809
      %4545 = vmatmul.mubr.f32.gmra.mrb[0].mxu0 %v808
      %v4546 = vpop.f32.mrb[0].mxu0
      %v4547 = vadd.f32 %v4322, %v4546
      %v4548 = vpop.f32.mrb[0].mxu0
      %4549 = vmatprep.mubr.f32.mxu0 %v841
      %4550 = vmatmul.mubr.f32.gmra.mrb[0].mxu0 %v840
      %v4551 = vpop.f32.mrb[0].mxu0
      %v4552 = vadd.f32 %v4327, %v4551
      %v4553 = vpop.f32.mrb[0].mxu0
      %4554 = vmatprep.mubr.f32.mxu0 %v873
      %4555 = vmatmul.mubr.f32.gmra.mrb[0].mxu0 %v872
      %v4556 = vpop.f32.mrb[0].mxu0
      %v4557 = vadd.f32 %v4332, %v4556
      %v4558 = vpop.f32.mrb[0].mxu0
      %4559 = vmatprep.mubr.f32.mxu0 %v905
      %4560 = vmatmul.mubr.f32.gmra.mrb[0].mxu0 %v904
      %v4561 = vpop.f32.mrb[0].mxu0
      %v4562 = vadd.f32 %v4337, %v4561
      %v4563 = vpop.f32.mrb[0].mxu0
      %4564 = vmatprep.mubr.f32.mxu0 %v937
      %4565 = vmatmul.mubr.f32.gmra.mrb[0].mxu0 %v936
      %v4566 = vpop.f32.mrb[0].mxu0
      %v4567 = vadd.f32 %v4342, %v4566
      %v4568 = vpop.f32.mrb[0].mxu0
      %4569 = vmatprep.mubr.f32.mxu0 %v969
      %4570 = vmatmul.mubr.f32.gmra.mrb[0].mxu0 %v968
      %v4571 = vpop.f32.mrb[0].mxu0
      %v4572 = vadd.f32 %v4347, %v4571
      %v4573 = vpop.f32.mrb[0].mxu0
      %4574 = vmatprep.mubr.f32.mxu0 %v1001
      %4575 = vmatmul.mubr.f32.gmra.mrb[0].mxu0 %v1000
      %v4576 = vpop.f32.mrb[0].mxu0
      %v4577 = vadd.f32 %v4352, %v4576
      %v4578 = vpop.f32.mrb[0].mxu0
      %4579 = vmatprep.mubr.f32.mxu0 %v1033
      %4580 = vmatmul.mubr.f32.gmra.mrb[0].mxu0 %v1032
      %v4581 = vpop.f32.mrb[0].mxu0
      %v4582 = vadd.f32 %v4357, %v4581
      %v4583 = vpop.f32.mrb[0].mxu0
      %4584 = vmatprep.mubr.f32.mxu0 %v1065
      %4585 = vmatmul.mubr.f32.gmra.mrb[0].mxu0 %v1064
      %v4586 = vpop.f32.mrb[0].mxu0
      %v4587 = vadd.f32 %v4362, %v4586
      %v4588 = vpop.f32.mrb[0].mxu0
      %4589 = vmatprep.mubr.f32.mxu0 %v1097
      %4590 = vmatmul.mubr.f32.gmra.mrb[0].mxu0 %v1096
      %v4591 = vpop.f32.mrb[0].mxu0
      %v4592 = vadd.f32 %v4367, %v4591
      %v4593 = vpop.f32.mrb[0].mxu0
      %4594 = vmatprep.mubr.f32.mxu0 %v1129
      %4595 = vmatmul.mubr.f32.gmra.mrb[0].mxu0 %v1128
      %v4596 = vpop.f32.mrb[0].mxu0
      %v4597 = vadd.f32 %v4372, %v4596
      %v4598 = vpop.f32.mrb[0].mxu0
      %4599 = vmatprep.mubr.f32.mxu0 %v1161
      %4600 = vmatmul.mubr.f32.gmra.mrb[0].mxu0 %v1160
      %v4601 = vpop.f32.mrb[0].mxu0
      %v4602 = vadd.f32 %v4377, %v4601
      %v4603 = vpop.f32.mrb[0].mxu0
      %4604 = vdwg.mxu0
      %4605 = vmatprep.subr.mxu0 0.0
      %4606 = vmatpush1.msra.mxu0 %v1584
      %4607 = vmatprep.subr.mxu0 0.0
      %4608 = vmatpush1.msra.mxu0 %v1585
      %4609 = vmatprep.subr.mxu0 0.0
      %4610 = vmatpush1.msra.mxu0 %v1586
      %4611 = vmatprep.subr.mxu0 0.0
      %4612 = vmatpush1.msra.mxu0 %v1587
      %4613 = vmatprep.subr.mxu0 0.0
      %4614 = vmatpush1.msra.mxu0 %v1588
      %4615 = vmatprep.subr.mxu0 0.0
      %4616 = vmatpush1.msra.mxu0 %v1589
      %4617 = vmatprep.subr.mxu0 0.0
      %4618 = vmatpush1.msra.mxu0 %v1590
      %4619 = vmatprep.subr.mxu0 0.0
      %4620 = vmatpush1.msra.mxu0 %v1591
      %4621 = vmatprep.subr.mxu0 0.0
      %4622 = vmatpush1.msra.mxu0 %v1592
      %4623 = vmatprep.subr.mxu0 0.0
      %4624 = vmatpush1.msra.mxu0 %v1593
      %4625 = vmatprep.subr.mxu0 0.0
      %4626 = vmatpush1.msra.mxu0 %v1594
      %4627 = vmatprep.subr.mxu0 0.0
      %4628 = vmatpush1.msra.mxu0 %v1595
      %4629 = vmatprep.subr.mxu0 0.0
      %4630 = vmatpush1.msra.mxu0 %v1596
      %4631 = vmatprep.subr.mxu0 0.0
      %4632 = vmatpush1.msra.mxu0 %v1597
      %4633 = vmatprep.subr.mxu0 0.0
      %4634 = vmatpush1.msra.mxu0 %v1598
      %4635 = vmatprep.subr.mxu0 0.0
      %4636 = vmatpush1.msra.mxu0 %v1599
      %4637 = vmatprep.subr.mxu0 0.0
      %4638 = vmatpush1.msra.mxu0 %v1600
      %4639 = vmatprep.subr.mxu0 0.0
      %4640 = vmatpush1.msra.mxu0 %v1601
      %4641 = vmatprep.subr.mxu0 0.0
      %4642 = vmatpush1.msra.mxu0 %v1602
      %4643 = vmatprep.subr.mxu0 0.0
      %4644 = vmatpush1.msra.mxu0 %v1603
      %4645 = vmatprep.subr.mxu0 0.0
      %4646 = vmatpush1.msra.mxu0 %v1604
      %4647 = vmatprep.subr.mxu0 0.0
      %4648 = vmatpush1.msra.mxu0 %v1605
      %4649 = vmatprep.subr.mxu0 0.0
      %4650 = vmatpush1.msra.mxu0 %v1606
      %4651 = vmatprep.subr.mxu0 0.0
      %4652 = vmatpush1.msra.mxu0 %v1607
      %4653 = vmatprep.subr.mxu0 0.0
      %4654 = vmatpush1.msra.mxu0 %v1608
      %4655 = vmatprep.subr.mxu0 0.0
      %4656 = vmatpush1.msra.mxu0 %v1609
      %4657 = vmatprep.subr.mxu0 0.0
      %4658 = vmatpush1.msra.mxu0 %v1610
      %4659 = vmatprep.subr.mxu0 0.0
      %4660 = vmatpush1.msra.mxu0 %v1611
      %4661 = vmatprep.subr.mxu0 0.0
      %4662 = vmatpush1.msra.mxu0 %v1612
      %4663 = vmatprep.subr.mxu0 0.0
      %4664 = vmatpush1.msra.mxu0 %v1613
      %4665 = vmatprep.subr.mxu0 0.0
      %4666 = vmatpush1.msra.mxu0 %v1614
      %4667 = vmatprep.subr.mxu0 0.0
      %4668 = vmatpush1.msra.mxu0 %v1615
      %4669 = vmatprep.mubr.f32.mxu0 %v171
      %4670 = vmatmul.mubr.f32.gmra.mrb[0].mxu0 %v170
      %v4671 = vpop.f32.mrb[0].mxu0
      %v4672 = vadd.f32 %v4447, %v4671
      %v4673 = vpop.f32.mrb[0].mxu0
      %4674 = vmatprep.mubr.f32.mxu0 %v203
      %4675 = vmatmul.mubr.f32.gmra.mrb[0].mxu0 %v202
      %v4676 = vpop.f32.mrb[0].mxu0
      %v4677 = vadd.f32 %v4452, %v4676
      %v4678 = vpop.f32.mrb[0].mxu0
      %4679 = vmatprep.mubr.f32.mxu0 %v235
      %4680 = vmatmul.mubr.f32.gmra.mrb[0].mxu0 %v234
      %v4681 = vpop.f32.mrb[0].mxu0
      %v4682 = vadd.f32 %v4457, %v4681
      %v4683 = vpop.f32.mrb[0].mxu0
      %4684 = vmatprep.mubr.f32.mxu0 %v267
      %4685 = vmatmul.mubr.f32.gmra.mrb[0].mxu0 %v266
      %v4686 = vpop.f32.mrb[0].mxu0
      %v4687 = vadd.f32 %v4462, %v4686
      %v4688 = vpop.f32.mrb[0].mxu0
      %4689 = vmatprep.mubr.f32.mxu0 %v299
      %4690 = vmatmul.mubr.f32.gmra.mrb[0].mxu0 %v298
      %v4691 = vpop.f32.mrb[0].mxu0
      %v4692 = vadd.f32 %v4467, %v4691
      %v4693 = vpop.f32.mrb[0].mxu0
      %4694 = vmatprep.mubr.f32.mxu0 %v331
      %4695 = vmatmul.mubr.f32.gmra.mrb[0].mxu0 %v330
      %v4696 = vpop.f32.mrb[0].mxu0
      %v4697 = vadd.f32 %v4472, %v4696
      %v4698 = vpop.f32.mrb[0].mxu0
      %4699 = vmatprep.mubr.f32.mxu0 %v363
      %4700 = vmatmul.mubr.f32.gmra.mrb[0].mxu0 %v362
      %v4701 = vpop.f32.mrb[0].mxu0
      %v4702 = vadd.f32 %v4477, %v4701
      %v4703 = vpop.f32.mrb[0].mxu0
      %4704 = vmatprep.mubr.f32.mxu0 %v395
      %4705 = vmatmul.mubr.f32.gmra.mrb[0].mxu0 %v394
      %v4706 = vpop.f32.mrb[0].mxu0
      %v4707 = vadd.f32 %v4482, %v4706
      %v4708 = vpop.f32.mrb[0].mxu0
      %4709 = vmatprep.mubr.f32.mxu0 %v427
      %4710 = vmatmul.mubr.f32.gmra.mrb[0].mxu0 %v426
      %v4711 = vpop.f32.mrb[0].mxu0
      %v4712 = vadd.f32 %v4487, %v4711
      %v4713 = vpop.f32.mrb[0].mxu0
      %4714 = vmatprep.mubr.f32.mxu0 %v459
      %4715 = vmatmul.mubr.f32.gmra.mrb[0].mxu0 %v458
      %v4716 = vpop.f32.mrb[0].mxu0
      %v4717 = vadd.f32 %v4492, %v4716
      %v4718 = vpop.f32.mrb[0].mxu0
      %4719 = vmatprep.mubr.f32.mxu0 %v491
      %4720 = vmatmul.mubr.f32.gmra.mrb[0].mxu0 %v490
      %v4721 = vpop.f32.mrb[0].mxu0
      %v4722 = vadd.f32 %v4497, %v4721
      %v4723 = vpop.f32.mrb[0].mxu0
      %4724 = vmatprep.mubr.f32.mxu0 %v523
      %4725 = vmatmul.mubr.f32.gmra.mrb[0].mxu0 %v522
      %v4726 = vpop.f32.mrb[0].mxu0
      %v4727 = vadd.f32 %v4502, %v4726
      %v4728 = vpop.f32.mrb[0].mxu0
      %4729 = vmatprep.mubr.f32.mxu0 %v555
      %4730 = vmatmul.mubr.f32.gmra.mrb[0].mxu0 %v554
      %v4731 = vpop.f32.mrb[0].mxu0
      %v4732 = vadd.f32 %v4507, %v4731
      %v4733 = vpop.f32.mrb[0].mxu0
      %4734 = vmatprep.mubr.f32.mxu0 %v587
      %4735 = vmatmul.mubr.f32.gmra.mrb[0].mxu0 %v586
      %v4736 = vpop.f32.mrb[0].mxu0
      %v4737 = vadd.f32 %v4512, %v4736
      %v4738 = vpop.f32.mrb[0].mxu0
      %4739 = vmatprep.mubr.f32.mxu0 %v619
      %4740 = vmatmul.mubr.f32.gmra.mrb[0].mxu0 %v618
      %v4741 = vpop.f32.mrb[0].mxu0
      %v4742 = vadd.f32 %v4517, %v4741
      %v4743 = vpop.f32.mrb[0].mxu0
      %4744 = vmatprep.mubr.f32.mxu0 %v651
      %4745 = vmatmul.mubr.f32.gmra.mrb[0].mxu0 %v650
      %v4746 = vpop.f32.mrb[0].mxu0
      %v4747 = vadd.f32 %v4522, %v4746
      %v4748 = vpop.f32.mrb[0].mxu0
      %4749 = vmatprep.mubr.f32.mxu0 %v683
      %4750 = vmatmul.mubr.f32.gmra.mrb[0].mxu0 %v682
      %v4751 = vpop.f32.mrb[0].mxu0
      %v4752 = vadd.f32 %v4527, %v4751
      %v4753 = vpop.f32.mrb[0].mxu0
      %4754 = vmatprep.mubr.f32.mxu0 %v715
      %4755 = vmatmul.mubr.f32.gmra.mrb[0].mxu0 %v714
      %v4756 = vpop.f32.mrb[0].mxu0
      %v4757 = vadd.f32 %v4532, %v4756
      %v4758 = vpop.f32.mrb[0].mxu0
      %4759 = vmatprep.mubr.f32.mxu0 %v747
      %4760 = vmatmul.mubr.f32.gmra.mrb[0].mxu0 %v746
      %v4761 = vpop.f32.mrb[0].mxu0
      %v4762 = vadd.f32 %v4537, %v4761
      %v4763 = vpop.f32.mrb[0].mxu0
      %4764 = vmatprep.mubr.f32.mxu0 %v779
      %4765 = vmatmul.mubr.f32.gmra.mrb[0].mxu0 %v778
      %v4766 = vpop.f32.mrb[0].mxu0
      %v4767 = vadd.f32 %v4542, %v4766
      %v4768 = vpop.f32.mrb[0].mxu0
      %4769 = vmatprep.mubr.f32.mxu0 %v811
      %4770 = vmatmul.mubr.f32.gmra.mrb[0].mxu0 %v810
      %v4771 = vpop.f32.mrb[0].mxu0
      %v4772 = vadd.f32 %v4547, %v4771
      %v4773 = vpop.f32.mrb[0].mxu0
      %4774 = vmatprep.mubr.f32.mxu0 %v843
      %4775 = vmatmul.mubr.f32.gmra.mrb[0].mxu0 %v842
      %v4776 = vpop.f32.mrb[0].mxu0
      %v4777 = vadd.f32 %v4552, %v4776
      %v4778 = vpop.f32.mrb[0].mxu0
      %4779 = vmatprep.mubr.f32.mxu0 %v875
      %4780 = vmatmul.mubr.f32.gmra.mrb[0].mxu0 %v874
      %v4781 = vpop.f32.mrb[0].mxu0
      %v4782 = vadd.f32 %v4557, %v4781
      %v4783 = vpop.f32.mrb[0].mxu0
      %4784 = vmatprep.mubr.f32.mxu0 %v907
      %4785 = vmatmul.mubr.f32.gmra.mrb[0].mxu0 %v906
      %v4786 = vpop.f32.mrb[0].mxu0
      %v4787 = vadd.f32 %v4562, %v4786
      %v4788 = vpop.f32.mrb[0].mxu0
      %4789 = vmatprep.mubr.f32.mxu0 %v939
      %4790 = vmatmul.mubr.f32.gmra.mrb[0].mxu0 %v938
      %v4791 = vpop.f32.mrb[0].mxu0
      %v4792 = vadd.f32 %v4567, %v4791
      %v4793 = vpop.f32.mrb[0].mxu0
      %4794 = vmatprep.mubr.f32.mxu0 %v971
      %4795 = vmatmul.mubr.f32.gmra.mrb[0].mxu0 %v970
      %v4796 = vpop.f32.mrb[0].mxu0
      %v4797 = vadd.f32 %v4572, %v4796
      %v4798 = vpop.f32.mrb[0].mxu0
      %4799 = vmatprep.mubr.f32.mxu0 %v1003
      %4800 = vmatmul.mubr.f32.gmra.mrb[0].mxu0 %v1002
      %v4801 = vpop.f32.mrb[0].mxu0
      %v4802 = vadd.f32 %v4577, %v4801
      %v4803 = vpop.f32.mrb[0].mxu0
      %4804 = vmatprep.mubr.f32.mxu0 %v1035
      %4805 = vmatmul.mubr.f32.gmra.mrb[0].mxu0 %v1034
      %v4806 = vpop.f32.mrb[0].mxu0
      %v4807 = vadd.f32 %v4582, %v4806
      %v4808 = vpop.f32.mrb[0].mxu0
      %4809 = vmatprep.mubr.f32.mxu0 %v1067
      %4810 = vmatmul.mubr.f32.gmra.mrb[0].mxu0 %v1066
      %v4811 = vpop.f32.mrb[0].mxu0
      %v4812 = vadd.f32 %v4587, %v4811
      %v4813 = vpop.f32.mrb[0].mxu0
      %4814 = vmatprep.mubr.f32.mxu0 %v1099
      %4815 = vmatmul.mubr.f32.gmra.mrb[0].mxu0 %v1098
      %v4816 = vpop.f32.mrb[0].mxu0
      %v4817 = vadd.f32 %v4592, %v4816
      %v4818 = vpop.f32.mrb[0].mxu0
      %4819 = vmatprep.mubr.f32.mxu0 %v1131
      %4820 = vmatmul.mubr.f32.gmra.mrb[0].mxu0 %v1130
      %v4821 = vpop.f32.mrb[0].mxu0
      %v4822 = vadd.f32 %v4597, %v4821
      %v4823 = vpop.f32.mrb[0].mxu0
      %4824 = vmatprep.mubr.f32.mxu0 %v1163
      %4825 = vmatmul.mubr.f32.gmra.mrb[0].mxu0 %v1162
      %v4826 = vpop.f32.mrb[0].mxu0
      %v4827 = vadd.f32 %v4602, %v4826
      %v4828 = vpop.f32.mrb[0].mxu0
      %4829 = vdwg.mxu0
      %4830 = vmatprep.subr.mxu0 0.0
      %4831 = vmatpush1.msra.mxu0 %v1616
      %4832 = vmatprep.subr.mxu0 0.0
      %4833 = vmatpush1.msra.mxu0 %v1617
      %4834 = vmatprep.subr.mxu0 0.0
      %4835 = vmatpush1.msra.mxu0 %v1618
      %4836 = vmatprep.subr.mxu0 0.0
      %4837 = vmatpush1.msra.mxu0 %v1619
      %4838 = vmatprep.subr.mxu0 0.0
      %4839 = vmatpush1.msra.mxu0 %v1620
      %4840 = vmatprep.subr.mxu0 0.0
      %4841 = vmatpush1.msra.mxu0 %v1621
      %4842 = vmatprep.subr.mxu0 0.0
      %4843 = vmatpush1.msra.mxu0 %v1622
      %4844 = vmatprep.subr.mxu0 0.0
      %4845 = vmatpush1.msra.mxu0 %v1623
      %4846 = vmatprep.subr.mxu0 0.0
      %4847 = vmatpush1.msra.mxu0 %v1624
      %4848 = vmatprep.subr.mxu0 0.0
      %4849 = vmatpush1.msra.mxu0 %v1625
      %4850 = vmatprep.subr.mxu0 0.0
      %4851 = vmatpush1.msra.mxu0 %v1626
      %4852 = vmatprep.subr.mxu0 0.0
      %4853 = vmatpush1.msra.mxu0 %v1627
      %4854 = vmatprep.subr.mxu0 0.0
      %4855 = vmatpush1.msra.mxu0 %v1628
      %4856 = vmatprep.subr.mxu0 0.0
      %4857 = vmatpush1.msra.mxu0 %v1629
      %4858 = vmatprep.subr.mxu0 0.0
      %4859 = vmatpush1.msra.mxu0 %v1630
      %4860 = vmatprep.subr.mxu0 0.0
      %4861 = vmatpush1.msra.mxu0 %v1631
      %4862 = vmatprep.subr.mxu0 0.0
      %4863 = vmatpush1.msra.mxu0 %v1632
      %4864 = vmatprep.subr.mxu0 0.0
      %4865 = vmatpush1.msra.mxu0 %v1633
      %4866 = vmatprep.subr.mxu0 0.0
      %4867 = vmatpush1.msra.mxu0 %v1634
      %4868 = vmatprep.subr.mxu0 0.0
      %4869 = vmatpush1.msra.mxu0 %v1635
      %4870 = vmatprep.subr.mxu0 0.0
      %4871 = vmatpush1.msra.mxu0 %v1636
      %4872 = vmatprep.subr.mxu0 0.0
      %4873 = vmatpush1.msra.mxu0 %v1637
      %4874 = vmatprep.subr.mxu0 0.0
      %4875 = vmatpush1.msra.mxu0 %v1638
      %4876 = vmatprep.subr.mxu0 0.0
      %4877 = vmatpush1.msra.mxu0 %v1639
      %4878 = vmatprep.subr.mxu0 0.0
      %4879 = vmatpush1.msra.mxu0 %v1640
      %4880 = vmatprep.subr.mxu0 0.0
      %4881 = vmatpush1.msra.mxu0 %v1641
      %4882 = vmatprep.subr.mxu0 0.0
      %4883 = vmatpush1.msra.mxu0 %v1642
      %4884 = vmatprep.subr.mxu0 0.0
      %4885 = vmatpush1.msra.mxu0 %v1643
      %4886 = vmatprep.subr.mxu0 0.0
      %4887 = vmatpush1.msra.mxu0 %v1644
      %4888 = vmatprep.subr.mxu0 0.0
      %4889 = vmatpush1.msra.mxu0 %v1645
      %4890 = vmatprep.subr.mxu0 0.0
      %4891 = vmatpush1.msra.mxu0 %v1646
      %4892 = vmatprep.subr.mxu0 0.0
      %4893 = vmatpush1.msra.mxu0 %v1647
      %4894 = vmatprep.mubr.f32.mxu0 %v173
      %4895 = vmatmul.mubr.f32.gmra.mrb[0].mxu0 %v172
      %v4896 = vpop.f32.mrb[0].mxu0
      %v4897 = vadd.f32 %v4672, %v4896
      %v4898 = vpop.f32.mrb[0].mxu0
      %4899 = vmatprep.mubr.f32.mxu0 %v205
      %4900 = vmatmul.mubr.f32.gmra.mrb[0].mxu0 %v204
      %v4901 = vpop.f32.mrb[0].mxu0
      %v4902 = vadd.f32 %v4677, %v4901
      %v4903 = vpop.f32.mrb[0].mxu0
      %4904 = vmatprep.mubr.f32.mxu0 %v237
      %4905 = vmatmul.mubr.f32.gmra.mrb[0].mxu0 %v236
      %v4906 = vpop.f32.mrb[0].mxu0
      %v4907 = vadd.f32 %v4682, %v4906
      %v4908 = vpop.f32.mrb[0].mxu0
      %4909 = vmatprep.mubr.f32.mxu0 %v269
      %4910 = vmatmul.mubr.f32.gmra.mrb[0].mxu0 %v268
      %v4911 = vpop.f32.mrb[0].mxu0
      %v4912 = vadd.f32 %v4687, %v4911
      %v4913 = vpop.f32.mrb[0].mxu0
      %4914 = vmatprep.mubr.f32.mxu0 %v301
      %4915 = vmatmul.mubr.f32.gmra.mrb[0].mxu0 %v300
      %v4916 = vpop.f32.mrb[0].mxu0
      %v4917 = vadd.f32 %v4692, %v4916
      %v4918 = vpop.f32.mrb[0].mxu0
      %4919 = vmatprep.mubr.f32.mxu0 %v333
      %4920 = vmatmul.mubr.f32.gmra.mrb[0].mxu0 %v332
      %v4921 = vpop.f32.mrb[0].mxu0
      %v4922 = vadd.f32 %v4697, %v4921
      %v4923 = vpop.f32.mrb[0].mxu0
      %4924 = vmatprep.mubr.f32.mxu0 %v365
      %4925 = vmatmul.mubr.f32.gmra.mrb[0].mxu0 %v364
      %v4926 = vpop.f32.mrb[0].mxu0
      %v4927 = vadd.f32 %v4702, %v4926
      %v4928 = vpop.f32.mrb[0].mxu0
      %4929 = vmatprep.mubr.f32.mxu0 %v397
      %4930 = vmatmul.mubr.f32.gmra.mrb[0].mxu0 %v396
      %v4931 = vpop.f32.mrb[0].mxu0
      %v4932 = vadd.f32 %v4707, %v4931
      %v4933 = vpop.f32.mrb[0].mxu0
      %4934 = vmatprep.mubr.f32.mxu0 %v429
      %4935 = vmatmul.mubr.f32.gmra.mrb[0].mxu0 %v428
      %v4936 = vpop.f32.mrb[0].mxu0
      %v4937 = vadd.f32 %v4712, %v4936
      %v4938 = vpop.f32.mrb[0].mxu0
      %4939 = vmatprep.mubr.f32.mxu0 %v461
      %4940 = vmatmul.mubr.f32.gmra.mrb[0].mxu0 %v460
      %v4941 = vpop.f32.mrb[0].mxu0
      %v4942 = vadd.f32 %v4717, %v4941
      %v4943 = vpop.f32.mrb[0].mxu0
      %4944 = vmatprep.mubr.f32.mxu0 %v493
      %4945 = vmatmul.mubr.f32.gmra.mrb[0].mxu0 %v492
      %v4946 = vpop.f32.mrb[0].mxu0
      %v4947 = vadd.f32 %v4722, %v4946
      %v4948 = vpop.f32.mrb[0].mxu0
      %4949 = vmatprep.mubr.f32.mxu0 %v525
      %4950 = vmatmul.mubr.f32.gmra.mrb[0].mxu0 %v524
      %v4951 = vpop.f32.mrb[0].mxu0
      %v4952 = vadd.f32 %v4727, %v4951
      %v4953 = vpop.f32.mrb[0].mxu0
      %4954 = vmatprep.mubr.f32.mxu0 %v557
      %4955 = vmatmul.mubr.f32.gmra.mrb[0].mxu0 %v556
      %v4956 = vpop.f32.mrb[0].mxu0
      %v4957 = vadd.f32 %v4732, %v4956
      %v4958 = vpop.f32.mrb[0].mxu0
      %4959 = vmatprep.mubr.f32.mxu0 %v589
      %4960 = vmatmul.mubr.f32.gmra.mrb[0].mxu0 %v588
      %v4961 = vpop.f32.mrb[0].mxu0
      %v4962 = vadd.f32 %v4737, %v4961
      %v4963 = vpop.f32.mrb[0].mxu0
      %4964 = vmatprep.mubr.f32.mxu0 %v621
      %4965 = vmatmul.mubr.f32.gmra.mrb[0].mxu0 %v620
      %v4966 = vpop.f32.mrb[0].mxu0
      %v4967 = vadd.f32 %v4742, %v4966
      %v4968 = vpop.f32.mrb[0].mxu0
      %4969 = vmatprep.mubr.f32.mxu0 %v653
      %4970 = vmatmul.mubr.f32.gmra.mrb[0].mxu0 %v652
      %v4971 = vpop.f32.mrb[0].mxu0
      %v4972 = vadd.f32 %v4747, %v4971
      %v4973 = vpop.f32.mrb[0].mxu0
      %4974 = vmatprep.mubr.f32.mxu0 %v685
      %4975 = vmatmul.mubr.f32.gmra.mrb[0].mxu0 %v684
      %v4976 = vpop.f32.mrb[0].mxu0
      %v4977 = vadd.f32 %v4752, %v4976
      %v4978 = vpop.f32.mrb[0].mxu0
      %4979 = vmatprep.mubr.f32.mxu0 %v717
      %4980 = vmatmul.mubr.f32.gmra.mrb[0].mxu0 %v716
      %v4981 = vpop.f32.mrb[0].mxu0
      %v4982 = vadd.f32 %v4757, %v4981
      %v4983 = vpop.f32.mrb[0].mxu0
      %4984 = vmatprep.mubr.f32.mxu0 %v749
      %4985 = vmatmul.mubr.f32.gmra.mrb[0].mxu0 %v748
      %v4986 = vpop.f32.mrb[0].mxu0
      %v4987 = vadd.f32 %v4762, %v4986
      %v4988 = vpop.f32.mrb[0].mxu0
      %4989 = vmatprep.mubr.f32.mxu0 %v781
      %4990 = vmatmul.mubr.f32.gmra.mrb[0].mxu0 %v780
      %v4991 = vpop.f32.mrb[0].mxu0
      %v4992 = vadd.f32 %v4767, %v4991
      %v4993 = vpop.f32.mrb[0].mxu0
      %4994 = vmatprep.mubr.f32.mxu0 %v813
      %4995 = vmatmul.mubr.f32.gmra.mrb[0].mxu0 %v812
      %v4996 = vpop.f32.mrb[0].mxu0
      %v4997 = vadd.f32 %v4772, %v4996
      %v4998 = vpop.f32.mrb[0].mxu0
      %4999 = vmatprep.mubr.f32.mxu0 %v845
      %5000 = vmatmul.mubr.f32.gmra.mrb[0].mxu0 %v844
      %v5001 = vpop.f32.mrb[0].mxu0
      %v5002 = vadd.f32 %v4777, %v5001
      %v5003 = vpop.f32.mrb[0].mxu0
      %5004 = vmatprep.mubr.f32.mxu0 %v877
      %5005 = vmatmul.mubr.f32.gmra.mrb[0].mxu0 %v876
      %v5006 = vpop.f32.mrb[0].mxu0
      %v5007 = vadd.f32 %v4782, %v5006
      %v5008 = vpop.f32.mrb[0].mxu0
      %5009 = vmatprep.mubr.f32.mxu0 %v909
      %5010 = vmatmul.mubr.f32.gmra.mrb[0].mxu0 %v908
      %v5011 = vpop.f32.mrb[0].mxu0
      %v5012 = vadd.f32 %v4787, %v5011
      %v5013 = vpop.f32.mrb[0].mxu0
      %5014 = vmatprep.mubr.f32.mxu0 %v941
      %5015 = vmatmul.mubr.f32.gmra.mrb[0].mxu0 %v940
      %v5016 = vpop.f32.mrb[0].mxu0
      %v5017 = vadd.f32 %v4792, %v5016
      %v5018 = vpop.f32.mrb[0].mxu0
      %5019 = vmatprep.mubr.f32.mxu0 %v973
      %5020 = vmatmul.mubr.f32.gmra.mrb[0].mxu0 %v972
      %v5021 = vpop.f32.mrb[0].mxu0
      %v5022 = vadd.f32 %v4797, %v5021
      %v5023 = vpop.f32.mrb[0].mxu0
      %5024 = vmatprep.mubr.f32.mxu0 %v1005
      %5025 = vmatmul.mubr.f32.gmra.mrb[0].mxu0 %v1004
      %v5026 = vpop.f32.mrb[0].mxu0
      %v5027 = vadd.f32 %v4802, %v5026
      %v5028 = vpop.f32.mrb[0].mxu0
      %5029 = vmatprep.mubr.f32.mxu0 %v1037
      %5030 = vmatmul.mubr.f32.gmra.mrb[0].mxu0 %v1036
      %v5031 = vpop.f32.mrb[0].mxu0
      %v5032 = vadd.f32 %v4807, %v5031
      %v5033 = vpop.f32.mrb[0].mxu0
      %5034 = vmatprep.mubr.f32.mxu0 %v1069
      %5035 = vmatmul.mubr.f32.gmra.mrb[0].mxu0 %v1068
      %v5036 = vpop.f32.mrb[0].mxu0
      %v5037 = vadd.f32 %v4812, %v5036
      %v5038 = vpop.f32.mrb[0].mxu0
      %5039 = vmatprep.mubr.f32.mxu0 %v1101
      %5040 = vmatmul.mubr.f32.gmra.mrb[0].mxu0 %v1100
      %v5041 = vpop.f32.mrb[0].mxu0
      %v5042 = vadd.f32 %v4817, %v5041
      %v5043 = vpop.f32.mrb[0].mxu0
      %5044 = vmatprep.mubr.f32.mxu0 %v1133
      %5045 = vmatmul.mubr.f32.gmra.mrb[0].mxu0 %v1132
      %v5046 = vpop.f32.mrb[0].mxu0
      %v5047 = vadd.f32 %v4822, %v5046
      %v5048 = vpop.f32.mrb[0].mxu0
      %5049 = vmatprep.mubr.f32.mxu0 %v1165
      %5050 = vmatmul.mubr.f32.gmra.mrb[0].mxu0 %v1164
      %v5051 = vpop.f32.mrb[0].mxu0
      %v5052 = vadd.f32 %v4827, %v5051
      %v5053 = vpop.f32.mrb[0].mxu0
      %5054 = vdwg.mxu0
      %5055 = vmatprep.subr.mxu0 0.0
      %5056 = vmatpush1.msra.mxu0 %v1648
      %5057 = vmatprep.subr.mxu0 0.0
      %5058 = vmatpush1.msra.mxu0 %v1649
      %5059 = vmatprep.subr.mxu0 0.0
      %5060 = vmatpush1.msra.mxu0 %v1650
      %5061 = vmatprep.subr.mxu0 0.0
      %5062 = vmatpush1.msra.mxu0 %v1651
      %5063 = vmatprep.subr.mxu0 0.0
      %5064 = vmatpush1.msra.mxu0 %v1652
      %5065 = vmatprep.subr.mxu0 0.0
      %5066 = vmatpush1.msra.mxu0 %v1653
      %5067 = vmatprep.subr.mxu0 0.0
      %5068 = vmatpush1.msra.mxu0 %v1654
      %5069 = vmatprep.subr.mxu0 0.0
      %5070 = vmatpush1.msra.mxu0 %v1655
      %5071 = vmatprep.subr.mxu0 0.0
      %5072 = vmatpush1.msra.mxu0 %v1656
      %5073 = vmatprep.subr.mxu0 0.0
      %5074 = vmatpush1.msra.mxu0 %v1657
      %5075 = vmatprep.subr.mxu0 0.0
      %5076 = vmatpush1.msra.mxu0 %v1658
      %5077 = vmatprep.subr.mxu0 0.0
      %5078 = vmatpush1.msra.mxu0 %v1659
      %5079 = vmatprep.subr.mxu0 0.0
      %5080 = vmatpush1.msra.mxu0 %v1660
      %5081 = vmatprep.subr.mxu0 0.0
      %5082 = vmatpush1.msra.mxu0 %v1661
      %5083 = vmatprep.subr.mxu0 0.0
      %5084 = vmatpush1.msra.mxu0 %v1662
      %5085 = vmatprep.subr.mxu0 0.0
      %5086 = vmatpush1.msra.mxu0 %v1663
      %5087 = vmatprep.subr.mxu0 0.0
      %5088 = vmatpush1.msra.mxu0 %v1664
      %5089 = vmatprep.subr.mxu0 0.0
      %5090 = vmatpush1.msra.mxu0 %v1665
      %5091 = vmatprep.subr.mxu0 0.0
      %5092 = vmatpush1.msra.mxu0 %v1666
      %5093 = vmatprep.subr.mxu0 0.0
      %5094 = vmatpush1.msra.mxu0 %v1667
      %5095 = vmatprep.subr.mxu0 0.0
      %5096 = vmatpush1.msra.mxu0 %v1668
      %5097 = vmatprep.subr.mxu0 0.0
      %5098 = vmatpush1.msra.mxu0 %v1669
      %5099 = vmatprep.subr.mxu0 0.0
      %5100 = vmatpush1.msra.mxu0 %v1670
      %5101 = vmatprep.subr.mxu0 0.0
      %5102 = vmatpush1.msra.mxu0 %v1671
      %5103 = vmatprep.subr.mxu0 0.0
      %5104 = vmatpush1.msra.mxu0 %v1672
      %5105 = vmatprep.subr.mxu0 0.0
      %5106 = vmatpush1.msra.mxu0 %v1673
      %5107 = vmatprep.subr.mxu0 0.0
      %5108 = vmatpush1.msra.mxu0 %v1674
      %5109 = vmatprep.subr.mxu0 0.0
      %5110 = vmatpush1.msra.mxu0 %v1675
      %5111 = vmatprep.subr.mxu0 0.0
      %5112 = vmatpush1.msra.mxu0 %v1676
      %5113 = vmatprep.subr.mxu0 0.0
      %5114 = vmatpush1.msra.mxu0 %v1677
      %5115 = vmatprep.subr.mxu0 0.0
      %5116 = vmatpush1.msra.mxu0 %v1678
      %5117 = vmatprep.subr.mxu0 0.0
      %5118 = vmatpush1.msra.mxu0 %v1679
      %5119 = vmatprep.mubr.f32.mxu0 %v175
      %5120 = vmatmul.mubr.f32.gmra.mrb[0].mxu0 %v174
      %v5121 = vpop.f32.mrb[0].mxu0
      %v5122 = vadd.f32 %v4897, %v5121
      %v5123 = vpop.f32.mrb[0].mxu0
      %5124 = vmatprep.mubr.f32.mxu0 %v207
      %5125 = vmatmul.mubr.f32.gmra.mrb[0].mxu0 %v206
      %v5126 = vpop.f32.mrb[0].mxu0
      %v5127 = vadd.f32 %v4902, %v5126
      %v5128 = vpop.f32.mrb[0].mxu0
      %5129 = vmatprep.mubr.f32.mxu0 %v239
      %5130 = vmatmul.mubr.f32.gmra.mrb[0].mxu0 %v238
      %v5131 = vpop.f32.mrb[0].mxu0
      %v5132 = vadd.f32 %v4907, %v5131
      %v5133 = vpop.f32.mrb[0].mxu0
      %5134 = vmatprep.mubr.f32.mxu0 %v271
      %5135 = vmatmul.mubr.f32.gmra.mrb[0].mxu0 %v270
      %v5136 = vpop.f32.mrb[0].mxu0
      %v5137 = vadd.f32 %v4912, %v5136
      %v5138 = vpop.f32.mrb[0].mxu0
      %5139 = vmatprep.mubr.f32.mxu0 %v303
      %5140 = vmatmul.mubr.f32.gmra.mrb[0].mxu0 %v302
      %v5141 = vpop.f32.mrb[0].mxu0
      %v5142 = vadd.f32 %v4917, %v5141
      %v5143 = vpop.f32.mrb[0].mxu0
      %5144 = vmatprep.mubr.f32.mxu0 %v335
      %5145 = vmatmul.mubr.f32.gmra.mrb[0].mxu0 %v334
      %v5146 = vpop.f32.mrb[0].mxu0
      %v5147 = vadd.f32 %v4922, %v5146
      %v5148 = vpop.f32.mrb[0].mxu0
      %5149 = vmatprep.mubr.f32.mxu0 %v367
      %5150 = vmatmul.mubr.f32.gmra.mrb[0].mxu0 %v366
      %v5151 = vpop.f32.mrb[0].mxu0
      %v5152 = vadd.f32 %v4927, %v5151
      %v5153 = vpop.f32.mrb[0].mxu0
      %5154 = vmatprep.mubr.f32.mxu0 %v399
      %5155 = vmatmul.mubr.f32.gmra.mrb[0].mxu0 %v398
      %v5156 = vpop.f32.mrb[0].mxu0
      %v5157 = vadd.f32 %v4932, %v5156
      %v5158 = vpop.f32.mrb[0].mxu0
      %5159 = vmatprep.mubr.f32.mxu0 %v431
      %5160 = vmatmul.mubr.f32.gmra.mrb[0].mxu0 %v430
      %v5161 = vpop.f32.mrb[0].mxu0
      %v5162 = vadd.f32 %v4937, %v5161
      %v5163 = vpop.f32.mrb[0].mxu0
      %5164 = vmatprep.mubr.f32.mxu0 %v463
      %5165 = vmatmul.mubr.f32.gmra.mrb[0].mxu0 %v462
      %v5166 = vpop.f32.mrb[0].mxu0
      %v5167 = vadd.f32 %v4942, %v5166
      %v5168 = vpop.f32.mrb[0].mxu0
      %5169 = vmatprep.mubr.f32.mxu0 %v495
      %5170 = vmatmul.mubr.f32.gmra.mrb[0].mxu0 %v494
      %v5171 = vpop.f32.mrb[0].mxu0
      %v5172 = vadd.f32 %v4947, %v5171
      %v5173 = vpop.f32.mrb[0].mxu0
      %5174 = vmatprep.mubr.f32.mxu0 %v527
      %5175 = vmatmul.mubr.f32.gmra.mrb[0].mxu0 %v526
      %v5176 = vpop.f32.mrb[0].mxu0
      %v5177 = vadd.f32 %v4952, %v5176
      %v5178 = vpop.f32.mrb[0].mxu0
      %5179 = vmatprep.mubr.f32.mxu0 %v559
      %5180 = vmatmul.mubr.f32.gmra.mrb[0].mxu0 %v558
      %v5181 = vpop.f32.mrb[0].mxu0
      %v5182 = vadd.f32 %v4957, %v5181
      %v5183 = vpop.f32.mrb[0].mxu0
      %5184 = vmatprep.mubr.f32.mxu0 %v591
      %5185 = vmatmul.mubr.f32.gmra.mrb[0].mxu0 %v590
      %v5186 = vpop.f32.mrb[0].mxu0
      %v5187 = vadd.f32 %v4962, %v5186
      %v5188 = vpop.f32.mrb[0].mxu0
      %5189 = vmatprep.mubr.f32.mxu0 %v623
      %5190 = vmatmul.mubr.f32.gmra.mrb[0].mxu0 %v622
      %v5191 = vpop.f32.mrb[0].mxu0
      %v5192 = vadd.f32 %v4967, %v5191
      %v5193 = vpop.f32.mrb[0].mxu0
      %5194 = vmatprep.mubr.f32.mxu0 %v655
      %5195 = vmatmul.mubr.f32.gmra.mrb[0].mxu0 %v654
      %v5196 = vpop.f32.mrb[0].mxu0
      %v5197 = vadd.f32 %v4972, %v5196
      %v5198 = vpop.f32.mrb[0].mxu0
      %5199 = vmatprep.mubr.f32.mxu0 %v687
      %5200 = vmatmul.mubr.f32.gmra.mrb[0].mxu0 %v686
      %v5201 = vpop.f32.mrb[0].mxu0
      %v5202 = vadd.f32 %v4977, %v5201
      %v5203 = vpop.f32.mrb[0].mxu0
      %5204 = vmatprep.mubr.f32.mxu0 %v719
      %5205 = vmatmul.mubr.f32.gmra.mrb[0].mxu0 %v718
      %v5206 = vpop.f32.mrb[0].mxu0
      %v5207 = vadd.f32 %v4982, %v5206
      %v5208 = vpop.f32.mrb[0].mxu0
      %5209 = vmatprep.mubr.f32.mxu0 %v751
      %5210 = vmatmul.mubr.f32.gmra.mrb[0].mxu0 %v750
      %v5211 = vpop.f32.mrb[0].mxu0
      %v5212 = vadd.f32 %v4987, %v5211
      %v5213 = vpop.f32.mrb[0].mxu0
      %5214 = vmatprep.mubr.f32.mxu0 %v783
      %5215 = vmatmul.mubr.f32.gmra.mrb[0].mxu0 %v782
      %v5216 = vpop.f32.mrb[0].mxu0
      %v5217 = vadd.f32 %v4992, %v5216
      %v5218 = vpop.f32.mrb[0].mxu0
      %5219 = vmatprep.mubr.f32.mxu0 %v815
      %5220 = vmatmul.mubr.f32.gmra.mrb[0].mxu0 %v814
      %v5221 = vpop.f32.mrb[0].mxu0
      %v5222 = vadd.f32 %v4997, %v5221
      %v5223 = vpop.f32.mrb[0].mxu0
      %5224 = vmatprep.mubr.f32.mxu0 %v847
      %5225 = vmatmul.mubr.f32.gmra.mrb[0].mxu0 %v846
      %v5226 = vpop.f32.mrb[0].mxu0
      %v5227 = vadd.f32 %v5002, %v5226
      %v5228 = vpop.f32.mrb[0].mxu0
      %5229 = vmatprep.mubr.f32.mxu0 %v879
      %5230 = vmatmul.mubr.f32.gmra.mrb[0].mxu0 %v878
      %v5231 = vpop.f32.mrb[0].mxu0
      %v5232 = vadd.f32 %v5007, %v5231
      %v5233 = vpop.f32.mrb[0].mxu0
      %5234 = vmatprep.mubr.f32.mxu0 %v911
      %5235 = vmatmul.mubr.f32.gmra.mrb[0].mxu0 %v910
      %v5236 = vpop.f32.mrb[0].mxu0
      %v5237 = vadd.f32 %v5012, %v5236
      %v5238 = vpop.f32.mrb[0].mxu0
      %5239 = vmatprep.mubr.f32.mxu0 %v943
      %5240 = vmatmul.mubr.f32.gmra.mrb[0].mxu0 %v942
      %v5241 = vpop.f32.mrb[0].mxu0
      %v5242 = vadd.f32 %v5017, %v5241
      %v5243 = vpop.f32.mrb[0].mxu0
      %5244 = vmatprep.mubr.f32.mxu0 %v975
      %5245 = vmatmul.mubr.f32.gmra.mrb[0].mxu0 %v974
      %v5246 = vpop.f32.mrb[0].mxu0
      %v5247 = vadd.f32 %v5022, %v5246
      %v5248 = vpop.f32.mrb[0].mxu0
      %5249 = vmatprep.mubr.f32.mxu0 %v1007
      %5250 = vmatmul.mubr.f32.gmra.mrb[0].mxu0 %v1006
      %v5251 = vpop.f32.mrb[0].mxu0
      %v5252 = vadd.f32 %v5027, %v5251
      %v5253 = vpop.f32.mrb[0].mxu0
      %5254 = vmatprep.mubr.f32.mxu0 %v1039
      %5255 = vmatmul.mubr.f32.gmra.mrb[0].mxu0 %v1038
      %v5256 = vpop.f32.mrb[0].mxu0
      %v5257 = vadd.f32 %v5032, %v5256
      %v5258 = vpop.f32.mrb[0].mxu0
      %5259 = vmatprep.mubr.f32.mxu0 %v1071
      %5260 = vmatmul.mubr.f32.gmra.mrb[0].mxu0 %v1070
      %v5261 = vpop.f32.mrb[0].mxu0
      %v5262 = vadd.f32 %v5037, %v5261
      %v5263 = vpop.f32.mrb[0].mxu0
      %5264 = vmatprep.mubr.f32.mxu0 %v1103
      %5265 = vmatmul.mubr.f32.gmra.mrb[0].mxu0 %v1102
      %v5266 = vpop.f32.mrb[0].mxu0
      %v5267 = vadd.f32 %v5042, %v5266
      %v5268 = vpop.f32.mrb[0].mxu0
      %5269 = vmatprep.mubr.f32.mxu0 %v1135
      %5270 = vmatmul.mubr.f32.gmra.mrb[0].mxu0 %v1134
      %v5271 = vpop.f32.mrb[0].mxu0
      %v5272 = vadd.f32 %v5047, %v5271
      %v5273 = vpop.f32.mrb[0].mxu0
      %5274 = vmatprep.mubr.f32.mxu0 %v1167
      %5275 = vmatmul.mubr.f32.gmra.mrb[0].mxu0 %v1166
      %v5276 = vpop.f32.mrb[0].mxu0
      %v5277 = vadd.f32 %v5052, %v5276
      %v5278 = vpop.f32.mrb[0].mxu0
      %5279 = vdwg.mxu0
      %vm5280 = vcmask 23552
      %5281 = vst.msk [vmem:[%s143] sm:$0xff] %vm5280, %v5122
      %5282 = vst.msk [vmem:[%s143 + $0x8] sm:$0xff] %vm5280, %v5127
      %5283 = vst.msk [vmem:[%s143 + $0x10] sm:$0xff] %vm5280, %v5132
      %5284 = vst.msk [vmem:[%s143 + $0x18] sm:$0xff] %vm5280, %v5137
      %5285 = vst.msk [vmem:[%s143 + $0x20] sm:$0xff] %vm5280, %v5142
      %5286 = vst.msk [vmem:[%s143 + $0x28] sm:$0xff] %vm5280, %v5147
      %5287 = vst.msk [vmem:[%s143 + $0x30] sm:$0xff] %vm5280, %v5152
      %5288 = vst.msk [vmem:[%s143 + $0x38] sm:$0xff] %vm5280, %v5157
      %5289 = vst.msk [vmem:[%s143 + $0x40] sm:$0xff] %vm5280, %v5162
      %5290 = vst.msk [vmem:[%s143 + $0x48] sm:$0xff] %vm5280, %v5167
      %5291 = vst.msk [vmem:[%s143 + $0x50] sm:$0xff] %vm5280, %v5172
      %5292 = vst.msk [vmem:[%s143 + $0x58] sm:$0xff] %vm5280, %v5177
      %5293 = vst.msk [vmem:[%s143 + $0x60] sm:$0xff] %vm5280, %v5182
      %5294 = vst.msk [vmem:[%s143 + $0x68] sm:$0xff] %vm5280, %v5187
      %5295 = vst.msk [vmem:[%s143 + $0x70] sm:$0xff] %vm5280, %v5192
      %5296 = vst.msk [vmem:[%s143 + $0x78] sm:$0xff] %vm5280, %v5197
      %5297 = vst.msk [vmem:[%s143 + $0x80] sm:$0xff] %vm5280, %v5202
      %5298 = vst.msk [vmem:[%s143 + $0x88] sm:$0xff] %vm5280, %v5207
      %5299 = vst.msk [vmem:[%s143 + $0x90] sm:$0xff] %vm5280, %v5212
      %5300 = vst.msk [vmem:[%s143 + $0x98] sm:$0xff] %vm5280, %v5217
      %5301 = vst.msk [vmem:[%s143 + $0xa0] sm:$0xff] %vm5280, %v5222
      %5302 = vst.msk [vmem:[%s143 + $0xa8] sm:$0xff] %vm5280, %v5227
      %5303 = vst.msk [vmem:[%s143 + $0xb0] sm:$0xff] %vm5280, %v5232
      %5304 = vst.msk [vmem:[%s143 + $0xb8] sm:$0xff] %vm5280, %v5237
      %5305 = vst.msk [vmem:[%s143 + $0xc0] sm:$0xff] %vm5280, %v5242
      %5306 = vst.msk [vmem:[%s143 + $0xc8] sm:$0xff] %vm5280, %v5247
      %5307 = vst.msk [vmem:[%s143 + $0xd0] sm:$0xff] %vm5280, %v5252
      %5308 = vst.msk [vmem:[%s143 + $0xd8] sm:$0xff] %vm5280, %v5257
      %5309 = vst.msk [vmem:[%s143 + $0xe0] sm:$0xff] %vm5280, %v5262
      %5310 = vst.msk [vmem:[%s143 + $0xe8] sm:$0xff] %vm5280, %v5267
      %5311 = vst.msk [vmem:[%s143 + $0xf0] sm:$0xff] %vm5280, %v5272
      %5312 = vst.msk [vmem:[%s143 + $0xf8] sm:$0xff] %vm5280, %v5277
      %p5313 = scmp.lt.s32.totalorder %s13, 1
      %s5314 = scalar_select %p5313, %s13, 1
      %s5315 = smul.addr %s5314, 32
      %s5316 = smul.addr %s5315, 8
      %s5317 = scalar_lea.vmem %s2, %s5316
      // Predicated region
      $region29: #{tpu_custom_call.1} parent=27 // pred_check
        %p5318 = pneg %p78
      $region30: #{tpu_custom_call.1} parent=27 // pred_check_branch
        %5320 = sbr.rel (%p5318) target = $region32
      $region31: #{tpu_custom_call.1} parent=27 // pred_region
        _
      $region32: #{tpu_custom_call.1} parent=27 // pred_fallthru
        _
    $region28: #{tpu_custom_call.1} parent=5 // pred_fallthru
      _
    %p5321 = scmp.le.s32.totalorder 2, %s8
    // Predicated region
    $region33: #{tpu_custom_call.1} parent=5 // pred_check
      %p5322 = pneg %p5321
    $region34: #{tpu_custom_call.1} parent=5 // pred_check_branch
      %5324 = sbr.rel (%p5322) target = $region36
    $region35: #{tpu_custom_call.1} parent=5 // pred_region
      %s5325 = ssub.s32 %s8, 2
      // Predicated region
      $region37: #{tpu_custom_call.1} parent=35 // pred_check
        %p5326 = pneg %p84
      $region38: #{tpu_custom_call.1} parent=35 // pred_check_branch
        %5328 = sbr.rel (%p5326) target = $region40
      $region39: #{tpu_custom_call.1} parent=35 // pred_region
        %p5329 = scmp.lt.s32.totalorder %s14, 1
        %s5330 = scalar_select %p5329, %s14, 1
        %s5331 = smul.addr %s5330, 32
        %s5332 = smul.addr %s5331, 8
        %s5333 = scalar_lea.vmem %s2, %s5332
      $region40: #{tpu_custom_call.1} parent=35 // pred_fallthru
        _
    $region36: #{tpu_custom_call.1} parent=5 // pred_fallthru
      _
  $region6: #{tpu_custom_call.1} parent=0 // loop_footer
    %s12 = sadd.s32 1, %s8
  $region7: #{tpu_custom_call.1} parent=0 // loop_footer_branch
    %7 = sbr.rel target = $region3
  $region8: #{tpu_custom_call.1} parent=0 // loop_exit
    _

</llo_original>
